<compile_context>
chip_gen: v7x
topology: tpu7x:2x2x1
jax: 0.10.0
libtpu: 0.0.40
codegen_flags: <defaults>
</compile_context>

<pallas_src>
import jax
import jax.numpy as jnp
import numpy as np
from jax.experimental import pallas as pl
from jax.experimental.pallas import tpu as pltpu


# ----------------------------- kernel helpers ------------------------------

def _bn_fold(x2, gamma, beta, eps=1e-5):
    """Training-mode BatchNorm2d folded to per-channel (scale, bias).

    x2 is (rows, C) f32 with C on the lane axis; gamma/beta are (1, C) f32.
    Biased batch variance (matches PyTorch training-mode normalisation).
    Single-axis (sublane) reductions + one EUP rsqrt per channel.
    """
    inv_cnt = 1.0 / x2.shape[0]
    mean = jnp.sum(x2, axis=0, keepdims=True) * inv_cnt            # (1, C)
    var = jnp.sum((x2 - mean) ** 2, axis=0, keepdims=True) * inv_cnt
    scale = gamma * jax.lax.rsqrt(var + eps)                       # EUP rsqrt
    bias = beta - mean * scale
    return scale, bias


def _make_kernel(stride, dim_match, n, h, w, cin, cout, mm_dtype):
    """Build the fused BottleNeck_IR kernel for static (stride, dim_match, shapes)."""
    ho = (h - 1) // stride + 1
    wo = (w - 1) // stride + 1
    rows1 = n * h * w
    rows2 = n * ho * wo
    f32 = jnp.float32

    def ds_s(start, size, step):
        # (strided) dynamic slice helper for tap / shortcut gathers
        if step == 1:
            return pl.ds(start, size)
        return pl.ds(start, size, stride=step)

    def zero_halo(pad, hh, ww, c):
        # [R4] zero only the 1-pixel border of the padded scratch
        pad[:, pl.ds(0, 1), :, :] = jnp.zeros((n, 1, ww + 2, c), f32)
        pad[:, pl.ds(hh + 1, 1), :, :] = jnp.zeros((n, 1, ww + 2, c), f32)
        pad[:, :, pl.ds(0, 1), :] = jnp.zeros((n, hh + 2, 1, c), f32)
        pad[:, :, pl.ds(ww + 1, 1), :] = jnp.zeros((n, hh + 2, 1, c), f32)

    def conv3x3(pad, w_ref, c_in, out_h, out_w, step):
        # [R1] 9 accumulating tap-dots straight from the padded scratch.
        acc = None
        for t in range(9):
            dh, dw = divmod(t, 3)
            tap = pad[:, ds_s(dh, out_h, step), ds_s(dw, out_w, step), :]
            tap = tap.reshape(n * out_h * out_w, c_in).astype(mm_dtype)
            d = jnp.dot(tap, w_ref[t], preferred_element_type=f32)
            acc = d if acc is None else acc + d
        return acc                                        # f32 accumulator

    def kernel(*refs):
        if dim_match:
            (x_ref, pp_ref, w1_ref, w2_ref, o_ref, pad1, pad2) = refs
        else:
            (x_ref, pp_ref, w1_ref, w2_ref, wsc_ref, o_ref, pad1, pad2) = refs

        # [R10] single packed per-channel parameter load
        p = pp_ref[...]                                   # (K, cmax) f32
        g1, b1 = p[0:1, :cin], p[1:2, :cin]
        g2, b2 = p[2:3, :cout], p[3:4, :cout]
        a2 = p[4:5, :cout]
        g3, b3 = p[5:6, :cout], p[6:7, :cout]

        x4 = x_ref[...]                                   # (n, h, w, cin) f32
        x2 = x4.reshape(rows1, cin)

        # ---- BN1 (batch stats in-kernel) ----
        s1, c1 = _bn_fold(x2, g1, b1)
        y1 = x4 * s1 + c1                                 # (n, h, w, cin)

        # ---- Conv1: 3x3 / stride 1 / pad 1 ----
        zero_halo(pad1, h, w, cin)
        pad1[:, pl.ds(1, h), pl.ds(1, w), :] = y1
        r1 = conv3x3(pad1, w1_ref, cin, h, w, 1)          # (rows1, cout) f32

        # ---- BN2 + PReLU (f32 elementwise) ----
        s2, c2 = _bn_fold(r1, g2, b2)
        y2 = r1 * s2 + c2
        y2 = jnp.where(y2 >= 0, y2, a2 * y2)

        # ---- Conv2: 3x3 / stride / pad 1, directly on the strided output grid ----
        zero_halo(pad2, h, w, cout)
        pad2[:, pl.ds(1, h), pl.ds(1, w), :] = y2.reshape(n, h, w, cout)
        r2 = conv3x3(pad2, w2_ref, cout, ho, wo, stride)  # (rows2, cout) f32

        # ---- BN3 ----
        s3, c3 = _bn_fold(r2, g3, b3)
        res = r2 * s3 + c3

        # ---- shortcut branch, fused ----
        if dim_match:
            sc = x2                                       # identity (raw x)
        else:
            gsc, bsc = p[7:8, :cout], p[8:9, :cout]
            xs = x_ref[:, ds_s(0, ho, stride), ds_s(0, wo, stride), :]
            xs = xs.reshape(rows2, cin).astype(mm_dtype)
            sc = jnp.dot(xs, wsc_ref[...], preferred_element_type=f32)  # 1x1 conv
            ssc, csc = _bn_fold(sc, gsc, bsc)
            sc = sc * ssc + csc

        out = res + sc                                    # (rows2, cout) f32
        o_ref[...] = out.reshape(n, ho, wo, cout).astype(o_ref.dtype)

    return kernel


# ------------------------------- wrappers -----------------------------------

def bottleneck_ir_forward_nhwc(x, params, stride, dim_match,
                               matmul_dtype=jnp.bfloat16):
    """Core NHWC forward (no layout transposes) as a single fused Pallas kernel."""
    x = x.astype(jnp.float32)
    n, h, w, cin = x.shape
    cout = params["w1"].shape[-1]
    ho = (h - 1) // stride + 1
    wo = (w - 1) // stride + 1
    f32 = jnp.float32

    if dim_match:
        assert stride == 1 and cin == cout, \
            "identity shortcut requires stride == 1 and in_channel == out_channel"

    # [R10] pack all per-channel parameters into one (K, cmax) f32 array
    cmax = max(cin, cout)

    def row(v):
        v = jnp.asarray(v, f32).reshape(-1)
        return jnp.pad(v, (0, cmax - v.shape[0]))

    names = ["bn1_g", "bn1_b", "bn2_g", "bn2_b", "prelu_a", "bn3_g", "bn3_b"]
    if not dim_match:
        names += ["bnsc_g", "bnsc_b"]
    packed = jnp.stack([row(params[k]) for k in names], axis=0)    # (K, cmax)

    # [R6] weights stored/loaded in the MXU operand dtype (bf16 by default)
    w1 = params["w1"].astype(matmul_dtype)                # (9, cin, cout)
    w2 = params["w2"].astype(matmul_dtype)                # (9, cout, cout)

    args = [x, packed, w1, w2]
    if not dim_match:
        args.append(params["wsc"].astype(matmul_dtype))   # (cin, cout)

    kernel = _make_kernel(stride, dim_match, n, h, w, cin, cout, matmul_dtype)

    def full_spec(shape):
        nd = len(shape)
        return pl.BlockSpec(shape, lambda i, nd=nd: (0,) * nd)

    # [R11] advisory cost estimate for the XLA scheduler
    rows1, rows2 = n * h * w, n * ho * wo
    flops = 2 * rows1 * 9 * cin * cout + 2 * rows2 * 9 * cout * cout
    if not dim_match:
        flops += 2 * rows2 * cin * cout
    flops += 12 * (rows1 * cin + rows1 * cout + rows2 * cout)       # BN/PReLU etc.
    w_itemsize = np.dtype(matmul_dtype).itemsize
    bytes_accessed = (4 * (x.size + rows2 * cout + packed.size)
                      + w_itemsize * (w1.size + w2.size
                                      + (0 if dim_match else cin * cout)))
    cost = pl.CostEstimate(flops=int(flops),
                           transcendentals=int(cin + 3 * cout),
                           bytes_accessed=int(bytes_accessed))

    out = pl.pallas_call(
        kernel,
        grid=(1,),
        in_specs=[full_spec(a.shape) for a in args],
        out_specs=full_spec((n, ho, wo, cout)),
        out_shape=jax.ShapeDtypeStruct((n, ho, wo, cout), f32),
        scratch_shapes=[pltpu.VMEM((n, h + 2, w + 2, cin), f32),   # padded BN1(x)
                        pltpu.VMEM((n, h + 2, w + 2, cout), f32)],  # padded PReLU(BN2)
        compiler_params=pltpu.CompilerParams(
            dimension_semantics=("arbitrary",),
            vmem_limit_bytes=32 * 1024 * 1024),
        cost_estimate=cost,
    )(*args)
    return out


def bottleneck_ir_forward(x_nchw, params, stride, dim_match,
                          matmul_dtype=jnp.bfloat16):
    """NCHW adapter matching the PyTorch interface (use the NHWC entry point in
    an NHWC model to avoid the two layout transposes entirely)."""
    x = jnp.transpose(x_nchw, (0, 2, 3, 1))               # NCHW -> NHWC
    out = bottleneck_ir_forward_nhwc(x, params, stride, dim_match, matmul_dtype)
    return jnp.transpose(out, (0, 3, 1, 2))               # NHWC -> NCHW


# --------------------------- pure-JAX reference -----------------------------

def _ref_bn(x, g, b, eps=1e-5):
    mean = jnp.mean(x, axis=(0, 2, 3), keepdims=True)
    var = jnp.mean((x - mean) ** 2, axis=(0, 2, 3), keepdims=True)
    return (x - mean) / jnp.sqrt(var + eps) * g.reshape(1, -1, 1, 1) + \
        b.reshape(1, -1, 1, 1)


def _ref_conv3x3(x, w9, stride):
    cin, cout = w9.shape[1], w9.shape[2]
    w = jnp.transpose(w9.reshape(3, 3, cin, cout), (3, 2, 0, 1))  # OIHW
    return jax.lax.conv_general_dilated(
        x, w, (stride, stride), ((1, 1), (1, 1)),
        dimension_numbers=("NCHW", "OIHW", "NCHW"),
        precision=jax.lax.Precision.HIGHEST)


def reference_forward(x, params, stride, dim_match):
    res = _ref_bn(x, params["bn1_g"], params["bn1_b"])
    res = _ref_conv3x3(res, params["w1"], 1)
    res = _ref_bn(res, params["bn2_g"], params["bn2_b"])
    a = params["prelu_a"].reshape(1, -1, 1, 1)
    res = jnp.where(res >= 0, res, a * res)
    res = _ref_conv3x3(res, params["w2"], stride)
    res = _ref_bn(res, params["bn3_g"], params["bn3_b"])
    if dim_match:
        shortcut = x
    else:
        wsc = jnp.transpose(params["wsc"]).reshape(params["wsc"].shape[1],
                                                   params["wsc"].shape[0], 1, 1)
        shortcut = jax.lax.conv_general_dilated(
            x, wsc, (stride, stride), ((0, 0), (0, 0)),
            dimension_numbers=("NCHW", "OIHW", "NCHW"),
            precision=jax.lax.Precision.HIGHEST)
        shortcut = _ref_bn(shortcut, params["bnsc_g"], params["bnsc_b"])
    return shortcut + res


# ------------------------------ param setup ---------------------------------

def init_params(key, cin, cout, dim_match):
    ks = jax.random.split(key, 12)
    f32 = jnp.float32
    p = {
        "bn1_g": jax.random.uniform(ks[0], (cin,), f32, 0.5, 1.5),
        "bn1_b": 0.1 * jax.random.normal(ks[1], (cin,), f32),
        "w1": jax.random.normal(ks[2], (9, cin, cout), f32) / np.sqrt(9 * cin),
        "bn2_g": jax.random.uniform(ks[3], (cout,), f32, 0.5, 1.5),
        "bn2_b": 0.1 * jax.random.normal(ks[4], (cout,), f32),
        "prelu_a": jnp.full((cout,), 0.25, f32),  # PyTorch PReLU default init
        "w2": jax.random.normal(ks[5], (9, cout, cout), f32) / np.sqrt(9 * cout),
        "bn3_g": jax.random.uniform(ks[6], (cout,), f32, 0.5, 1.5),
        "bn3_b": 0.1 * jax.random.normal(ks[7], (cout,), f32),
    }
    if not dim_match:
        p["wsc"] = jax.random.normal(ks[8], (cin, cout), f32) / np.sqrt(cin)
        p["bnsc_g"] = jax.random.uniform(ks[9], (cout,), f32, 0.5, 1.5)
        p["bnsc_b"] = 0.1 * jax.random.normal(ks[10], (cout,), f32)
    return p


# ---------------------------------- main ------------------------------------

if __name__ == "__main__":
    key = jax.random.PRNGKey(0)

    def check(x, params, stride, dim_match, out_shape):
        ref = reference_forward(x, params, stride, dim_match)
        # f32 MXU operands: tight tolerance; bf16 operands (production default on
        # v6e/v7x): loosened tolerance as anticipated by the review.
        for mm_dtype, tol in ((jnp.float32, 2e-3), (jnp.bfloat16, 4e-2)):
            out = bottleneck_ir_forward(x, params, stride, dim_match,
                                        matmul_dtype=mm_dtype)
            jax.block_until_ready(out)
            assert out.shape == out_shape
            np.testing.assert_allclose(np.asarray(out), np.asarray(ref),
                                       rtol=tol, atol=tol)

    # Case 1: dim_match=False, stride=2 (projection shortcut, strided convs).
    kx, kp = jax.random.split(key)
    x = jax.random.normal(kx, (2, 4, 16, 16), jnp.float32)  # NCHW, like PyTorch
    params = init_params(kp, cin=4, cout=8, dim_match=False)
    check(x, params, stride=2, dim_match=False, out_shape=(2, 8, 8, 8))

    # Case 2: dim_match=True, stride=1 (identity shortcut).
    kx2, kp2 = jax.random.split(kp)
    x2 = jax.random.normal(kx2, (2, 8, 16, 16), jnp.float32)
    params2 = init_params(kp2, cin=8, cout=8, dim_match=True)
    check(x2, params2, stride=1, dim_match=True, out_shape=(2, 8, 16, 16))

    print("KERNEL_OK")
</pallas_src>

<mosaic_0001>
module attributes {stable_mosaic.version = 11 : i64} {
  func.func @kernel(%arg0: i32, %arg1: memref<2x16x16x4xf32, #tpu.memory_space<vmem>>, %arg2: memref<9x8xf32, #tpu.memory_space<vmem>>, %arg3: memref<9x4x8xf32, #tpu.memory_space<vmem>>, %arg4: memref<9x8x8xf32, #tpu.memory_space<vmem>>, %arg5: memref<4x8xf32, #tpu.memory_space<vmem>>, %arg6: memref<2x8x8x8xf32, #tpu.memory_space<vmem>>, %arg7: memref<2x18x18x4xf32, #tpu.memory_space<vmem>>, %arg8: memref<2x18x18x8xf32, #tpu.memory_space<vmem>>) attributes {dimension_semantics = [#tpu.dimension_semantics<arbitrary>], iteration_bounds = array<i64: 1>, scalar_prefetch = 0 : i64, scratch_operands = 2 : i64, tpu.core_type = #tpu.core_type<tc>, window_params = [{pipeline_mode = #tpu.pipeline_mode<synchronous>, transform_indices = @transform_0, window_bounds = array<i64: 2, 16, 16, 4>}, {pipeline_mode = #tpu.pipeline_mode<synchronous>, transform_indices = @transform_1, window_bounds = array<i64: 9, 8>}, {pipeline_mode = #tpu.pipeline_mode<synchronous>, transform_indices = @transform_2, window_bounds = array<i64: 9, 4, 8>}, {pipeline_mode = #tpu.pipeline_mode<synchronous>, transform_indices = @transform_3, window_bounds = array<i64: 9, 8, 8>}, {pipeline_mode = #tpu.pipeline_mode<synchronous>, transform_indices = @transform_4, window_bounds = array<i64: 4, 8>}, {pipeline_mode = #tpu.pipeline_mode<synchronous>, transform_indices = @transform_5, window_bounds = array<i64: 2, 8, 8, 8>}]} {
    %c0 = arith.constant 0 : index
    %c0_0 = arith.constant 0 : index
    %0 = vector.load %arg2[%c0, %c0_0] : memref<9x8xf32, #tpu.memory_space<vmem>>, vector<9x8xf32>
    %1 = vector.extract_strided_slice %0 {offsets = [0, 0], sizes = [1, 4], strides = [1, 1]} : vector<9x8xf32> to vector<1x4xf32>
    %2 = vector.extract_strided_slice %0 {offsets = [1, 0], sizes = [1, 4], strides = [1, 1]} : vector<9x8xf32> to vector<1x4xf32>
    %3 = vector.extract_strided_slice %0 {offsets = [2, 0], sizes = [1, 8], strides = [1, 1]} : vector<9x8xf32> to vector<1x8xf32>
    %4 = vector.extract_strided_slice %0 {offsets = [3, 0], sizes = [1, 8], strides = [1, 1]} : vector<9x8xf32> to vector<1x8xf32>
    %5 = vector.extract_strided_slice %0 {offsets = [4, 0], sizes = [1, 8], strides = [1, 1]} : vector<9x8xf32> to vector<1x8xf32>
    %6 = vector.extract_strided_slice %0 {offsets = [5, 0], sizes = [1, 8], strides = [1, 1]} : vector<9x8xf32> to vector<1x8xf32>
    %7 = vector.extract_strided_slice %0 {offsets = [6, 0], sizes = [1, 8], strides = [1, 1]} : vector<9x8xf32> to vector<1x8xf32>
    %c0_1 = arith.constant 0 : index
    %c0_2 = arith.constant 0 : index
    %c0_3 = arith.constant 0 : index
    %c0_4 = arith.constant 0 : index
    %8 = vector.load %arg1[%c0_1, %c0_2, %c0_3, %c0_4] : memref<2x16x16x4xf32, #tpu.memory_space<vmem>>, vector<2x16x16x4xf32>
    %9 = vector.shape_cast %8 : vector<2x16x16x4xf32> to vector<512x4xf32>
    %cst = arith.constant dense<0.000000e+00> : vector<4xf32>
    %10 = vector.multi_reduction <add>, %9, %cst [0] : vector<512x4xf32> to vector<4xf32>
    %11 = vector.shape_cast %10 : vector<4xf32> to vector<1x4xf32>
    %cst_5 = arith.constant 0.001953125 : f32
    %12 = vector.broadcast %cst_5 : f32 to vector<1x4xf32>
    %13 = arith.mulf %11, %12 : vector<1x4xf32>
    %14 = vector.broadcast %13 : vector<1x4xf32> to vector<512x4xf32>
    %15 = arith.subf %9, %14 : vector<512x4xf32>
    %16 = arith.mulf %15, %15 : vector<512x4xf32>
    %cst_6 = arith.constant dense<0.000000e+00> : vector<4xf32>
    %17 = vector.multi_reduction <add>, %16, %cst_6 [0] : vector<512x4xf32> to vector<4xf32>
    %18 = vector.shape_cast %17 : vector<4xf32> to vector<1x4xf32>
    %cst_7 = arith.constant 0.001953125 : f32
    %19 = vector.broadcast %cst_7 : f32 to vector<1x4xf32>
    %20 = arith.mulf %18, %19 : vector<1x4xf32>
    %cst_8 = arith.constant 9.99999974E-6 : f32
    %21 = vector.broadcast %cst_8 : f32 to vector<1x4xf32>
    %22 = arith.addf %20, %21 : vector<1x4xf32>
    %23 = math.rsqrt %22 : vector<1x4xf32>
    %24 = arith.mulf %1, %23 : vector<1x4xf32>
    %25 = arith.mulf %13, %24 : vector<1x4xf32>
    %26 = arith.subf %2, %25 : vector<1x4xf32>
    %27 = vector.shape_cast %24 : vector<1x4xf32> to vector<1x1x1x4xf32>
    %28 = vector.broadcast %27 : vector<1x1x1x4xf32> to vector<2x16x16x4xf32>
    %29 = arith.mulf %8, %28 : vector<2x16x16x4xf32>
    %30 = vector.shape_cast %26 : vector<1x4xf32> to vector<1x1x1x4xf32>
    %31 = vector.broadcast %30 : vector<1x1x1x4xf32> to vector<2x16x16x4xf32>
    %32 = arith.addf %29, %31 : vector<2x16x16x4xf32>
    %cst_9 = arith.constant 0.000000e+00 : f32
    %33 = vector.broadcast %cst_9 : f32 to vector<2x1x18x4xf32>
    %c0_10 = arith.constant 0 : index
    %c0_11 = arith.constant 0 : index
    %c0_12 = arith.constant 0 : index
    %c0_13 = arith.constant 0 : index
    %34 = vector.load %arg7[%c0_10, %c0_11, %c0_12, %c0_13] : memref<2x18x18x4xf32, #tpu.memory_space<vmem>>, vector<2x1x18x4xf32>
    tpu.vector_store %arg7[%c0_10, %c0_11, %c0_12, %c0_13], %33 {strides = array<i32>} : memref<2x18x18x4xf32, #tpu.memory_space<vmem>>, vector<2x1x18x4xf32>,
    %cst_14 = arith.constant 0.000000e+00 : f32
    %35 = vector.broadcast %cst_14 : f32 to vector<2x1x18x4xf32>
    %c0_15 = arith.constant 0 : index
    %c17 = arith.constant 17 : index
    %c0_16 = arith.constant 0 : index
    %c0_17 = arith.constant 0 : index
    %36 = vector.load %arg7[%c0_15, %c17, %c0_16, %c0_17] : memref<2x18x18x4xf32, #tpu.memory_space<vmem>>, vector<2x1x18x4xf32>
    tpu.vector_store %arg7[%c0_15, %c17, %c0_16, %c0_17], %35 {strides = array<i32>} : memref<2x18x18x4xf32, #tpu.memory_space<vmem>>, vector<2x1x18x4xf32>,
    %cst_18 = arith.constant 0.000000e+00 : f32
    %37 = vector.broadcast %cst_18 : f32 to vector<2x18x1x4xf32>
    %c0_19 = arith.constant 0 : index
    %c0_20 = arith.constant 0 : index
    %c0_21 = arith.constant 0 : index
    %c0_22 = arith.constant 0 : index
    %38 = vector.load %arg7[%c0_19, %c0_20, %c0_21, %c0_22] : memref<2x18x18x4xf32, #tpu.memory_space<vmem>>, vector<2x18x1x4xf32>
    tpu.vector_store %arg7[%c0_19, %c0_20, %c0_21, %c0_22], %37 {strides = array<i32>} : memref<2x18x18x4xf32, #tpu.memory_space<vmem>>, vector<2x18x1x4xf32>,
    %cst_23 = arith.constant 0.000000e+00 : f32
    %39 = vector.broadcast %cst_23 : f32 to vector<2x18x1x4xf32>
    %c0_24 = arith.constant 0 : index
    %c0_25 = arith.constant 0 : index
    %c17_26 = arith.constant 17 : index
    %c0_27 = arith.constant 0 : index
    %40 = vector.load %arg7[%c0_24, %c0_25, %c17_26, %c0_27] : memref<2x18x18x4xf32, #tpu.memory_space<vmem>>, vector<2x18x1x4xf32>
    tpu.vector_store %arg7[%c0_24, %c0_25, %c17_26, %c0_27], %39 {strides = array<i32>} : memref<2x18x18x4xf32, #tpu.memory_space<vmem>>, vector<2x18x1x4xf32>,
    %c0_28 = arith.constant 0 : index
    %c1 = arith.constant 1 : index
    %c1_29 = arith.constant 1 : index
    %c0_30 = arith.constant 0 : index
    %41 = vector.load %arg7[%c0_28, %c1, %c1_29, %c0_30] : memref<2x18x18x4xf32, #tpu.memory_space<vmem>>, vector<2x16x16x4xf32>
    tpu.vector_store %arg7[%c0_28, %c1, %c1_29, %c0_30], %32 {strides = array<i32>} : memref<2x18x18x4xf32, #tpu.memory_space<vmem>>, vector<2x16x16x4xf32>,
    %c0_31 = arith.constant 0 : index
    %c0_32 = arith.constant 0 : index
    %c0_33 = arith.constant 0 : index
    %c0_34 = arith.constant 0 : index
    %42 = vector.load %arg7[%c0_31, %c0_32, %c0_33, %c0_34] : memref<2x18x18x4xf32, #tpu.memory_space<vmem>>, vector<2x16x16x4xf32>
    %43 = vector.shape_cast %42 : vector<2x16x16x4xf32> to vector<512x4xf32>
    %c0_35 = arith.constant 0 : index
    %c0_36 = arith.constant 0 : index
    %c0_37 = arith.constant 0 : index
    %44 = vector.load %arg3[%c0_35, %c0_36, %c0_37] : memref<9x4x8xf32, #tpu.memory_space<vmem>>, vector<1x4x8xf32>
    %45 = vector.shape_cast %44 : vector<1x4x8xf32> to vector<4x8xf32>
    %cst_38 = arith.constant dense<0.000000e+00> : vector<512x8xf32>
    %46 = tpu.matmul %43, %45, %cst_38 {dimension_numbers = #tpu.dot_dimension_numbers<[1], [0], [0], [1], [0, 0, 1, 1], [], []>} : vector<512x4xf32>, vector<4x8xf32>, vector<512x8xf32> -> vector<512x8xf32>
    %c0_39 = arith.constant 0 : index
    %c0_40 = arith.constant 0 : index
    %c1_41 = arith.constant 1 : index
    %c0_42 = arith.constant 0 : index
    %47 = vector.load %arg7[%c0_39, %c0_40, %c1_41, %c0_42] : memref<2x18x18x4xf32, #tpu.memory_space<vmem>>, vector<2x16x16x4xf32>
    %48 = vector.shape_cast %47 : vector<2x16x16x4xf32> to vector<512x4xf32>
    %c1_43 = arith.constant 1 : index
    %c0_44 = arith.constant 0 : index
    %c0_45 = arith.constant 0 : index
    %49 = vector.load %arg3[%c1_43, %c0_44, %c0_45] : memref<9x4x8xf32, #tpu.memory_space<vmem>>, vector<1x4x8xf32>
    %50 = vector.shape_cast %49 : vector<1x4x8xf32> to vector<4x8xf32>
    %cst_46 = arith.constant dense<0.000000e+00> : vector<512x8xf32>
    %51 = tpu.matmul %48, %50, %cst_46 {dimension_numbers = #tpu.dot_dimension_numbers<[1], [0], [0], [1], [0, 0, 1, 1], [], []>} : vector<512x4xf32>, vector<4x8xf32>, vector<512x8xf32> -> vector<512x8xf32>
    %52 = arith.addf %46, %51 : vector<512x8xf32>
    %c0_47 = arith.constant 0 : index
    %c0_48 = arith.constant 0 : index
    %c2 = arith.constant 2 : index
    %c0_49 = arith.constant 0 : index
    %53 = vector.load %arg7[%c0_47, %c0_48, %c2, %c0_49] : memref<2x18x18x4xf32, #tpu.memory_space<vmem>>, vector<2x16x16x4xf32>
    %54 = vector.shape_cast %53 : vector<2x16x16x4xf32> to vector<512x4xf32>
    %c2_50 = arith.constant 2 : index
    %c0_51 = arith.constant 0 : index
    %c0_52 = arith.constant 0 : index
    %55 = vector.load %arg3[%c2_50, %c0_51, %c0_52] : memref<9x4x8xf32, #tpu.memory_space<vmem>>, vector<1x4x8xf32>
    %56 = vector.shape_cast %55 : vector<1x4x8xf32> to vector<4x8xf32>
    %cst_53 = arith.constant dense<0.000000e+00> : vector<512x8xf32>
    %57 = tpu.matmul %54, %56, %cst_53 {dimension_numbers = #tpu.dot_dimension_numbers<[1], [0], [0], [1], [0, 0, 1, 1], [], []>} : vector<512x4xf32>, vector<4x8xf32>, vector<512x8xf32> -> vector<512x8xf32>
    %58 = arith.addf %52, %57 : vector<512x8xf32>
    %c0_54 = arith.constant 0 : index
    %c1_55 = arith.constant 1 : index
    %c0_56 = arith.constant 0 : index
    %c0_57 = arith.constant 0 : index
    %59 = vector.load %arg7[%c0_54, %c1_55, %c0_56, %c0_57] : memref<2x18x18x4xf32, #tpu.memory_space<vmem>>, vector<2x16x16x4xf32>
    %60 = vector.shape_cast %59 : vector<2x16x16x4xf32> to vector<512x4xf32>
    %c3 = arith.constant 3 : index
    %c0_58 = arith.constant 0 : index
    %c0_59 = arith.constant 0 : index
    %61 = vector.load %arg3[%c3, %c0_58, %c0_59] : memref<9x4x8xf32, #tpu.memory_space<vmem>>, vector<1x4x8xf32>
    %62 = vector.shape_cast %61 : vector<1x4x8xf32> to vector<4x8xf32>
    %cst_60 = arith.constant dense<0.000000e+00> : vector<512x8xf32>
    %63 = tpu.matmul %60, %62, %cst_60 {dimension_numbers = #tpu.dot_dimension_numbers<[1], [0], [0], [1], [0, 0, 1, 1], [], []>} : vector<512x4xf32>, vector<4x8xf32>, vector<512x8xf32> -> vector<512x8xf32>
    %64 = arith.addf %58, %63 : vector<512x8xf32>
    %c0_61 = arith.constant 0 : index
    %c1_62 = arith.constant 1 : index
    %c1_63 = arith.constant 1 : index
    %c0_64 = arith.constant 0 : index
    %65 = vector.load %arg7[%c0_61, %c1_62, %c1_63, %c0_64] : memref<2x18x18x4xf32, #tpu.memory_space<vmem>>, vector<2x16x16x4xf32>
    %66 = vector.shape_cast %65 : vector<2x16x16x4xf32> to vector<512x4xf32>
    %c4 = arith.constant 4 : index
    %c0_65 = arith.constant 0 : index
    %c0_66 = arith.constant 0 : index
    %67 = vector.load %arg3[%c4, %c0_65, %c0_66] : memref<9x4x8xf32, #tpu.memory_space<vmem>>, vector<1x4x8xf32>
    %68 = vector.shape_cast %67 : vector<1x4x8xf32> to vector<4x8xf32>
    %cst_67 = arith.constant dense<0.000000e+00> : vector<512x8xf32>
    %69 = tpu.matmul %66, %68, %cst_67 {dimension_numbers = #tpu.dot_dimension_numbers<[1], [0], [0], [1], [0, 0, 1, 1], [], []>} : vector<512x4xf32>, vector<4x8xf32>, vector<512x8xf32> -> vector<512x8xf32>
    %70 = arith.addf %64, %69 : vector<512x8xf32>
    %c0_68 = arith.constant 0 : index
    %c1_69 = arith.constant 1 : index
    %c2_70 = arith.constant 2 : index
    %c0_71 = arith.constant 0 : index
    %71 = vector.load %arg7[%c0_68, %c1_69, %c2_70, %c0_71] : memref<2x18x18x4xf32, #tpu.memory_space<vmem>>, vector<2x16x16x4xf32>
    %72 = vector.shape_cast %71 : vector<2x16x16x4xf32> to vector<512x4xf32>
    %c5 = arith.constant 5 : index
    %c0_72 = arith.constant 0 : index
    %c0_73 = arith.constant 0 : index
    %73 = vector.load %arg3[%c5, %c0_72, %c0_73] : memref<9x4x8xf32, #tpu.memory_space<vmem>>, vector<1x4x8xf32>
    %74 = vector.shape_cast %73 : vector<1x4x8xf32> to vector<4x8xf32>
    %cst_74 = arith.constant dense<0.000000e+00> : vector<512x8xf32>
    %75 = tpu.matmul %72, %74, %cst_74 {dimension_numbers = #tpu.dot_dimension_numbers<[1], [0], [0], [1], [0, 0, 1, 1], [], []>} : vector<512x4xf32>, vector<4x8xf32>, vector<512x8xf32> -> vector<512x8xf32>
    %76 = arith.addf %70, %75 : vector<512x8xf32>
    %c0_75 = arith.constant 0 : index
    %c2_76 = arith.constant 2 : index
    %c0_77 = arith.constant 0 : index
    %c0_78 = arith.constant 0 : index
    %77 = vector.load %arg7[%c0_75, %c2_76, %c0_77, %c0_78] : memref<2x18x18x4xf32, #tpu.memory_space<vmem>>, vector<2x16x16x4xf32>
    %78 = vector.shape_cast %77 : vector<2x16x16x4xf32> to vector<512x4xf32>
    %c6 = arith.constant 6 : index
    %c0_79 = arith.constant 0 : index
    %c0_80 = arith.constant 0 : index
    %79 = vector.load %arg3[%c6, %c0_79, %c0_80] : memref<9x4x8xf32, #tpu.memory_space<vmem>>, vector<1x4x8xf32>
    %80 = vector.shape_cast %79 : vector<1x4x8xf32> to vector<4x8xf32>
    %cst_81 = arith.constant dense<0.000000e+00> : vector<512x8xf32>
    %81 = tpu.matmul %78, %80, %cst_81 {dimension_numbers = #tpu.dot_dimension_numbers<[1], [0], [0], [1], [0, 0, 1, 1], [], []>} : vector<512x4xf32>, vector<4x8xf32>, vector<512x8xf32> -> vector<512x8xf32>
    %82 = arith.addf %76, %81 : vector<512x8xf32>
    %c0_82 = arith.constant 0 : index
    %c2_83 = arith.constant 2 : index
    %c1_84 = arith.constant 1 : index
    %c0_85 = arith.constant 0 : index
    %83 = vector.load %arg7[%c0_82, %c2_83, %c1_84, %c0_85] : memref<2x18x18x4xf32, #tpu.memory_space<vmem>>, vector<2x16x16x4xf32>
    %84 = vector.shape_cast %83 : vector<2x16x16x4xf32> to vector<512x4xf32>
    %c7 = arith.constant 7 : index
    %c0_86 = arith.constant 0 : index
    %c0_87 = arith.constant 0 : index
    %85 = vector.load %arg3[%c7, %c0_86, %c0_87] : memref<9x4x8xf32, #tpu.memory_space<vmem>>, vector<1x4x8xf32>
    %86 = vector.shape_cast %85 : vector<1x4x8xf32> to vector<4x8xf32>
    %cst_88 = arith.constant dense<0.000000e+00> : vector<512x8xf32>
    %87 = tpu.matmul %84, %86, %cst_88 {dimension_numbers = #tpu.dot_dimension_numbers<[1], [0], [0], [1], [0, 0, 1, 1], [], []>} : vector<512x4xf32>, vector<4x8xf32>, vector<512x8xf32> -> vector<512x8xf32>
    %88 = arith.addf %82, %87 : vector<512x8xf32>
    %c0_89 = arith.constant 0 : index
    %c2_90 = arith.constant 2 : index
    %c2_91 = arith.constant 2 : index
    %c0_92 = arith.constant 0 : index
    %89 = vector.load %arg7[%c0_89, %c2_90, %c2_91, %c0_92] : memref<2x18x18x4xf32, #tpu.memory_space<vmem>>, vector<2x16x16x4xf32>
    %90 = vector.shape_cast %89 : vector<2x16x16x4xf32> to vector<512x4xf32>
    %c8 = arith.constant 8 : index
    %c0_93 = arith.constant 0 : index
    %c0_94 = arith.constant 0 : index
    %91 = vector.load %arg3[%c8, %c0_93, %c0_94] : memref<9x4x8xf32, #tpu.memory_space<vmem>>, vector<1x4x8xf32>
    %92 = vector.shape_cast %91 : vector<1x4x8xf32> to vector<4x8xf32>
    %cst_95 = arith.constant dense<0.000000e+00> : vector<512x8xf32>
    %93 = tpu.matmul %90, %92, %cst_95 {dimension_numbers = #tpu.dot_dimension_numbers<[1], [0], [0], [1], [0, 0, 1, 1], [], []>} : vector<512x4xf32>, vector<4x8xf32>, vector<512x8xf32> -> vector<512x8xf32>
    %94 = arith.addf %88, %93 : vector<512x8xf32>
    %cst_96 = arith.constant dense<0.000000e+00> : vector<8xf32>
    %95 = vector.multi_reduction <add>, %94, %cst_96 [0] : vector<512x8xf32> to vector<8xf32>
    %96 = vector.shape_cast %95 : vector<8xf32> to vector<1x8xf32>
    %cst_97 = arith.constant 0.001953125 : f32
    %97 = vector.broadcast %cst_97 : f32 to vector<1x8xf32>
    %98 = arith.mulf %96, %97 : vector<1x8xf32>
    %99 = vector.broadcast %98 : vector<1x8xf32> to vector<512x8xf32>
    %100 = arith.subf %94, %99 : vector<512x8xf32>
    %101 = arith.mulf %100, %100 : vector<512x8xf32>
    %cst_98 = arith.constant dense<0.000000e+00> : vector<8xf32>
    %102 = vector.multi_reduction <add>, %101, %cst_98 [0] : vector<512x8xf32> to vector<8xf32>
    %103 = vector.shape_cast %102 : vector<8xf32> to vector<1x8xf32>
    %cst_99 = arith.constant 0.001953125 : f32
    %104 = vector.broadcast %cst_99 : f32 to vector<1x8xf32>
    %105 = arith.mulf %103, %104 : vector<1x8xf32>
    %cst_100 = arith.constant 9.99999974E-6 : f32
    %106 = vector.broadcast %cst_100 : f32 to vector<1x8xf32>
    %107 = arith.addf %105, %106 : vector<1x8xf32>
    %108 = math.rsqrt %107 : vector<1x8xf32>
    %109 = arith.mulf %3, %108 : vector<1x8xf32>
    %110 = arith.mulf %98, %109 : vector<1x8xf32>
    %111 = arith.subf %4, %110 : vector<1x8xf32>
    %112 = vector.broadcast %109 : vector<1x8xf32> to vector<512x8xf32>
    %113 = arith.mulf %94, %112 : vector<512x8xf32>
    %114 = vector.broadcast %111 : vector<1x8xf32> to vector<512x8xf32>
    %115 = arith.addf %113, %114 : vector<512x8xf32>
    %cst_101 = arith.constant 0.000000e+00 : f32
    %116 = vector.broadcast %cst_101 : f32 to vector<512x8xf32>
    %117 = arith.cmpf oge, %115, %116 : vector<512x8xf32>
    %118 = vector.broadcast %5 : vector<1x8xf32> to vector<512x8xf32>
    %119 = arith.mulf %118, %115 : vector<512x8xf32>
    %120 = arith.select %117, %115, %119 : vector<512x8xi1>, vector<512x8xf32>
    %cst_102 = arith.constant 0.000000e+00 : f32
    %121 = vector.broadcast %cst_102 : f32 to vector<2x1x18x8xf32>
    %c0_103 = arith.constant 0 : index
    %c0_104 = arith.constant 0 : index
    %c0_105 = arith.constant 0 : index
    %c0_106 = arith.constant 0 : index
    %122 = vector.load %arg8[%c0_103, %c0_104, %c0_105, %c0_106] : memref<2x18x18x8xf32, #tpu.memory_space<vmem>>, vector<2x1x18x8xf32>
    tpu.vector_store %arg8[%c0_103, %c0_104, %c0_105, %c0_106], %121 {strides = array<i32>} : memref<2x18x18x8xf32, #tpu.memory_space<vmem>>, vector<2x1x18x8xf32>,
    %cst_107 = arith.constant 0.000000e+00 : f32
    %123 = vector.broadcast %cst_107 : f32 to vector<2x1x18x8xf32>
    %c0_108 = arith.constant 0 : index
    %c17_109 = arith.constant 17 : index
    %c0_110 = arith.constant 0 : index
    %c0_111 = arith.constant 0 : index
    %124 = vector.load %arg8[%c0_108, %c17_109, %c0_110, %c0_111] : memref<2x18x18x8xf32, #tpu.memory_space<vmem>>, vector<2x1x18x8xf32>
    tpu.vector_store %arg8[%c0_108, %c17_109, %c0_110, %c0_111], %123 {strides = array<i32>} : memref<2x18x18x8xf32, #tpu.memory_space<vmem>>, vector<2x1x18x8xf32>,
    %cst_112 = arith.constant 0.000000e+00 : f32
    %125 = vector.broadcast %cst_112 : f32 to vector<2x18x1x8xf32>
    %c0_113 = arith.constant 0 : index
    %c0_114 = arith.constant 0 : index
    %c0_115 = arith.constant 0 : index
    %c0_116 = arith.constant 0 : index
    %126 = vector.load %arg8[%c0_113, %c0_114, %c0_115, %c0_116] : memref<2x18x18x8xf32, #tpu.memory_space<vmem>>, vector<2x18x1x8xf32>
    tpu.vector_store %arg8[%c0_113, %c0_114, %c0_115, %c0_116], %125 {strides = array<i32>} : memref<2x18x18x8xf32, #tpu.memory_space<vmem>>, vector<2x18x1x8xf32>,
    %cst_117 = arith.constant 0.000000e+00 : f32
    %127 = vector.broadcast %cst_117 : f32 to vector<2x18x1x8xf32>
    %c0_118 = arith.constant 0 : index
    %c0_119 = arith.constant 0 : index
    %c17_120 = arith.constant 17 : index
    %c0_121 = arith.constant 0 : index
    %128 = vector.load %arg8[%c0_118, %c0_119, %c17_120, %c0_121] : memref<2x18x18x8xf32, #tpu.memory_space<vmem>>, vector<2x18x1x8xf32>
    tpu.vector_store %arg8[%c0_118, %c0_119, %c17_120, %c0_121], %127 {strides = array<i32>} : memref<2x18x18x8xf32, #tpu.memory_space<vmem>>, vector<2x18x1x8xf32>,
    %129 = vector.shape_cast %120 : vector<512x8xf32> to vector<2x16x16x8xf32>
    %c0_122 = arith.constant 0 : index
    %c1_123 = arith.constant 1 : index
    %c1_124 = arith.constant 1 : index
    %c0_125 = arith.constant 0 : index
    %130 = vector.load %arg8[%c0_122, %c1_123, %c1_124, %c0_125] : memref<2x18x18x8xf32, #tpu.memory_space<vmem>>, vector<2x16x16x8xf32>
    tpu.vector_store %arg8[%c0_122, %c1_123, %c1_124, %c0_125], %129 {strides = array<i32>} : memref<2x18x18x8xf32, #tpu.memory_space<vmem>>, vector<2x16x16x8xf32>,
    %c0_126 = arith.constant 0 : index
    %c0_127 = arith.constant 0 : index
    %c0_128 = arith.constant 0 : index
    %c0_129 = arith.constant 0 : index
    %131 = tpu.strided_load %arg8[%c0_126, %c0_127, %c0_128, %c0_129] {strides = array<i32: 1, 2, 2, 1>} : memref<2x18x18x8xf32, #tpu.memory_space<vmem>>, vector<2x8x8x8xf32>
    %132 = vector.shape_cast %131 : vector<2x8x8x8xf32> to vector<128x8xf32>
    %c0_130 = arith.constant 0 : index
    %c0_131 = arith.constant 0 : index
    %c0_132 = arith.constant 0 : index
    %133 = vector.load %arg4[%c0_130, %c0_131, %c0_132] : memref<9x8x8xf32, #tpu.memory_space<vmem>>, vector<1x8x8xf32>
    %134 = vector.shape_cast %133 : vector<1x8x8xf32> to vector<8x8xf32>
    %cst_133 = arith.constant dense<0.000000e+00> : vector<128x8xf32>
    %135 = tpu.matmul %132, %134, %cst_133 {dimension_numbers = #tpu.dot_dimension_numbers<[1], [0], [0], [1], [0, 0, 1, 1], [], []>} : vector<128x8xf32>, vector<8x8xf32>, vector<128x8xf32> -> vector<128x8xf32>
    %c0_134 = arith.constant 0 : index
    %c0_135 = arith.constant 0 : index
    %c1_136 = arith.constant 1 : index
    %c0_137 = arith.constant 0 : index
    %136 = tpu.strided_load %arg8[%c0_134, %c0_135, %c1_136, %c0_137] {strides = array<i32: 1, 2, 2, 1>} : memref<2x18x18x8xf32, #tpu.memory_space<vmem>>, vector<2x8x8x8xf32>
    %137 = vector.shape_cast %136 : vector<2x8x8x8xf32> to vector<128x8xf32>
    %c1_138 = arith.constant 1 : index
    %c0_139 = arith.constant 0 : index
    %c0_140 = arith.constant 0 : index
    %138 = vector.load %arg4[%c1_138, %c0_139, %c0_140] : memref<9x8x8xf32, #tpu.memory_space<vmem>>, vector<1x8x8xf32>
    %139 = vector.shape_cast %138 : vector<1x8x8xf32> to vector<8x8xf32>
    %cst_141 = arith.constant dense<0.000000e+00> : vector<128x8xf32>
    %140 = tpu.matmul %137, %139, %cst_141 {dimension_numbers = #tpu.dot_dimension_numbers<[1], [0], [0], [1], [0, 0, 1, 1], [], []>} : vector<128x8xf32>, vector<8x8xf32>, vector<128x8xf32> -> vector<128x8xf32>
    %141 = arith.addf %135, %140 : vector<128x8xf32>
    %c0_142 = arith.constant 0 : index
    %c0_143 = arith.constant 0 : index
    %c2_144 = arith.constant 2 : index
    %c0_145 = arith.constant 0 : index
    %142 = tpu.strided_load %arg8[%c0_142, %c0_143, %c2_144, %c0_145] {strides = array<i32: 1, 2, 2, 1>} : memref<2x18x18x8xf32, #tpu.memory_space<vmem>>, vector<2x8x8x8xf32>
    %143 = vector.shape_cast %142 : vector<2x8x8x8xf32> to vector<128x8xf32>
    %c2_146 = arith.constant 2 : index
    %c0_147 = arith.constant 0 : index
    %c0_148 = arith.constant 0 : index
    %144 = vector.load %arg4[%c2_146, %c0_147, %c0_148] : memref<9x8x8xf32, #tpu.memory_space<vmem>>, vector<1x8x8xf32>
    %145 = vector.shape_cast %144 : vector<1x8x8xf32> to vector<8x8xf32>
    %cst_149 = arith.constant dense<0.000000e+00> : vector<128x8xf32>
    %146 = tpu.matmul %143, %145, %cst_149 {dimension_numbers = #tpu.dot_dimension_numbers<[1], [0], [0], [1], [0, 0, 1, 1], [], []>} : vector<128x8xf32>, vector<8x8xf32>, vector<128x8xf32> -> vector<128x8xf32>
    %147 = arith.addf %141, %146 : vector<128x8xf32>
    %c0_150 = arith.constant 0 : index
    %c1_151 = arith.constant 1 : index
    %c0_152 = arith.constant 0 : index
    %c0_153 = arith.constant 0 : index
    %148 = tpu.strided_load %arg8[%c0_150, %c1_151, %c0_152, %c0_153] {strides = array<i32: 1, 2, 2, 1>} : memref<2x18x18x8xf32, #tpu.memory_space<vmem>>, vector<2x8x8x8xf32>
    %149 = vector.shape_cast %148 : vector<2x8x8x8xf32> to vector<128x8xf32>
    %c3_154 = arith.constant 3 : index
    %c0_155 = arith.constant 0 : index
    %c0_156 = arith.constant 0 : index
    %150 = vector.load %arg4[%c3_154, %c0_155, %c0_156] : memref<9x8x8xf32, #tpu.memory_space<vmem>>, vector<1x8x8xf32>
    %151 = vector.shape_cast %150 : vector<1x8x8xf32> to vector<8x8xf32>
    %cst_157 = arith.constant dense<0.000000e+00> : vector<128x8xf32>
    %152 = tpu.matmul %149, %151, %cst_157 {dimension_numbers = #tpu.dot_dimension_numbers<[1], [0], [0], [1], [0, 0, 1, 1], [], []>} : vector<128x8xf32>, vector<8x8xf32>, vector<128x8xf32> -> vector<128x8xf32>
    %153 = arith.addf %147, %152 : vector<128x8xf32>
    %c0_158 = arith.constant 0 : index
    %c1_159 = arith.constant 1 : index
    %c1_160 = arith.constant 1 : index
    %c0_161 = arith.constant 0 : index
    %154 = tpu.strided_load %arg8[%c0_158, %c1_159, %c1_160, %c0_161] {strides = array<i32: 1, 2, 2, 1>} : memref<2x18x18x8xf32, #tpu.memory_space<vmem>>, vector<2x8x8x8xf32>
    %155 = vector.shape_cast %154 : vector<2x8x8x8xf32> to vector<128x8xf32>
    %c4_162 = arith.constant 4 : index
    %c0_163 = arith.constant 0 : index
    %c0_164 = arith.constant 0 : index
    %156 = vector.load %arg4[%c4_162, %c0_163, %c0_164] : memref<9x8x8xf32, #tpu.memory_space<vmem>>, vector<1x8x8xf32>
    %157 = vector.shape_cast %156 : vector<1x8x8xf32> to vector<8x8xf32>
    %cst_165 = arith.constant dense<0.000000e+00> : vector<128x8xf32>
    %158 = tpu.matmul %155, %157, %cst_165 {dimension_numbers = #tpu.dot_dimension_numbers<[1], [0], [0], [1], [0, 0, 1, 1], [], []>} : vector<128x8xf32>, vector<8x8xf32>, vector<128x8xf32> -> vector<128x8xf32>
    %159 = arith.addf %153, %158 : vector<128x8xf32>
    %c0_166 = arith.constant 0 : index
    %c1_167 = arith.constant 1 : index
    %c2_168 = arith.constant 2 : index
    %c0_169 = arith.constant 0 : index
    %160 = tpu.strided_load %arg8[%c0_166, %c1_167, %c2_168, %c0_169] {strides = array<i32: 1, 2, 2, 1>} : memref<2x18x18x8xf32, #tpu.memory_space<vmem>>, vector<2x8x8x8xf32>
    %161 = vector.shape_cast %160 : vector<2x8x8x8xf32> to vector<128x8xf32>
    %c5_170 = arith.constant 5 : index
    %c0_171 = arith.constant 0 : index
    %c0_172 = arith.constant 0 : index
    %162 = vector.load %arg4[%c5_170, %c0_171, %c0_172] : memref<9x8x8xf32, #tpu.memory_space<vmem>>, vector<1x8x8xf32>
    %163 = vector.shape_cast %162 : vector<1x8x8xf32> to vector<8x8xf32>
    %cst_173 = arith.constant dense<0.000000e+00> : vector<128x8xf32>
    %164 = tpu.matmul %161, %163, %cst_173 {dimension_numbers = #tpu.dot_dimension_numbers<[1], [0], [0], [1], [0, 0, 1, 1], [], []>} : vector<128x8xf32>, vector<8x8xf32>, vector<128x8xf32> -> vector<128x8xf32>
    %165 = arith.addf %159, %164 : vector<128x8xf32>
    %c0_174 = arith.constant 0 : index
    %c2_175 = arith.constant 2 : index
    %c0_176 = arith.constant 0 : index
    %c0_177 = arith.constant 0 : index
    %166 = tpu.strided_load %arg8[%c0_174, %c2_175, %c0_176, %c0_177] {strides = array<i32: 1, 2, 2, 1>} : memref<2x18x18x8xf32, #tpu.memory_space<vmem>>, vector<2x8x8x8xf32>
    %167 = vector.shape_cast %166 : vector<2x8x8x8xf32> to vector<128x8xf32>
    %c6_178 = arith.constant 6 : index
    %c0_179 = arith.constant 0 : index
    %c0_180 = arith.constant 0 : index
    %168 = vector.load %arg4[%c6_178, %c0_179, %c0_180] : memref<9x8x8xf32, #tpu.memory_space<vmem>>, vector<1x8x8xf32>
    %169 = vector.shape_cast %168 : vector<1x8x8xf32> to vector<8x8xf32>
    %cst_181 = arith.constant dense<0.000000e+00> : vector<128x8xf32>
    %170 = tpu.matmul %167, %169, %cst_181 {dimension_numbers = #tpu.dot_dimension_numbers<[1], [0], [0], [1], [0, 0, 1, 1], [], []>} : vector<128x8xf32>, vector<8x8xf32>, vector<128x8xf32> -> vector<128x8xf32>
    %171 = arith.addf %165, %170 : vector<128x8xf32>
    %c0_182 = arith.constant 0 : index
    %c2_183 = arith.constant 2 : index
    %c1_184 = arith.constant 1 : index
    %c0_185 = arith.constant 0 : index
    %172 = tpu.strided_load %arg8[%c0_182, %c2_183, %c1_184, %c0_185] {strides = array<i32: 1, 2, 2, 1>} : memref<2x18x18x8xf32, #tpu.memory_space<vmem>>, vector<2x8x8x8xf32>
    %173 = vector.shape_cast %172 : vector<2x8x8x8xf32> to vector<128x8xf32>
    %c7_186 = arith.constant 7 : index
    %c0_187 = arith.constant 0 : index
    %c0_188 = arith.constant 0 : index
    %174 = vector.load %arg4[%c7_186, %c0_187, %c0_188] : memref<9x8x8xf32, #tpu.memory_space<vmem>>, vector<1x8x8xf32>
    %175 = vector.shape_cast %174 : vector<1x8x8xf32> to vector<8x8xf32>
    %cst_189 = arith.constant dense<0.000000e+00> : vector<128x8xf32>
    %176 = tpu.matmul %173, %175, %cst_189 {dimension_numbers = #tpu.dot_dimension_numbers<[1], [0], [0], [1], [0, 0, 1, 1], [], []>} : vector<128x8xf32>, vector<8x8xf32>, vector<128x8xf32> -> vector<128x8xf32>
    %177 = arith.addf %171, %176 : vector<128x8xf32>
    %c0_190 = arith.constant 0 : index
    %c2_191 = arith.constant 2 : index
    %c2_192 = arith.constant 2 : index
    %c0_193 = arith.constant 0 : index
    %178 = tpu.strided_load %arg8[%c0_190, %c2_191, %c2_192, %c0_193] {strides = array<i32: 1, 2, 2, 1>} : memref<2x18x18x8xf32, #tpu.memory_space<vmem>>, vector<2x8x8x8xf32>
    %179 = vector.shape_cast %178 : vector<2x8x8x8xf32> to vector<128x8xf32>
    %c8_194 = arith.constant 8 : index
    %c0_195 = arith.constant 0 : index
    %c0_196 = arith.constant 0 : index
    %180 = vector.load %arg4[%c8_194, %c0_195, %c0_196] : memref<9x8x8xf32, #tpu.memory_space<vmem>>, vector<1x8x8xf32>
    %181 = vector.shape_cast %180 : vector<1x8x8xf32> to vector<8x8xf32>
    %cst_197 = arith.constant dense<0.000000e+00> : vector<128x8xf32>
    %182 = tpu.matmul %179, %181, %cst_197 {dimension_numbers = #tpu.dot_dimension_numbers<[1], [0], [0], [1], [0, 0, 1, 1], [], []>} : vector<128x8xf32>, vector<8x8xf32>, vector<128x8xf32> -> vector<128x8xf32>
    %183 = arith.addf %177, %182 : vector<128x8xf32>
    %cst_198 = arith.constant dense<0.000000e+00> : vector<8xf32>
    %184 = vector.multi_reduction <add>, %183, %cst_198 [0] : vector<128x8xf32> to vector<8xf32>
    %185 = vector.shape_cast %184 : vector<8xf32> to vector<1x8xf32>
    %cst_199 = arith.constant 7.812500e-03 : f32
    %186 = vector.broadcast %cst_199 : f32 to vector<1x8xf32>
    %187 = arith.mulf %185, %186 : vector<1x8xf32>
    %188 = vector.broadcast %187 : vector<1x8xf32> to vector<128x8xf32>
    %189 = arith.subf %183, %188 : vector<128x8xf32>
    %190 = arith.mulf %189, %189 : vector<128x8xf32>
    %cst_200 = arith.constant dense<0.000000e+00> : vector<8xf32>
    %191 = vector.multi_reduction <add>, %190, %cst_200 [0] : vector<128x8xf32> to vector<8xf32>
    %192 = vector.shape_cast %191 : vector<8xf32> to vector<1x8xf32>
    %cst_201 = arith.constant 7.812500e-03 : f32
    %193 = vector.broadcast %cst_201 : f32 to vector<1x8xf32>
    %194 = arith.mulf %192, %193 : vector<1x8xf32>
    %cst_202 = arith.constant 9.99999974E-6 : f32
    %195 = vector.broadcast %cst_202 : f32 to vector<1x8xf32>
    %196 = arith.addf %194, %195 : vector<1x8xf32>
    %197 = math.rsqrt %196 : vector<1x8xf32>
    %198 = arith.mulf %6, %197 : vector<1x8xf32>
    %199 = arith.mulf %187, %198 : vector<1x8xf32>
    %200 = arith.subf %7, %199 : vector<1x8xf32>
    %201 = vector.broadcast %198 : vector<1x8xf32> to vector<128x8xf32>
    %202 = arith.mulf %183, %201 : vector<128x8xf32>
    %203 = vector.broadcast %200 : vector<1x8xf32> to vector<128x8xf32>
    %204 = arith.addf %202, %203 : vector<128x8xf32>
    %205 = vector.extract_strided_slice %0 {offsets = [7, 0], sizes = [1, 8], strides = [1, 1]} : vector<9x8xf32> to vector<1x8xf32>
    %206 = vector.extract_strided_slice %0 {offsets = [8, 0], sizes = [1, 8], strides = [1, 1]} : vector<9x8xf32> to vector<1x8xf32>
    %c0_203 = arith.constant 0 : index
    %c0_204 = arith.constant 0 : index
    %c0_205 = arith.constant 0 : index
    %c0_206 = arith.constant 0 : index
    %207 = tpu.strided_load %arg1[%c0_203, %c0_204, %c0_205, %c0_206] {strides = array<i32: 1, 2, 2, 1>} : memref<2x16x16x4xf32, #tpu.memory_space<vmem>>, vector<2x8x8x4xf32>
    %208 = vector.shape_cast %207 : vector<2x8x8x4xf32> to vector<128x4xf32>
    %c0_207 = arith.constant 0 : index
    %c0_208 = arith.constant 0 : index
    %209 = vector.load %arg5[%c0_207, %c0_208] : memref<4x8xf32, #tpu.memory_space<vmem>>, vector<4x8xf32>
    %cst_209 = arith.constant dense<0.000000e+00> : vector<128x8xf32>
    %210 = tpu.matmul %208, %209, %cst_209 {dimension_numbers = #tpu.dot_dimension_numbers<[1], [0], [0], [1], [0, 0, 1, 1], [], []>} : vector<128x4xf32>, vector<4x8xf32>, vector<128x8xf32> -> vector<128x8xf32>
    %cst_210 = arith.constant dense<0.000000e+00> : vector<8xf32>
    %211 = vector.multi_reduction <add>, %210, %cst_210 [0] : vector<128x8xf32> to vector<8xf32>
    %212 = vector.shape_cast %211 : vector<8xf32> to vector<1x8xf32>
    %cst_211 = arith.constant 7.812500e-03 : f32
    %213 = vector.broadcast %cst_211 : f32 to vector<1x8xf32>
    %214 = arith.mulf %212, %213 : vector<1x8xf32>
    %215 = vector.broadcast %214 : vector<1x8xf32> to vector<128x8xf32>
    %216 = arith.subf %210, %215 : vector<128x8xf32>
    %217 = arith.mulf %216, %216 : vector<128x8xf32>
    %cst_212 = arith.constant dense<0.000000e+00> : vector<8xf32>
    %218 = vector.multi_reduction <add>, %217, %cst_212 [0] : vector<128x8xf32> to vector<8xf32>
    %219 = vector.shape_cast %218 : vector<8xf32> to vector<1x8xf32>
    %cst_213 = arith.constant 7.812500e-03 : f32
    %220 = vector.broadcast %cst_213 : f32 to vector<1x8xf32>
    %221 = arith.mulf %219, %220 : vector<1x8xf32>
    %cst_214 = arith.constant 9.99999974E-6 : f32
    %222 = vector.broadcast %cst_214 : f32 to vector<1x8xf32>
    %223 = arith.addf %221, %222 : vector<1x8xf32>
    %224 = math.rsqrt %223 : vector<1x8xf32>
    %225 = arith.mulf %205, %224 : vector<1x8xf32>
    %226 = arith.mulf %214, %225 : vector<1x8xf32>
    %227 = arith.subf %206, %226 : vector<1x8xf32>
    %228 = vector.broadcast %225 : vector<1x8xf32> to vector<128x8xf32>
    %229 = arith.mulf %210, %228 : vector<128x8xf32>
    %230 = vector.broadcast %227 : vector<1x8xf32> to vector<128x8xf32>
    %231 = arith.addf %229, %230 : vector<128x8xf32>
    %232 = arith.addf %204, %231 : vector<128x8xf32>
    %233 = vector.shape_cast %232 : vector<128x8xf32> to vector<2x8x8x8xf32>
    %c0_215 = arith.constant 0 : index
    %c0_216 = arith.constant 0 : index
    %c0_217 = arith.constant 0 : index
    %c0_218 = arith.constant 0 : index
    %234 = vector.load %arg6[%c0_215, %c0_216, %c0_217, %c0_218] : memref<2x8x8x8xf32, #tpu.memory_space<vmem>>, vector<2x8x8x8xf32>
    tpu.vector_store %arg6[%c0_215, %c0_216, %c0_217, %c0_218], %233 {strides = array<i32>} : memref<2x8x8x8xf32, #tpu.memory_space<vmem>>, vector<2x8x8x8xf32>,
    return
  }
  func.func @transform_0(%arg0: i32) -> (i32, i32, i32, i32) {
    %c0_i32 = arith.constant 0 : i32
    %c0_i32_0 = arith.constant 0 : i32
    %c0_i32_1 = arith.constant 0 : i32
    %c0_i32_2 = arith.constant 0 : i32
    %c0_i32_3 = arith.constant 0 : i32
    return %c0_i32, %c0_i32_0, %c0_i32_1, %c0_i32_2 : i32, i32, i32, i32
  }
  func.func @transform_1(%arg0: i32) -> (i32, i32) {
    %c0_i32 = arith.constant 0 : i32
    %c0_i32_0 = arith.constant 0 : i32
    %c0_i32_1 = arith.constant 0 : i32
    return %c0_i32, %c0_i32_0 : i32, i32
  }
  func.func @transform_2(%arg0: i32) -> (i32, i32, i32) {
    %c0_i32 = arith.constant 0 : i32
    %c0_i32_0 = arith.constant 0 : i32
    %c0_i32_1 = arith.constant 0 : i32
    %c0_i32_2 = arith.constant 0 : i32
    return %c0_i32, %c0_i32_0, %c0_i32_1 : i32, i32, i32
  }
  func.func @transform_3(%arg0: i32) -> (i32, i32, i32) {
    %c0_i32 = arith.constant 0 : i32
    %c0_i32_0 = arith.constant 0 : i32
    %c0_i32_1 = arith.constant 0 : i32
    %c0_i32_2 = arith.constant 0 : i32
    return %c0_i32, %c0_i32_0, %c0_i32_1 : i32, i32, i32
  }
  func.func @transform_4(%arg0: i32) -> (i32, i32) {
    %c0_i32 = arith.constant 0 : i32
    %c0_i32_0 = arith.constant 0 : i32
    %c0_i32_1 = arith.constant 0 : i32
    return %c0_i32, %c0_i32_0 : i32, i32
  }
  func.func @transform_5(%arg0: i32) -> (i32, i32, i32, i32) {
    %c0_i32 = arith.constant 0 : i32
    %c0_i32_0 = arith.constant 0 : i32
    %c0_i32_1 = arith.constant 0 : i32
    %c0_i32_2 = arith.constant 0 : i32
    %c0_i32_3 = arith.constant 0 : i32
    return %c0_i32, %c0_i32_0, %c0_i32_1, %c0_i32_2 : i32, i32, i32, i32
  }
}

</mosaic_0001>

<llo_original>
// kernel: tpu_custom_call.1
$region0: #{tpu_custom_call.1}
  #allocation0 [shape = 'u32[]', space=smem, size = 0x4, offset = 0x4, fixed_abs, tag = 'smem constant byte address 0x4 - core index']
  #allocation1 [shape = 'u32[144,128]{1,0:T(1,128)}', space=vmem, size = 0x12000, scoped, tag = 'internal scratch']
  #allocation2 [shape = 'f32[2,18,18,4]{3,2,1,0:T(8,128)}', space=vmem, size = 0x6c000, scoped, tag = 'scratch operand']
  #allocation3 [shape = 'f32[2,18,18,8]{3,2,1,0:T(8,128)}', space=vmem, size = 0x6c000, scoped, tag = 'scratch operand']
  %s0 = inlined_call_operand.vmem [shape: f32[2,16,16,4], index: 0, kind: input, shape index: {}]
  %s1 = inlined_call_operand.vmem [shape: f32[9,8], index: 1, kind: input, shape index: {}]
  %s2 = inlined_call_operand.vmem [shape: f32[9,4,8], index: 2, kind: input, shape index: {}]
  %s3 = inlined_call_operand.vmem [shape: f32[9,8,8], index: 3, kind: input, shape index: {}]
  %s4 = inlined_call_operand.vmem [shape: f32[4,8], index: 4, kind: input, shape index: {}]
  %s5 = inlined_call_operand.hbm [shape: f32[2,8,8,8], index: 5, kind: output, shape index: {}]
  %s6 = sld [smem:[#allocation0]]
  $region30: #{tpu_custom_call.1} parent=0
    _
  %s8 = ssub.s32 1, %s6
  %s9 = scalar_select 0, %s8, %s6
  $region1: #{tpu_custom_call.1} parent=0
    #allocation4 [shape = 'u8[65536]{0}', space=vmem, size = 0x10000, scoped, tag = 'output window, operand 0, single buffered']
    #allocation5 [shape = 's32[1]{0}', space=sflag, size = 0x4, scoped, tag = 'scoped memory for tpu_custom_call.1']
    %10 = vsyncpa [#allocation5], 0
    // Predicated region
    $region2: #{tpu_custom_call.1} parent=1 // pred_check
      _
    $region3: #{tpu_custom_call.1} parent=1 // pred_check_branch
      %12 = sbr.rel (0) target = $region5
    $region4: #{tpu_custom_call.1} parent=1 // pred_region
      _
    $region5: #{tpu_custom_call.1} parent=1 // pred_fallthru
      _
    // Predicated region
    $region6: #{tpu_custom_call.1} parent=1 // pred_check
      _
    $region7: #{tpu_custom_call.1} parent=1 // pred_check_branch
      %14 = sbr.rel (0) target = $region9
    $region8: #{tpu_custom_call.1} parent=1 // pred_region
      _
    $region9: #{tpu_custom_call.1} parent=1 // pred_fallthru
      _
    // Predicated region
    $region10: #{tpu_custom_call.1} parent=1 // pred_check
      _
    $region11: #{tpu_custom_call.1} parent=1 // pred_check_branch
      %16 = sbr.rel (0) target = $region13
    $region12: #{tpu_custom_call.1} parent=1 // pred_region
      _
    $region13: #{tpu_custom_call.1} parent=1 // pred_fallthru
      _
    // Predicated region
    $region14: #{tpu_custom_call.1} parent=1 // pred_check
      _
    $region15: #{tpu_custom_call.1} parent=1 // pred_check_branch
      %18 = sbr.rel (0) target = $region17
    $region16: #{tpu_custom_call.1} parent=1 // pred_region
      _
    $region17: #{tpu_custom_call.1} parent=1 // pred_fallthru
      _
    // Predicated region
    $region18: #{tpu_custom_call.1} parent=1 // pred_check
      _
    $region19: #{tpu_custom_call.1} parent=1 // pred_check_branch
      %20 = sbr.rel (0) target = $region21
    $region20: #{tpu_custom_call.1} parent=1 // pred_region
      _
    $region21: #{tpu_custom_call.1} parent=1 // pred_fallthru
      _
    %v21 = vld [vmem:[%s1] sm:$0xff]
    %v22 = vld [vmem:[%s1 + $0x8] sm:$0x1]
    %v23 = vld [vmem:[%s0] sm:$0xff]
    %v24 = vld [vmem:[%s0 + $0x8] sm:$0xff]
    %v25 = vld [vmem:[%s0 + $0x10] sm:$0xff]
    %v26 = vld [vmem:[%s0 + $0x18] sm:$0xff]
    %v27 = vld [vmem:[%s0 + $0x20] sm:$0xff]
    %v28 = vld [vmem:[%s0 + $0x28] sm:$0xff]
    %v29 = vld [vmem:[%s0 + $0x30] sm:$0xff]
    %v30 = vld [vmem:[%s0 + $0x38] sm:$0xff]
    %v31 = vld [vmem:[%s0 + $0x40] sm:$0xff]
    %v32 = vld [vmem:[%s0 + $0x48] sm:$0xff]
    %v33 = vld [vmem:[%s0 + $0x50] sm:$0xff]
    %v34 = vld [vmem:[%s0 + $0x58] sm:$0xff]
    %v35 = vld [vmem:[%s0 + $0x60] sm:$0xff]
    %v36 = vld [vmem:[%s0 + $0x68] sm:$0xff]
    %v37 = vld [vmem:[%s0 + $0x70] sm:$0xff]
    %v38 = vld [vmem:[%s0 + $0x78] sm:$0xff]
    %v39 = vld [vmem:[%s0 + $0x80] sm:$0xff]
    %v40 = vld [vmem:[%s0 + $0x88] sm:$0xff]
    %v41 = vld [vmem:[%s0 + $0x90] sm:$0xff]
    %v42 = vld [vmem:[%s0 + $0x98] sm:$0xff]
    %v43 = vld [vmem:[%s0 + $0xa0] sm:$0xff]
    %v44 = vld [vmem:[%s0 + $0xa8] sm:$0xff]
    %v45 = vld [vmem:[%s0 + $0xb0] sm:$0xff]
    %v46 = vld [vmem:[%s0 + $0xb8] sm:$0xff]
    %v47 = vld [vmem:[%s0 + $0xc0] sm:$0xff]
    %v48 = vld [vmem:[%s0 + $0xc8] sm:$0xff]
    %v49 = vld [vmem:[%s0 + $0xd0] sm:$0xff]
    %v50 = vld [vmem:[%s0 + $0xd8] sm:$0xff]
    %v51 = vld [vmem:[%s0 + $0xe0] sm:$0xff]
    %v52 = vld [vmem:[%s0 + $0xe8] sm:$0xff]
    %v53 = vld [vmem:[%s0 + $0xf0] sm:$0xff]
    %v54 = vld [vmem:[%s0 + $0xf8] sm:$0xff]
    %v55 = vld [vmem:[%s0 + $0x100] sm:$0xff]
    %v56 = vld [vmem:[%s0 + $0x108] sm:$0xff]
    %v57 = vld [vmem:[%s0 + $0x110] sm:$0xff]
    %v58 = vld [vmem:[%s0 + $0x118] sm:$0xff]
    %v59 = vld [vmem:[%s0 + $0x120] sm:$0xff]
    %v60 = vld [vmem:[%s0 + $0x128] sm:$0xff]
    %v61 = vld [vmem:[%s0 + $0x130] sm:$0xff]
    %v62 = vld [vmem:[%s0 + $0x138] sm:$0xff]
    %v63 = vld [vmem:[%s0 + $0x140] sm:$0xff]
    %v64 = vld [vmem:[%s0 + $0x148] sm:$0xff]
    %v65 = vld [vmem:[%s0 + $0x150] sm:$0xff]
    %v66 = vld [vmem:[%s0 + $0x158] sm:$0xff]
    %v67 = vld [vmem:[%s0 + $0x160] sm:$0xff]
    %v68 = vld [vmem:[%s0 + $0x168] sm:$0xff]
    %v69 = vld [vmem:[%s0 + $0x170] sm:$0xff]
    %v70 = vld [vmem:[%s0 + $0x178] sm:$0xff]
    %v71 = vld [vmem:[%s0 + $0x180] sm:$0xff]
    %v72 = vld [vmem:[%s0 + $0x188] sm:$0xff]
    %v73 = vld [vmem:[%s0 + $0x190] sm:$0xff]
    %v74 = vld [vmem:[%s0 + $0x198] sm:$0xff]
    %v75 = vld [vmem:[%s0 + $0x1a0] sm:$0xff]
    %v76 = vld [vmem:[%s0 + $0x1a8] sm:$0xff]
    %v77 = vld [vmem:[%s0 + $0x1b0] sm:$0xff]
    %v78 = vld [vmem:[%s0 + $0x1b8] sm:$0xff]
    %v79 = vld [vmem:[%s0 + $0x1c0] sm:$0xff]
    %v80 = vld [vmem:[%s0 + $0x1c8] sm:$0xff]
    %v81 = vld [vmem:[%s0 + $0x1d0] sm:$0xff]
    %v82 = vld [vmem:[%s0 + $0x1d8] sm:$0xff]
    %v83 = vld [vmem:[%s0 + $0x1e0] sm:$0xff]
    %v84 = vld [vmem:[%s0 + $0x1e8] sm:$0xff]
    %v85 = vld [vmem:[%s0 + $0x1f0] sm:$0xff]
    %v86 = vld [vmem:[%s0 + $0x1f8] sm:$0xff]
    %vm87 = vcmask 31744
    %v88 = vsel %vm87, %v23, 0.0
    %v89 = vsel %vm87, %v24, 0.0
    %v90 = vadd.f32 %v88, %v89
    %v91 = vsel %vm87, %v25, 0.0
    %v92 = vadd.f32 %v90, %v91
    %v93 = vsel %vm87, %v26, 0.0
    %v94 = vadd.f32 %v92, %v93
    %v95 = vsel %vm87, %v27, 0.0
    %v96 = vadd.f32 %v94, %v95
    %v97 = vsel %vm87, %v28, 0.0
    %v98 = vadd.f32 %v96, %v97
    %v99 = vsel %vm87, %v29, 0.0
    %v100 = vadd.f32 %v98, %v99
    %v101 = vsel %vm87, %v30, 0.0
    %v102 = vadd.f32 %v100, %v101
    %v103 = vsel %vm87, %v31, 0.0
    %v104 = vadd.f32 %v102, %v103
    %v105 = vsel %vm87, %v32, 0.0
    %v106 = vadd.f32 %v104, %v105
    %v107 = vsel %vm87, %v33, 0.0
    %v108 = vadd.f32 %v106, %v107
    %v109 = vsel %vm87, %v34, 0.0
    %v110 = vadd.f32 %v108, %v109
    %v111 = vsel %vm87, %v35, 0.0
    %v112 = vadd.f32 %v110, %v111
    %v113 = vsel %vm87, %v36, 0.0
    %v114 = vadd.f32 %v112, %v113
    %v115 = vsel %vm87, %v37, 0.0
    %v116 = vadd.f32 %v114, %v115
    %v117 = vsel %vm87, %v38, 0.0
    %v118 = vadd.f32 %v116, %v117
    %v119 = vsel %vm87, %v39, 0.0
    %v120 = vadd.f32 %v118, %v119
    %v121 = vsel %vm87, %v40, 0.0
    %v122 = vadd.f32 %v120, %v121
    %v123 = vsel %vm87, %v41, 0.0
    %v124 = vadd.f32 %v122, %v123
    %v125 = vsel %vm87, %v42, 0.0
    %v126 = vadd.f32 %v124, %v125
    %v127 = vsel %vm87, %v43, 0.0
    %v128 = vadd.f32 %v126, %v127
    %v129 = vsel %vm87, %v44, 0.0
    %v130 = vadd.f32 %v128, %v129
    %v131 = vsel %vm87, %v45, 0.0
    %v132 = vadd.f32 %v130, %v131
    %v133 = vsel %vm87, %v46, 0.0
    %v134 = vadd.f32 %v132, %v133
    %v135 = vsel %vm87, %v47, 0.0
    %v136 = vadd.f32 %v134, %v135
    %v137 = vsel %vm87, %v48, 0.0
    %v138 = vadd.f32 %v136, %v137
    %v139 = vsel %vm87, %v49, 0.0
    %v140 = vadd.f32 %v138, %v139
    %v141 = vsel %vm87, %v50, 0.0
    %v142 = vadd.f32 %v140, %v141
    %v143 = vsel %vm87, %v51, 0.0
    %v144 = vadd.f32 %v142, %v143
    %v145 = vsel %vm87, %v52, 0.0
    %v146 = vadd.f32 %v144, %v145
    %v147 = vsel %vm87, %v53, 0.0
    %v148 = vadd.f32 %v146, %v147
    %v149 = vsel %vm87, %v54, 0.0
    %v150 = vadd.f32 %v148, %v149
    %v151 = vsel %vm87, %v55, 0.0
    %v152 = vadd.f32 %v150, %v151
    %v153 = vsel %vm87, %v56, 0.0
    %v154 = vadd.f32 %v152, %v153
    %v155 = vsel %vm87, %v57, 0.0
    %v156 = vadd.f32 %v154, %v155
    %v157 = vsel %vm87, %v58, 0.0
    %v158 = vadd.f32 %v156, %v157
    %v159 = vsel %vm87, %v59, 0.0
    %v160 = vadd.f32 %v158, %v159
    %v161 = vsel %vm87, %v60, 0.0
    %v162 = vadd.f32 %v160, %v161
    %v163 = vsel %vm87, %v61, 0.0
    %v164 = vadd.f32 %v162, %v163
    %v165 = vsel %vm87, %v62, 0.0
    %v166 = vadd.f32 %v164, %v165
    %v167 = vsel %vm87, %v63, 0.0
    %v168 = vadd.f32 %v166, %v167
    %v169 = vsel %vm87, %v64, 0.0
    %v170 = vadd.f32 %v168, %v169
    %v171 = vsel %vm87, %v65, 0.0
    %v172 = vadd.f32 %v170, %v171
    %v173 = vsel %vm87, %v66, 0.0
    %v174 = vadd.f32 %v172, %v173
    %v175 = vsel %vm87, %v67, 0.0
    %v176 = vadd.f32 %v174, %v175
    %v177 = vsel %vm87, %v68, 0.0
    %v178 = vadd.f32 %v176, %v177
    %v179 = vsel %vm87, %v69, 0.0
    %v180 = vadd.f32 %v178, %v179
    %v181 = vsel %vm87, %v70, 0.0
    %v182 = vadd.f32 %v180, %v181
    %v183 = vsel %vm87, %v71, 0.0
    %v184 = vadd.f32 %v182, %v183
    %v185 = vsel %vm87, %v72, 0.0
    %v186 = vadd.f32 %v184, %v185
    %v187 = vsel %vm87, %v73, 0.0
    %v188 = vadd.f32 %v186, %v187
    %v189 = vsel %vm87, %v74, 0.0
    %v190 = vadd.f32 %v188, %v189
    %v191 = vsel %vm87, %v75, 0.0
    %v192 = vadd.f32 %v190, %v191
    %v193 = vsel %vm87, %v76, 0.0
    %v194 = vadd.f32 %v192, %v193
    %v195 = vsel %vm87, %v77, 0.0
    %v196 = vadd.f32 %v194, %v195
    %v197 = vsel %vm87, %v78, 0.0
    %v198 = vadd.f32 %v196, %v197
    %v199 = vsel %vm87, %v79, 0.0
    %v200 = vadd.f32 %v198, %v199
    %v201 = vsel %vm87, %v80, 0.0
    %v202 = vadd.f32 %v200, %v201
    %v203 = vsel %vm87, %v81, 0.0
    %v204 = vadd.f32 %v202, %v203
    %v205 = vsel %vm87, %v82, 0.0
    %v206 = vadd.f32 %v204, %v205
    %v207 = vsel %vm87, %v83, 0.0
    %v208 = vadd.f32 %v206, %v207
    %v209 = vsel %vm87, %v84, 0.0
    %v210 = vadd.f32 %v208, %v209
    %v211 = vsel %vm87, %v85, 0.0
    %v212 = vadd.f32 %v210, %v211
    %v213 = vsel %vm87, %v86, 0.0
    %v214 = vadd.f32 %v212, %v213
    %v215 = vrot.slane %v214, 4
    %v216 = vadd.f32 %v214, %v215
    %v217 = vrot.slane %v216, 2
    %v218 = vadd.f32 %v216, %v217
    %v219 = vrot.slane %v218, 1
    %v220 = vadd.f32 %v218, %v219
    %v221 = vmul.f32 %v220, 0.001953125
    %v222 = vsub.f32 %v23, %v221
    %v223 = vsub.f32 %v24, %v221
    %v224 = vsub.f32 %v25, %v221
    %v225 = vsub.f32 %v26, %v221
    %v226 = vsub.f32 %v27, %v221
    %v227 = vsub.f32 %v28, %v221
    %v228 = vsub.f32 %v29, %v221
    %v229 = vsub.f32 %v30, %v221
    %v230 = vsub.f32 %v31, %v221
    %v231 = vsub.f32 %v32, %v221
    %v232 = vsub.f32 %v33, %v221
    %v233 = vsub.f32 %v34, %v221
    %v234 = vsub.f32 %v35, %v221
    %v235 = vsub.f32 %v36, %v221
    %v236 = vsub.f32 %v37, %v221
    %v237 = vsub.f32 %v38, %v221
    %v238 = vsub.f32 %v39, %v221
    %v239 = vsub.f32 %v40, %v221
    %v240 = vsub.f32 %v41, %v221
    %v241 = vsub.f32 %v42, %v221
    %v242 = vsub.f32 %v43, %v221
    %v243 = vsub.f32 %v44, %v221
    %v244 = vsub.f32 %v45, %v221
    %v245 = vsub.f32 %v46, %v221
    %v246 = vsub.f32 %v47, %v221
    %v247 = vsub.f32 %v48, %v221
    %v248 = vsub.f32 %v49, %v221
    %v249 = vsub.f32 %v50, %v221
    %v250 = vsub.f32 %v51, %v221
    %v251 = vsub.f32 %v52, %v221
    %v252 = vsub.f32 %v53, %v221
    %v253 = vsub.f32 %v54, %v221
    %v254 = vsub.f32 %v55, %v221
    %v255 = vsub.f32 %v56, %v221
    %v256 = vsub.f32 %v57, %v221
    %v257 = vsub.f32 %v58, %v221
    %v258 = vsub.f32 %v59, %v221
    %v259 = vsub.f32 %v60, %v221
    %v260 = vsub.f32 %v61, %v221
    %v261 = vsub.f32 %v62, %v221
    %v262 = vsub.f32 %v63, %v221
    %v263 = vsub.f32 %v64, %v221
    %v264 = vsub.f32 %v65, %v221
    %v265 = vsub.f32 %v66, %v221
    %v266 = vsub.f32 %v67, %v221
    %v267 = vsub.f32 %v68, %v221
    %v268 = vsub.f32 %v69, %v221
    %v269 = vsub.f32 %v70, %v221
    %v270 = vsub.f32 %v71, %v221
    %v271 = vsub.f32 %v72, %v221
    %v272 = vsub.f32 %v73, %v221
    %v273 = vsub.f32 %v74, %v221
    %v274 = vsub.f32 %v75, %v221
    %v275 = vsub.f32 %v76, %v221
    %v276 = vsub.f32 %v77, %v221
    %v277 = vsub.f32 %v78, %v221
    %v278 = vsub.f32 %v79, %v221
    %v279 = vsub.f32 %v80, %v221
    %v280 = vsub.f32 %v81, %v221
    %v281 = vsub.f32 %v82, %v221
    %v282 = vsub.f32 %v83, %v221
    %v283 = vsub.f32 %v84, %v221
    %v284 = vsub.f32 %v85, %v221
    %v285 = vsub.f32 %v86, %v221
    %v286 = vmul.f32 %v222, %v222
    %v287 = vmul.f32 %v223, %v223
    %v288 = vmul.f32 %v224, %v224
    %v289 = vmul.f32 %v225, %v225
    %v290 = vmul.f32 %v226, %v226
    %v291 = vmul.f32 %v227, %v227
    %v292 = vmul.f32 %v228, %v228
    %v293 = vmul.f32 %v229, %v229
    %v294 = vmul.f32 %v230, %v230
    %v295 = vmul.f32 %v231, %v231
    %v296 = vmul.f32 %v232, %v232
    %v297 = vmul.f32 %v233, %v233
    %v298 = vmul.f32 %v234, %v234
    %v299 = vmul.f32 %v235, %v235
    %v300 = vmul.f32 %v236, %v236
    %v301 = vmul.f32 %v237, %v237
    %v302 = vmul.f32 %v238, %v238
    %v303 = vmul.f32 %v239, %v239
    %v304 = vmul.f32 %v240, %v240
    %v305 = vmul.f32 %v241, %v241
    %v306 = vmul.f32 %v242, %v242
    %v307 = vmul.f32 %v243, %v243
    %v308 = vmul.f32 %v244, %v244
    %v309 = vmul.f32 %v245, %v245
    %v310 = vmul.f32 %v246, %v246
    %v311 = vmul.f32 %v247, %v247
    %v312 = vmul.f32 %v248, %v248
    %v313 = vmul.f32 %v249, %v249
    %v314 = vmul.f32 %v250, %v250
    %v315 = vmul.f32 %v251, %v251
    %v316 = vmul.f32 %v252, %v252
    %v317 = vmul.f32 %v253, %v253
    %v318 = vmul.f32 %v254, %v254
    %v319 = vmul.f32 %v255, %v255
    %v320 = vmul.f32 %v256, %v256
    %v321 = vmul.f32 %v257, %v257
    %v322 = vmul.f32 %v258, %v258
    %v323 = vmul.f32 %v259, %v259
    %v324 = vmul.f32 %v260, %v260
    %v325 = vmul.f32 %v261, %v261
    %v326 = vmul.f32 %v262, %v262
    %v327 = vmul.f32 %v263, %v263
    %v328 = vmul.f32 %v264, %v264
    %v329 = vmul.f32 %v265, %v265
    %v330 = vmul.f32 %v266, %v266
    %v331 = vmul.f32 %v267, %v267
    %v332 = vmul.f32 %v268, %v268
    %v333 = vmul.f32 %v269, %v269
    %v334 = vmul.f32 %v270, %v270
    %v335 = vmul.f32 %v271, %v271
    %v336 = vmul.f32 %v272, %v272
    %v337 = vmul.f32 %v273, %v273
    %v338 = vmul.f32 %v274, %v274
    %v339 = vmul.f32 %v275, %v275
    %v340 = vmul.f32 %v276, %v276
    %v341 = vmul.f32 %v277, %v277
    %v342 = vmul.f32 %v278, %v278
    %v343 = vmul.f32 %v279, %v279
    %v344 = vmul.f32 %v280, %v280
    %v345 = vmul.f32 %v281, %v281
    %v346 = vmul.f32 %v282, %v282
    %v347 = vmul.f32 %v283, %v283
    %v348 = vmul.f32 %v284, %v284
    %v349 = vmul.f32 %v285, %v285
    %v350 = vsel %vm87, %v286, 0.0
    %v351 = vsel %vm87, %v287, 0.0
    %v352 = vadd.f32 %v350, %v351
    %v353 = vsel %vm87, %v288, 0.0
    %v354 = vadd.f32 %v352, %v353
    %v355 = vsel %vm87, %v289, 0.0
    %v356 = vadd.f32 %v354, %v355
    %v357 = vsel %vm87, %v290, 0.0
    %v358 = vadd.f32 %v356, %v357
    %v359 = vsel %vm87, %v291, 0.0
    %v360 = vadd.f32 %v358, %v359
    %v361 = vsel %vm87, %v292, 0.0
    %v362 = vadd.f32 %v360, %v361
    %v363 = vsel %vm87, %v293, 0.0
    %v364 = vadd.f32 %v362, %v363
    %v365 = vsel %vm87, %v294, 0.0
    %v366 = vadd.f32 %v364, %v365
    %v367 = vsel %vm87, %v295, 0.0
    %v368 = vadd.f32 %v366, %v367
    %v369 = vsel %vm87, %v296, 0.0
    %v370 = vadd.f32 %v368, %v369
    %v371 = vsel %vm87, %v297, 0.0
    %v372 = vadd.f32 %v370, %v371
    %v373 = vsel %vm87, %v298, 0.0
    %v374 = vadd.f32 %v372, %v373
    %v375 = vsel %vm87, %v299, 0.0
    %v376 = vadd.f32 %v374, %v375
    %v377 = vsel %vm87, %v300, 0.0
    %v378 = vadd.f32 %v376, %v377
    %v379 = vsel %vm87, %v301, 0.0
    %v380 = vadd.f32 %v378, %v379
    %v381 = vsel %vm87, %v302, 0.0
    %v382 = vadd.f32 %v380, %v381
    %v383 = vsel %vm87, %v303, 0.0
    %v384 = vadd.f32 %v382, %v383
    %v385 = vsel %vm87, %v304, 0.0
    %v386 = vadd.f32 %v384, %v385
    %v387 = vsel %vm87, %v305, 0.0
    %v388 = vadd.f32 %v386, %v387
    %v389 = vsel %vm87, %v306, 0.0
    %v390 = vadd.f32 %v388, %v389
    %v391 = vsel %vm87, %v307, 0.0
    %v392 = vadd.f32 %v390, %v391
    %v393 = vsel %vm87, %v308, 0.0
    %v394 = vadd.f32 %v392, %v393
    %v395 = vsel %vm87, %v309, 0.0
    %v396 = vadd.f32 %v394, %v395
    %v397 = vsel %vm87, %v310, 0.0
    %v398 = vadd.f32 %v396, %v397
    %v399 = vsel %vm87, %v311, 0.0
    %v400 = vadd.f32 %v398, %v399
    %v401 = vsel %vm87, %v312, 0.0
    %v402 = vadd.f32 %v400, %v401
    %v403 = vsel %vm87, %v313, 0.0
    %v404 = vadd.f32 %v402, %v403
    %v405 = vsel %vm87, %v314, 0.0
    %v406 = vadd.f32 %v404, %v405
    %v407 = vsel %vm87, %v315, 0.0
    %v408 = vadd.f32 %v406, %v407
    %v409 = vsel %vm87, %v316, 0.0
    %v410 = vadd.f32 %v408, %v409
    %v411 = vsel %vm87, %v317, 0.0
    %v412 = vadd.f32 %v410, %v411
    %v413 = vsel %vm87, %v318, 0.0
    %v414 = vadd.f32 %v412, %v413
    %v415 = vsel %vm87, %v319, 0.0
    %v416 = vadd.f32 %v414, %v415
    %v417 = vsel %vm87, %v320, 0.0
    %v418 = vadd.f32 %v416, %v417
    %v419 = vsel %vm87, %v321, 0.0
    %v420 = vadd.f32 %v418, %v419
    %v421 = vsel %vm87, %v322, 0.0
    %v422 = vadd.f32 %v420, %v421
    %v423 = vsel %vm87, %v323, 0.0
    %v424 = vadd.f32 %v422, %v423
    %v425 = vsel %vm87, %v324, 0.0
    %v426 = vadd.f32 %v424, %v425
    %v427 = vsel %vm87, %v325, 0.0
    %v428 = vadd.f32 %v426, %v427
    %v429 = vsel %vm87, %v326, 0.0
    %v430 = vadd.f32 %v428, %v429
    %v431 = vsel %vm87, %v327, 0.0
    %v432 = vadd.f32 %v430, %v431
    %v433 = vsel %vm87, %v328, 0.0
    %v434 = vadd.f32 %v432, %v433
    %v435 = vsel %vm87, %v329, 0.0
    %v436 = vadd.f32 %v434, %v435
    %v437 = vsel %vm87, %v330, 0.0
    %v438 = vadd.f32 %v436, %v437
    %v439 = vsel %vm87, %v331, 0.0
    %v440 = vadd.f32 %v438, %v439
    %v441 = vsel %vm87, %v332, 0.0
    %v442 = vadd.f32 %v440, %v441
    %v443 = vsel %vm87, %v333, 0.0
    %v444 = vadd.f32 %v442, %v443
    %v445 = vsel %vm87, %v334, 0.0
    %v446 = vadd.f32 %v444, %v445
    %v447 = vsel %vm87, %v335, 0.0
    %v448 = vadd.f32 %v446, %v447
    %v449 = vsel %vm87, %v336, 0.0
    %v450 = vadd.f32 %v448, %v449
    %v451 = vsel %vm87, %v337, 0.0
    %v452 = vadd.f32 %v450, %v451
    %v453 = vsel %vm87, %v338, 0.0
    %v454 = vadd.f32 %v452, %v453
    %v455 = vsel %vm87, %v339, 0.0
    %v456 = vadd.f32 %v454, %v455
    %v457 = vsel %vm87, %v340, 0.0
    %v458 = vadd.f32 %v456, %v457
    %v459 = vsel %vm87, %v341, 0.0
    %v460 = vadd.f32 %v458, %v459
    %v461 = vsel %vm87, %v342, 0.0
    %v462 = vadd.f32 %v460, %v461
    %v463 = vsel %vm87, %v343, 0.0
    %v464 = vadd.f32 %v462, %v463
    %v465 = vsel %vm87, %v344, 0.0
    %v466 = vadd.f32 %v464, %v465
    %v467 = vsel %vm87, %v345, 0.0
    %v468 = vadd.f32 %v466, %v467
    %v469 = vsel %vm87, %v346, 0.0
    %v470 = vadd.f32 %v468, %v469
    %v471 = vsel %vm87, %v347, 0.0
    %v472 = vadd.f32 %v470, %v471
    %v473 = vsel %vm87, %v348, 0.0
    %v474 = vadd.f32 %v472, %v473
    %v475 = vsel %vm87, %v349, 0.0
    %v476 = vadd.f32 %v474, %v475
    %v477 = vrot.slane %v476, 4
    %v478 = vadd.f32 %v476, %v477
    %v479 = vrot.slane %v478, 2
    %v480 = vadd.f32 %v478, %v479
    %v481 = vrot.slane %v480, 1
    %v482 = vadd.f32 %v480, %v481
    %v483 = vmul.f32 %v482, 0.001953125
    %v484 = vadd.f32 %v483, 1e-05
    %v485 = vrsqrt.pop %v484
    %v486 = vmul.f32 %v21, %v485
    %v487 = vmul.f32 %v221, %v486
    %v489 = vrot.slane %v487, 7
    %v491 = vsub.f32 %v21, %v489
    %v492 = vlaneseq
    %v493 = vshrl.u32 %v492, 7
    %v494 = vsub.s32 0, %v493
    %v495 = vrot.slane %v486, %v494
    %v496 = vmul.f32 %v23, %v495
    %v497 = vmul.f32 %v24, %v495
    %v498 = vmul.f32 %v25, %v495
    %v499 = vmul.f32 %v26, %v495
    %v500 = vmul.f32 %v27, %v495
    %v501 = vmul.f32 %v28, %v495
    %v502 = vmul.f32 %v29, %v495
    %v503 = vmul.f32 %v30, %v495
    %v504 = vmul.f32 %v31, %v495
    %v505 = vmul.f32 %v32, %v495
    %v506 = vmul.f32 %v33, %v495
    %v507 = vmul.f32 %v34, %v495
    %v508 = vmul.f32 %v35, %v495
    %v509 = vmul.f32 %v36, %v495
    %v510 = vmul.f32 %v37, %v495
    %v511 = vmul.f32 %v38, %v495
    %v512 = vmul.f32 %v39, %v495
    %v513 = vmul.f32 %v40, %v495
    %v514 = vmul.f32 %v41, %v495
    %v515 = vmul.f32 %v42, %v495
    %v516 = vmul.f32 %v43, %v495
    %v517 = vmul.f32 %v44, %v495
    %v518 = vmul.f32 %v45, %v495
    %v519 = vmul.f32 %v46, %v495
    %v520 = vmul.f32 %v47, %v495
    %v521 = vmul.f32 %v48, %v495
    %v522 = vmul.f32 %v49, %v495
    %v523 = vmul.f32 %v50, %v495
    %v524 = vmul.f32 %v51, %v495
    %v525 = vmul.f32 %v52, %v495
    %v526 = vmul.f32 %v53, %v495
    %v527 = vmul.f32 %v54, %v495
    %v528 = vmul.f32 %v55, %v495
    %v529 = vmul.f32 %v56, %v495
    %v530 = vmul.f32 %v57, %v495
    %v531 = vmul.f32 %v58, %v495
    %v532 = vmul.f32 %v59, %v495
    %v533 = vmul.f32 %v60, %v495
    %v534 = vmul.f32 %v61, %v495
    %v535 = vmul.f32 %v62, %v495
    %v536 = vmul.f32 %v63, %v495
    %v537 = vmul.f32 %v64, %v495
    %v538 = vmul.f32 %v65, %v495
    %v539 = vmul.f32 %v66, %v495
    %v540 = vmul.f32 %v67, %v495
    %v541 = vmul.f32 %v68, %v495
    %v542 = vmul.f32 %v69, %v495
    %v543 = vmul.f32 %v70, %v495
    %v544 = vmul.f32 %v71, %v495
    %v545 = vmul.f32 %v72, %v495
    %v546 = vmul.f32 %v73, %v495
    %v547 = vmul.f32 %v74, %v495
    %v548 = vmul.f32 %v75, %v495
    %v549 = vmul.f32 %v76, %v495
    %v550 = vmul.f32 %v77, %v495
    %v551 = vmul.f32 %v78, %v495
    %v552 = vmul.f32 %v79, %v495
    %v553 = vmul.f32 %v80, %v495
    %v554 = vmul.f32 %v81, %v495
    %v555 = vmul.f32 %v82, %v495
    %v556 = vmul.f32 %v83, %v495
    %v557 = vmul.f32 %v84, %v495
    %v558 = vmul.f32 %v85, %v495
    %v559 = vmul.f32 %v86, %v495
    %v560 = vlaneseq
    %v561 = vshrl.u32 %v560, 7
    %v562 = vsub.s32 1, %v561
    %v563 = vrot.slane %v491, %v562
    %v564 = vadd.f32 %v496, %v563
    %v565 = vadd.f32 %v497, %v563
    %v566 = vadd.f32 %v498, %v563
    %v567 = vadd.f32 %v499, %v563
    %v568 = vadd.f32 %v500, %v563
    %v569 = vadd.f32 %v501, %v563
    %v570 = vadd.f32 %v502, %v563
    %v571 = vadd.f32 %v503, %v563
    %v572 = vadd.f32 %v504, %v563
    %v573 = vadd.f32 %v505, %v563
    %v574 = vadd.f32 %v506, %v563
    %v575 = vadd.f32 %v507, %v563
    %v576 = vadd.f32 %v508, %v563
    %v577 = vadd.f32 %v509, %v563
    %v578 = vadd.f32 %v510, %v563
    %v579 = vadd.f32 %v511, %v563
    %v580 = vadd.f32 %v512, %v563
    %v581 = vadd.f32 %v513, %v563
    %v582 = vadd.f32 %v514, %v563
    %v583 = vadd.f32 %v515, %v563
    %v584 = vadd.f32 %v516, %v563
    %v585 = vadd.f32 %v517, %v563
    %v586 = vadd.f32 %v518, %v563
    %v587 = vadd.f32 %v519, %v563
    %v588 = vadd.f32 %v520, %v563
    %v589 = vadd.f32 %v521, %v563
    %v590 = vadd.f32 %v522, %v563
    %v591 = vadd.f32 %v523, %v563
    %v592 = vadd.f32 %v524, %v563
    %v593 = vadd.f32 %v525, %v563
    %v594 = vadd.f32 %v526, %v563
    %v595 = vadd.f32 %v527, %v563
    %v596 = vadd.f32 %v528, %v563
    %v597 = vadd.f32 %v529, %v563
    %v598 = vadd.f32 %v530, %v563
    %v599 = vadd.f32 %v531, %v563
    %v600 = vadd.f32 %v532, %v563
    %v601 = vadd.f32 %v533, %v563
    %v602 = vadd.f32 %v534, %v563
    %v603 = vadd.f32 %v535, %v563
    %v604 = vadd.f32 %v536, %v563
    %v605 = vadd.f32 %v537, %v563
    %v606 = vadd.f32 %v538, %v563
    %v607 = vadd.f32 %v539, %v563
    %v608 = vadd.f32 %v540, %v563
    %v609 = vadd.f32 %v541, %v563
    %v610 = vadd.f32 %v542, %v563
    %v611 = vadd.f32 %v543, %v563
    %v612 = vadd.f32 %v544, %v563
    %v613 = vadd.f32 %v545, %v563
    %v614 = vadd.f32 %v546, %v563
    %v615 = vadd.f32 %v547, %v563
    %v616 = vadd.f32 %v548, %v563
    %v617 = vadd.f32 %v549, %v563
    %v618 = vadd.f32 %v550, %v563
    %v619 = vadd.f32 %v551, %v563
    %v620 = vadd.f32 %v552, %v563
    %v621 = vadd.f32 %v553, %v563
    %v622 = vadd.f32 %v554, %v563
    %v623 = vadd.f32 %v555, %v563
    %v624 = vadd.f32 %v556, %v563
    %v625 = vadd.f32 %v557, %v563
    %v626 = vadd.f32 %v558, %v563
    %v627 = vadd.f32 %v559, %v563
    %628 = vst.msk [vmem:[#allocation2] sm:$0xff] %vm87, 0.0
    %629 = vst.msk [vmem:[#allocation2 + $0x8] sm:$0xff] %vm87, 0.0
    %vm630 = vcmask 25600
    %631 = vst.msk [vmem:[#allocation2 + $0x10] sm:$0x3] %vm630, 0.0
    %632 = vst.msk [vmem:[#allocation2 + $0x1b0] sm:$0xff] %vm87, 0.0
    %633 = vst.msk [vmem:[#allocation2 + $0x1b8] sm:$0xff] %vm87, 0.0
    %634 = vst.msk [vmem:[#allocation2 + $0x1c0] sm:$0x3] %vm630, 0.0
    %s635 = scalar_lea.vmem [#allocation2], 408
    %636 = vst.msk [vmem:[%s635] sm:$0xff] %vm87, 0.0
    %637 = vst.msk [vmem:[%s635 + $0x8] sm:$0xff] %vm87, 0.0
    %638 = vst.msk [vmem:[%s635 + $0x10] sm:$0x3] %vm630, 0.0
    %639 = vst.msk [vmem:[%s635 + $0x1b0] sm:$0xff] %vm87, 0.0
    %640 = vst.msk [vmem:[%s635 + $0x1b8] sm:$0xff] %vm87, 0.0
    %641 = vst.msk [vmem:[%s635 + $0x1c0] sm:$0x3] %vm630, 0.0
    %vm642 = vcmask 24576
    %643 = vst.msk [vmem:[#allocation2] sm:$0x1] %vm642, 0.0
    %644 = vst.msk [vmem:[#allocation2 + $0x18] sm:$0x1] %vm642, 0.0
    %645 = vst.msk [vmem:[#allocation2 + $0x30] sm:$0x1] %vm642, 0.0
    %646 = vst.msk [vmem:[#allocation2 + $0x48] sm:$0x1] %vm642, 0.0
    %647 = vst.msk [vmem:[#allocation2 + $0x60] sm:$0x1] %vm642, 0.0
    %648 = vst.msk [vmem:[#allocation2 + $0x78] sm:$0x1] %vm642, 0.0
    %649 = vst.msk [vmem:[#allocation2 + $0x90] sm:$0x1] %vm642, 0.0
    %650 = vst.msk [vmem:[#allocation2 + $0xa8] sm:$0x1] %vm642, 0.0
    %651 = vst.msk [vmem:[#allocation2 + $0xc0] sm:$0x1] %vm642, 0.0
    %652 = vst.msk [vmem:[#allocation2 + $0xd8] sm:$0x1] %vm642, 0.0
    %653 = vst.msk [vmem:[#allocation2 + $0xf0] sm:$0x1] %vm642, 0.0
    %654 = vst.msk [vmem:[#allocation2 + $0x108] sm:$0x1] %vm642, 0.0
    %655 = vst.msk [vmem:[#allocation2 + $0x120] sm:$0x1] %vm642, 0.0
    %656 = vst.msk [vmem:[#allocation2 + $0x138] sm:$0x1] %vm642, 0.0
    %657 = vst.msk [vmem:[#allocation2 + $0x150] sm:$0x1] %vm642, 0.0
    %658 = vst.msk [vmem:[#allocation2 + $0x168] sm:$0x1] %vm642, 0.0
    %659 = vst.msk [vmem:[#allocation2 + $0x180] sm:$0x1] %vm642, 0.0
    %660 = vst.msk [vmem:[#allocation2 + $0x198] sm:$0x1] %vm642, 0.0
    %661 = vst.msk [vmem:[#allocation2 + $0x1b0] sm:$0x1] %vm642, 0.0
    %662 = vst.msk [vmem:[#allocation2 + $0x1c8] sm:$0x1] %vm642, 0.0
    %663 = vst.msk [vmem:[#allocation2 + $0x1e0] sm:$0x1] %vm642, 0.0
    %664 = vst.msk [vmem:[#allocation2 + $0x1f8] sm:$0x1] %vm642, 0.0
    %665 = vst.msk [vmem:[#allocation2 + $0x210] sm:$0x1] %vm642, 0.0
    %666 = vst.msk [vmem:[#allocation2 + $0x228] sm:$0x1] %vm642, 0.0
    %667 = vst.msk [vmem:[#allocation2 + $0x240] sm:$0x1] %vm642, 0.0
    %668 = vst.msk [vmem:[#allocation2 + $0x258] sm:$0x1] %vm642, 0.0
    %669 = vst.msk [vmem:[#allocation2 + $0x270] sm:$0x1] %vm642, 0.0
    %670 = vst.msk [vmem:[#allocation2 + $0x288] sm:$0x1] %vm642, 0.0
    %671 = vst.msk [vmem:[#allocation2 + $0x2a0] sm:$0x1] %vm642, 0.0
    %672 = vst.msk [vmem:[#allocation2 + $0x2b8] sm:$0x1] %vm642, 0.0
    %673 = vst.msk [vmem:[#allocation2 + $0x2d0] sm:$0x1] %vm642, 0.0
    %674 = vst.msk [vmem:[#allocation2 + $0x2e8] sm:$0x1] %vm642, 0.0
    %675 = vst.msk [vmem:[#allocation2 + $0x300] sm:$0x1] %vm642, 0.0
    %676 = vst.msk [vmem:[#allocation2 + $0x318] sm:$0x1] %vm642, 0.0
    %677 = vst.msk [vmem:[#allocation2 + $0x330] sm:$0x1] %vm642, 0.0
    %678 = vst.msk [vmem:[#allocation2 + $0x348] sm:$0x1] %vm642, 0.0
    %679 = vst.msk [vmem:[#allocation2 + $0x11] sm:$0x1] %vm642, 0.0
    %680 = vst.msk [vmem:[#allocation2 + $0x29] sm:$0x1] %vm642, 0.0
    %681 = vst.msk [vmem:[#allocation2 + $0x41] sm:$0x1] %vm642, 0.0
    %682 = vst.msk [vmem:[#allocation2 + $0x59] sm:$0x1] %vm642, 0.0
    %683 = vst.msk [vmem:[#allocation2 + $0x71] sm:$0x1] %vm642, 0.0
    %684 = vst.msk [vmem:[#allocation2 + $0x89] sm:$0x1] %vm642, 0.0
    %685 = vst.msk [vmem:[#allocation2 + $0xa1] sm:$0x1] %vm642, 0.0
    %686 = vst.msk [vmem:[#allocation2 + $0xb9] sm:$0x1] %vm642, 0.0
    %687 = vst.msk [vmem:[#allocation2 + $0xd1] sm:$0x1] %vm642, 0.0
    %688 = vst.msk [vmem:[#allocation2 + $0xe9] sm:$0x1] %vm642, 0.0
    %689 = vst.msk [vmem:[#allocation2 + $0x101] sm:$0x1] %vm642, 0.0
    %690 = vst.msk [vmem:[#allocation2 + $0x119] sm:$0x1] %vm642, 0.0
    %691 = vst.msk [vmem:[#allocation2 + $0x131] sm:$0x1] %vm642, 0.0
    %692 = vst.msk [vmem:[#allocation2 + $0x149] sm:$0x1] %vm642, 0.0
    %693 = vst.msk [vmem:[#allocation2 + $0x161] sm:$0x1] %vm642, 0.0
    %694 = vst.msk [vmem:[#allocation2 + $0x179] sm:$0x1] %vm642, 0.0
    %695 = vst.msk [vmem:[#allocation2 + $0x191] sm:$0x1] %vm642, 0.0
    %696 = vst.msk [vmem:[#allocation2 + $0x1a9] sm:$0x1] %vm642, 0.0
    %697 = vst.msk [vmem:[#allocation2 + $0x1c1] sm:$0x1] %vm642, 0.0
    %698 = vst.msk [vmem:[#allocation2 + $0x1d9] sm:$0x1] %vm642, 0.0
    %699 = vst.msk [vmem:[#allocation2 + $0x1f1] sm:$0x1] %vm642, 0.0
    %700 = vst.msk [vmem:[#allocation2 + $0x209] sm:$0x1] %vm642, 0.0
    %701 = vst.msk [vmem:[#allocation2 + $0x221] sm:$0x1] %vm642, 0.0
    %702 = vst.msk [vmem:[#allocation2 + $0x239] sm:$0x1] %vm642, 0.0
    %703 = vst.msk [vmem:[#allocation2 + $0x251] sm:$0x1] %vm642, 0.0
    %704 = vst.msk [vmem:[#allocation2 + $0x269] sm:$0x1] %vm642, 0.0
    %705 = vst.msk [vmem:[#allocation2 + $0x281] sm:$0x1] %vm642, 0.0
    %706 = vst.msk [vmem:[#allocation2 + $0x299] sm:$0x1] %vm642, 0.0
    %707 = vst.msk [vmem:[#allocation2 + $0x2b1] sm:$0x1] %vm642, 0.0
    %708 = vst.msk [vmem:[#allocation2 + $0x2c9] sm:$0x1] %vm642, 0.0
    %709 = vst.msk [vmem:[#allocation2 + $0x2e1] sm:$0x1] %vm642, 0.0
    %710 = vst.msk [vmem:[#allocation2 + $0x2f9] sm:$0x1] %vm642, 0.0
    %711 = vst.msk [vmem:[#allocation2 + $0x311] sm:$0x1] %vm642, 0.0
    %712 = vst.msk [vmem:[#allocation2 + $0x329] sm:$0x1] %vm642, 0.0
    %713 = vst.msk [vmem:[#allocation2 + $0x341] sm:$0x1] %vm642, 0.0
    %714 = vst.msk [vmem:[#allocation2 + $0x359] sm:$0x1] %vm642, 0.0
    %s715 = scalar_lea.vmem [#allocation2], 24
    %716 = vst.msk [vmem:[%s715 + $0x1] sm:$0xff] %vm87, %v564
    %717 = vst.msk [vmem:[%s715 + $0x9] sm:$0xff] %vm87, %v565
    %718 = vst.msk [vmem:[%s715 + $0x19] sm:$0xff] %vm87, %v566
    %719 = vst.msk [vmem:[%s715 + $0x21] sm:$0xff] %vm87, %v567
    %720 = vst.msk [vmem:[%s715 + $0x31] sm:$0xff] %vm87, %v568
    %721 = vst.msk [vmem:[%s715 + $0x39] sm:$0xff] %vm87, %v569
    %722 = vst.msk [vmem:[%s715 + $0x49] sm:$0xff] %vm87, %v570
    %723 = vst.msk [vmem:[%s715 + $0x51] sm:$0xff] %vm87, %v571
    %724 = vst.msk [vmem:[%s715 + $0x61] sm:$0xff] %vm87, %v572
    %725 = vst.msk [vmem:[%s715 + $0x69] sm:$0xff] %vm87, %v573
    %726 = vst.msk [vmem:[%s715 + $0x79] sm:$0xff] %vm87, %v574
    %727 = vst.msk [vmem:[%s715 + $0x81] sm:$0xff] %vm87, %v575
    %728 = vst.msk [vmem:[%s715 + $0x91] sm:$0xff] %vm87, %v576
    %729 = vst.msk [vmem:[%s715 + $0x99] sm:$0xff] %vm87, %v577
    %730 = vst.msk [vmem:[%s715 + $0xa9] sm:$0xff] %vm87, %v578
    %731 = vst.msk [vmem:[%s715 + $0xb1] sm:$0xff] %vm87, %v579
    %732 = vst.msk [vmem:[%s715 + $0xc1] sm:$0xff] %vm87, %v580
    %733 = vst.msk [vmem:[%s715 + $0xc9] sm:$0xff] %vm87, %v581
    %734 = vst.msk [vmem:[%s715 + $0xd9] sm:$0xff] %vm87, %v582
    %735 = vst.msk [vmem:[%s715 + $0xe1] sm:$0xff] %vm87, %v583
    %736 = vst.msk [vmem:[%s715 + $0xf1] sm:$0xff] %vm87, %v584
    %737 = vst.msk [vmem:[%s715 + $0xf9] sm:$0xff] %vm87, %v585
    %738 = vst.msk [vmem:[%s715 + $0x109] sm:$0xff] %vm87, %v586
    %739 = vst.msk [vmem:[%s715 + $0x111] sm:$0xff] %vm87, %v587
    %740 = vst.msk [vmem:[%s715 + $0x121] sm:$0xff] %vm87, %v588
    %741 = vst.msk [vmem:[%s715 + $0x129] sm:$0xff] %vm87, %v589
    %742 = vst.msk [vmem:[%s715 + $0x139] sm:$0xff] %vm87, %v590
    %743 = vst.msk [vmem:[%s715 + $0x141] sm:$0xff] %vm87, %v591
    %744 = vst.msk [vmem:[%s715 + $0x151] sm:$0xff] %vm87, %v592
    %745 = vst.msk [vmem:[%s715 + $0x159] sm:$0xff] %vm87, %v593
    %746 = vst.msk [vmem:[%s715 + $0x169] sm:$0xff] %vm87, %v594
    %747 = vst.msk [vmem:[%s715 + $0x171] sm:$0xff] %vm87, %v595
    %748 = vst.msk [vmem:[%s715 + $0x1b1] sm:$0xff] %vm87, %v596
    %749 = vst.msk [vmem:[%s715 + $0x1b9] sm:$0xff] %vm87, %v597
    %750 = vst.msk [vmem:[%s715 + $0x1c9] sm:$0xff] %vm87, %v598
    %751 = vst.msk [vmem:[%s715 + $0x1d1] sm:$0xff] %vm87, %v599
    %752 = vst.msk [vmem:[%s715 + $0x1e1] sm:$0xff] %vm87, %v600
    %753 = vst.msk [vmem:[%s715 + $0x1e9] sm:$0xff] %vm87, %v601
    %754 = vst.msk [vmem:[%s715 + $0x1f9] sm:$0xff] %vm87, %v602
    %755 = vst.msk [vmem:[%s715 + $0x201] sm:$0xff] %vm87, %v603
    %756 = vst.msk [vmem:[%s715 + $0x211] sm:$0xff] %vm87, %v604
    %757 = vst.msk [vmem:[%s715 + $0x219] sm:$0xff] %vm87, %v605
    %758 = vst.msk [vmem:[%s715 + $0x229] sm:$0xff] %vm87, %v606
    %759 = vst.msk [vmem:[%s715 + $0x231] sm:$0xff] %vm87, %v607
    %760 = vst.msk [vmem:[%s715 + $0x241] sm:$0xff] %vm87, %v608
    %761 = vst.msk [vmem:[%s715 + $0x249] sm:$0xff] %vm87, %v609
    %762 = vst.msk [vmem:[%s715 + $0x259] sm:$0xff] %vm87, %v610
    %763 = vst.msk [vmem:[%s715 + $0x261] sm:$0xff] %vm87, %v611
    %764 = vst.msk [vmem:[%s715 + $0x271] sm:$0xff] %vm87, %v612
    %765 = vst.msk [vmem:[%s715 + $0x279] sm:$0xff] %vm87, %v613
    %766 = vst.msk [vmem:[%s715 + $0x289] sm:$0xff] %vm87, %v614
    %767 = vst.msk [vmem:[%s715 + $0x291] sm:$0xff] %vm87, %v615
    %768 = vst.msk [vmem:[%s715 + $0x2a1] sm:$0xff] %vm87, %v616
    %769 = vst.msk [vmem:[%s715 + $0x2a9] sm:$0xff] %vm87, %v617
    %770 = vst.msk [vmem:[%s715 + $0x2b9] sm:$0xff] %vm87, %v618
    %771 = vst.msk [vmem:[%s715 + $0x2c1] sm:$0xff] %vm87, %v619
    %772 = vst.msk [vmem:[%s715 + $0x2d1] sm:$0xff] %vm87, %v620
    %773 = vst.msk [vmem:[%s715 + $0x2d9] sm:$0xff] %vm87, %v621
    %774 = vst.msk [vmem:[%s715 + $0x2e9] sm:$0xff] %vm87, %v622
    %775 = vst.msk [vmem:[%s715 + $0x2f1] sm:$0xff] %vm87, %v623
    %776 = vst.msk [vmem:[%s715 + $0x301] sm:$0xff] %vm87, %v624
    %777 = vst.msk [vmem:[%s715 + $0x309] sm:$0xff] %vm87, %v625
    %778 = vst.msk [vmem:[%s715 + $0x319] sm:$0xff] %vm87, %v626
    %779 = vst.msk [vmem:[%s715 + $0x321] sm:$0xff] %vm87, %v627
    %v780 = vld [vmem:[#allocation2] sm:$0xff]
    %v781 = vld [vmem:[#allocation2 + $0x8] sm:$0xff]
    %v782 = vld [vmem:[#allocation2 + $0x18] sm:$0xff]
    %v783 = vld [vmem:[#allocation2 + $0x20] sm:$0xff]
    %v784 = vld [vmem:[#allocation2 + $0x30] sm:$0xff]
    %v785 = vld [vmem:[#allocation2 + $0x38] sm:$0xff]
    %v786 = vld [vmem:[#allocation2 + $0x48] sm:$0xff]
    %v787 = vld [vmem:[#allocation2 + $0x50] sm:$0xff]
    %v788 = vld [vmem:[#allocation2 + $0x60] sm:$0xff]
    %v789 = vld [vmem:[#allocation2 + $0x68] sm:$0xff]
    %v790 = vld [vmem:[#allocation2 + $0x78] sm:$0xff]
    %v791 = vld [vmem:[#allocation2 + $0x80] sm:$0xff]
    %v792 = vld [vmem:[#allocation2 + $0x90] sm:$0xff]
    %v793 = vld [vmem:[#allocation2 + $0x98] sm:$0xff]
    %v794 = vld [vmem:[#allocation2 + $0xa8] sm:$0xff]
    %v795 = vld [vmem:[#allocation2 + $0xb0] sm:$0xff]
    %v796 = vld [vmem:[#allocation2 + $0xc0] sm:$0xff]
    %v797 = vld [vmem:[#allocation2 + $0xc8] sm:$0xff]
    %v798 = vld [vmem:[#allocation2 + $0xd8] sm:$0xff]
    %v799 = vld [vmem:[#allocation2 + $0xe0] sm:$0xff]
    %v800 = vld [vmem:[#allocation2 + $0xf0] sm:$0xff]
    %v801 = vld [vmem:[#allocation2 + $0xf8] sm:$0xff]
    %v802 = vld [vmem:[#allocation2 + $0x108] sm:$0xff]
    %v803 = vld [vmem:[#allocation2 + $0x110] sm:$0xff]
    %v804 = vld [vmem:[#allocation2 + $0x120] sm:$0xff]
    %v805 = vld [vmem:[#allocation2 + $0x128] sm:$0xff]
    %v806 = vld [vmem:[#allocation2 + $0x138] sm:$0xff]
    %v807 = vld [vmem:[#allocation2 + $0x140] sm:$0xff]
    %v808 = vld [vmem:[#allocation2 + $0x150] sm:$0xff]
    %v809 = vld [vmem:[#allocation2 + $0x158] sm:$0xff]
    %v810 = vld [vmem:[#allocation2 + $0x168] sm:$0xff]
    %v811 = vld [vmem:[#allocation2 + $0x170] sm:$0xff]
    %v812 = vld [vmem:[#allocation2 + $0x1b0] sm:$0xff]
    %v813 = vld [vmem:[#allocation2 + $0x1b8] sm:$0xff]
    %v814 = vld [vmem:[#allocation2 + $0x1c8] sm:$0xff]
    %v815 = vld [vmem:[#allocation2 + $0x1d0] sm:$0xff]
    %v816 = vld [vmem:[#allocation2 + $0x1e0] sm:$0xff]
    %v817 = vld [vmem:[#allocation2 + $0x1e8] sm:$0xff]
    %v818 = vld [vmem:[#allocation2 + $0x1f8] sm:$0xff]
    %v819 = vld [vmem:[#allocation2 + $0x200] sm:$0xff]
    %v820 = vld [vmem:[#allocation2 + $0x210] sm:$0xff]
    %v821 = vld [vmem:[#allocation2 + $0x218] sm:$0xff]
    %v822 = vld [vmem:[#allocation2 + $0x228] sm:$0xff]
    %v823 = vld [vmem:[#allocation2 + $0x230] sm:$0xff]
    %v824 = vld [vmem:[#allocation2 + $0x240] sm:$0xff]
    %v825 = vld [vmem:[#allocation2 + $0x248] sm:$0xff]
    %v826 = vld [vmem:[#allocation2 + $0x258] sm:$0xff]
    %v827 = vld [vmem:[#allocation2 + $0x260] sm:$0xff]
    %v828 = vld [vmem:[#allocation2 + $0x270] sm:$0xff]
    %v829 = vld [vmem:[#allocation2 + $0x278] sm:$0xff]
    %v830 = vld [vmem:[#allocation2 + $0x288] sm:$0xff]
    %v831 = vld [vmem:[#allocation2 + $0x290] sm:$0xff]
    %v832 = vld [vmem:[#allocation2 + $0x2a0] sm:$0xff]
    %v833 = vld [vmem:[#allocation2 + $0x2a8] sm:$0xff]
    %v834 = vld [vmem:[#allocation2 + $0x2b8] sm:$0xff]
    %v835 = vld [vmem:[#allocation2 + $0x2c0] sm:$0xff]
    %v836 = vld [vmem:[#allocation2 + $0x2d0] sm:$0xff]
    %v837 = vld [vmem:[#allocation2 + $0x2d8] sm:$0xff]
    %v838 = vld [vmem:[#allocation2 + $0x2e8] sm:$0xff]
    %v839 = vld [vmem:[#allocation2 + $0x2f0] sm:$0xff]
    %v840 = vld [vmem:[#allocation2 + $0x300] sm:$0xff]
    %v841 = vld [vmem:[#allocation2 + $0x308] sm:$0xff]
    %v842 = vld [vmem:[#allocation2 + $0x318] sm:$0xff]
    %v843 = vld [vmem:[#allocation2 + $0x320] sm:$0xff]
    %v844 = vld [vmem:[%s2] sm:$0xf]
    %v845 = vld [vmem:[#allocation2 + $0x1] sm:$0xff]
    %v846 = vld [vmem:[#allocation2 + $0x9] sm:$0xff]
    %v847 = vld [vmem:[#allocation2 + $0x19] sm:$0xff]
    %v848 = vld [vmem:[#allocation2 + $0x21] sm:$0xff]
    %v849 = vld [vmem:[#allocation2 + $0x31] sm:$0xff]
    %v850 = vld [vmem:[#allocation2 + $0x39] sm:$0xff]
    %v851 = vld [vmem:[#allocation2 + $0x49] sm:$0xff]
    %v852 = vld [vmem:[#allocation2 + $0x51] sm:$0xff]
    %v853 = vld [vmem:[#allocation2 + $0x61] sm:$0xff]
    %v854 = vld [vmem:[#allocation2 + $0x69] sm:$0xff]
    %v855 = vld [vmem:[#allocation2 + $0x79] sm:$0xff]
    %v856 = vld [vmem:[#allocation2 + $0x81] sm:$0xff]
    %v857 = vld [vmem:[#allocation2 + $0x91] sm:$0xff]
    %v858 = vld [vmem:[#allocation2 + $0x99] sm:$0xff]
    %v859 = vld [vmem:[#allocation2 + $0xa9] sm:$0xff]
    %v860 = vld [vmem:[#allocation2 + $0xb1] sm:$0xff]
    %v861 = vld [vmem:[#allocation2 + $0xc1] sm:$0xff]
    %v862 = vld [vmem:[#allocation2 + $0xc9] sm:$0xff]
    %v863 = vld [vmem:[#allocation2 + $0xd9] sm:$0xff]
    %v864 = vld [vmem:[#allocation2 + $0xe1] sm:$0xff]
    %v865 = vld [vmem:[#allocation2 + $0xf1] sm:$0xff]
    %v866 = vld [vmem:[#allocation2 + $0xf9] sm:$0xff]
    %v867 = vld [vmem:[#allocation2 + $0x109] sm:$0xff]
    %v868 = vld [vmem:[#allocation2 + $0x111] sm:$0xff]
    %v869 = vld [vmem:[#allocation2 + $0x121] sm:$0xff]
    %v870 = vld [vmem:[#allocation2 + $0x129] sm:$0xff]
    %v871 = vld [vmem:[#allocation2 + $0x139] sm:$0xff]
    %v872 = vld [vmem:[#allocation2 + $0x141] sm:$0xff]
    %v873 = vld [vmem:[#allocation2 + $0x151] sm:$0xff]
    %v874 = vld [vmem:[#allocation2 + $0x159] sm:$0xff]
    %v875 = vld [vmem:[#allocation2 + $0x169] sm:$0xff]
    %v876 = vld [vmem:[#allocation2 + $0x171] sm:$0xff]
    %v877 = vld [vmem:[#allocation2 + $0x1b1] sm:$0xff]
    %v878 = vld [vmem:[#allocation2 + $0x1b9] sm:$0xff]
    %v879 = vld [vmem:[#allocation2 + $0x1c9] sm:$0xff]
    %v880 = vld [vmem:[#allocation2 + $0x1d1] sm:$0xff]
    %v881 = vld [vmem:[#allocation2 + $0x1e1] sm:$0xff]
    %v882 = vld [vmem:[#allocation2 + $0x1e9] sm:$0xff]
    %v883 = vld [vmem:[#allocation2 + $0x1f9] sm:$0xff]
    %v884 = vld [vmem:[#allocation2 + $0x201] sm:$0xff]
    %v885 = vld [vmem:[#allocation2 + $0x211] sm:$0xff]
    %v886 = vld [vmem:[#allocation2 + $0x219] sm:$0xff]
    %v887 = vld [vmem:[#allocation2 + $0x229] sm:$0xff]
    %v888 = vld [vmem:[#allocation2 + $0x231] sm:$0xff]
    %v889 = vld [vmem:[#allocation2 + $0x241] sm:$0xff]
    %v890 = vld [vmem:[#allocation2 + $0x249] sm:$0xff]
    %v891 = vld [vmem:[#allocation2 + $0x259] sm:$0xff]
    %v892 = vld [vmem:[#allocation2 + $0x261] sm:$0xff]
    %v893 = vld [vmem:[#allocation2 + $0x271] sm:$0xff]
    %v894 = vld [vmem:[#allocation2 + $0x279] sm:$0xff]
    %v895 = vld [vmem:[#allocation2 + $0x289] sm:$0xff]
    %v896 = vld [vmem:[#allocation2 + $0x291] sm:$0xff]
    %v897 = vld [vmem:[#allocation2 + $0x2a1] sm:$0xff]
    %v898 = vld [vmem:[#allocation2 + $0x2a9] sm:$0xff]
    %v899 = vld [vmem:[#allocation2 + $0x2b9] sm:$0xff]
    %v900 = vld [vmem:[#allocation2 + $0x2c1] sm:$0xff]
    %v901 = vld [vmem:[#allocation2 + $0x2d1] sm:$0xff]
    %v902 = vld [vmem:[#allocation2 + $0x2d9] sm:$0xff]
    %v903 = vld [vmem:[#allocation2 + $0x2e9] sm:$0xff]
    %v904 = vld [vmem:[#allocation2 + $0x2f1] sm:$0xff]
    %v905 = vld [vmem:[#allocation2 + $0x301] sm:$0xff]
    %v906 = vld [vmem:[#allocation2 + $0x309] sm:$0xff]
    %v907 = vld [vmem:[#allocation2 + $0x319] sm:$0xff]
    %v908 = vld [vmem:[#allocation2 + $0x321] sm:$0xff]
    %s909 = scalar_lea.vmem %s2, 4
    %v910 = vld [vmem:[%s909] sm:$0xf]
    %v912 = vsel %vm87, %v845, 0
    %v915 = vsel %vm87, %v846, 0
    %v918 = vsel %vm87, %v847, 0
    %v921 = vsel %vm87, %v848, 0
    %v924 = vsel %vm87, %v849, 0
    %v927 = vsel %vm87, %v850, 0
    %v930 = vsel %vm87, %v851, 0
    %v933 = vsel %vm87, %v852, 0
    %v936 = vsel %vm87, %v853, 0
    %v939 = vsel %vm87, %v854, 0
    %v942 = vsel %vm87, %v855, 0
    %v945 = vsel %vm87, %v856, 0
    %v948 = vsel %vm87, %v857, 0
    %v951 = vsel %vm87, %v858, 0
    %v954 = vsel %vm87, %v859, 0
    %v957 = vsel %vm87, %v860, 0
    %v960 = vsel %vm87, %v861, 0
    %v963 = vsel %vm87, %v862, 0
    %v966 = vsel %vm87, %v863, 0
    %v969 = vsel %vm87, %v864, 0
    %v972 = vsel %vm87, %v865, 0
    %v975 = vsel %vm87, %v866, 0
    %v978 = vsel %vm87, %v867, 0
    %v981 = vsel %vm87, %v868, 0
    %v984 = vsel %vm87, %v869, 0
    %v987 = vsel %vm87, %v870, 0
    %v990 = vsel %vm87, %v871, 0
    %v993 = vsel %vm87, %v872, 0
    %v996 = vsel %vm87, %v873, 0
    %v999 = vsel %vm87, %v874, 0
    %v1002 = vsel %vm87, %v875, 0
    %v1005 = vsel %vm87, %v876, 0
    %v1008 = vsel %vm87, %v877, 0
    %v1011 = vsel %vm87, %v878, 0
    %v1014 = vsel %vm87, %v879, 0
    %v1017 = vsel %vm87, %v880, 0
    %v1020 = vsel %vm87, %v881, 0
    %v1023 = vsel %vm87, %v882, 0
    %v1026 = vsel %vm87, %v883, 0
    %v1029 = vsel %vm87, %v884, 0
    %v1032 = vsel %vm87, %v885, 0
    %v1035 = vsel %vm87, %v886, 0
    %v1038 = vsel %vm87, %v887, 0
    %v1041 = vsel %vm87, %v888, 0
    %v1044 = vsel %vm87, %v889, 0
    %v1047 = vsel %vm87, %v890, 0
    %v1050 = vsel %vm87, %v891, 0
    %v1053 = vsel %vm87, %v892, 0
    %v1056 = vsel %vm87, %v893, 0
    %v1059 = vsel %vm87, %v894, 0
    %v1062 = vsel %vm87, %v895, 0
    %v1065 = vsel %vm87, %v896, 0
    %v1068 = vsel %vm87, %v897, 0
    %v1071 = vsel %vm87, %v898, 0
    %v1074 = vsel %vm87, %v899, 0
    %v1077 = vsel %vm87, %v900, 0
    %v1080 = vsel %vm87, %v901, 0
    %v1083 = vsel %vm87, %v902, 0
    %v1086 = vsel %vm87, %v903, 0
    %v1089 = vsel %vm87, %v904, 0
    %v1092 = vsel %vm87, %v905, 0
    %v1095 = vsel %vm87, %v906, 0
    %v1098 = vsel %vm87, %v907, 0
    %v1101 = vsel %vm87, %v908, 0
    %vm1103 = vcmask 1043456
    %v1105 = vsel %vm1103, %v910, 0
    %1107 = vmatprep.subr.mxu0 0.0
    %1108 = vmatpush1.msra.mxu0 %v1105
    %1109 = vmatprep.subr.mxu0 0.0
    %1110 = vmatpush1.msra.mxu0 0.0
    %1111 = vmatprep.subr.mxu0 0.0
    %1112 = vmatpush1.msra.mxu0 0.0
    %1113 = vmatprep.subr.mxu0 0.0
    %1114 = vmatpush1.msra.mxu0 0.0
    %1115 = vmatprep.subr.mxu0 0.0
    %1116 = vmatpush1.msra.mxu0 0.0
    %1117 = vmatprep.subr.mxu0 0.0
    %1118 = vmatpush1.msra.mxu0 0.0
    %1119 = vmatprep.subr.mxu0 0.0
    %1120 = vmatpush1.msra.mxu0 0.0
    %1121 = vmatprep.subr.mxu0 0.0
    %1122 = vmatpush1.msra.mxu0 0.0
    %1123 = vmatprep.subr.mxu0 0.0
    %1124 = vmatpush1.msra.mxu0 0.0
    %1125 = vmatprep.subr.mxu0 0.0
    %1126 = vmatpush1.msra.mxu0 0.0
    %1127 = vmatprep.subr.mxu0 0.0
    %1128 = vmatpush1.msra.mxu0 0.0
    %1129 = vmatprep.subr.mxu0 0.0
    %1130 = vmatpush1.msra.mxu0 0.0
    %1131 = vmatprep.subr.mxu0 0.0
    %1132 = vmatpush1.msra.mxu0 0.0
    %1133 = vmatprep.subr.mxu0 0.0
    %1134 = vmatpush1.msra.mxu0 0.0
    %1135 = vmatprep.subr.mxu0 0.0
    %1136 = vmatpush1.msra.mxu0 0.0
    %1137 = vmatprep.subr.mxu0 0.0
    %1138 = vmatpush1.msra.mxu0 0.0
    %1139 = vmatprep.subr.mxu0 0.0
    %1140 = vmatpush1.msra.mxu0 0.0
    %1141 = vmatprep.subr.mxu0 0.0
    %1142 = vmatpush1.msra.mxu0 0.0
    %1143 = vmatprep.subr.mxu0 0.0
    %1144 = vmatpush1.msra.mxu0 0.0
    %1145 = vmatprep.subr.mxu0 0.0
    %1146 = vmatpush1.msra.mxu0 0.0
    %1147 = vmatprep.subr.mxu0 0.0
    %1148 = vmatpush1.msra.mxu0 0.0
    %1149 = vmatprep.subr.mxu0 0.0
    %1150 = vmatpush1.msra.mxu0 0.0
    %1151 = vmatprep.subr.mxu0 0.0
    %1152 = vmatpush1.msra.mxu0 0.0
    %1153 = vmatprep.subr.mxu0 0.0
    %1154 = vmatpush1.msra.mxu0 0.0
    %1155 = vmatprep.subr.mxu0 0.0
    %1156 = vmatpush1.msra.mxu0 0.0
    %1157 = vmatprep.subr.mxu0 0.0
    %1158 = vmatpush1.msra.mxu0 0.0
    %1159 = vmatprep.subr.mxu0 0.0
    %1160 = vmatpush1.msra.mxu0 0.0
    %1161 = vmatprep.subr.mxu0 0.0
    %1162 = vmatpush1.msra.mxu0 0.0
    %1163 = vmatprep.subr.mxu0 0.0
    %1164 = vmatpush1.msra.mxu0 0.0
    %1165 = vmatprep.subr.mxu0 0.0
    %1166 = vmatpush1.msra.mxu0 0.0
    %1167 = vmatprep.subr.mxu0 0.0
    %1168 = vmatpush1.msra.mxu0 0.0
    %1169 = vmatprep.subr.mxu0 0.0
    %1170 = vmatpush1.msra.mxu0 0.0
    %1171 = vmatprep.mubr.f32.mxu0 0.0
    %1172 = vmatmul.mubr.f32.gmra.mrb[0].mxu0 %v912
    %v1173 = vpop.f32.mrb[0].mxu0
    %v1174 = vadd.f32 0.0, %v1173
    %v1175 = vpop.f32.mrb[0].mxu0
    %1176 = vmatprep.mubr.f32.mxu0 0.0
    %1177 = vmatmul.mubr.f32.gmra.mrb[0].mxu0 %v915
    %v1178 = vpop.f32.mrb[0].mxu0
    %v1179 = vadd.f32 0.0, %v1178
    %v1180 = vpop.f32.mrb[0].mxu0
    %1181 = vmatprep.mubr.f32.mxu0 0.0
    %1182 = vmatmul.mubr.f32.gmra.mrb[0].mxu0 %v918
    %v1183 = vpop.f32.mrb[0].mxu0
    %v1184 = vadd.f32 0.0, %v1183
    %v1185 = vpop.f32.mrb[0].mxu0
    %1186 = vmatprep.mubr.f32.mxu0 0.0
    %1187 = vmatmul.mubr.f32.gmra.mrb[0].mxu0 %v921
    %v1188 = vpop.f32.mrb[0].mxu0
    %v1189 = vadd.f32 0.0, %v1188
    %v1190 = vpop.f32.mrb[0].mxu0
    %1191 = vmatprep.mubr.f32.mxu0 0.0
    %1192 = vmatmul.mubr.f32.gmra.mrb[0].mxu0 %v924
    %v1193 = vpop.f32.mrb[0].mxu0
    %v1194 = vadd.f32 0.0, %v1193
    %v1195 = vpop.f32.mrb[0].mxu0
    %1196 = vmatprep.mubr.f32.mxu0 0.0
    %1197 = vmatmul.mubr.f32.gmra.mrb[0].mxu0 %v927
    %v1198 = vpop.f32.mrb[0].mxu0
    %v1199 = vadd.f32 0.0, %v1198
    %v1200 = vpop.f32.mrb[0].mxu0
    %1201 = vmatprep.mubr.f32.mxu0 0.0
    %1202 = vmatmul.mubr.f32.gmra.mrb[0].mxu0 %v930
    %v1203 = vpop.f32.mrb[0].mxu0
    %v1204 = vadd.f32 0.0, %v1203
    %v1205 = vpop.f32.mrb[0].mxu0
    %1206 = vmatprep.mubr.f32.mxu0 0.0
    %1207 = vmatmul.mubr.f32.gmra.mrb[0].mxu0 %v933
    %v1208 = vpop.f32.mrb[0].mxu0
    %v1209 = vadd.f32 0.0, %v1208
    %v1210 = vpop.f32.mrb[0].mxu0
    %1211 = vmatprep.mubr.f32.mxu0 0.0
    %1212 = vmatmul.mubr.f32.gmra.mrb[0].mxu0 %v936
    %v1213 = vpop.f32.mrb[0].mxu0
    %v1214 = vadd.f32 0.0, %v1213
    %v1215 = vpop.f32.mrb[0].mxu0
    %1216 = vmatprep.mubr.f32.mxu0 0.0
    %1217 = vmatmul.mubr.f32.gmra.mrb[0].mxu0 %v939
    %v1218 = vpop.f32.mrb[0].mxu0
    %v1219 = vadd.f32 0.0, %v1218
    %v1220 = vpop.f32.mrb[0].mxu0
    %1221 = vmatprep.mubr.f32.mxu0 0.0
    %1222 = vmatmul.mubr.f32.gmra.mrb[0].mxu0 %v942
    %v1223 = vpop.f32.mrb[0].mxu0
    %v1224 = vadd.f32 0.0, %v1223
    %v1225 = vpop.f32.mrb[0].mxu0
    %1226 = vmatprep.mubr.f32.mxu0 0.0
    %1227 = vmatmul.mubr.f32.gmra.mrb[0].mxu0 %v945
    %v1228 = vpop.f32.mrb[0].mxu0
    %v1229 = vadd.f32 0.0, %v1228
    %v1230 = vpop.f32.mrb[0].mxu0
    %1231 = vmatprep.mubr.f32.mxu0 0.0
    %1232 = vmatmul.mubr.f32.gmra.mrb[0].mxu0 %v948
    %v1233 = vpop.f32.mrb[0].mxu0
    %v1234 = vadd.f32 0.0, %v1233
    %v1235 = vpop.f32.mrb[0].mxu0
    %1236 = vmatprep.mubr.f32.mxu0 0.0
    %1237 = vmatmul.mubr.f32.gmra.mrb[0].mxu0 %v951
    %v1238 = vpop.f32.mrb[0].mxu0
    %v1239 = vadd.f32 0.0, %v1238
    %v1240 = vpop.f32.mrb[0].mxu0
    %1241 = vmatprep.mubr.f32.mxu0 0.0
    %1242 = vmatmul.mubr.f32.gmra.mrb[0].mxu0 %v954
    %v1243 = vpop.f32.mrb[0].mxu0
    %v1244 = vadd.f32 0.0, %v1243
    %v1245 = vpop.f32.mrb[0].mxu0
    %1246 = vmatprep.mubr.f32.mxu0 0.0
    %1247 = vmatmul.mubr.f32.gmra.mrb[0].mxu0 %v957
    %v1248 = vpop.f32.mrb[0].mxu0
    %v1249 = vadd.f32 0.0, %v1248
    %v1250 = vpop.f32.mrb[0].mxu0
    %1251 = vmatprep.mubr.f32.mxu0 0.0
    %1252 = vmatmul.mubr.f32.gmra.mrb[0].mxu0 %v960
    %v1253 = vpop.f32.mrb[0].mxu0
    %v1254 = vadd.f32 0.0, %v1253
    %v1255 = vpop.f32.mrb[0].mxu0
    %1256 = vmatprep.mubr.f32.mxu0 0.0
    %1257 = vmatmul.mubr.f32.gmra.mrb[0].mxu0 %v963
    %v1258 = vpop.f32.mrb[0].mxu0
    %v1259 = vadd.f32 0.0, %v1258
    %v1260 = vpop.f32.mrb[0].mxu0
    %1261 = vmatprep.mubr.f32.mxu0 0.0
    %1262 = vmatmul.mubr.f32.gmra.mrb[0].mxu0 %v966
    %v1263 = vpop.f32.mrb[0].mxu0
    %v1264 = vadd.f32 0.0, %v1263
    %v1265 = vpop.f32.mrb[0].mxu0
    %1266 = vmatprep.mubr.f32.mxu0 0.0
    %1267 = vmatmul.mubr.f32.gmra.mrb[0].mxu0 %v969
    %v1268 = vpop.f32.mrb[0].mxu0
    %v1269 = vadd.f32 0.0, %v1268
    %v1270 = vpop.f32.mrb[0].mxu0
    %1271 = vmatprep.mubr.f32.mxu0 0.0
    %1272 = vmatmul.mubr.f32.gmra.mrb[0].mxu0 %v972
    %v1273 = vpop.f32.mrb[0].mxu0
    %v1274 = vadd.f32 0.0, %v1273
    %v1275 = vpop.f32.mrb[0].mxu0
    %1276 = vmatprep.mubr.f32.mxu0 0.0
    %1277 = vmatmul.mubr.f32.gmra.mrb[0].mxu0 %v975
    %v1278 = vpop.f32.mrb[0].mxu0
    %v1279 = vadd.f32 0.0, %v1278
    %v1280 = vpop.f32.mrb[0].mxu0
    %1281 = vmatprep.mubr.f32.mxu0 0.0
    %1282 = vmatmul.mubr.f32.gmra.mrb[0].mxu0 %v978
    %v1283 = vpop.f32.mrb[0].mxu0
    %v1284 = vadd.f32 0.0, %v1283
    %v1285 = vpop.f32.mrb[0].mxu0
    %1286 = vmatprep.mubr.f32.mxu0 0.0
    %1287 = vmatmul.mubr.f32.gmra.mrb[0].mxu0 %v981
    %v1288 = vpop.f32.mrb[0].mxu0
    %v1289 = vadd.f32 0.0, %v1288
    %v1290 = vpop.f32.mrb[0].mxu0
    %1291 = vmatprep.mubr.f32.mxu0 0.0
    %1292 = vmatmul.mubr.f32.gmra.mrb[0].mxu0 %v984
    %v1293 = vpop.f32.mrb[0].mxu0
    %v1294 = vadd.f32 0.0, %v1293
    %v1295 = vpop.f32.mrb[0].mxu0
    %1296 = vmatprep.mubr.f32.mxu0 0.0
    %1297 = vmatmul.mubr.f32.gmra.mrb[0].mxu0 %v987
    %v1298 = vpop.f32.mrb[0].mxu0
    %v1299 = vadd.f32 0.0, %v1298
    %v1300 = vpop.f32.mrb[0].mxu0
    %1301 = vmatprep.mubr.f32.mxu0 0.0
    %1302 = vmatmul.mubr.f32.gmra.mrb[0].mxu0 %v990
    %v1303 = vpop.f32.mrb[0].mxu0
    %v1304 = vadd.f32 0.0, %v1303
    %v1305 = vpop.f32.mrb[0].mxu0
    %1306 = vmatprep.mubr.f32.mxu0 0.0
    %1307 = vmatmul.mubr.f32.gmra.mrb[0].mxu0 %v993
    %v1308 = vpop.f32.mrb[0].mxu0
    %v1309 = vadd.f32 0.0, %v1308
    %v1310 = vpop.f32.mrb[0].mxu0
    %1311 = vmatprep.mubr.f32.mxu0 0.0
    %1312 = vmatmul.mubr.f32.gmra.mrb[0].mxu0 %v996
    %v1313 = vpop.f32.mrb[0].mxu0
    %v1314 = vadd.f32 0.0, %v1313
    %v1315 = vpop.f32.mrb[0].mxu0
    %1316 = vmatprep.mubr.f32.mxu0 0.0
    %1317 = vmatmul.mubr.f32.gmra.mrb[0].mxu0 %v999
    %v1318 = vpop.f32.mrb[0].mxu0
    %v1319 = vadd.f32 0.0, %v1318
    %v1320 = vpop.f32.mrb[0].mxu0
    %1321 = vmatprep.mubr.f32.mxu0 0.0
    %1322 = vmatmul.mubr.f32.gmra.mrb[0].mxu0 %v1002
    %v1323 = vpop.f32.mrb[0].mxu0
    %v1324 = vadd.f32 0.0, %v1323
    %v1325 = vpop.f32.mrb[0].mxu0
    %1326 = vmatprep.mubr.f32.mxu0 0.0
    %1327 = vmatmul.mubr.f32.gmra.mrb[0].mxu0 %v1005
    %v1328 = vpop.f32.mrb[0].mxu0
    %v1329 = vadd.f32 0.0, %v1328
    %v1330 = vpop.f32.mrb[0].mxu0
    %1331 = vmatprep.mubr.f32.mxu0 0.0
    %1332 = vmatmul.mubr.f32.gmra.mrb[0].mxu0 %v1008
    %v1333 = vpop.f32.mrb[0].mxu0
    %v1334 = vadd.f32 0.0, %v1333
    %v1335 = vpop.f32.mrb[0].mxu0
    %1336 = vmatprep.mubr.f32.mxu0 0.0
    %1337 = vmatmul.mubr.f32.gmra.mrb[0].mxu0 %v1011
    %v1338 = vpop.f32.mrb[0].mxu0
    %v1339 = vadd.f32 0.0, %v1338
    %v1340 = vpop.f32.mrb[0].mxu0
    %1341 = vmatprep.mubr.f32.mxu0 0.0
    %1342 = vmatmul.mubr.f32.gmra.mrb[0].mxu0 %v1014
    %v1343 = vpop.f32.mrb[0].mxu0
    %v1344 = vadd.f32 0.0, %v1343
    %v1345 = vpop.f32.mrb[0].mxu0
    %1346 = vmatprep.mubr.f32.mxu0 0.0
    %1347 = vmatmul.mubr.f32.gmra.mrb[0].mxu0 %v1017
    %v1348 = vpop.f32.mrb[0].mxu0
    %v1349 = vadd.f32 0.0, %v1348
    %v1350 = vpop.f32.mrb[0].mxu0
    %1351 = vmatprep.mubr.f32.mxu0 0.0
    %1352 = vmatmul.mubr.f32.gmra.mrb[0].mxu0 %v1020
    %v1353 = vpop.f32.mrb[0].mxu0
    %v1354 = vadd.f32 0.0, %v1353
    %v1355 = vpop.f32.mrb[0].mxu0
    %1356 = vmatprep.mubr.f32.mxu0 0.0
    %1357 = vmatmul.mubr.f32.gmra.mrb[0].mxu0 %v1023
    %v1358 = vpop.f32.mrb[0].mxu0
    %v1359 = vadd.f32 0.0, %v1358
    %v1360 = vpop.f32.mrb[0].mxu0
    %1361 = vmatprep.mubr.f32.mxu0 0.0
    %1362 = vmatmul.mubr.f32.gmra.mrb[0].mxu0 %v1026
    %v1363 = vpop.f32.mrb[0].mxu0
    %v1364 = vadd.f32 0.0, %v1363
    %v1365 = vpop.f32.mrb[0].mxu0
    %1366 = vmatprep.mubr.f32.mxu0 0.0
    %1367 = vmatmul.mubr.f32.gmra.mrb[0].mxu0 %v1029
    %v1368 = vpop.f32.mrb[0].mxu0
    %v1369 = vadd.f32 0.0, %v1368
    %v1370 = vpop.f32.mrb[0].mxu0
    %1371 = vmatprep.mubr.f32.mxu0 0.0
    %1372 = vmatmul.mubr.f32.gmra.mrb[0].mxu0 %v1032
    %v1373 = vpop.f32.mrb[0].mxu0
    %v1374 = vadd.f32 0.0, %v1373
    %v1375 = vpop.f32.mrb[0].mxu0
    %1376 = vmatprep.mubr.f32.mxu0 0.0
    %1377 = vmatmul.mubr.f32.gmra.mrb[0].mxu0 %v1035
    %v1378 = vpop.f32.mrb[0].mxu0
    %v1379 = vadd.f32 0.0, %v1378
    %v1380 = vpop.f32.mrb[0].mxu0
    %1381 = vmatprep.mubr.f32.mxu0 0.0
    %1382 = vmatmul.mubr.f32.gmra.mrb[0].mxu0 %v1038
    %v1383 = vpop.f32.mrb[0].mxu0
    %v1384 = vadd.f32 0.0, %v1383
    %v1385 = vpop.f32.mrb[0].mxu0
    %1386 = vmatprep.mubr.f32.mxu0 0.0
    %1387 = vmatmul.mubr.f32.gmra.mrb[0].mxu0 %v1041
    %v1388 = vpop.f32.mrb[0].mxu0
    %v1389 = vadd.f32 0.0, %v1388
    %v1390 = vpop.f32.mrb[0].mxu0
    %1391 = vmatprep.mubr.f32.mxu0 0.0
    %1392 = vmatmul.mubr.f32.gmra.mrb[0].mxu0 %v1044
    %v1393 = vpop.f32.mrb[0].mxu0
    %v1394 = vadd.f32 0.0, %v1393
    %v1395 = vpop.f32.mrb[0].mxu0
    %1396 = vmatprep.mubr.f32.mxu0 0.0
    %1397 = vmatmul.mubr.f32.gmra.mrb[0].mxu0 %v1047
    %v1398 = vpop.f32.mrb[0].mxu0
    %v1399 = vadd.f32 0.0, %v1398
    %v1400 = vpop.f32.mrb[0].mxu0
    %1401 = vmatprep.mubr.f32.mxu0 0.0
    %1402 = vmatmul.mubr.f32.gmra.mrb[0].mxu0 %v1050
    %v1403 = vpop.f32.mrb[0].mxu0
    %v1404 = vadd.f32 0.0, %v1403
    %v1405 = vpop.f32.mrb[0].mxu0
    %1406 = vmatprep.mubr.f32.mxu0 0.0
    %1407 = vmatmul.mubr.f32.gmra.mrb[0].mxu0 %v1053
    %v1408 = vpop.f32.mrb[0].mxu0
    %v1409 = vadd.f32 0.0, %v1408
    %v1410 = vpop.f32.mrb[0].mxu0
    %1411 = vmatprep.mubr.f32.mxu0 0.0
    %1412 = vmatmul.mubr.f32.gmra.mrb[0].mxu0 %v1056
    %v1413 = vpop.f32.mrb[0].mxu0
    %v1414 = vadd.f32 0.0, %v1413
    %v1415 = vpop.f32.mrb[0].mxu0
    %1416 = vmatprep.mubr.f32.mxu0 0.0
    %1417 = vmatmul.mubr.f32.gmra.mrb[0].mxu0 %v1059
    %v1418 = vpop.f32.mrb[0].mxu0
    %v1419 = vadd.f32 0.0, %v1418
    %v1420 = vpop.f32.mrb[0].mxu0
    %1421 = vmatprep.mubr.f32.mxu0 0.0
    %1422 = vmatmul.mubr.f32.gmra.mrb[0].mxu0 %v1062
    %v1423 = vpop.f32.mrb[0].mxu0
    %v1424 = vadd.f32 0.0, %v1423
    %v1425 = vpop.f32.mrb[0].mxu0
    %1426 = vmatprep.mubr.f32.mxu0 0.0
    %1427 = vmatmul.mubr.f32.gmra.mrb[0].mxu0 %v1065
    %v1428 = vpop.f32.mrb[0].mxu0
    %v1429 = vadd.f32 0.0, %v1428
    %v1430 = vpop.f32.mrb[0].mxu0
    %1431 = vmatprep.mubr.f32.mxu0 0.0
    %1432 = vmatmul.mubr.f32.gmra.mrb[0].mxu0 %v1068
    %v1433 = vpop.f32.mrb[0].mxu0
    %v1434 = vadd.f32 0.0, %v1433
    %v1435 = vpop.f32.mrb[0].mxu0
    %1436 = vmatprep.mubr.f32.mxu0 0.0
    %1437 = vmatmul.mubr.f32.gmra.mrb[0].mxu0 %v1071
    %v1438 = vpop.f32.mrb[0].mxu0
    %v1439 = vadd.f32 0.0, %v1438
    %v1440 = vpop.f32.mrb[0].mxu0
    %1441 = vmatprep.mubr.f32.mxu0 0.0
    %1442 = vmatmul.mubr.f32.gmra.mrb[0].mxu0 %v1074
    %v1443 = vpop.f32.mrb[0].mxu0
    %v1444 = vadd.f32 0.0, %v1443
    %v1445 = vpop.f32.mrb[0].mxu0
    %1446 = vmatprep.mubr.f32.mxu0 0.0
    %1447 = vmatmul.mubr.f32.gmra.mrb[0].mxu0 %v1077
    %v1448 = vpop.f32.mrb[0].mxu0
    %v1449 = vadd.f32 0.0, %v1448
    %v1450 = vpop.f32.mrb[0].mxu0
    %1451 = vmatprep.mubr.f32.mxu0 0.0
    %1452 = vmatmul.mubr.f32.gmra.mrb[0].mxu0 %v1080
    %v1453 = vpop.f32.mrb[0].mxu0
    %v1454 = vadd.f32 0.0, %v1453
    %v1455 = vpop.f32.mrb[0].mxu0
    %1456 = vmatprep.mubr.f32.mxu0 0.0
    %1457 = vmatmul.mubr.f32.gmra.mrb[0].mxu0 %v1083
    %v1458 = vpop.f32.mrb[0].mxu0
    %v1459 = vadd.f32 0.0, %v1458
    %v1460 = vpop.f32.mrb[0].mxu0
    %1461 = vmatprep.mubr.f32.mxu0 0.0
    %1462 = vmatmul.mubr.f32.gmra.mrb[0].mxu0 %v1086
    %v1463 = vpop.f32.mrb[0].mxu0
    %v1464 = vadd.f32 0.0, %v1463
    %v1465 = vpop.f32.mrb[0].mxu0
    %1466 = vmatprep.mubr.f32.mxu0 0.0
    %1467 = vmatmul.mubr.f32.gmra.mrb[0].mxu0 %v1089
    %v1468 = vpop.f32.mrb[0].mxu0
    %v1469 = vadd.f32 0.0, %v1468
    %v1470 = vpop.f32.mrb[0].mxu0
    %1471 = vmatprep.mubr.f32.mxu0 0.0
    %1472 = vmatmul.mubr.f32.gmra.mrb[0].mxu0 %v1092
    %v1473 = vpop.f32.mrb[0].mxu0
    %v1474 = vadd.f32 0.0, %v1473
    %v1475 = vpop.f32.mrb[0].mxu0
    %1476 = vmatprep.mubr.f32.mxu0 0.0
    %1477 = vmatmul.mubr.f32.gmra.mrb[0].mxu0 %v1095
    %v1478 = vpop.f32.mrb[0].mxu0
    %v1479 = vadd.f32 0.0, %v1478
    %v1480 = vpop.f32.mrb[0].mxu0
    %1481 = vmatprep.mubr.f32.mxu0 0.0
    %1482 = vmatmul.mubr.f32.gmra.mrb[0].mxu0 %v1098
    %v1483 = vpop.f32.mrb[0].mxu0
    %v1484 = vadd.f32 0.0, %v1483
    %v1485 = vpop.f32.mrb[0].mxu0
    %1486 = vmatprep.mubr.f32.mxu0 0.0
    %1487 = vmatmul.mubr.f32.gmra.mrb[0].mxu0 %v1101
    %v1488 = vpop.f32.mrb[0].mxu0
    %v1489 = vadd.f32 0.0, %v1488
    %v1490 = vpop.f32.mrb[0].mxu0
    %1491 = vdwg.mxu0
    %v1493 = vsel %vm87, %v780, 0
    %v1496 = vsel %vm87, %v781, 0
    %v1499 = vsel %vm87, %v782, 0
    %v1502 = vsel %vm87, %v783, 0
    %v1505 = vsel %vm87, %v784, 0
    %v1508 = vsel %vm87, %v785, 0
    %v1511 = vsel %vm87, %v786, 0
    %v1514 = vsel %vm87, %v787, 0
    %v1517 = vsel %vm87, %v788, 0
    %v1520 = vsel %vm87, %v789, 0
    %v1523 = vsel %vm87, %v790, 0
    %v1526 = vsel %vm87, %v791, 0
    %v1529 = vsel %vm87, %v792, 0
    %v1532 = vsel %vm87, %v793, 0
    %v1535 = vsel %vm87, %v794, 0
    %v1538 = vsel %vm87, %v795, 0
    %v1541 = vsel %vm87, %v796, 0
    %v1544 = vsel %vm87, %v797, 0
    %v1547 = vsel %vm87, %v798, 0
    %v1550 = vsel %vm87, %v799, 0
    %v1553 = vsel %vm87, %v800, 0
    %v1556 = vsel %vm87, %v801, 0
    %v1559 = vsel %vm87, %v802, 0
    %v1562 = vsel %vm87, %v803, 0
    %v1565 = vsel %vm87, %v804, 0
    %v1568 = vsel %vm87, %v805, 0
    %v1571 = vsel %vm87, %v806, 0
    %v1574 = vsel %vm87, %v807, 0
    %v1577 = vsel %vm87, %v808, 0
    %v1580 = vsel %vm87, %v809, 0
    %v1583 = vsel %vm87, %v810, 0
    %v1586 = vsel %vm87, %v811, 0
    %v1589 = vsel %vm87, %v812, 0
    %v1592 = vsel %vm87, %v813, 0
    %v1595 = vsel %vm87, %v814, 0
    %v1598 = vsel %vm87, %v815, 0
    %v1601 = vsel %vm87, %v816, 0
    %v1604 = vsel %vm87, %v817, 0
    %v1607 = vsel %vm87, %v818, 0
    %v1610 = vsel %vm87, %v819, 0
    %v1613 = vsel %vm87, %v820, 0
    %v1616 = vsel %vm87, %v821, 0
    %v1619 = vsel %vm87, %v822, 0
    %v1622 = vsel %vm87, %v823, 0
    %v1625 = vsel %vm87, %v824, 0
    %v1628 = vsel %vm87, %v825, 0
    %v1631 = vsel %vm87, %v826, 0
    %v1634 = vsel %vm87, %v827, 0
    %v1637 = vsel %vm87, %v828, 0
    %v1640 = vsel %vm87, %v829, 0
    %v1643 = vsel %vm87, %v830, 0
    %v1646 = vsel %vm87, %v831, 0
    %v1649 = vsel %vm87, %v832, 0
    %v1652 = vsel %vm87, %v833, 0
    %v1655 = vsel %vm87, %v834, 0
    %v1658 = vsel %vm87, %v835, 0
    %v1661 = vsel %vm87, %v836, 0
    %v1664 = vsel %vm87, %v837, 0
    %v1667 = vsel %vm87, %v838, 0
    %v1670 = vsel %vm87, %v839, 0
    %v1673 = vsel %vm87, %v840, 0
    %v1676 = vsel %vm87, %v841, 0
    %v1679 = vsel %vm87, %v842, 0
    %v1682 = vsel %vm87, %v843, 0
    %v1685 = vsel %vm1103, %v844, 0
    %1687 = vmatprep.subr.mxu0 0.0
    %1688 = vmatpush1.msra.mxu0 %v1685
    %1689 = vmatprep.subr.mxu0 0.0
    %1690 = vmatpush1.msra.mxu0 0.0
    %1691 = vmatprep.subr.mxu0 0.0
    %1692 = vmatpush1.msra.mxu0 0.0
    %1693 = vmatprep.subr.mxu0 0.0
    %1694 = vmatpush1.msra.mxu0 0.0
    %1695 = vmatprep.subr.mxu0 0.0
    %1696 = vmatpush1.msra.mxu0 0.0
    %1697 = vmatprep.subr.mxu0 0.0
    %1698 = vmatpush1.msra.mxu0 0.0
    %1699 = vmatprep.subr.mxu0 0.0
    %1700 = vmatpush1.msra.mxu0 0.0
    %1701 = vmatprep.subr.mxu0 0.0
    %1702 = vmatpush1.msra.mxu0 0.0
    %1703 = vmatprep.subr.mxu0 0.0
    %1704 = vmatpush1.msra.mxu0 0.0
    %1705 = vmatprep.subr.mxu0 0.0
    %1706 = vmatpush1.msra.mxu0 0.0
    %1707 = vmatprep.subr.mxu0 0.0
    %1708 = vmatpush1.msra.mxu0 0.0
    %1709 = vmatprep.subr.mxu0 0.0
    %1710 = vmatpush1.msra.mxu0 0.0
    %1711 = vmatprep.subr.mxu0 0.0
    %1712 = vmatpush1.msra.mxu0 0.0
    %1713 = vmatprep.subr.mxu0 0.0
    %1714 = vmatpush1.msra.mxu0 0.0
    %1715 = vmatprep.subr.mxu0 0.0
    %1716 = vmatpush1.msra.mxu0 0.0
    %1717 = vmatprep.subr.mxu0 0.0
    %1718 = vmatpush1.msra.mxu0 0.0
    %1719 = vmatprep.subr.mxu0 0.0
    %1720 = vmatpush1.msra.mxu0 0.0
    %1721 = vmatprep.subr.mxu0 0.0
    %1722 = vmatpush1.msra.mxu0 0.0
    %1723 = vmatprep.subr.mxu0 0.0
    %1724 = vmatpush1.msra.mxu0 0.0
    %1725 = vmatprep.subr.mxu0 0.0
    %1726 = vmatpush1.msra.mxu0 0.0
    %1727 = vmatprep.subr.mxu0 0.0
    %1728 = vmatpush1.msra.mxu0 0.0
    %1729 = vmatprep.subr.mxu0 0.0
    %1730 = vmatpush1.msra.mxu0 0.0
    %1731 = vmatprep.subr.mxu0 0.0
    %1732 = vmatpush1.msra.mxu0 0.0
    %1733 = vmatprep.subr.mxu0 0.0
    %1734 = vmatpush1.msra.mxu0 0.0
    %1735 = vmatprep.subr.mxu0 0.0
    %1736 = vmatpush1.msra.mxu0 0.0
    %1737 = vmatprep.subr.mxu0 0.0
    %1738 = vmatpush1.msra.mxu0 0.0
    %1739 = vmatprep.subr.mxu0 0.0
    %1740 = vmatpush1.msra.mxu0 0.0
    %1741 = vmatprep.subr.mxu0 0.0
    %1742 = vmatpush1.msra.mxu0 0.0
    %1743 = vmatprep.subr.mxu0 0.0
    %1744 = vmatpush1.msra.mxu0 0.0
    %1745 = vmatprep.subr.mxu0 0.0
    %1746 = vmatpush1.msra.mxu0 0.0
    %1747 = vmatprep.subr.mxu0 0.0
    %1748 = vmatpush1.msra.mxu0 0.0
    %1749 = vmatprep.subr.mxu0 0.0
    %1750 = vmatpush1.msra.mxu0 0.0
    %1751 = vmatprep.mubr.f32.mxu0 0.0
    %1752 = vmatmul.mubr.f32.gmra.mrb[0].mxu0 %v1493
    %v1753 = vpop.f32.mrb[0].mxu0
    %v1754 = vadd.f32 %v1174, %v1753
    %v1755 = vpop.f32.mrb[0].mxu0
    %1756 = vmatprep.mubr.f32.mxu0 0.0
    %1757 = vmatmul.mubr.f32.gmra.mrb[0].mxu0 %v1496
    %v1758 = vpop.f32.mrb[0].mxu0
    %v1759 = vadd.f32 %v1179, %v1758
    %v1760 = vpop.f32.mrb[0].mxu0
    %1761 = vmatprep.mubr.f32.mxu0 0.0
    %1762 = vmatmul.mubr.f32.gmra.mrb[0].mxu0 %v1499
    %v1763 = vpop.f32.mrb[0].mxu0
    %v1764 = vadd.f32 %v1184, %v1763
    %v1765 = vpop.f32.mrb[0].mxu0
    %1766 = vmatprep.mubr.f32.mxu0 0.0
    %1767 = vmatmul.mubr.f32.gmra.mrb[0].mxu0 %v1502
    %v1768 = vpop.f32.mrb[0].mxu0
    %v1769 = vadd.f32 %v1189, %v1768
    %v1770 = vpop.f32.mrb[0].mxu0
    %1771 = vmatprep.mubr.f32.mxu0 0.0
    %1772 = vmatmul.mubr.f32.gmra.mrb[0].mxu0 %v1505
    %v1773 = vpop.f32.mrb[0].mxu0
    %v1774 = vadd.f32 %v1194, %v1773
    %v1775 = vpop.f32.mrb[0].mxu0
    %1776 = vmatprep.mubr.f32.mxu0 0.0
    %1777 = vmatmul.mubr.f32.gmra.mrb[0].mxu0 %v1508
    %v1778 = vpop.f32.mrb[0].mxu0
    %v1779 = vadd.f32 %v1199, %v1778
    %v1780 = vpop.f32.mrb[0].mxu0
    %1781 = vmatprep.mubr.f32.mxu0 0.0
    %1782 = vmatmul.mubr.f32.gmra.mrb[0].mxu0 %v1511
    %v1783 = vpop.f32.mrb[0].mxu0
    %v1784 = vadd.f32 %v1204, %v1783
    %v1785 = vpop.f32.mrb[0].mxu0
    %1786 = vmatprep.mubr.f32.mxu0 0.0
    %1787 = vmatmul.mubr.f32.gmra.mrb[0].mxu0 %v1514
    %v1788 = vpop.f32.mrb[0].mxu0
    %v1789 = vadd.f32 %v1209, %v1788
    %v1790 = vpop.f32.mrb[0].mxu0
    %1791 = vmatprep.mubr.f32.mxu0 0.0
    %1792 = vmatmul.mubr.f32.gmra.mrb[0].mxu0 %v1517
    %v1793 = vpop.f32.mrb[0].mxu0
    %v1794 = vadd.f32 %v1214, %v1793
    %v1795 = vpop.f32.mrb[0].mxu0
    %1796 = vmatprep.mubr.f32.mxu0 0.0
    %1797 = vmatmul.mubr.f32.gmra.mrb[0].mxu0 %v1520
    %v1798 = vpop.f32.mrb[0].mxu0
    %v1799 = vadd.f32 %v1219, %v1798
    %v1800 = vpop.f32.mrb[0].mxu0
    %1801 = vmatprep.mubr.f32.mxu0 0.0
    %1802 = vmatmul.mubr.f32.gmra.mrb[0].mxu0 %v1523
    %v1803 = vpop.f32.mrb[0].mxu0
    %v1804 = vadd.f32 %v1224, %v1803
    %v1805 = vpop.f32.mrb[0].mxu0
    %1806 = vmatprep.mubr.f32.mxu0 0.0
    %1807 = vmatmul.mubr.f32.gmra.mrb[0].mxu0 %v1526
    %v1808 = vpop.f32.mrb[0].mxu0
    %v1809 = vadd.f32 %v1229, %v1808
    %v1810 = vpop.f32.mrb[0].mxu0
    %1811 = vmatprep.mubr.f32.mxu0 0.0
    %1812 = vmatmul.mubr.f32.gmra.mrb[0].mxu0 %v1529
    %v1813 = vpop.f32.mrb[0].mxu0
    %v1814 = vadd.f32 %v1234, %v1813
    %v1815 = vpop.f32.mrb[0].mxu0
    %1816 = vmatprep.mubr.f32.mxu0 0.0
    %1817 = vmatmul.mubr.f32.gmra.mrb[0].mxu0 %v1532
    %v1818 = vpop.f32.mrb[0].mxu0
    %v1819 = vadd.f32 %v1239, %v1818
    %v1820 = vpop.f32.mrb[0].mxu0
    %1821 = vmatprep.mubr.f32.mxu0 0.0
    %1822 = vmatmul.mubr.f32.gmra.mrb[0].mxu0 %v1535
    %v1823 = vpop.f32.mrb[0].mxu0
    %v1824 = vadd.f32 %v1244, %v1823
    %v1825 = vpop.f32.mrb[0].mxu0
    %1826 = vmatprep.mubr.f32.mxu0 0.0
    %1827 = vmatmul.mubr.f32.gmra.mrb[0].mxu0 %v1538
    %v1828 = vpop.f32.mrb[0].mxu0
    %v1829 = vadd.f32 %v1249, %v1828
    %v1830 = vpop.f32.mrb[0].mxu0
    %1831 = vmatprep.mubr.f32.mxu0 0.0
    %1832 = vmatmul.mubr.f32.gmra.mrb[0].mxu0 %v1541
    %v1833 = vpop.f32.mrb[0].mxu0
    %v1834 = vadd.f32 %v1254, %v1833
    %v1835 = vpop.f32.mrb[0].mxu0
    %1836 = vmatprep.mubr.f32.mxu0 0.0
    %1837 = vmatmul.mubr.f32.gmra.mrb[0].mxu0 %v1544
    %v1838 = vpop.f32.mrb[0].mxu0
    %v1839 = vadd.f32 %v1259, %v1838
    %v1840 = vpop.f32.mrb[0].mxu0
    %1841 = vmatprep.mubr.f32.mxu0 0.0
    %1842 = vmatmul.mubr.f32.gmra.mrb[0].mxu0 %v1547
    %v1843 = vpop.f32.mrb[0].mxu0
    %v1844 = vadd.f32 %v1264, %v1843
    %v1845 = vpop.f32.mrb[0].mxu0
    %1846 = vmatprep.mubr.f32.mxu0 0.0
    %1847 = vmatmul.mubr.f32.gmra.mrb[0].mxu0 %v1550
    %v1848 = vpop.f32.mrb[0].mxu0
    %v1849 = vadd.f32 %v1269, %v1848
    %v1850 = vpop.f32.mrb[0].mxu0
    %1851 = vmatprep.mubr.f32.mxu0 0.0
    %1852 = vmatmul.mubr.f32.gmra.mrb[0].mxu0 %v1553
    %v1853 = vpop.f32.mrb[0].mxu0
    %v1854 = vadd.f32 %v1274, %v1853
    %v1855 = vpop.f32.mrb[0].mxu0
    %1856 = vmatprep.mubr.f32.mxu0 0.0
    %1857 = vmatmul.mubr.f32.gmra.mrb[0].mxu0 %v1556
    %v1858 = vpop.f32.mrb[0].mxu0
    %v1859 = vadd.f32 %v1279, %v1858
    %v1860 = vpop.f32.mrb[0].mxu0
    %1861 = vmatprep.mubr.f32.mxu0 0.0
    %1862 = vmatmul.mubr.f32.gmra.mrb[0].mxu0 %v1559
    %v1863 = vpop.f32.mrb[0].mxu0
    %v1864 = vadd.f32 %v1284, %v1863
    %v1865 = vpop.f32.mrb[0].mxu0
    %1866 = vmatprep.mubr.f32.mxu0 0.0
    %1867 = vmatmul.mubr.f32.gmra.mrb[0].mxu0 %v1562
    %v1868 = vpop.f32.mrb[0].mxu0
    %v1869 = vadd.f32 %v1289, %v1868
    %v1870 = vpop.f32.mrb[0].mxu0
    %1871 = vmatprep.mubr.f32.mxu0 0.0
    %1872 = vmatmul.mubr.f32.gmra.mrb[0].mxu0 %v1565
    %v1873 = vpop.f32.mrb[0].mxu0
    %v1874 = vadd.f32 %v1294, %v1873
    %v1875 = vpop.f32.mrb[0].mxu0
    %1876 = vmatprep.mubr.f32.mxu0 0.0
    %1877 = vmatmul.mubr.f32.gmra.mrb[0].mxu0 %v1568
    %v1878 = vpop.f32.mrb[0].mxu0
    %v1879 = vadd.f32 %v1299, %v1878
    %v1880 = vpop.f32.mrb[0].mxu0
    %1881 = vmatprep.mubr.f32.mxu0 0.0
    %1882 = vmatmul.mubr.f32.gmra.mrb[0].mxu0 %v1571
    %v1883 = vpop.f32.mrb[0].mxu0
    %v1884 = vadd.f32 %v1304, %v1883
    %v1885 = vpop.f32.mrb[0].mxu0
    %1886 = vmatprep.mubr.f32.mxu0 0.0
    %1887 = vmatmul.mubr.f32.gmra.mrb[0].mxu0 %v1574
    %v1888 = vpop.f32.mrb[0].mxu0
    %v1889 = vadd.f32 %v1309, %v1888
    %v1890 = vpop.f32.mrb[0].mxu0
    %1891 = vmatprep.mubr.f32.mxu0 0.0
    %1892 = vmatmul.mubr.f32.gmra.mrb[0].mxu0 %v1577
    %v1893 = vpop.f32.mrb[0].mxu0
    %v1894 = vadd.f32 %v1314, %v1893
    %v1895 = vpop.f32.mrb[0].mxu0
    %1896 = vmatprep.mubr.f32.mxu0 0.0
    %1897 = vmatmul.mubr.f32.gmra.mrb[0].mxu0 %v1580
    %v1898 = vpop.f32.mrb[0].mxu0
    %v1899 = vadd.f32 %v1319, %v1898
    %v1900 = vpop.f32.mrb[0].mxu0
    %1901 = vmatprep.mubr.f32.mxu0 0.0
    %1902 = vmatmul.mubr.f32.gmra.mrb[0].mxu0 %v1583
    %v1903 = vpop.f32.mrb[0].mxu0
    %v1904 = vadd.f32 %v1324, %v1903
    %v1905 = vpop.f32.mrb[0].mxu0
    %1906 = vmatprep.mubr.f32.mxu0 0.0
    %1907 = vmatmul.mubr.f32.gmra.mrb[0].mxu0 %v1586
    %v1908 = vpop.f32.mrb[0].mxu0
    %v1909 = vadd.f32 %v1329, %v1908
    %v1910 = vpop.f32.mrb[0].mxu0
    %1911 = vmatprep.mubr.f32.mxu0 0.0
    %1912 = vmatmul.mubr.f32.gmra.mrb[0].mxu0 %v1589
    %v1913 = vpop.f32.mrb[0].mxu0
    %v1914 = vadd.f32 %v1334, %v1913
    %v1915 = vpop.f32.mrb[0].mxu0
    %1916 = vmatprep.mubr.f32.mxu0 0.0
    %1917 = vmatmul.mubr.f32.gmra.mrb[0].mxu0 %v1592
    %v1918 = vpop.f32.mrb[0].mxu0
    %v1919 = vadd.f32 %v1339, %v1918
    %v1920 = vpop.f32.mrb[0].mxu0
    %1921 = vmatprep.mubr.f32.mxu0 0.0
    %1922 = vmatmul.mubr.f32.gmra.mrb[0].mxu0 %v1595
    %v1923 = vpop.f32.mrb[0].mxu0
    %v1924 = vadd.f32 %v1344, %v1923
    %v1925 = vpop.f32.mrb[0].mxu0
    %1926 = vmatprep.mubr.f32.mxu0 0.0
    %1927 = vmatmul.mubr.f32.gmra.mrb[0].mxu0 %v1598
    %v1928 = vpop.f32.mrb[0].mxu0
    %v1929 = vadd.f32 %v1349, %v1928
    %v1930 = vpop.f32.mrb[0].mxu0
    %1931 = vmatprep.mubr.f32.mxu0 0.0
    %1932 = vmatmul.mubr.f32.gmra.mrb[0].mxu0 %v1601
    %v1933 = vpop.f32.mrb[0].mxu0
    %v1934 = vadd.f32 %v1354, %v1933
    %v1935 = vpop.f32.mrb[0].mxu0
    %1936 = vmatprep.mubr.f32.mxu0 0.0
    %1937 = vmatmul.mubr.f32.gmra.mrb[0].mxu0 %v1604
    %v1938 = vpop.f32.mrb[0].mxu0
    %v1939 = vadd.f32 %v1359, %v1938
    %v1940 = vpop.f32.mrb[0].mxu0
    %1941 = vmatprep.mubr.f32.mxu0 0.0
    %1942 = vmatmul.mubr.f32.gmra.mrb[0].mxu0 %v1607
    %v1943 = vpop.f32.mrb[0].mxu0
    %v1944 = vadd.f32 %v1364, %v1943
    %v1945 = vpop.f32.mrb[0].mxu0
    %1946 = vmatprep.mubr.f32.mxu0 0.0
    %1947 = vmatmul.mubr.f32.gmra.mrb[0].mxu0 %v1610
    %v1948 = vpop.f32.mrb[0].mxu0
    %v1949 = vadd.f32 %v1369, %v1948
    %v1950 = vpop.f32.mrb[0].mxu0
    %1951 = vmatprep.mubr.f32.mxu0 0.0
    %1952 = vmatmul.mubr.f32.gmra.mrb[0].mxu0 %v1613
    %v1953 = vpop.f32.mrb[0].mxu0
    %v1954 = vadd.f32 %v1374, %v1953
    %v1955 = vpop.f32.mrb[0].mxu0
    %1956 = vmatprep.mubr.f32.mxu0 0.0
    %1957 = vmatmul.mubr.f32.gmra.mrb[0].mxu0 %v1616
    %v1958 = vpop.f32.mrb[0].mxu0
    %v1959 = vadd.f32 %v1379, %v1958
    %v1960 = vpop.f32.mrb[0].mxu0
    %1961 = vmatprep.mubr.f32.mxu0 0.0
    %1962 = vmatmul.mubr.f32.gmra.mrb[0].mxu0 %v1619
    %v1963 = vpop.f32.mrb[0].mxu0
    %v1964 = vadd.f32 %v1384, %v1963
    %v1965 = vpop.f32.mrb[0].mxu0
    %1966 = vmatprep.mubr.f32.mxu0 0.0
    %1967 = vmatmul.mubr.f32.gmra.mrb[0].mxu0 %v1622
    %v1968 = vpop.f32.mrb[0].mxu0
    %v1969 = vadd.f32 %v1389, %v1968
    %v1970 = vpop.f32.mrb[0].mxu0
    %1971 = vmatprep.mubr.f32.mxu0 0.0
    %1972 = vmatmul.mubr.f32.gmra.mrb[0].mxu0 %v1625
    %v1973 = vpop.f32.mrb[0].mxu0
    %v1974 = vadd.f32 %v1394, %v1973
    %v1975 = vpop.f32.mrb[0].mxu0
    %1976 = vmatprep.mubr.f32.mxu0 0.0
    %1977 = vmatmul.mubr.f32.gmra.mrb[0].mxu0 %v1628
    %v1978 = vpop.f32.mrb[0].mxu0
    %v1979 = vadd.f32 %v1399, %v1978
    %v1980 = vpop.f32.mrb[0].mxu0
    %1981 = vmatprep.mubr.f32.mxu0 0.0
    %1982 = vmatmul.mubr.f32.gmra.mrb[0].mxu0 %v1631
    %v1983 = vpop.f32.mrb[0].mxu0
    %v1984 = vadd.f32 %v1404, %v1983
    %v1985 = vpop.f32.mrb[0].mxu0
    %1986 = vmatprep.mubr.f32.mxu0 0.0
    %1987 = vmatmul.mubr.f32.gmra.mrb[0].mxu0 %v1634
    %v1988 = vpop.f32.mrb[0].mxu0
    %v1989 = vadd.f32 %v1409, %v1988
    %v1990 = vpop.f32.mrb[0].mxu0
    %1991 = vmatprep.mubr.f32.mxu0 0.0
    %1992 = vmatmul.mubr.f32.gmra.mrb[0].mxu0 %v1637
    %v1993 = vpop.f32.mrb[0].mxu0
    %v1994 = vadd.f32 %v1414, %v1993
    %v1995 = vpop.f32.mrb[0].mxu0
    %1996 = vmatprep.mubr.f32.mxu0 0.0
    %1997 = vmatmul.mubr.f32.gmra.mrb[0].mxu0 %v1640
    %v1998 = vpop.f32.mrb[0].mxu0
    %v1999 = vadd.f32 %v1419, %v1998
    %v2000 = vpop.f32.mrb[0].mxu0
    %2001 = vmatprep.mubr.f32.mxu0 0.0
    %2002 = vmatmul.mubr.f32.gmra.mrb[0].mxu0 %v1643
    %v2003 = vpop.f32.mrb[0].mxu0
    %v2004 = vadd.f32 %v1424, %v2003
    %v2005 = vpop.f32.mrb[0].mxu0
    %2006 = vmatprep.mubr.f32.mxu0 0.0
    %2007 = vmatmul.mubr.f32.gmra.mrb[0].mxu0 %v1646
    %v2008 = vpop.f32.mrb[0].mxu0
    %v2009 = vadd.f32 %v1429, %v2008
    %v2010 = vpop.f32.mrb[0].mxu0
    %2011 = vmatprep.mubr.f32.mxu0 0.0
    %2012 = vmatmul.mubr.f32.gmra.mrb[0].mxu0 %v1649
    %v2013 = vpop.f32.mrb[0].mxu0
    %v2014 = vadd.f32 %v1434, %v2013
    %v2015 = vpop.f32.mrb[0].mxu0
    %2016 = vmatprep.mubr.f32.mxu0 0.0
    %2017 = vmatmul.mubr.f32.gmra.mrb[0].mxu0 %v1652
    %v2018 = vpop.f32.mrb[0].mxu0
    %v2019 = vadd.f32 %v1439, %v2018
    %v2020 = vpop.f32.mrb[0].mxu0
    %2021 = vmatprep.mubr.f32.mxu0 0.0
    %2022 = vmatmul.mubr.f32.gmra.mrb[0].mxu0 %v1655
    %v2023 = vpop.f32.mrb[0].mxu0
    %v2024 = vadd.f32 %v1444, %v2023
    %v2025 = vpop.f32.mrb[0].mxu0
    %2026 = vmatprep.mubr.f32.mxu0 0.0
    %2027 = vmatmul.mubr.f32.gmra.mrb[0].mxu0 %v1658
    %v2028 = vpop.f32.mrb[0].mxu0
    %v2029 = vadd.f32 %v1449, %v2028
    %v2030 = vpop.f32.mrb[0].mxu0
    %2031 = vmatprep.mubr.f32.mxu0 0.0
    %2032 = vmatmul.mubr.f32.gmra.mrb[0].mxu0 %v1661
    %v2033 = vpop.f32.mrb[0].mxu0
    %v2034 = vadd.f32 %v1454, %v2033
    %v2035 = vpop.f32.mrb[0].mxu0
    %2036 = vmatprep.mubr.f32.mxu0 0.0
    %2037 = vmatmul.mubr.f32.gmra.mrb[0].mxu0 %v1664
    %v2038 = vpop.f32.mrb[0].mxu0
    %v2039 = vadd.f32 %v1459, %v2038
    %v2040 = vpop.f32.mrb[0].mxu0
    %2041 = vmatprep.mubr.f32.mxu0 0.0
    %2042 = vmatmul.mubr.f32.gmra.mrb[0].mxu0 %v1667
    %v2043 = vpop.f32.mrb[0].mxu0
    %v2044 = vadd.f32 %v1464, %v2043
    %v2045 = vpop.f32.mrb[0].mxu0
    %2046 = vmatprep.mubr.f32.mxu0 0.0
    %2047 = vmatmul.mubr.f32.gmra.mrb[0].mxu0 %v1670
    %v2048 = vpop.f32.mrb[0].mxu0
    %v2049 = vadd.f32 %v1469, %v2048
    %v2050 = vpop.f32.mrb[0].mxu0
    %2051 = vmatprep.mubr.f32.mxu0 0.0
    %2052 = vmatmul.mubr.f32.gmra.mrb[0].mxu0 %v1673
    %v2053 = vpop.f32.mrb[0].mxu0
    %v2054 = vadd.f32 %v1474, %v2053
    %v2055 = vpop.f32.mrb[0].mxu0
    %2056 = vmatprep.mubr.f32.mxu0 0.0
    %2057 = vmatmul.mubr.f32.gmra.mrb[0].mxu0 %v1676
    %v2058 = vpop.f32.mrb[0].mxu0
    %v2059 = vadd.f32 %v1479, %v2058
    %v2060 = vpop.f32.mrb[0].mxu0
    %2061 = vmatprep.mubr.f32.mxu0 0.0
    %2062 = vmatmul.mubr.f32.gmra.mrb[0].mxu0 %v1679
    %v2063 = vpop.f32.mrb[0].mxu0
    %v2064 = vadd.f32 %v1484, %v2063
    %v2065 = vpop.f32.mrb[0].mxu0
    %2066 = vmatprep.mubr.f32.mxu0 0.0
    %2067 = vmatmul.mubr.f32.gmra.mrb[0].mxu0 %v1682
    %v2068 = vpop.f32.mrb[0].mxu0
    %v2069 = vadd.f32 %v1489, %v2068
    %v2070 = vpop.f32.mrb[0].mxu0
    %2071 = vdwg.mxu0
    %v2072 = vld [vmem:[#allocation2 + $0x2] sm:$0xff]
    %v2073 = vld [vmem:[#allocation2 + $0xa] sm:$0xff]
    %v2074 = vld [vmem:[#allocation2 + $0x1a] sm:$0xff]
    %v2075 = vld [vmem:[#allocation2 + $0x22] sm:$0xff]
    %v2076 = vld [vmem:[#allocation2 + $0x32] sm:$0xff]
    %v2077 = vld [vmem:[#allocation2 + $0x3a] sm:$0xff]
    %v2078 = vld [vmem:[#allocation2 + $0x4a] sm:$0xff]
    %v2079 = vld [vmem:[#allocation2 + $0x52] sm:$0xff]
    %v2080 = vld [vmem:[#allocation2 + $0x62] sm:$0xff]
    %v2081 = vld [vmem:[#allocation2 + $0x6a] sm:$0xff]
    %v2082 = vld [vmem:[#allocation2 + $0x7a] sm:$0xff]
    %v2083 = vld [vmem:[#allocation2 + $0x82] sm:$0xff]
    %v2084 = vld [vmem:[#allocation2 + $0x92] sm:$0xff]
    %v2085 = vld [vmem:[#allocation2 + $0x9a] sm:$0xff]
    %v2086 = vld [vmem:[#allocation2 + $0xaa] sm:$0xff]
    %v2087 = vld [vmem:[#allocation2 + $0xb2] sm:$0xff]
    %v2088 = vld [vmem:[#allocation2 + $0xc2] sm:$0xff]
    %v2089 = vld [vmem:[#allocation2 + $0xca] sm:$0xff]
    %v2090 = vld [vmem:[#allocation2 + $0xda] sm:$0xff]
    %v2091 = vld [vmem:[#allocation2 + $0xe2] sm:$0xff]
    %v2092 = vld [vmem:[#allocation2 + $0xf2] sm:$0xff]
    %v2093 = vld [vmem:[#allocation2 + $0xfa] sm:$0xff]
    %v2094 = vld [vmem:[#allocation2 + $0x10a] sm:$0xff]
    %v2095 = vld [vmem:[#allocation2 + $0x112] sm:$0xff]
    %v2096 = vld [vmem:[#allocation2 + $0x122] sm:$0xff]
    %v2097 = vld [vmem:[#allocation2 + $0x12a] sm:$0xff]
    %v2098 = vld [vmem:[#allocation2 + $0x13a] sm:$0xff]
    %v2099 = vld [vmem:[#allocation2 + $0x142] sm:$0xff]
    %v2100 = vld [vmem:[#allocation2 + $0x152] sm:$0xff]
    %v2101 = vld [vmem:[#allocation2 + $0x15a] sm:$0xff]
    %v2102 = vld [vmem:[#allocation2 + $0x16a] sm:$0xff]
    %v2103 = vld [vmem:[#allocation2 + $0x172] sm:$0xff]
    %v2104 = vld [vmem:[#allocation2 + $0x1b2] sm:$0xff]
    %v2105 = vld [vmem:[#allocation2 + $0x1ba] sm:$0xff]
    %v2106 = vld [vmem:[#allocation2 + $0x1ca] sm:$0xff]
    %v2107 = vld [vmem:[#allocation2 + $0x1d2] sm:$0xff]
    %v2108 = vld [vmem:[#allocation2 + $0x1e2] sm:$0xff]
    %v2109 = vld [vmem:[#allocation2 + $0x1ea] sm:$0xff]
    %v2110 = vld [vmem:[#allocation2 + $0x1fa] sm:$0xff]
    %v2111 = vld [vmem:[#allocation2 + $0x202] sm:$0xff]
    %v2112 = vld [vmem:[#allocation2 + $0x212] sm:$0xff]
    %v2113 = vld [vmem:[#allocation2 + $0x21a] sm:$0xff]
    %v2114 = vld [vmem:[#allocation2 + $0x22a] sm:$0xff]
    %v2115 = vld [vmem:[#allocation2 + $0x232] sm:$0xff]
    %v2116 = vld [vmem:[#allocation2 + $0x242] sm:$0xff]
    %v2117 = vld [vmem:[#allocation2 + $0x24a] sm:$0xff]
    %v2118 = vld [vmem:[#allocation2 + $0x25a] sm:$0xff]
    %v2119 = vld [vmem:[#allocation2 + $0x262] sm:$0xff]
    %v2120 = vld [vmem:[#allocation2 + $0x272] sm:$0xff]
    %v2121 = vld [vmem:[#allocation2 + $0x27a] sm:$0xff]
    %v2122 = vld [vmem:[#allocation2 + $0x28a] sm:$0xff]
    %v2123 = vld [vmem:[#allocation2 + $0x292] sm:$0xff]
    %v2124 = vld [vmem:[#allocation2 + $0x2a2] sm:$0xff]
    %v2125 = vld [vmem:[#allocation2 + $0x2aa] sm:$0xff]
    %v2126 = vld [vmem:[#allocation2 + $0x2ba] sm:$0xff]
    %v2127 = vld [vmem:[#allocation2 + $0x2c2] sm:$0xff]
    %v2128 = vld [vmem:[#allocation2 + $0x2d2] sm:$0xff]
    %v2129 = vld [vmem:[#allocation2 + $0x2da] sm:$0xff]
    %v2130 = vld [vmem:[#allocation2 + $0x2ea] sm:$0xff]
    %v2131 = vld [vmem:[#allocation2 + $0x2f2] sm:$0xff]
    %v2132 = vld [vmem:[#allocation2 + $0x302] sm:$0xff]
    %v2133 = vld [vmem:[#allocation2 + $0x30a] sm:$0xff]
    %v2134 = vld [vmem:[#allocation2 + $0x31a] sm:$0xff]
    %v2135 = vld [vmem:[#allocation2 + $0x322] sm:$0xff]
    %s2136 = scalar_lea.vmem %s2, 8
    %v2137 = vld [vmem:[%s2136] sm:$0xf]
    %v2139 = vsel %vm87, %v2072, 0
    %v2142 = vsel %vm87, %v2073, 0
    %v2145 = vsel %vm87, %v2074, 0
    %v2148 = vsel %vm87, %v2075, 0
    %v2151 = vsel %vm87, %v2076, 0
    %v2154 = vsel %vm87, %v2077, 0
    %v2157 = vsel %vm87, %v2078, 0
    %v2160 = vsel %vm87, %v2079, 0
    %v2163 = vsel %vm87, %v2080, 0
    %v2166 = vsel %vm87, %v2081, 0
    %v2169 = vsel %vm87, %v2082, 0
    %v2172 = vsel %vm87, %v2083, 0
    %v2175 = vsel %vm87, %v2084, 0
    %v2178 = vsel %vm87, %v2085, 0
    %v2181 = vsel %vm87, %v2086, 0
    %v2184 = vsel %vm87, %v2087, 0
    %v2187 = vsel %vm87, %v2088, 0
    %v2190 = vsel %vm87, %v2089, 0
    %v2193 = vsel %vm87, %v2090, 0
    %v2196 = vsel %vm87, %v2091, 0
    %v2199 = vsel %vm87, %v2092, 0
    %v2202 = vsel %vm87, %v2093, 0
    %v2205 = vsel %vm87, %v2094, 0
    %v2208 = vsel %vm87, %v2095, 0
    %v2211 = vsel %vm87, %v2096, 0
    %v2214 = vsel %vm87, %v2097, 0
    %v2217 = vsel %vm87, %v2098, 0
    %v2220 = vsel %vm87, %v2099, 0
    %v2223 = vsel %vm87, %v2100, 0
    %v2226 = vsel %vm87, %v2101, 0
    %v2229 = vsel %vm87, %v2102, 0
    %v2232 = vsel %vm87, %v2103, 0
    %v2235 = vsel %vm87, %v2104, 0
    %v2238 = vsel %vm87, %v2105, 0
    %v2241 = vsel %vm87, %v2106, 0
    %v2244 = vsel %vm87, %v2107, 0
    %v2247 = vsel %vm87, %v2108, 0
    %v2250 = vsel %vm87, %v2109, 0
    %v2253 = vsel %vm87, %v2110, 0
    %v2256 = vsel %vm87, %v2111, 0
    %v2259 = vsel %vm87, %v2112, 0
    %v2262 = vsel %vm87, %v2113, 0
    %v2265 = vsel %vm87, %v2114, 0
    %v2268 = vsel %vm87, %v2115, 0
    %v2271 = vsel %vm87, %v2116, 0
    %v2274 = vsel %vm87, %v2117, 0
    %v2277 = vsel %vm87, %v2118, 0
    %v2280 = vsel %vm87, %v2119, 0
    %v2283 = vsel %vm87, %v2120, 0
    %v2286 = vsel %vm87, %v2121, 0
    %v2289 = vsel %vm87, %v2122, 0
    %v2292 = vsel %vm87, %v2123, 0
    %v2295 = vsel %vm87, %v2124, 0
    %v2298 = vsel %vm87, %v2125, 0
    %v2301 = vsel %vm87, %v2126, 0
    %v2304 = vsel %vm87, %v2127, 0
    %v2307 = vsel %vm87, %v2128, 0
    %v2310 = vsel %vm87, %v2129, 0
    %v2313 = vsel %vm87, %v2130, 0
    %v2316 = vsel %vm87, %v2131, 0
    %v2319 = vsel %vm87, %v2132, 0
    %v2322 = vsel %vm87, %v2133, 0
    %v2325 = vsel %vm87, %v2134, 0
    %v2328 = vsel %vm87, %v2135, 0
    %v2331 = vsel %vm1103, %v2137, 0
    %2333 = vmatprep.subr.mxu0 0.0
    %2334 = vmatpush1.msra.mxu0 %v2331
    %2335 = vmatprep.subr.mxu0 0.0
    %2336 = vmatpush1.msra.mxu0 0.0
    %2337 = vmatprep.subr.mxu0 0.0
    %2338 = vmatpush1.msra.mxu0 0.0
    %2339 = vmatprep.subr.mxu0 0.0
    %2340 = vmatpush1.msra.mxu0 0.0
    %2341 = vmatprep.subr.mxu0 0.0
    %2342 = vmatpush1.msra.mxu0 0.0
    %2343 = vmatprep.subr.mxu0 0.0
    %2344 = vmatpush1.msra.mxu0 0.0
    %2345 = vmatprep.subr.mxu0 0.0
    %2346 = vmatpush1.msra.mxu0 0.0
    %2347 = vmatprep.subr.mxu0 0.0
    %2348 = vmatpush1.msra.mxu0 0.0
    %2349 = vmatprep.subr.mxu0 0.0
    %2350 = vmatpush1.msra.mxu0 0.0
    %2351 = vmatprep.subr.mxu0 0.0
    %2352 = vmatpush1.msra.mxu0 0.0
    %2353 = vmatprep.subr.mxu0 0.0
    %2354 = vmatpush1.msra.mxu0 0.0
    %2355 = vmatprep.subr.mxu0 0.0
    %2356 = vmatpush1.msra.mxu0 0.0
    %2357 = vmatprep.subr.mxu0 0.0
    %2358 = vmatpush1.msra.mxu0 0.0
    %2359 = vmatprep.subr.mxu0 0.0
    %2360 = vmatpush1.msra.mxu0 0.0
    %2361 = vmatprep.subr.mxu0 0.0
    %2362 = vmatpush1.msra.mxu0 0.0
    %2363 = vmatprep.subr.mxu0 0.0
    %2364 = vmatpush1.msra.mxu0 0.0
    %2365 = vmatprep.subr.mxu0 0.0
    %2366 = vmatpush1.msra.mxu0 0.0
    %2367 = vmatprep.subr.mxu0 0.0
    %2368 = vmatpush1.msra.mxu0 0.0
    %2369 = vmatprep.subr.mxu0 0.0
    %2370 = vmatpush1.msra.mxu0 0.0
    %2371 = vmatprep.subr.mxu0 0.0
    %2372 = vmatpush1.msra.mxu0 0.0
    %2373 = vmatprep.subr.mxu0 0.0
    %2374 = vmatpush1.msra.mxu0 0.0
    %2375 = vmatprep.subr.mxu0 0.0
    %2376 = vmatpush1.msra.mxu0 0.0
    %2377 = vmatprep.subr.mxu0 0.0
    %2378 = vmatpush1.msra.mxu0 0.0
    %2379 = vmatprep.subr.mxu0 0.0
    %2380 = vmatpush1.msra.mxu0 0.0
    %2381 = vmatprep.subr.mxu0 0.0
    %2382 = vmatpush1.msra.mxu0 0.0
    %2383 = vmatprep.subr.mxu0 0.0
    %2384 = vmatpush1.msra.mxu0 0.0
    %2385 = vmatprep.subr.mxu0 0.0
    %2386 = vmatpush1.msra.mxu0 0.0
    %2387 = vmatprep.subr.mxu0 0.0
    %2388 = vmatpush1.msra.mxu0 0.0
    %2389 = vmatprep.subr.mxu0 0.0
    %2390 = vmatpush1.msra.mxu0 0.0
    %2391 = vmatprep.subr.mxu0 0.0
    %2392 = vmatpush1.msra.mxu0 0.0
    %2393 = vmatprep.subr.mxu0 0.0
    %2394 = vmatpush1.msra.mxu0 0.0
    %2395 = vmatprep.subr.mxu0 0.0
    %2396 = vmatpush1.msra.mxu0 0.0
    %2397 = vmatprep.mubr.f32.mxu0 0.0
    %2398 = vmatmul.mubr.f32.gmra.mrb[0].mxu0 %v2139
    %v2399 = vpop.f32.mrb[0].mxu0
    %v2400 = vadd.f32 0.0, %v2399
    %v2401 = vpop.f32.mrb[0].mxu0
    %2402 = vmatprep.mubr.f32.mxu0 0.0
    %2403 = vmatmul.mubr.f32.gmra.mrb[0].mxu0 %v2142
    %v2404 = vpop.f32.mrb[0].mxu0
    %v2405 = vadd.f32 0.0, %v2404
    %v2406 = vpop.f32.mrb[0].mxu0
    %2407 = vmatprep.mubr.f32.mxu0 0.0
    %2408 = vmatmul.mubr.f32.gmra.mrb[0].mxu0 %v2145
    %v2409 = vpop.f32.mrb[0].mxu0
    %v2410 = vadd.f32 0.0, %v2409
    %v2411 = vpop.f32.mrb[0].mxu0
    %2412 = vmatprep.mubr.f32.mxu0 0.0
    %2413 = vmatmul.mubr.f32.gmra.mrb[0].mxu0 %v2148
    %v2414 = vpop.f32.mrb[0].mxu0
    %v2415 = vadd.f32 0.0, %v2414
    %v2416 = vpop.f32.mrb[0].mxu0
    %2417 = vmatprep.mubr.f32.mxu0 0.0
    %2418 = vmatmul.mubr.f32.gmra.mrb[0].mxu0 %v2151
    %v2419 = vpop.f32.mrb[0].mxu0
    %v2420 = vadd.f32 0.0, %v2419
    %v2421 = vpop.f32.mrb[0].mxu0
    %2422 = vmatprep.mubr.f32.mxu0 0.0
    %2423 = vmatmul.mubr.f32.gmra.mrb[0].mxu0 %v2154
    %v2424 = vpop.f32.mrb[0].mxu0
    %v2425 = vadd.f32 0.0, %v2424
    %v2426 = vpop.f32.mrb[0].mxu0
    %2427 = vmatprep.mubr.f32.mxu0 0.0
    %2428 = vmatmul.mubr.f32.gmra.mrb[0].mxu0 %v2157
    %v2429 = vpop.f32.mrb[0].mxu0
    %v2430 = vadd.f32 0.0, %v2429
    %v2431 = vpop.f32.mrb[0].mxu0
    %2432 = vmatprep.mubr.f32.mxu0 0.0
    %2433 = vmatmul.mubr.f32.gmra.mrb[0].mxu0 %v2160
    %v2434 = vpop.f32.mrb[0].mxu0
    %v2435 = vadd.f32 0.0, %v2434
    %v2436 = vpop.f32.mrb[0].mxu0
    %2437 = vmatprep.mubr.f32.mxu0 0.0
    %2438 = vmatmul.mubr.f32.gmra.mrb[0].mxu0 %v2163
    %v2439 = vpop.f32.mrb[0].mxu0
    %v2440 = vadd.f32 0.0, %v2439
    %v2441 = vpop.f32.mrb[0].mxu0
    %2442 = vmatprep.mubr.f32.mxu0 0.0
    %2443 = vmatmul.mubr.f32.gmra.mrb[0].mxu0 %v2166
    %v2444 = vpop.f32.mrb[0].mxu0
    %v2445 = vadd.f32 0.0, %v2444
    %v2446 = vpop.f32.mrb[0].mxu0
    %2447 = vmatprep.mubr.f32.mxu0 0.0
    %2448 = vmatmul.mubr.f32.gmra.mrb[0].mxu0 %v2169
    %v2449 = vpop.f32.mrb[0].mxu0
    %v2450 = vadd.f32 0.0, %v2449
    %v2451 = vpop.f32.mrb[0].mxu0
    %2452 = vmatprep.mubr.f32.mxu0 0.0
    %2453 = vmatmul.mubr.f32.gmra.mrb[0].mxu0 %v2172
    %v2454 = vpop.f32.mrb[0].mxu0
    %v2455 = vadd.f32 0.0, %v2454
    %v2456 = vpop.f32.mrb[0].mxu0
    %2457 = vmatprep.mubr.f32.mxu0 0.0
    %2458 = vmatmul.mubr.f32.gmra.mrb[0].mxu0 %v2175
    %v2459 = vpop.f32.mrb[0].mxu0
    %v2460 = vadd.f32 0.0, %v2459
    %v2461 = vpop.f32.mrb[0].mxu0
    %2462 = vmatprep.mubr.f32.mxu0 0.0
    %2463 = vmatmul.mubr.f32.gmra.mrb[0].mxu0 %v2178
    %v2464 = vpop.f32.mrb[0].mxu0
    %v2465 = vadd.f32 0.0, %v2464
    %v2466 = vpop.f32.mrb[0].mxu0
    %2467 = vmatprep.mubr.f32.mxu0 0.0
    %2468 = vmatmul.mubr.f32.gmra.mrb[0].mxu0 %v2181
    %v2469 = vpop.f32.mrb[0].mxu0
    %v2470 = vadd.f32 0.0, %v2469
    %v2471 = vpop.f32.mrb[0].mxu0
    %2472 = vmatprep.mubr.f32.mxu0 0.0
    %2473 = vmatmul.mubr.f32.gmra.mrb[0].mxu0 %v2184
    %v2474 = vpop.f32.mrb[0].mxu0
    %v2475 = vadd.f32 0.0, %v2474
    %v2476 = vpop.f32.mrb[0].mxu0
    %2477 = vmatprep.mubr.f32.mxu0 0.0
    %2478 = vmatmul.mubr.f32.gmra.mrb[0].mxu0 %v2187
    %v2479 = vpop.f32.mrb[0].mxu0
    %v2480 = vadd.f32 0.0, %v2479
    %v2481 = vpop.f32.mrb[0].mxu0
    %2482 = vmatprep.mubr.f32.mxu0 0.0
    %2483 = vmatmul.mubr.f32.gmra.mrb[0].mxu0 %v2190
    %v2484 = vpop.f32.mrb[0].mxu0
    %v2485 = vadd.f32 0.0, %v2484
    %v2486 = vpop.f32.mrb[0].mxu0
    %2487 = vmatprep.mubr.f32.mxu0 0.0
    %2488 = vmatmul.mubr.f32.gmra.mrb[0].mxu0 %v2193
    %v2489 = vpop.f32.mrb[0].mxu0
    %v2490 = vadd.f32 0.0, %v2489
    %v2491 = vpop.f32.mrb[0].mxu0
    %2492 = vmatprep.mubr.f32.mxu0 0.0
    %2493 = vmatmul.mubr.f32.gmra.mrb[0].mxu0 %v2196
    %v2494 = vpop.f32.mrb[0].mxu0
    %v2495 = vadd.f32 0.0, %v2494
    %v2496 = vpop.f32.mrb[0].mxu0
    %2497 = vmatprep.mubr.f32.mxu0 0.0
    %2498 = vmatmul.mubr.f32.gmra.mrb[0].mxu0 %v2199
    %v2499 = vpop.f32.mrb[0].mxu0
    %v2500 = vadd.f32 0.0, %v2499
    %v2501 = vpop.f32.mrb[0].mxu0
    %2502 = vmatprep.mubr.f32.mxu0 0.0
    %2503 = vmatmul.mubr.f32.gmra.mrb[0].mxu0 %v2202
    %v2504 = vpop.f32.mrb[0].mxu0
    %v2505 = vadd.f32 0.0, %v2504
    %v2506 = vpop.f32.mrb[0].mxu0
    %2507 = vmatprep.mubr.f32.mxu0 0.0
    %2508 = vmatmul.mubr.f32.gmra.mrb[0].mxu0 %v2205
    %v2509 = vpop.f32.mrb[0].mxu0
    %v2510 = vadd.f32 0.0, %v2509
    %v2511 = vpop.f32.mrb[0].mxu0
    %2512 = vmatprep.mubr.f32.mxu0 0.0
    %2513 = vmatmul.mubr.f32.gmra.mrb[0].mxu0 %v2208
    %v2514 = vpop.f32.mrb[0].mxu0
    %v2515 = vadd.f32 0.0, %v2514
    %v2516 = vpop.f32.mrb[0].mxu0
    %2517 = vmatprep.mubr.f32.mxu0 0.0
    %2518 = vmatmul.mubr.f32.gmra.mrb[0].mxu0 %v2211
    %v2519 = vpop.f32.mrb[0].mxu0
    %v2520 = vadd.f32 0.0, %v2519
    %v2521 = vpop.f32.mrb[0].mxu0
    %2522 = vmatprep.mubr.f32.mxu0 0.0
    %2523 = vmatmul.mubr.f32.gmra.mrb[0].mxu0 %v2214
    %v2524 = vpop.f32.mrb[0].mxu0
    %v2525 = vadd.f32 0.0, %v2524
    %v2526 = vpop.f32.mrb[0].mxu0
    %2527 = vmatprep.mubr.f32.mxu0 0.0
    %2528 = vmatmul.mubr.f32.gmra.mrb[0].mxu0 %v2217
    %v2529 = vpop.f32.mrb[0].mxu0
    %v2530 = vadd.f32 0.0, %v2529
    %v2531 = vpop.f32.mrb[0].mxu0
    %2532 = vmatprep.mubr.f32.mxu0 0.0
    %2533 = vmatmul.mubr.f32.gmra.mrb[0].mxu0 %v2220
    %v2534 = vpop.f32.mrb[0].mxu0
    %v2535 = vadd.f32 0.0, %v2534
    %v2536 = vpop.f32.mrb[0].mxu0
    %2537 = vmatprep.mubr.f32.mxu0 0.0
    %2538 = vmatmul.mubr.f32.gmra.mrb[0].mxu0 %v2223
    %v2539 = vpop.f32.mrb[0].mxu0
    %v2540 = vadd.f32 0.0, %v2539
    %v2541 = vpop.f32.mrb[0].mxu0
    %2542 = vmatprep.mubr.f32.mxu0 0.0
    %2543 = vmatmul.mubr.f32.gmra.mrb[0].mxu0 %v2226
    %v2544 = vpop.f32.mrb[0].mxu0
    %v2545 = vadd.f32 0.0, %v2544
    %v2546 = vpop.f32.mrb[0].mxu0
    %2547 = vmatprep.mubr.f32.mxu0 0.0
    %2548 = vmatmul.mubr.f32.gmra.mrb[0].mxu0 %v2229
    %v2549 = vpop.f32.mrb[0].mxu0
    %v2550 = vadd.f32 0.0, %v2549
    %v2551 = vpop.f32.mrb[0].mxu0
    %2552 = vmatprep.mubr.f32.mxu0 0.0
    %2553 = vmatmul.mubr.f32.gmra.mrb[0].mxu0 %v2232
    %v2554 = vpop.f32.mrb[0].mxu0
    %v2555 = vadd.f32 0.0, %v2554
    %v2556 = vpop.f32.mrb[0].mxu0
    %2557 = vmatprep.mubr.f32.mxu0 0.0
    %2558 = vmatmul.mubr.f32.gmra.mrb[0].mxu0 %v2235
    %v2559 = vpop.f32.mrb[0].mxu0
    %v2560 = vadd.f32 0.0, %v2559
    %v2561 = vpop.f32.mrb[0].mxu0
    %2562 = vmatprep.mubr.f32.mxu0 0.0
    %2563 = vmatmul.mubr.f32.gmra.mrb[0].mxu0 %v2238
    %v2564 = vpop.f32.mrb[0].mxu0
    %v2565 = vadd.f32 0.0, %v2564
    %v2566 = vpop.f32.mrb[0].mxu0
    %2567 = vmatprep.mubr.f32.mxu0 0.0
    %2568 = vmatmul.mubr.f32.gmra.mrb[0].mxu0 %v2241
    %v2569 = vpop.f32.mrb[0].mxu0
    %v2570 = vadd.f32 0.0, %v2569
    %v2571 = vpop.f32.mrb[0].mxu0
    %2572 = vmatprep.mubr.f32.mxu0 0.0
    %2573 = vmatmul.mubr.f32.gmra.mrb[0].mxu0 %v2244
    %v2574 = vpop.f32.mrb[0].mxu0
    %v2575 = vadd.f32 0.0, %v2574
    %v2576 = vpop.f32.mrb[0].mxu0
    %2577 = vmatprep.mubr.f32.mxu0 0.0
    %2578 = vmatmul.mubr.f32.gmra.mrb[0].mxu0 %v2247
    %v2579 = vpop.f32.mrb[0].mxu0
    %v2580 = vadd.f32 0.0, %v2579
    %v2581 = vpop.f32.mrb[0].mxu0
    %2582 = vmatprep.mubr.f32.mxu0 0.0
    %2583 = vmatmul.mubr.f32.gmra.mrb[0].mxu0 %v2250
    %v2584 = vpop.f32.mrb[0].mxu0
    %v2585 = vadd.f32 0.0, %v2584
    %v2586 = vpop.f32.mrb[0].mxu0
    %2587 = vmatprep.mubr.f32.mxu0 0.0
    %2588 = vmatmul.mubr.f32.gmra.mrb[0].mxu0 %v2253
    %v2589 = vpop.f32.mrb[0].mxu0
    %v2590 = vadd.f32 0.0, %v2589
    %v2591 = vpop.f32.mrb[0].mxu0
    %2592 = vmatprep.mubr.f32.mxu0 0.0
    %2593 = vmatmul.mubr.f32.gmra.mrb[0].mxu0 %v2256
    %v2594 = vpop.f32.mrb[0].mxu0
    %v2595 = vadd.f32 0.0, %v2594
    %v2596 = vpop.f32.mrb[0].mxu0
    %2597 = vmatprep.mubr.f32.mxu0 0.0
    %2598 = vmatmul.mubr.f32.gmra.mrb[0].mxu0 %v2259
    %v2599 = vpop.f32.mrb[0].mxu0
    %v2600 = vadd.f32 0.0, %v2599
    %v2601 = vpop.f32.mrb[0].mxu0
    %2602 = vmatprep.mubr.f32.mxu0 0.0
    %2603 = vmatmul.mubr.f32.gmra.mrb[0].mxu0 %v2262
    %v2604 = vpop.f32.mrb[0].mxu0
    %v2605 = vadd.f32 0.0, %v2604
    %v2606 = vpop.f32.mrb[0].mxu0
    %2607 = vmatprep.mubr.f32.mxu0 0.0
    %2608 = vmatmul.mubr.f32.gmra.mrb[0].mxu0 %v2265
    %v2609 = vpop.f32.mrb[0].mxu0
    %v2610 = vadd.f32 0.0, %v2609
    %v2611 = vpop.f32.mrb[0].mxu0
    %2612 = vmatprep.mubr.f32.mxu0 0.0
    %2613 = vmatmul.mubr.f32.gmra.mrb[0].mxu0 %v2268
    %v2614 = vpop.f32.mrb[0].mxu0
    %v2615 = vadd.f32 0.0, %v2614
    %v2616 = vpop.f32.mrb[0].mxu0
    %2617 = vmatprep.mubr.f32.mxu0 0.0
    %2618 = vmatmul.mubr.f32.gmra.mrb[0].mxu0 %v2271
    %v2619 = vpop.f32.mrb[0].mxu0
    %v2620 = vadd.f32 0.0, %v2619
    %v2621 = vpop.f32.mrb[0].mxu0
    %2622 = vmatprep.mubr.f32.mxu0 0.0
    %2623 = vmatmul.mubr.f32.gmra.mrb[0].mxu0 %v2274
    %v2624 = vpop.f32.mrb[0].mxu0
    %v2625 = vadd.f32 0.0, %v2624
    %v2626 = vpop.f32.mrb[0].mxu0
    %2627 = vmatprep.mubr.f32.mxu0 0.0
    %2628 = vmatmul.mubr.f32.gmra.mrb[0].mxu0 %v2277
    %v2629 = vpop.f32.mrb[0].mxu0
    %v2630 = vadd.f32 0.0, %v2629
    %v2631 = vpop.f32.mrb[0].mxu0
    %2632 = vmatprep.mubr.f32.mxu0 0.0
    %2633 = vmatmul.mubr.f32.gmra.mrb[0].mxu0 %v2280
    %v2634 = vpop.f32.mrb[0].mxu0
    %v2635 = vadd.f32 0.0, %v2634
    %v2636 = vpop.f32.mrb[0].mxu0
    %2637 = vmatprep.mubr.f32.mxu0 0.0
    %2638 = vmatmul.mubr.f32.gmra.mrb[0].mxu0 %v2283
    %v2639 = vpop.f32.mrb[0].mxu0
    %v2640 = vadd.f32 0.0, %v2639
    %v2641 = vpop.f32.mrb[0].mxu0
    %2642 = vmatprep.mubr.f32.mxu0 0.0
    %2643 = vmatmul.mubr.f32.gmra.mrb[0].mxu0 %v2286
    %v2644 = vpop.f32.mrb[0].mxu0
    %v2645 = vadd.f32 0.0, %v2644
    %v2646 = vpop.f32.mrb[0].mxu0
    %2647 = vmatprep.mubr.f32.mxu0 0.0
    %2648 = vmatmul.mubr.f32.gmra.mrb[0].mxu0 %v2289
    %v2649 = vpop.f32.mrb[0].mxu0
    %v2650 = vadd.f32 0.0, %v2649
    %v2651 = vpop.f32.mrb[0].mxu0
    %2652 = vmatprep.mubr.f32.mxu0 0.0
    %2653 = vmatmul.mubr.f32.gmra.mrb[0].mxu0 %v2292
    %v2654 = vpop.f32.mrb[0].mxu0
    %v2655 = vadd.f32 0.0, %v2654
    %v2656 = vpop.f32.mrb[0].mxu0
    %2657 = vmatprep.mubr.f32.mxu0 0.0
    %2658 = vmatmul.mubr.f32.gmra.mrb[0].mxu0 %v2295
    %v2659 = vpop.f32.mrb[0].mxu0
    %v2660 = vadd.f32 0.0, %v2659
    %v2661 = vpop.f32.mrb[0].mxu0
    %2662 = vmatprep.mubr.f32.mxu0 0.0
    %2663 = vmatmul.mubr.f32.gmra.mrb[0].mxu0 %v2298
    %v2664 = vpop.f32.mrb[0].mxu0
    %v2665 = vadd.f32 0.0, %v2664
    %v2666 = vpop.f32.mrb[0].mxu0
    %2667 = vmatprep.mubr.f32.mxu0 0.0
    %2668 = vmatmul.mubr.f32.gmra.mrb[0].mxu0 %v2301
    %v2669 = vpop.f32.mrb[0].mxu0
    %v2670 = vadd.f32 0.0, %v2669
    %v2671 = vpop.f32.mrb[0].mxu0
    %2672 = vmatprep.mubr.f32.mxu0 0.0
    %2673 = vmatmul.mubr.f32.gmra.mrb[0].mxu0 %v2304
    %v2674 = vpop.f32.mrb[0].mxu0
    %v2675 = vadd.f32 0.0, %v2674
    %v2676 = vpop.f32.mrb[0].mxu0
    %2677 = vmatprep.mubr.f32.mxu0 0.0
    %2678 = vmatmul.mubr.f32.gmra.mrb[0].mxu0 %v2307
    %v2679 = vpop.f32.mrb[0].mxu0
    %v2680 = vadd.f32 0.0, %v2679
    %v2681 = vpop.f32.mrb[0].mxu0
    %2682 = vmatprep.mubr.f32.mxu0 0.0
    %2683 = vmatmul.mubr.f32.gmra.mrb[0].mxu0 %v2310
    %v2684 = vpop.f32.mrb[0].mxu0
    %v2685 = vadd.f32 0.0, %v2684
    %v2686 = vpop.f32.mrb[0].mxu0
    %2687 = vmatprep.mubr.f32.mxu0 0.0
    %2688 = vmatmul.mubr.f32.gmra.mrb[0].mxu0 %v2313
    %v2689 = vpop.f32.mrb[0].mxu0
    %v2690 = vadd.f32 0.0, %v2689
    %v2691 = vpop.f32.mrb[0].mxu0
    %2692 = vmatprep.mubr.f32.mxu0 0.0
    %2693 = vmatmul.mubr.f32.gmra.mrb[0].mxu0 %v2316
    %v2694 = vpop.f32.mrb[0].mxu0
    %v2695 = vadd.f32 0.0, %v2694
    %v2696 = vpop.f32.mrb[0].mxu0
    %2697 = vmatprep.mubr.f32.mxu0 0.0
    %2698 = vmatmul.mubr.f32.gmra.mrb[0].mxu0 %v2319
    %v2699 = vpop.f32.mrb[0].mxu0
    %v2700 = vadd.f32 0.0, %v2699
    %v2701 = vpop.f32.mrb[0].mxu0
    %2702 = vmatprep.mubr.f32.mxu0 0.0
    %2703 = vmatmul.mubr.f32.gmra.mrb[0].mxu0 %v2322
    %v2704 = vpop.f32.mrb[0].mxu0
    %v2705 = vadd.f32 0.0, %v2704
    %v2706 = vpop.f32.mrb[0].mxu0
    %2707 = vmatprep.mubr.f32.mxu0 0.0
    %2708 = vmatmul.mubr.f32.gmra.mrb[0].mxu0 %v2325
    %v2709 = vpop.f32.mrb[0].mxu0
    %v2710 = vadd.f32 0.0, %v2709
    %v2711 = vpop.f32.mrb[0].mxu0
    %2712 = vmatprep.mubr.f32.mxu0 0.0
    %2713 = vmatmul.mubr.f32.gmra.mrb[0].mxu0 %v2328
    %v2714 = vpop.f32.mrb[0].mxu0
    %v2715 = vadd.f32 0.0, %v2714
    %v2716 = vpop.f32.mrb[0].mxu0
    %2717 = vdwg.mxu0
    %v2718 = vadd.f32 %v1754, %v2400
    %v2719 = vadd.f32 %v1759, %v2405
    %v2720 = vadd.f32 %v1764, %v2410
    %v2721 = vadd.f32 %v1769, %v2415
    %v2722 = vadd.f32 %v1774, %v2420
    %v2723 = vadd.f32 %v1779, %v2425
    %v2724 = vadd.f32 %v1784, %v2430
    %v2725 = vadd.f32 %v1789, %v2435
    %v2726 = vadd.f32 %v1794, %v2440
    %v2727 = vadd.f32 %v1799, %v2445
    %v2728 = vadd.f32 %v1804, %v2450
    %v2729 = vadd.f32 %v1809, %v2455
    %v2730 = vadd.f32 %v1814, %v2460
    %v2731 = vadd.f32 %v1819, %v2465
    %v2732 = vadd.f32 %v1824, %v2470
    %v2733 = vadd.f32 %v1829, %v2475
    %v2734 = vadd.f32 %v1834, %v2480
    %v2735 = vadd.f32 %v1839, %v2485
    %v2736 = vadd.f32 %v1844, %v2490
    %v2737 = vadd.f32 %v1849, %v2495
    %v2738 = vadd.f32 %v1854, %v2500
    %v2739 = vadd.f32 %v1859, %v2505
    %v2740 = vadd.f32 %v1864, %v2510
    %v2741 = vadd.f32 %v1869, %v2515
    %v2742 = vadd.f32 %v1874, %v2520
    %v2743 = vadd.f32 %v1879, %v2525
    %v2744 = vadd.f32 %v1884, %v2530
    %v2745 = vadd.f32 %v1889, %v2535
    %v2746 = vadd.f32 %v1894, %v2540
    %v2747 = vadd.f32 %v1899, %v2545
    %v2748 = vadd.f32 %v1904, %v2550
    %v2749 = vadd.f32 %v1909, %v2555
    %v2750 = vadd.f32 %v1914, %v2560
    %v2751 = vadd.f32 %v1919, %v2565
    %v2752 = vadd.f32 %v1924, %v2570
    %v2753 = vadd.f32 %v1929, %v2575
    %v2754 = vadd.f32 %v1934, %v2580
    %v2755 = vadd.f32 %v1939, %v2585
    %v2756 = vadd.f32 %v1944, %v2590
    %v2757 = vadd.f32 %v1949, %v2595
    %v2758 = vadd.f32 %v1954, %v2600
    %v2759 = vadd.f32 %v1959, %v2605
    %v2760 = vadd.f32 %v1964, %v2610
    %v2761 = vadd.f32 %v1969, %v2615
    %v2762 = vadd.f32 %v1974, %v2620
    %v2763 = vadd.f32 %v1979, %v2625
    %v2764 = vadd.f32 %v1984, %v2630
    %v2765 = vadd.f32 %v1989, %v2635
    %v2766 = vadd.f32 %v1994, %v2640
    %v2767 = vadd.f32 %v1999, %v2645
    %v2768 = vadd.f32 %v2004, %v2650
    %v2769 = vadd.f32 %v2009, %v2655
    %v2770 = vadd.f32 %v2014, %v2660
    %v2771 = vadd.f32 %v2019, %v2665
    %v2772 = vadd.f32 %v2024, %v2670
    %v2773 = vadd.f32 %v2029, %v2675
    %v2774 = vadd.f32 %v2034, %v2680
    %v2775 = vadd.f32 %v2039, %v2685
    %v2776 = vadd.f32 %v2044, %v2690
    %v2777 = vadd.f32 %v2049, %v2695
    %v2778 = vadd.f32 %v2054, %v2700
    %v2779 = vadd.f32 %v2059, %v2705
    %v2780 = vadd.f32 %v2064, %v2710
    %v2781 = vadd.f32 %v2069, %v2715
    %v2782 = vld [vmem:[%s715] sm:$0xff]
    %v2783 = vld [vmem:[%s715 + $0x8] sm:$0xff]
    %v2784 = vld [vmem:[%s715 + $0x18] sm:$0xff]
    %v2785 = vld [vmem:[%s715 + $0x20] sm:$0xff]
    %v2786 = vld [vmem:[%s715 + $0x30] sm:$0xff]
    %v2787 = vld [vmem:[%s715 + $0x38] sm:$0xff]
    %v2788 = vld [vmem:[%s715 + $0x48] sm:$0xff]
    %v2789 = vld [vmem:[%s715 + $0x50] sm:$0xff]
    %v2790 = vld [vmem:[%s715 + $0x60] sm:$0xff]
    %v2791 = vld [vmem:[%s715 + $0x68] sm:$0xff]
    %v2792 = vld [vmem:[%s715 + $0x78] sm:$0xff]
    %v2793 = vld [vmem:[%s715 + $0x80] sm:$0xff]
    %v2794 = vld [vmem:[%s715 + $0x90] sm:$0xff]
    %v2795 = vld [vmem:[%s715 + $0x98] sm:$0xff]
    %v2796 = vld [vmem:[%s715 + $0xa8] sm:$0xff]
    %v2797 = vld [vmem:[%s715 + $0xb0] sm:$0xff]
    %v2798 = vld [vmem:[%s715 + $0xc0] sm:$0xff]
    %v2799 = vld [vmem:[%s715 + $0xc8] sm:$0xff]
    %v2800 = vld [vmem:[%s715 + $0xd8] sm:$0xff]
    %v2801 = vld [vmem:[%s715 + $0xe0] sm:$0xff]
    %v2802 = vld [vmem:[%s715 + $0xf0] sm:$0xff]
    %v2803 = vld [vmem:[%s715 + $0xf8] sm:$0xff]
    %v2804 = vld [vmem:[%s715 + $0x108] sm:$0xff]
    %v2805 = vld [vmem:[%s715 + $0x110] sm:$0xff]
    %v2806 = vld [vmem:[%s715 + $0x120] sm:$0xff]
    %v2807 = vld [vmem:[%s715 + $0x128] sm:$0xff]
    %v2808 = vld [vmem:[%s715 + $0x138] sm:$0xff]
    %v2809 = vld [vmem:[%s715 + $0x140] sm:$0xff]
    %v2810 = vld [vmem:[%s715 + $0x150] sm:$0xff]
    %v2811 = vld [vmem:[%s715 + $0x158] sm:$0xff]
    %v2812 = vld [vmem:[%s715 + $0x168] sm:$0xff]
    %v2813 = vld [vmem:[%s715 + $0x170] sm:$0xff]
    %v2814 = vld [vmem:[%s715 + $0x1b0] sm:$0xff]
    %v2815 = vld [vmem:[%s715 + $0x1b8] sm:$0xff]
    %v2816 = vld [vmem:[%s715 + $0x1c8] sm:$0xff]
    %v2817 = vld [vmem:[%s715 + $0x1d0] sm:$0xff]
    %v2818 = vld [vmem:[%s715 + $0x1e0] sm:$0xff]
    %v2819 = vld [vmem:[%s715 + $0x1e8] sm:$0xff]
    %v2820 = vld [vmem:[%s715 + $0x1f8] sm:$0xff]
    %v2821 = vld [vmem:[%s715 + $0x200] sm:$0xff]
    %v2822 = vld [vmem:[%s715 + $0x210] sm:$0xff]
    %v2823 = vld [vmem:[%s715 + $0x218] sm:$0xff]
    %v2824 = vld [vmem:[%s715 + $0x228] sm:$0xff]
    %v2825 = vld [vmem:[%s715 + $0x230] sm:$0xff]
    %v2826 = vld [vmem:[%s715 + $0x240] sm:$0xff]
    %v2827 = vld [vmem:[%s715 + $0x248] sm:$0xff]
    %v2828 = vld [vmem:[%s715 + $0x258] sm:$0xff]
    %v2829 = vld [vmem:[%s715 + $0x260] sm:$0xff]
    %v2830 = vld [vmem:[%s715 + $0x270] sm:$0xff]
    %v2831 = vld [vmem:[%s715 + $0x278] sm:$0xff]
    %v2832 = vld [vmem:[%s715 + $0x288] sm:$0xff]
    %v2833 = vld [vmem:[%s715 + $0x290] sm:$0xff]
    %v2834 = vld [vmem:[%s715 + $0x2a0] sm:$0xff]
    %v2835 = vld [vmem:[%s715 + $0x2a8] sm:$0xff]
    %v2836 = vld [vmem:[%s715 + $0x2b8] sm:$0xff]
    %v2837 = vld [vmem:[%s715 + $0x2c0] sm:$0xff]
    %v2838 = vld [vmem:[%s715 + $0x2d0] sm:$0xff]
    %v2839 = vld [vmem:[%s715 + $0x2d8] sm:$0xff]
    %v2840 = vld [vmem:[%s715 + $0x2e8] sm:$0xff]
    %v2841 = vld [vmem:[%s715 + $0x2f0] sm:$0xff]
    %v2842 = vld [vmem:[%s715 + $0x300] sm:$0xff]
    %v2843 = vld [vmem:[%s715 + $0x308] sm:$0xff]
    %v2844 = vld [vmem:[%s715 + $0x318] sm:$0xff]
    %v2845 = vld [vmem:[%s715 + $0x320] sm:$0xff]
    %s2846 = scalar_lea.vmem %s2, 12
    %v2847 = vld [vmem:[%s2846] sm:$0xf]
    %v2849 = vsel %vm87, %v2782, 0
    %v2852 = vsel %vm87, %v2783, 0
    %v2855 = vsel %vm87, %v2784, 0
    %v2858 = vsel %vm87, %v2785, 0
    %v2861 = vsel %vm87, %v2786, 0
    %v2864 = vsel %vm87, %v2787, 0
    %v2867 = vsel %vm87, %v2788, 0
    %v2870 = vsel %vm87, %v2789, 0
    %v2873 = vsel %vm87, %v2790, 0
    %v2876 = vsel %vm87, %v2791, 0
    %v2879 = vsel %vm87, %v2792, 0
    %v2882 = vsel %vm87, %v2793, 0
    %v2885 = vsel %vm87, %v2794, 0
    %v2888 = vsel %vm87, %v2795, 0
    %v2891 = vsel %vm87, %v2796, 0
    %v2894 = vsel %vm87, %v2797, 0
    %v2897 = vsel %vm87, %v2798, 0
    %v2900 = vsel %vm87, %v2799, 0
    %v2903 = vsel %vm87, %v2800, 0
    %v2906 = vsel %vm87, %v2801, 0
    %v2909 = vsel %vm87, %v2802, 0
    %v2912 = vsel %vm87, %v2803, 0
    %v2915 = vsel %vm87, %v2804, 0
    %v2918 = vsel %vm87, %v2805, 0
    %v2921 = vsel %vm87, %v2806, 0
    %v2924 = vsel %vm87, %v2807, 0
    %v2927 = vsel %vm87, %v2808, 0
    %v2930 = vsel %vm87, %v2809, 0
    %v2933 = vsel %vm87, %v2810, 0
    %v2936 = vsel %vm87, %v2811, 0
    %v2939 = vsel %vm87, %v2812, 0
    %v2942 = vsel %vm87, %v2813, 0
    %v2945 = vsel %vm87, %v2814, 0
    %v2948 = vsel %vm87, %v2815, 0
    %v2951 = vsel %vm87, %v2816, 0
    %v2954 = vsel %vm87, %v2817, 0
    %v2957 = vsel %vm87, %v2818, 0
    %v2960 = vsel %vm87, %v2819, 0
    %v2963 = vsel %vm87, %v2820, 0
    %v2966 = vsel %vm87, %v2821, 0
    %v2969 = vsel %vm87, %v2822, 0
    %v2972 = vsel %vm87, %v2823, 0
    %v2975 = vsel %vm87, %v2824, 0
    %v2978 = vsel %vm87, %v2825, 0
    %v2981 = vsel %vm87, %v2826, 0
    %v2984 = vsel %vm87, %v2827, 0
    %v2987 = vsel %vm87, %v2828, 0
    %v2990 = vsel %vm87, %v2829, 0
    %v2993 = vsel %vm87, %v2830, 0
    %v2996 = vsel %vm87, %v2831, 0
    %v2999 = vsel %vm87, %v2832, 0
    %v3002 = vsel %vm87, %v2833, 0
    %v3005 = vsel %vm87, %v2834, 0
    %v3008 = vsel %vm87, %v2835, 0
    %v3011 = vsel %vm87, %v2836, 0
    %v3014 = vsel %vm87, %v2837, 0
    %v3017 = vsel %vm87, %v2838, 0
    %v3020 = vsel %vm87, %v2839, 0
    %v3023 = vsel %vm87, %v2840, 0
    %v3026 = vsel %vm87, %v2841, 0
    %v3029 = vsel %vm87, %v2842, 0
    %v3032 = vsel %vm87, %v2843, 0
    %v3035 = vsel %vm87, %v2844, 0
    %v3038 = vsel %vm87, %v2845, 0
    %v3041 = vsel %vm1103, %v2847, 0
    %3043 = vmatprep.subr.mxu0 0.0
    %3044 = vmatpush1.msra.mxu0 %v3041
    %3045 = vmatprep.subr.mxu0 0.0
    %3046 = vmatpush1.msra.mxu0 0.0
    %3047 = vmatprep.subr.mxu0 0.0
    %3048 = vmatpush1.msra.mxu0 0.0
    %3049 = vmatprep.subr.mxu0 0.0
    %3050 = vmatpush1.msra.mxu0 0.0
    %3051 = vmatprep.subr.mxu0 0.0
    %3052 = vmatpush1.msra.mxu0 0.0
    %3053 = vmatprep.subr.mxu0 0.0
    %3054 = vmatpush1.msra.mxu0 0.0
    %3055 = vmatprep.subr.mxu0 0.0
    %3056 = vmatpush1.msra.mxu0 0.0
    %3057 = vmatprep.subr.mxu0 0.0
    %3058 = vmatpush1.msra.mxu0 0.0
    %3059 = vmatprep.subr.mxu0 0.0
    %3060 = vmatpush1.msra.mxu0 0.0
    %3061 = vmatprep.subr.mxu0 0.0
    %3062 = vmatpush1.msra.mxu0 0.0
    %3063 = vmatprep.subr.mxu0 0.0
    %3064 = vmatpush1.msra.mxu0 0.0
    %3065 = vmatprep.subr.mxu0 0.0
    %3066 = vmatpush1.msra.mxu0 0.0
    %3067 = vmatprep.subr.mxu0 0.0
    %3068 = vmatpush1.msra.mxu0 0.0
    %3069 = vmatprep.subr.mxu0 0.0
    %3070 = vmatpush1.msra.mxu0 0.0
    %3071 = vmatprep.subr.mxu0 0.0
    %3072 = vmatpush1.msra.mxu0 0.0
    %3073 = vmatprep.subr.mxu0 0.0
    %3074 = vmatpush1.msra.mxu0 0.0
    %3075 = vmatprep.subr.mxu0 0.0
    %3076 = vmatpush1.msra.mxu0 0.0
    %3077 = vmatprep.subr.mxu0 0.0
    %3078 = vmatpush1.msra.mxu0 0.0
    %3079 = vmatprep.subr.mxu0 0.0
    %3080 = vmatpush1.msra.mxu0 0.0
    %3081 = vmatprep.subr.mxu0 0.0
    %3082 = vmatpush1.msra.mxu0 0.0
    %3083 = vmatprep.subr.mxu0 0.0
    %3084 = vmatpush1.msra.mxu0 0.0
    %3085 = vmatprep.subr.mxu0 0.0
    %3086 = vmatpush1.msra.mxu0 0.0
    %3087 = vmatprep.subr.mxu0 0.0
    %3088 = vmatpush1.msra.mxu0 0.0
    %3089 = vmatprep.subr.mxu0 0.0
    %3090 = vmatpush1.msra.mxu0 0.0
    %3091 = vmatprep.subr.mxu0 0.0
    %3092 = vmatpush1.msra.mxu0 0.0
    %3093 = vmatprep.subr.mxu0 0.0
    %3094 = vmatpush1.msra.mxu0 0.0
    %3095 = vmatprep.subr.mxu0 0.0
    %3096 = vmatpush1.msra.mxu0 0.0
    %3097 = vmatprep.subr.mxu0 0.0
    %3098 = vmatpush1.msra.mxu0 0.0
    %3099 = vmatprep.subr.mxu0 0.0
    %3100 = vmatpush1.msra.mxu0 0.0
    %3101 = vmatprep.subr.mxu0 0.0
    %3102 = vmatpush1.msra.mxu0 0.0
    %3103 = vmatprep.subr.mxu0 0.0
    %3104 = vmatpush1.msra.mxu0 0.0
    %3105 = vmatprep.subr.mxu0 0.0
    %3106 = vmatpush1.msra.mxu0 0.0
    %3107 = vmatprep.mubr.f32.mxu0 0.0
    %3108 = vmatmul.mubr.f32.gmra.mrb[0].mxu0 %v2849
    %v3109 = vpop.f32.mrb[0].mxu0
    %v3110 = vadd.f32 0.0, %v3109
    %v3111 = vpop.f32.mrb[0].mxu0
    %3112 = vmatprep.mubr.f32.mxu0 0.0
    %3113 = vmatmul.mubr.f32.gmra.mrb[0].mxu0 %v2852
    %v3114 = vpop.f32.mrb[0].mxu0
    %v3115 = vadd.f32 0.0, %v3114
    %v3116 = vpop.f32.mrb[0].mxu0
    %3117 = vmatprep.mubr.f32.mxu0 0.0
    %3118 = vmatmul.mubr.f32.gmra.mrb[0].mxu0 %v2855
    %v3119 = vpop.f32.mrb[0].mxu0
    %v3120 = vadd.f32 0.0, %v3119
    %v3121 = vpop.f32.mrb[0].mxu0
    %3122 = vmatprep.mubr.f32.mxu0 0.0
    %3123 = vmatmul.mubr.f32.gmra.mrb[0].mxu0 %v2858
    %v3124 = vpop.f32.mrb[0].mxu0
    %v3125 = vadd.f32 0.0, %v3124
    %v3126 = vpop.f32.mrb[0].mxu0
    %3127 = vmatprep.mubr.f32.mxu0 0.0
    %3128 = vmatmul.mubr.f32.gmra.mrb[0].mxu0 %v2861
    %v3129 = vpop.f32.mrb[0].mxu0
    %v3130 = vadd.f32 0.0, %v3129
    %v3131 = vpop.f32.mrb[0].mxu0
    %3132 = vmatprep.mubr.f32.mxu0 0.0
    %3133 = vmatmul.mubr.f32.gmra.mrb[0].mxu0 %v2864
    %v3134 = vpop.f32.mrb[0].mxu0
    %v3135 = vadd.f32 0.0, %v3134
    %v3136 = vpop.f32.mrb[0].mxu0
    %3137 = vmatprep.mubr.f32.mxu0 0.0
    %3138 = vmatmul.mubr.f32.gmra.mrb[0].mxu0 %v2867
    %v3139 = vpop.f32.mrb[0].mxu0
    %v3140 = vadd.f32 0.0, %v3139
    %v3141 = vpop.f32.mrb[0].mxu0
    %3142 = vmatprep.mubr.f32.mxu0 0.0
    %3143 = vmatmul.mubr.f32.gmra.mrb[0].mxu0 %v2870
    %v3144 = vpop.f32.mrb[0].mxu0
    %v3145 = vadd.f32 0.0, %v3144
    %v3146 = vpop.f32.mrb[0].mxu0
    %3147 = vmatprep.mubr.f32.mxu0 0.0
    %3148 = vmatmul.mubr.f32.gmra.mrb[0].mxu0 %v2873
    %v3149 = vpop.f32.mrb[0].mxu0
    %v3150 = vadd.f32 0.0, %v3149
    %v3151 = vpop.f32.mrb[0].mxu0
    %3152 = vmatprep.mubr.f32.mxu0 0.0
    %3153 = vmatmul.mubr.f32.gmra.mrb[0].mxu0 %v2876
    %v3154 = vpop.f32.mrb[0].mxu0
    %v3155 = vadd.f32 0.0, %v3154
    %v3156 = vpop.f32.mrb[0].mxu0
    %3157 = vmatprep.mubr.f32.mxu0 0.0
    %3158 = vmatmul.mubr.f32.gmra.mrb[0].mxu0 %v2879
    %v3159 = vpop.f32.mrb[0].mxu0
    %v3160 = vadd.f32 0.0, %v3159
    %v3161 = vpop.f32.mrb[0].mxu0
    %3162 = vmatprep.mubr.f32.mxu0 0.0
    %3163 = vmatmul.mubr.f32.gmra.mrb[0].mxu0 %v2882
    %v3164 = vpop.f32.mrb[0].mxu0
    %v3165 = vadd.f32 0.0, %v3164
    %v3166 = vpop.f32.mrb[0].mxu0
    %3167 = vmatprep.mubr.f32.mxu0 0.0
    %3168 = vmatmul.mubr.f32.gmra.mrb[0].mxu0 %v2885
    %v3169 = vpop.f32.mrb[0].mxu0
    %v3170 = vadd.f32 0.0, %v3169
    %v3171 = vpop.f32.mrb[0].mxu0
    %3172 = vmatprep.mubr.f32.mxu0 0.0
    %3173 = vmatmul.mubr.f32.gmra.mrb[0].mxu0 %v2888
    %v3174 = vpop.f32.mrb[0].mxu0
    %v3175 = vadd.f32 0.0, %v3174
    %v3176 = vpop.f32.mrb[0].mxu0
    %3177 = vmatprep.mubr.f32.mxu0 0.0
    %3178 = vmatmul.mubr.f32.gmra.mrb[0].mxu0 %v2891
    %v3179 = vpop.f32.mrb[0].mxu0
    %v3180 = vadd.f32 0.0, %v3179
    %v3181 = vpop.f32.mrb[0].mxu0
    %3182 = vmatprep.mubr.f32.mxu0 0.0
    %3183 = vmatmul.mubr.f32.gmra.mrb[0].mxu0 %v2894
    %v3184 = vpop.f32.mrb[0].mxu0
    %v3185 = vadd.f32 0.0, %v3184
    %v3186 = vpop.f32.mrb[0].mxu0
    %3187 = vmatprep.mubr.f32.mxu0 0.0
    %3188 = vmatmul.mubr.f32.gmra.mrb[0].mxu0 %v2897
    %v3189 = vpop.f32.mrb[0].mxu0
    %v3190 = vadd.f32 0.0, %v3189
    %v3191 = vpop.f32.mrb[0].mxu0
    %3192 = vmatprep.mubr.f32.mxu0 0.0
    %3193 = vmatmul.mubr.f32.gmra.mrb[0].mxu0 %v2900
    %v3194 = vpop.f32.mrb[0].mxu0
    %v3195 = vadd.f32 0.0, %v3194
    %v3196 = vpop.f32.mrb[0].mxu0
    %3197 = vmatprep.mubr.f32.mxu0 0.0
    %3198 = vmatmul.mubr.f32.gmra.mrb[0].mxu0 %v2903
    %v3199 = vpop.f32.mrb[0].mxu0
    %v3200 = vadd.f32 0.0, %v3199
    %v3201 = vpop.f32.mrb[0].mxu0
    %3202 = vmatprep.mubr.f32.mxu0 0.0
    %3203 = vmatmul.mubr.f32.gmra.mrb[0].mxu0 %v2906
    %v3204 = vpop.f32.mrb[0].mxu0
    %v3205 = vadd.f32 0.0, %v3204
    %v3206 = vpop.f32.mrb[0].mxu0
    %3207 = vmatprep.mubr.f32.mxu0 0.0
    %3208 = vmatmul.mubr.f32.gmra.mrb[0].mxu0 %v2909
    %v3209 = vpop.f32.mrb[0].mxu0
    %v3210 = vadd.f32 0.0, %v3209
    %v3211 = vpop.f32.mrb[0].mxu0
    %3212 = vmatprep.mubr.f32.mxu0 0.0
    %3213 = vmatmul.mubr.f32.gmra.mrb[0].mxu0 %v2912
    %v3214 = vpop.f32.mrb[0].mxu0
    %v3215 = vadd.f32 0.0, %v3214
    %v3216 = vpop.f32.mrb[0].mxu0
    %3217 = vmatprep.mubr.f32.mxu0 0.0
    %3218 = vmatmul.mubr.f32.gmra.mrb[0].mxu0 %v2915
    %v3219 = vpop.f32.mrb[0].mxu0
    %v3220 = vadd.f32 0.0, %v3219
    %v3221 = vpop.f32.mrb[0].mxu0
    %3222 = vmatprep.mubr.f32.mxu0 0.0
    %3223 = vmatmul.mubr.f32.gmra.mrb[0].mxu0 %v2918
    %v3224 = vpop.f32.mrb[0].mxu0
    %v3225 = vadd.f32 0.0, %v3224
    %v3226 = vpop.f32.mrb[0].mxu0
    %3227 = vmatprep.mubr.f32.mxu0 0.0
    %3228 = vmatmul.mubr.f32.gmra.mrb[0].mxu0 %v2921
    %v3229 = vpop.f32.mrb[0].mxu0
    %v3230 = vadd.f32 0.0, %v3229
    %v3231 = vpop.f32.mrb[0].mxu0
    %3232 = vmatprep.mubr.f32.mxu0 0.0
    %3233 = vmatmul.mubr.f32.gmra.mrb[0].mxu0 %v2924
    %v3234 = vpop.f32.mrb[0].mxu0
    %v3235 = vadd.f32 0.0, %v3234
    %v3236 = vpop.f32.mrb[0].mxu0
    %3237 = vmatprep.mubr.f32.mxu0 0.0
    %3238 = vmatmul.mubr.f32.gmra.mrb[0].mxu0 %v2927
    %v3239 = vpop.f32.mrb[0].mxu0
    %v3240 = vadd.f32 0.0, %v3239
    %v3241 = vpop.f32.mrb[0].mxu0
    %3242 = vmatprep.mubr.f32.mxu0 0.0
    %3243 = vmatmul.mubr.f32.gmra.mrb[0].mxu0 %v2930
    %v3244 = vpop.f32.mrb[0].mxu0
    %v3245 = vadd.f32 0.0, %v3244
    %v3246 = vpop.f32.mrb[0].mxu0
    %3247 = vmatprep.mubr.f32.mxu0 0.0
    %3248 = vmatmul.mubr.f32.gmra.mrb[0].mxu0 %v2933
    %v3249 = vpop.f32.mrb[0].mxu0
    %v3250 = vadd.f32 0.0, %v3249
    %v3251 = vpop.f32.mrb[0].mxu0
    %3252 = vmatprep.mubr.f32.mxu0 0.0
    %3253 = vmatmul.mubr.f32.gmra.mrb[0].mxu0 %v2936
    %v3254 = vpop.f32.mrb[0].mxu0
    %v3255 = vadd.f32 0.0, %v3254
    %v3256 = vpop.f32.mrb[0].mxu0
    %3257 = vmatprep.mubr.f32.mxu0 0.0
    %3258 = vmatmul.mubr.f32.gmra.mrb[0].mxu0 %v2939
    %v3259 = vpop.f32.mrb[0].mxu0
    %v3260 = vadd.f32 0.0, %v3259
    %v3261 = vpop.f32.mrb[0].mxu0
    %3262 = vmatprep.mubr.f32.mxu0 0.0
    %3263 = vmatmul.mubr.f32.gmra.mrb[0].mxu0 %v2942
    %v3264 = vpop.f32.mrb[0].mxu0
    %v3265 = vadd.f32 0.0, %v3264
    %v3266 = vpop.f32.mrb[0].mxu0
    %3267 = vmatprep.mubr.f32.mxu0 0.0
    %3268 = vmatmul.mubr.f32.gmra.mrb[0].mxu0 %v2945
    %v3269 = vpop.f32.mrb[0].mxu0
    %v3270 = vadd.f32 0.0, %v3269
    %v3271 = vpop.f32.mrb[0].mxu0
    %3272 = vmatprep.mubr.f32.mxu0 0.0
    %3273 = vmatmul.mubr.f32.gmra.mrb[0].mxu0 %v2948
    %v3274 = vpop.f32.mrb[0].mxu0
    %v3275 = vadd.f32 0.0, %v3274
    %v3276 = vpop.f32.mrb[0].mxu0
    %3277 = vmatprep.mubr.f32.mxu0 0.0
    %3278 = vmatmul.mubr.f32.gmra.mrb[0].mxu0 %v2951
    %v3279 = vpop.f32.mrb[0].mxu0
    %v3280 = vadd.f32 0.0, %v3279
    %v3281 = vpop.f32.mrb[0].mxu0
    %3282 = vmatprep.mubr.f32.mxu0 0.0
    %3283 = vmatmul.mubr.f32.gmra.mrb[0].mxu0 %v2954
    %v3284 = vpop.f32.mrb[0].mxu0
    %v3285 = vadd.f32 0.0, %v3284
    %v3286 = vpop.f32.mrb[0].mxu0
    %3287 = vmatprep.mubr.f32.mxu0 0.0
    %3288 = vmatmul.mubr.f32.gmra.mrb[0].mxu0 %v2957
    %v3289 = vpop.f32.mrb[0].mxu0
    %v3290 = vadd.f32 0.0, %v3289
    %v3291 = vpop.f32.mrb[0].mxu0
    %3292 = vmatprep.mubr.f32.mxu0 0.0
    %3293 = vmatmul.mubr.f32.gmra.mrb[0].mxu0 %v2960
    %v3294 = vpop.f32.mrb[0].mxu0
    %v3295 = vadd.f32 0.0, %v3294
    %v3296 = vpop.f32.mrb[0].mxu0
    %3297 = vmatprep.mubr.f32.mxu0 0.0
    %3298 = vmatmul.mubr.f32.gmra.mrb[0].mxu0 %v2963
    %v3299 = vpop.f32.mrb[0].mxu0
    %v3300 = vadd.f32 0.0, %v3299
    %v3301 = vpop.f32.mrb[0].mxu0
    %3302 = vmatprep.mubr.f32.mxu0 0.0
    %3303 = vmatmul.mubr.f32.gmra.mrb[0].mxu0 %v2966
    %v3304 = vpop.f32.mrb[0].mxu0
    %v3305 = vadd.f32 0.0, %v3304
    %v3306 = vpop.f32.mrb[0].mxu0
    %3307 = vmatprep.mubr.f32.mxu0 0.0
    %3308 = vmatmul.mubr.f32.gmra.mrb[0].mxu0 %v2969
    %v3309 = vpop.f32.mrb[0].mxu0
    %v3310 = vadd.f32 0.0, %v3309
    %v3311 = vpop.f32.mrb[0].mxu0
    %3312 = vmatprep.mubr.f32.mxu0 0.0
    %3313 = vmatmul.mubr.f32.gmra.mrb[0].mxu0 %v2972
    %v3314 = vpop.f32.mrb[0].mxu0
    %v3315 = vadd.f32 0.0, %v3314
    %v3316 = vpop.f32.mrb[0].mxu0
    %3317 = vmatprep.mubr.f32.mxu0 0.0
    %3318 = vmatmul.mubr.f32.gmra.mrb[0].mxu0 %v2975
    %v3319 = vpop.f32.mrb[0].mxu0
    %v3320 = vadd.f32 0.0, %v3319
    %v3321 = vpop.f32.mrb[0].mxu0
    %3322 = vmatprep.mubr.f32.mxu0 0.0
    %3323 = vmatmul.mubr.f32.gmra.mrb[0].mxu0 %v2978
    %v3324 = vpop.f32.mrb[0].mxu0
    %v3325 = vadd.f32 0.0, %v3324
    %v3326 = vpop.f32.mrb[0].mxu0
    %3327 = vmatprep.mubr.f32.mxu0 0.0
    %3328 = vmatmul.mubr.f32.gmra.mrb[0].mxu0 %v2981
    %v3329 = vpop.f32.mrb[0].mxu0
    %v3330 = vadd.f32 0.0, %v3329
    %v3331 = vpop.f32.mrb[0].mxu0
    %3332 = vmatprep.mubr.f32.mxu0 0.0
    %3333 = vmatmul.mubr.f32.gmra.mrb[0].mxu0 %v2984
    %v3334 = vpop.f32.mrb[0].mxu0
    %v3335 = vadd.f32 0.0, %v3334
    %v3336 = vpop.f32.mrb[0].mxu0
    %3337 = vmatprep.mubr.f32.mxu0 0.0
    %3338 = vmatmul.mubr.f32.gmra.mrb[0].mxu0 %v2987
    %v3339 = vpop.f32.mrb[0].mxu0
    %v3340 = vadd.f32 0.0, %v3339
    %v3341 = vpop.f32.mrb[0].mxu0
    %3342 = vmatprep.mubr.f32.mxu0 0.0
    %3343 = vmatmul.mubr.f32.gmra.mrb[0].mxu0 %v2990
    %v3344 = vpop.f32.mrb[0].mxu0
    %v3345 = vadd.f32 0.0, %v3344
    %v3346 = vpop.f32.mrb[0].mxu0
    %3347 = vmatprep.mubr.f32.mxu0 0.0
    %3348 = vmatmul.mubr.f32.gmra.mrb[0].mxu0 %v2993
    %v3349 = vpop.f32.mrb[0].mxu0
    %v3350 = vadd.f32 0.0, %v3349
    %v3351 = vpop.f32.mrb[0].mxu0
    %3352 = vmatprep.mubr.f32.mxu0 0.0
    %3353 = vmatmul.mubr.f32.gmra.mrb[0].mxu0 %v2996
    %v3354 = vpop.f32.mrb[0].mxu0
    %v3355 = vadd.f32 0.0, %v3354
    %v3356 = vpop.f32.mrb[0].mxu0
    %3357 = vmatprep.mubr.f32.mxu0 0.0
    %3358 = vmatmul.mubr.f32.gmra.mrb[0].mxu0 %v2999
    %v3359 = vpop.f32.mrb[0].mxu0
    %v3360 = vadd.f32 0.0, %v3359
    %v3361 = vpop.f32.mrb[0].mxu0
    %3362 = vmatprep.mubr.f32.mxu0 0.0
    %3363 = vmatmul.mubr.f32.gmra.mrb[0].mxu0 %v3002
    %v3364 = vpop.f32.mrb[0].mxu0
    %v3365 = vadd.f32 0.0, %v3364
    %v3366 = vpop.f32.mrb[0].mxu0
    %3367 = vmatprep.mubr.f32.mxu0 0.0
    %3368 = vmatmul.mubr.f32.gmra.mrb[0].mxu0 %v3005
    %v3369 = vpop.f32.mrb[0].mxu0
    %v3370 = vadd.f32 0.0, %v3369
    %v3371 = vpop.f32.mrb[0].mxu0
    %3372 = vmatprep.mubr.f32.mxu0 0.0
    %3373 = vmatmul.mubr.f32.gmra.mrb[0].mxu0 %v3008
    %v3374 = vpop.f32.mrb[0].mxu0
    %v3375 = vadd.f32 0.0, %v3374
    %v3376 = vpop.f32.mrb[0].mxu0
    %3377 = vmatprep.mubr.f32.mxu0 0.0
    %3378 = vmatmul.mubr.f32.gmra.mrb[0].mxu0 %v3011
    %v3379 = vpop.f32.mrb[0].mxu0
    %v3380 = vadd.f32 0.0, %v3379
    %v3381 = vpop.f32.mrb[0].mxu0
    %3382 = vmatprep.mubr.f32.mxu0 0.0
    %3383 = vmatmul.mubr.f32.gmra.mrb[0].mxu0 %v3014
    %v3384 = vpop.f32.mrb[0].mxu0
    %v3385 = vadd.f32 0.0, %v3384
    %v3386 = vpop.f32.mrb[0].mxu0
    %3387 = vmatprep.mubr.f32.mxu0 0.0
    %3388 = vmatmul.mubr.f32.gmra.mrb[0].mxu0 %v3017
    %v3389 = vpop.f32.mrb[0].mxu0
    %v3390 = vadd.f32 0.0, %v3389
    %v3391 = vpop.f32.mrb[0].mxu0
    %3392 = vmatprep.mubr.f32.mxu0 0.0
    %3393 = vmatmul.mubr.f32.gmra.mrb[0].mxu0 %v3020
    %v3394 = vpop.f32.mrb[0].mxu0
    %v3395 = vadd.f32 0.0, %v3394
    %v3396 = vpop.f32.mrb[0].mxu0
    %3397 = vmatprep.mubr.f32.mxu0 0.0
    %3398 = vmatmul.mubr.f32.gmra.mrb[0].mxu0 %v3023
    %v3399 = vpop.f32.mrb[0].mxu0
    %v3400 = vadd.f32 0.0, %v3399
    %v3401 = vpop.f32.mrb[0].mxu0
    %3402 = vmatprep.mubr.f32.mxu0 0.0
    %3403 = vmatmul.mubr.f32.gmra.mrb[0].mxu0 %v3026
    %v3404 = vpop.f32.mrb[0].mxu0
    %v3405 = vadd.f32 0.0, %v3404
    %v3406 = vpop.f32.mrb[0].mxu0
    %3407 = vmatprep.mubr.f32.mxu0 0.0
    %3408 = vmatmul.mubr.f32.gmra.mrb[0].mxu0 %v3029
    %v3409 = vpop.f32.mrb[0].mxu0
    %v3410 = vadd.f32 0.0, %v3409
    %v3411 = vpop.f32.mrb[0].mxu0
    %3412 = vmatprep.mubr.f32.mxu0 0.0
    %3413 = vmatmul.mubr.f32.gmra.mrb[0].mxu0 %v3032
    %v3414 = vpop.f32.mrb[0].mxu0
    %v3415 = vadd.f32 0.0, %v3414
    %v3416 = vpop.f32.mrb[0].mxu0
    %3417 = vmatprep.mubr.f32.mxu0 0.0
    %3418 = vmatmul.mubr.f32.gmra.mrb[0].mxu0 %v3035
    %v3419 = vpop.f32.mrb[0].mxu0
    %v3420 = vadd.f32 0.0, %v3419
    %v3421 = vpop.f32.mrb[0].mxu0
    %3422 = vmatprep.mubr.f32.mxu0 0.0
    %3423 = vmatmul.mubr.f32.gmra.mrb[0].mxu0 %v3038
    %v3424 = vpop.f32.mrb[0].mxu0
    %v3425 = vadd.f32 0.0, %v3424
    %v3426 = vpop.f32.mrb[0].mxu0
    %3427 = vdwg.mxu0
    %v3428 = vadd.f32 %v2718, %v3110
    %v3429 = vadd.f32 %v2719, %v3115
    %v3430 = vadd.f32 %v2720, %v3120
    %v3431 = vadd.f32 %v2721, %v3125
    %v3432 = vadd.f32 %v2722, %v3130
    %v3433 = vadd.f32 %v2723, %v3135
    %v3434 = vadd.f32 %v2724, %v3140
    %v3435 = vadd.f32 %v2725, %v3145
    %v3436 = vadd.f32 %v2726, %v3150
    %v3437 = vadd.f32 %v2727, %v3155
    %v3438 = vadd.f32 %v2728, %v3160
    %v3439 = vadd.f32 %v2729, %v3165
    %v3440 = vadd.f32 %v2730, %v3170
    %v3441 = vadd.f32 %v2731, %v3175
    %v3442 = vadd.f32 %v2732, %v3180
    %v3443 = vadd.f32 %v2733, %v3185
    %v3444 = vadd.f32 %v2734, %v3190
    %v3445 = vadd.f32 %v2735, %v3195
    %v3446 = vadd.f32 %v2736, %v3200
    %v3447 = vadd.f32 %v2737, %v3205
    %v3448 = vadd.f32 %v2738, %v3210
    %v3449 = vadd.f32 %v2739, %v3215
    %v3450 = vadd.f32 %v2740, %v3220
    %v3451 = vadd.f32 %v2741, %v3225
    %v3452 = vadd.f32 %v2742, %v3230
    %v3453 = vadd.f32 %v2743, %v3235
    %v3454 = vadd.f32 %v2744, %v3240
    %v3455 = vadd.f32 %v2745, %v3245
    %v3456 = vadd.f32 %v2746, %v3250
    %v3457 = vadd.f32 %v2747, %v3255
    %v3458 = vadd.f32 %v2748, %v3260
    %v3459 = vadd.f32 %v2749, %v3265
    %v3460 = vadd.f32 %v2750, %v3270
    %v3461 = vadd.f32 %v2751, %v3275
    %v3462 = vadd.f32 %v2752, %v3280
    %v3463 = vadd.f32 %v2753, %v3285
    %v3464 = vadd.f32 %v2754, %v3290
    %v3465 = vadd.f32 %v2755, %v3295
    %v3466 = vadd.f32 %v2756, %v3300
    %v3467 = vadd.f32 %v2757, %v3305
    %v3468 = vadd.f32 %v2758, %v3310
    %v3469 = vadd.f32 %v2759, %v3315
    %v3470 = vadd.f32 %v2760, %v3320
    %v3471 = vadd.f32 %v2761, %v3325
    %v3472 = vadd.f32 %v2762, %v3330
    %v3473 = vadd.f32 %v2763, %v3335
    %v3474 = vadd.f32 %v2764, %v3340
    %v3475 = vadd.f32 %v2765, %v3345
    %v3476 = vadd.f32 %v2766, %v3350
    %v3477 = vadd.f32 %v2767, %v3355
    %v3478 = vadd.f32 %v2768, %v3360
    %v3479 = vadd.f32 %v2769, %v3365
    %v3480 = vadd.f32 %v2770, %v3370
    %v3481 = vadd.f32 %v2771, %v3375
    %v3482 = vadd.f32 %v2772, %v3380
    %v3483 = vadd.f32 %v2773, %v3385
    %v3484 = vadd.f32 %v2774, %v3390
    %v3485 = vadd.f32 %v2775, %v3395
    %v3486 = vadd.f32 %v2776, %v3400
    %v3487 = vadd.f32 %v2777, %v3405
    %v3488 = vadd.f32 %v2778, %v3410
    %v3489 = vadd.f32 %v2779, %v3415
    %v3490 = vadd.f32 %v2780, %v3420
    %v3491 = vadd.f32 %v2781, %v3425
    %v3492 = vld [vmem:[%s715 + $0x1] sm:$0xff]
    %v3493 = vld [vmem:[%s715 + $0x9] sm:$0xff]
    %v3494 = vld [vmem:[%s715 + $0x19] sm:$0xff]
    %v3495 = vld [vmem:[%s715 + $0x21] sm:$0xff]
    %v3496 = vld [vmem:[%s715 + $0x31] sm:$0xff]
    %v3497 = vld [vmem:[%s715 + $0x39] sm:$0xff]
    %v3498 = vld [vmem:[%s715 + $0x49] sm:$0xff]
    %v3499 = vld [vmem:[%s715 + $0x51] sm:$0xff]
    %v3500 = vld [vmem:[%s715 + $0x61] sm:$0xff]
    %v3501 = vld [vmem:[%s715 + $0x69] sm:$0xff]
    %v3502 = vld [vmem:[%s715 + $0x79] sm:$0xff]
    %v3503 = vld [vmem:[%s715 + $0x81] sm:$0xff]
    %v3504 = vld [vmem:[%s715 + $0x91] sm:$0xff]
    %v3505 = vld [vmem:[%s715 + $0x99] sm:$0xff]
    %v3506 = vld [vmem:[%s715 + $0xa9] sm:$0xff]
    %v3507 = vld [vmem:[%s715 + $0xb1] sm:$0xff]
    %v3508 = vld [vmem:[%s715 + $0xc1] sm:$0xff]
    %v3509 = vld [vmem:[%s715 + $0xc9] sm:$0xff]
    %v3510 = vld [vmem:[%s715 + $0xd9] sm:$0xff]
    %v3511 = vld [vmem:[%s715 + $0xe1] sm:$0xff]
    %v3512 = vld [vmem:[%s715 + $0xf1] sm:$0xff]
    %v3513 = vld [vmem:[%s715 + $0xf9] sm:$0xff]
    %v3514 = vld [vmem:[%s715 + $0x109] sm:$0xff]
    %v3515 = vld [vmem:[%s715 + $0x111] sm:$0xff]
    %v3516 = vld [vmem:[%s715 + $0x121] sm:$0xff]
    %v3517 = vld [vmem:[%s715 + $0x129] sm:$0xff]
    %v3518 = vld [vmem:[%s715 + $0x139] sm:$0xff]
    %v3519 = vld [vmem:[%s715 + $0x141] sm:$0xff]
    %v3520 = vld [vmem:[%s715 + $0x151] sm:$0xff]
    %v3521 = vld [vmem:[%s715 + $0x159] sm:$0xff]
    %v3522 = vld [vmem:[%s715 + $0x169] sm:$0xff]
    %v3523 = vld [vmem:[%s715 + $0x171] sm:$0xff]
    %v3524 = vld [vmem:[%s715 + $0x1b1] sm:$0xff]
    %v3525 = vld [vmem:[%s715 + $0x1b9] sm:$0xff]
    %v3526 = vld [vmem:[%s715 + $0x1c9] sm:$0xff]
    %v3527 = vld [vmem:[%s715 + $0x1d1] sm:$0xff]
    %v3528 = vld [vmem:[%s715 + $0x1e1] sm:$0xff]
    %v3529 = vld [vmem:[%s715 + $0x1e9] sm:$0xff]
    %v3530 = vld [vmem:[%s715 + $0x1f9] sm:$0xff]
    %v3531 = vld [vmem:[%s715 + $0x201] sm:$0xff]
    %v3532 = vld [vmem:[%s715 + $0x211] sm:$0xff]
    %v3533 = vld [vmem:[%s715 + $0x219] sm:$0xff]
    %v3534 = vld [vmem:[%s715 + $0x229] sm:$0xff]
    %v3535 = vld [vmem:[%s715 + $0x231] sm:$0xff]
    %v3536 = vld [vmem:[%s715 + $0x241] sm:$0xff]
    %v3537 = vld [vmem:[%s715 + $0x249] sm:$0xff]
    %v3538 = vld [vmem:[%s715 + $0x259] sm:$0xff]
    %v3539 = vld [vmem:[%s715 + $0x261] sm:$0xff]
    %v3540 = vld [vmem:[%s715 + $0x271] sm:$0xff]
    %v3541 = vld [vmem:[%s715 + $0x279] sm:$0xff]
    %v3542 = vld [vmem:[%s715 + $0x289] sm:$0xff]
    %v3543 = vld [vmem:[%s715 + $0x291] sm:$0xff]
    %v3544 = vld [vmem:[%s715 + $0x2a1] sm:$0xff]
    %v3545 = vld [vmem:[%s715 + $0x2a9] sm:$0xff]
    %v3546 = vld [vmem:[%s715 + $0x2b9] sm:$0xff]
    %v3547 = vld [vmem:[%s715 + $0x2c1] sm:$0xff]
    %v3548 = vld [vmem:[%s715 + $0x2d1] sm:$0xff]
    %v3549 = vld [vmem:[%s715 + $0x2d9] sm:$0xff]
    %v3550 = vld [vmem:[%s715 + $0x2e9] sm:$0xff]
    %v3551 = vld [vmem:[%s715 + $0x2f1] sm:$0xff]
    %v3552 = vld [vmem:[%s715 + $0x301] sm:$0xff]
    %v3553 = vld [vmem:[%s715 + $0x309] sm:$0xff]
    %v3554 = vld [vmem:[%s715 + $0x319] sm:$0xff]
    %v3555 = vld [vmem:[%s715 + $0x321] sm:$0xff]
    %s3556 = scalar_lea.vmem %s2, 16
    %v3557 = vld [vmem:[%s3556] sm:$0xf]
    %v3559 = vsel %vm87, %v3492, 0
    %v3562 = vsel %vm87, %v3493, 0
    %v3565 = vsel %vm87, %v3494, 0
    %v3568 = vsel %vm87, %v3495, 0
    %v3571 = vsel %vm87, %v3496, 0
    %v3574 = vsel %vm87, %v3497, 0
    %v3577 = vsel %vm87, %v3498, 0
    %v3580 = vsel %vm87, %v3499, 0
    %v3583 = vsel %vm87, %v3500, 0
    %v3586 = vsel %vm87, %v3501, 0
    %v3589 = vsel %vm87, %v3502, 0
    %v3592 = vsel %vm87, %v3503, 0
    %v3595 = vsel %vm87, %v3504, 0
    %v3598 = vsel %vm87, %v3505, 0
    %v3601 = vsel %vm87, %v3506, 0
    %v3604 = vsel %vm87, %v3507, 0
    %v3607 = vsel %vm87, %v3508, 0
    %v3610 = vsel %vm87, %v3509, 0
    %v3613 = vsel %vm87, %v3510, 0
    %v3616 = vsel %vm87, %v3511, 0
    %v3619 = vsel %vm87, %v3512, 0
    %v3622 = vsel %vm87, %v3513, 0
    %v3625 = vsel %vm87, %v3514, 0
    %v3628 = vsel %vm87, %v3515, 0
    %v3631 = vsel %vm87, %v3516, 0
    %v3634 = vsel %vm87, %v3517, 0
    %v3637 = vsel %vm87, %v3518, 0
    %v3640 = vsel %vm87, %v3519, 0
    %v3643 = vsel %vm87, %v3520, 0
    %v3646 = vsel %vm87, %v3521, 0
    %v3649 = vsel %vm87, %v3522, 0
    %v3652 = vsel %vm87, %v3523, 0
    %v3655 = vsel %vm87, %v3524, 0
    %v3658 = vsel %vm87, %v3525, 0
    %v3661 = vsel %vm87, %v3526, 0
    %v3664 = vsel %vm87, %v3527, 0
    %v3667 = vsel %vm87, %v3528, 0
    %v3670 = vsel %vm87, %v3529, 0
    %v3673 = vsel %vm87, %v3530, 0
    %v3676 = vsel %vm87, %v3531, 0
    %v3679 = vsel %vm87, %v3532, 0
    %v3682 = vsel %vm87, %v3533, 0
    %v3685 = vsel %vm87, %v3534, 0
    %v3688 = vsel %vm87, %v3535, 0
    %v3691 = vsel %vm87, %v3536, 0
    %v3694 = vsel %vm87, %v3537, 0
    %v3697 = vsel %vm87, %v3538, 0
    %v3700 = vsel %vm87, %v3539, 0
    %v3703 = vsel %vm87, %v3540, 0
    %v3706 = vsel %vm87, %v3541, 0
    %v3709 = vsel %vm87, %v3542, 0
    %v3712 = vsel %vm87, %v3543, 0
    %v3715 = vsel %vm87, %v3544, 0
    %v3718 = vsel %vm87, %v3545, 0
    %v3721 = vsel %vm87, %v3546, 0
    %v3724 = vsel %vm87, %v3547, 0
    %v3727 = vsel %vm87, %v3548, 0
    %v3730 = vsel %vm87, %v3549, 0
    %v3733 = vsel %vm87, %v3550, 0
    %v3736 = vsel %vm87, %v3551, 0
    %v3739 = vsel %vm87, %v3552, 0
    %v3742 = vsel %vm87, %v3553, 0
    %v3745 = vsel %vm87, %v3554, 0
    %v3748 = vsel %vm87, %v3555, 0
    %v3751 = vsel %vm1103, %v3557, 0
    %3753 = vmatprep.subr.mxu0 0.0
    %3754 = vmatpush1.msra.mxu0 %v3751
    %3755 = vmatprep.subr.mxu0 0.0
    %3756 = vmatpush1.msra.mxu0 0.0
    %3757 = vmatprep.subr.mxu0 0.0
    %3758 = vmatpush1.msra.mxu0 0.0
    %3759 = vmatprep.subr.mxu0 0.0
    %3760 = vmatpush1.msra.mxu0 0.0
    %3761 = vmatprep.subr.mxu0 0.0
    %3762 = vmatpush1.msra.mxu0 0.0
    %3763 = vmatprep.subr.mxu0 0.0
    %3764 = vmatpush1.msra.mxu0 0.0
    %3765 = vmatprep.subr.mxu0 0.0
    %3766 = vmatpush1.msra.mxu0 0.0
    %3767 = vmatprep.subr.mxu0 0.0
    %3768 = vmatpush1.msra.mxu0 0.0
    %3769 = vmatprep.subr.mxu0 0.0
    %3770 = vmatpush1.msra.mxu0 0.0
    %3771 = vmatprep.subr.mxu0 0.0
    %3772 = vmatpush1.msra.mxu0 0.0
    %3773 = vmatprep.subr.mxu0 0.0
    %3774 = vmatpush1.msra.mxu0 0.0
    %3775 = vmatprep.subr.mxu0 0.0
    %3776 = vmatpush1.msra.mxu0 0.0
    %3777 = vmatprep.subr.mxu0 0.0
    %3778 = vmatpush1.msra.mxu0 0.0
    %3779 = vmatprep.subr.mxu0 0.0
    %3780 = vmatpush1.msra.mxu0 0.0
    %3781 = vmatprep.subr.mxu0 0.0
    %3782 = vmatpush1.msra.mxu0 0.0
    %3783 = vmatprep.subr.mxu0 0.0
    %3784 = vmatpush1.msra.mxu0 0.0
    %3785 = vmatprep.subr.mxu0 0.0
    %3786 = vmatpush1.msra.mxu0 0.0
    %3787 = vmatprep.subr.mxu0 0.0
    %3788 = vmatpush1.msra.mxu0 0.0
    %3789 = vmatprep.subr.mxu0 0.0
    %3790 = vmatpush1.msra.mxu0 0.0
    %3791 = vmatprep.subr.mxu0 0.0
    %3792 = vmatpush1.msra.mxu0 0.0
    %3793 = vmatprep.subr.mxu0 0.0
    %3794 = vmatpush1.msra.mxu0 0.0
    %3795 = vmatprep.subr.mxu0 0.0
    %3796 = vmatpush1.msra.mxu0 0.0
    %3797 = vmatprep.subr.mxu0 0.0
    %3798 = vmatpush1.msra.mxu0 0.0
    %3799 = vmatprep.subr.mxu0 0.0
    %3800 = vmatpush1.msra.mxu0 0.0
    %3801 = vmatprep.subr.mxu0 0.0
    %3802 = vmatpush1.msra.mxu0 0.0
    %3803 = vmatprep.subr.mxu0 0.0
    %3804 = vmatpush1.msra.mxu0 0.0
    %3805 = vmatprep.subr.mxu0 0.0
    %3806 = vmatpush1.msra.mxu0 0.0
    %3807 = vmatprep.subr.mxu0 0.0
    %3808 = vmatpush1.msra.mxu0 0.0
    %3809 = vmatprep.subr.mxu0 0.0
    %3810 = vmatpush1.msra.mxu0 0.0
    %3811 = vmatprep.subr.mxu0 0.0
    %3812 = vmatpush1.msra.mxu0 0.0
    %3813 = vmatprep.subr.mxu0 0.0
    %3814 = vmatpush1.msra.mxu0 0.0
    %3815 = vmatprep.subr.mxu0 0.0
    %3816 = vmatpush1.msra.mxu0 0.0
    %3817 = vmatprep.mubr.f32.mxu0 0.0
    %3818 = vmatmul.mubr.f32.gmra.mrb[0].mxu0 %v3559
    %v3819 = vpop.f32.mrb[0].mxu0
    %v3820 = vadd.f32 0.0, %v3819
    %v3821 = vpop.f32.mrb[0].mxu0
    %3822 = vmatprep.mubr.f32.mxu0 0.0
    %3823 = vmatmul.mubr.f32.gmra.mrb[0].mxu0 %v3562
    %v3824 = vpop.f32.mrb[0].mxu0
    %v3825 = vadd.f32 0.0, %v3824
    %v3826 = vpop.f32.mrb[0].mxu0
    %3827 = vmatprep.mubr.f32.mxu0 0.0
    %3828 = vmatmul.mubr.f32.gmra.mrb[0].mxu0 %v3565
    %v3829 = vpop.f32.mrb[0].mxu0
    %v3830 = vadd.f32 0.0, %v3829
    %v3831 = vpop.f32.mrb[0].mxu0
    %3832 = vmatprep.mubr.f32.mxu0 0.0
    %3833 = vmatmul.mubr.f32.gmra.mrb[0].mxu0 %v3568
    %v3834 = vpop.f32.mrb[0].mxu0
    %v3835 = vadd.f32 0.0, %v3834
    %v3836 = vpop.f32.mrb[0].mxu0
    %3837 = vmatprep.mubr.f32.mxu0 0.0
    %3838 = vmatmul.mubr.f32.gmra.mrb[0].mxu0 %v3571
    %v3839 = vpop.f32.mrb[0].mxu0
    %v3840 = vadd.f32 0.0, %v3839
    %v3841 = vpop.f32.mrb[0].mxu0
    %3842 = vmatprep.mubr.f32.mxu0 0.0
    %3843 = vmatmul.mubr.f32.gmra.mrb[0].mxu0 %v3574
    %v3844 = vpop.f32.mrb[0].mxu0
    %v3845 = vadd.f32 0.0, %v3844
    %v3846 = vpop.f32.mrb[0].mxu0
    %3847 = vmatprep.mubr.f32.mxu0 0.0
    %3848 = vmatmul.mubr.f32.gmra.mrb[0].mxu0 %v3577
    %v3849 = vpop.f32.mrb[0].mxu0
    %v3850 = vadd.f32 0.0, %v3849
    %v3851 = vpop.f32.mrb[0].mxu0
    %3852 = vmatprep.mubr.f32.mxu0 0.0
    %3853 = vmatmul.mubr.f32.gmra.mrb[0].mxu0 %v3580
    %v3854 = vpop.f32.mrb[0].mxu0
    %v3855 = vadd.f32 0.0, %v3854
    %v3856 = vpop.f32.mrb[0].mxu0
    %3857 = vmatprep.mubr.f32.mxu0 0.0
    %3858 = vmatmul.mubr.f32.gmra.mrb[0].mxu0 %v3583
    %v3859 = vpop.f32.mrb[0].mxu0
    %v3860 = vadd.f32 0.0, %v3859
    %v3861 = vpop.f32.mrb[0].mxu0
    %3862 = vmatprep.mubr.f32.mxu0 0.0
    %3863 = vmatmul.mubr.f32.gmra.mrb[0].mxu0 %v3586
    %v3864 = vpop.f32.mrb[0].mxu0
    %v3865 = vadd.f32 0.0, %v3864
    %v3866 = vpop.f32.mrb[0].mxu0
    %3867 = vmatprep.mubr.f32.mxu0 0.0
    %3868 = vmatmul.mubr.f32.gmra.mrb[0].mxu0 %v3589
    %v3869 = vpop.f32.mrb[0].mxu0
    %v3870 = vadd.f32 0.0, %v3869
    %v3871 = vpop.f32.mrb[0].mxu0
    %3872 = vmatprep.mubr.f32.mxu0 0.0
    %3873 = vmatmul.mubr.f32.gmra.mrb[0].mxu0 %v3592
    %v3874 = vpop.f32.mrb[0].mxu0
    %v3875 = vadd.f32 0.0, %v3874
    %v3876 = vpop.f32.mrb[0].mxu0
    %3877 = vmatprep.mubr.f32.mxu0 0.0
    %3878 = vmatmul.mubr.f32.gmra.mrb[0].mxu0 %v3595
    %v3879 = vpop.f32.mrb[0].mxu0
    %v3880 = vadd.f32 0.0, %v3879
    %v3881 = vpop.f32.mrb[0].mxu0
    %3882 = vmatprep.mubr.f32.mxu0 0.0
    %3883 = vmatmul.mubr.f32.gmra.mrb[0].mxu0 %v3598
    %v3884 = vpop.f32.mrb[0].mxu0
    %v3885 = vadd.f32 0.0, %v3884
    %v3886 = vpop.f32.mrb[0].mxu0
    %3887 = vmatprep.mubr.f32.mxu0 0.0
    %3888 = vmatmul.mubr.f32.gmra.mrb[0].mxu0 %v3601
    %v3889 = vpop.f32.mrb[0].mxu0
    %v3890 = vadd.f32 0.0, %v3889
    %v3891 = vpop.f32.mrb[0].mxu0
    %3892 = vmatprep.mubr.f32.mxu0 0.0
    %3893 = vmatmul.mubr.f32.gmra.mrb[0].mxu0 %v3604
    %v3894 = vpop.f32.mrb[0].mxu0
    %v3895 = vadd.f32 0.0, %v3894
    %v3896 = vpop.f32.mrb[0].mxu0
    %3897 = vmatprep.mubr.f32.mxu0 0.0
    %3898 = vmatmul.mubr.f32.gmra.mrb[0].mxu0 %v3607
    %v3899 = vpop.f32.mrb[0].mxu0
    %v3900 = vadd.f32 0.0, %v3899
    %v3901 = vpop.f32.mrb[0].mxu0
    %3902 = vmatprep.mubr.f32.mxu0 0.0
    %3903 = vmatmul.mubr.f32.gmra.mrb[0].mxu0 %v3610
    %v3904 = vpop.f32.mrb[0].mxu0
    %v3905 = vadd.f32 0.0, %v3904
    %v3906 = vpop.f32.mrb[0].mxu0
    %3907 = vmatprep.mubr.f32.mxu0 0.0
    %3908 = vmatmul.mubr.f32.gmra.mrb[0].mxu0 %v3613
    %v3909 = vpop.f32.mrb[0].mxu0
    %v3910 = vadd.f32 0.0, %v3909
    %v3911 = vpop.f32.mrb[0].mxu0
    %3912 = vmatprep.mubr.f32.mxu0 0.0
    %3913 = vmatmul.mubr.f32.gmra.mrb[0].mxu0 %v3616
    %v3914 = vpop.f32.mrb[0].mxu0
    %v3915 = vadd.f32 0.0, %v3914
    %v3916 = vpop.f32.mrb[0].mxu0
    %3917 = vmatprep.mubr.f32.mxu0 0.0
    %3918 = vmatmul.mubr.f32.gmra.mrb[0].mxu0 %v3619
    %v3919 = vpop.f32.mrb[0].mxu0
    %v3920 = vadd.f32 0.0, %v3919
    %v3921 = vpop.f32.mrb[0].mxu0
    %3922 = vmatprep.mubr.f32.mxu0 0.0
    %3923 = vmatmul.mubr.f32.gmra.mrb[0].mxu0 %v3622
    %v3924 = vpop.f32.mrb[0].mxu0
    %v3925 = vadd.f32 0.0, %v3924
    %v3926 = vpop.f32.mrb[0].mxu0
    %3927 = vmatprep.mubr.f32.mxu0 0.0
    %3928 = vmatmul.mubr.f32.gmra.mrb[0].mxu0 %v3625
    %v3929 = vpop.f32.mrb[0].mxu0
    %v3930 = vadd.f32 0.0, %v3929
    %v3931 = vpop.f32.mrb[0].mxu0
    %3932 = vmatprep.mubr.f32.mxu0 0.0
    %3933 = vmatmul.mubr.f32.gmra.mrb[0].mxu0 %v3628
    %v3934 = vpop.f32.mrb[0].mxu0
    %v3935 = vadd.f32 0.0, %v3934
    %v3936 = vpop.f32.mrb[0].mxu0
    %3937 = vmatprep.mubr.f32.mxu0 0.0
    %3938 = vmatmul.mubr.f32.gmra.mrb[0].mxu0 %v3631
    %v3939 = vpop.f32.mrb[0].mxu0
    %v3940 = vadd.f32 0.0, %v3939
    %v3941 = vpop.f32.mrb[0].mxu0
    %3942 = vmatprep.mubr.f32.mxu0 0.0
    %3943 = vmatmul.mubr.f32.gmra.mrb[0].mxu0 %v3634
    %v3944 = vpop.f32.mrb[0].mxu0
    %v3945 = vadd.f32 0.0, %v3944
    %v3946 = vpop.f32.mrb[0].mxu0
    %3947 = vmatprep.mubr.f32.mxu0 0.0
    %3948 = vmatmul.mubr.f32.gmra.mrb[0].mxu0 %v3637
    %v3949 = vpop.f32.mrb[0].mxu0
    %v3950 = vadd.f32 0.0, %v3949
    %v3951 = vpop.f32.mrb[0].mxu0
    %3952 = vmatprep.mubr.f32.mxu0 0.0
    %3953 = vmatmul.mubr.f32.gmra.mrb[0].mxu0 %v3640
    %v3954 = vpop.f32.mrb[0].mxu0
    %v3955 = vadd.f32 0.0, %v3954
    %v3956 = vpop.f32.mrb[0].mxu0
    %3957 = vmatprep.mubr.f32.mxu0 0.0
    %3958 = vmatmul.mubr.f32.gmra.mrb[0].mxu0 %v3643
    %v3959 = vpop.f32.mrb[0].mxu0
    %v3960 = vadd.f32 0.0, %v3959
    %v3961 = vpop.f32.mrb[0].mxu0
    %3962 = vmatprep.mubr.f32.mxu0 0.0
    %3963 = vmatmul.mubr.f32.gmra.mrb[0].mxu0 %v3646
    %v3964 = vpop.f32.mrb[0].mxu0
    %v3965 = vadd.f32 0.0, %v3964
    %v3966 = vpop.f32.mrb[0].mxu0
    %3967 = vmatprep.mubr.f32.mxu0 0.0
    %3968 = vmatmul.mubr.f32.gmra.mrb[0].mxu0 %v3649
    %v3969 = vpop.f32.mrb[0].mxu0
    %v3970 = vadd.f32 0.0, %v3969
    %v3971 = vpop.f32.mrb[0].mxu0
    %3972 = vmatprep.mubr.f32.mxu0 0.0
    %3973 = vmatmul.mubr.f32.gmra.mrb[0].mxu0 %v3652
    %v3974 = vpop.f32.mrb[0].mxu0
    %v3975 = vadd.f32 0.0, %v3974
    %v3976 = vpop.f32.mrb[0].mxu0
    %3977 = vmatprep.mubr.f32.mxu0 0.0
    %3978 = vmatmul.mubr.f32.gmra.mrb[0].mxu0 %v3655
    %v3979 = vpop.f32.mrb[0].mxu0
    %v3980 = vadd.f32 0.0, %v3979
    %v3981 = vpop.f32.mrb[0].mxu0
    %3982 = vmatprep.mubr.f32.mxu0 0.0
    %3983 = vmatmul.mubr.f32.gmra.mrb[0].mxu0 %v3658
    %v3984 = vpop.f32.mrb[0].mxu0
    %v3985 = vadd.f32 0.0, %v3984
    %v3986 = vpop.f32.mrb[0].mxu0
    %3987 = vmatprep.mubr.f32.mxu0 0.0
    %3988 = vmatmul.mubr.f32.gmra.mrb[0].mxu0 %v3661
    %v3989 = vpop.f32.mrb[0].mxu0
    %v3990 = vadd.f32 0.0, %v3989
    %v3991 = vpop.f32.mrb[0].mxu0
    %3992 = vmatprep.mubr.f32.mxu0 0.0
    %3993 = vmatmul.mubr.f32.gmra.mrb[0].mxu0 %v3664
    %v3994 = vpop.f32.mrb[0].mxu0
    %v3995 = vadd.f32 0.0, %v3994
    %v3996 = vpop.f32.mrb[0].mxu0
    %3997 = vmatprep.mubr.f32.mxu0 0.0
    %3998 = vmatmul.mubr.f32.gmra.mrb[0].mxu0 %v3667
    %v3999 = vpop.f32.mrb[0].mxu0
    %v4000 = vadd.f32 0.0, %v3999
    %v4001 = vpop.f32.mrb[0].mxu0
    %4002 = vmatprep.mubr.f32.mxu0 0.0
    %4003 = vmatmul.mubr.f32.gmra.mrb[0].mxu0 %v3670
    %v4004 = vpop.f32.mrb[0].mxu0
    %v4005 = vadd.f32 0.0, %v4004
    %v4006 = vpop.f32.mrb[0].mxu0
    %4007 = vmatprep.mubr.f32.mxu0 0.0
    %4008 = vmatmul.mubr.f32.gmra.mrb[0].mxu0 %v3673
    %v4009 = vpop.f32.mrb[0].mxu0
    %v4010 = vadd.f32 0.0, %v4009
    %v4011 = vpop.f32.mrb[0].mxu0
    %4012 = vmatprep.mubr.f32.mxu0 0.0
    %4013 = vmatmul.mubr.f32.gmra.mrb[0].mxu0 %v3676
    %v4014 = vpop.f32.mrb[0].mxu0
    %v4015 = vadd.f32 0.0, %v4014
    %v4016 = vpop.f32.mrb[0].mxu0
    %4017 = vmatprep.mubr.f32.mxu0 0.0
    %4018 = vmatmul.mubr.f32.gmra.mrb[0].mxu0 %v3679
    %v4019 = vpop.f32.mrb[0].mxu0
    %v4020 = vadd.f32 0.0, %v4019
    %v4021 = vpop.f32.mrb[0].mxu0
    %4022 = vmatprep.mubr.f32.mxu0 0.0
    %4023 = vmatmul.mubr.f32.gmra.mrb[0].mxu0 %v3682
    %v4024 = vpop.f32.mrb[0].mxu0
    %v4025 = vadd.f32 0.0, %v4024
    %v4026 = vpop.f32.mrb[0].mxu0
    %4027 = vmatprep.mubr.f32.mxu0 0.0
    %4028 = vmatmul.mubr.f32.gmra.mrb[0].mxu0 %v3685
    %v4029 = vpop.f32.mrb[0].mxu0
    %v4030 = vadd.f32 0.0, %v4029
    %v4031 = vpop.f32.mrb[0].mxu0
    %4032 = vmatprep.mubr.f32.mxu0 0.0
    %4033 = vmatmul.mubr.f32.gmra.mrb[0].mxu0 %v3688
    %v4034 = vpop.f32.mrb[0].mxu0
    %v4035 = vadd.f32 0.0, %v4034
    %v4036 = vpop.f32.mrb[0].mxu0
    %4037 = vmatprep.mubr.f32.mxu0 0.0
    %4038 = vmatmul.mubr.f32.gmra.mrb[0].mxu0 %v3691
    %v4039 = vpop.f32.mrb[0].mxu0
    %v4040 = vadd.f32 0.0, %v4039
    %v4041 = vpop.f32.mrb[0].mxu0
    %4042 = vmatprep.mubr.f32.mxu0 0.0
    %4043 = vmatmul.mubr.f32.gmra.mrb[0].mxu0 %v3694
    %v4044 = vpop.f32.mrb[0].mxu0
    %v4045 = vadd.f32 0.0, %v4044
    %v4046 = vpop.f32.mrb[0].mxu0
    %4047 = vmatprep.mubr.f32.mxu0 0.0
    %4048 = vmatmul.mubr.f32.gmra.mrb[0].mxu0 %v3697
    %v4049 = vpop.f32.mrb[0].mxu0
    %v4050 = vadd.f32 0.0, %v4049
    %v4051 = vpop.f32.mrb[0].mxu0
    %4052 = vmatprep.mubr.f32.mxu0 0.0
    %4053 = vmatmul.mubr.f32.gmra.mrb[0].mxu0 %v3700
    %v4054 = vpop.f32.mrb[0].mxu0
    %v4055 = vadd.f32 0.0, %v4054
    %v4056 = vpop.f32.mrb[0].mxu0
    %4057 = vmatprep.mubr.f32.mxu0 0.0
    %4058 = vmatmul.mubr.f32.gmra.mrb[0].mxu0 %v3703
    %v4059 = vpop.f32.mrb[0].mxu0
    %v4060 = vadd.f32 0.0, %v4059
    %v4061 = vpop.f32.mrb[0].mxu0
    %4062 = vmatprep.mubr.f32.mxu0 0.0
    %4063 = vmatmul.mubr.f32.gmra.mrb[0].mxu0 %v3706
    %v4064 = vpop.f32.mrb[0].mxu0
    %v4065 = vadd.f32 0.0, %v4064
    %v4066 = vpop.f32.mrb[0].mxu0
    %4067 = vmatprep.mubr.f32.mxu0 0.0
    %4068 = vmatmul.mubr.f32.gmra.mrb[0].mxu0 %v3709
    %v4069 = vpop.f32.mrb[0].mxu0
    %v4070 = vadd.f32 0.0, %v4069
    %v4071 = vpop.f32.mrb[0].mxu0
    %4072 = vmatprep.mubr.f32.mxu0 0.0
    %4073 = vmatmul.mubr.f32.gmra.mrb[0].mxu0 %v3712
    %v4074 = vpop.f32.mrb[0].mxu0
    %v4075 = vadd.f32 0.0, %v4074
    %v4076 = vpop.f32.mrb[0].mxu0
    %4077 = vmatprep.mubr.f32.mxu0 0.0
    %4078 = vmatmul.mubr.f32.gmra.mrb[0].mxu0 %v3715
    %v4079 = vpop.f32.mrb[0].mxu0
    %v4080 = vadd.f32 0.0, %v4079
    %v4081 = vpop.f32.mrb[0].mxu0
    %4082 = vmatprep.mubr.f32.mxu0 0.0
    %4083 = vmatmul.mubr.f32.gmra.mrb[0].mxu0 %v3718
    %v4084 = vpop.f32.mrb[0].mxu0
    %v4085 = vadd.f32 0.0, %v4084
    %v4086 = vpop.f32.mrb[0].mxu0
    %4087 = vmatprep.mubr.f32.mxu0 0.0
    %4088 = vmatmul.mubr.f32.gmra.mrb[0].mxu0 %v3721
    %v4089 = vpop.f32.mrb[0].mxu0
    %v4090 = vadd.f32 0.0, %v4089
    %v4091 = vpop.f32.mrb[0].mxu0
    %4092 = vmatprep.mubr.f32.mxu0 0.0
    %4093 = vmatmul.mubr.f32.gmra.mrb[0].mxu0 %v3724
    %v4094 = vpop.f32.mrb[0].mxu0
    %v4095 = vadd.f32 0.0, %v4094
    %v4096 = vpop.f32.mrb[0].mxu0
    %4097 = vmatprep.mubr.f32.mxu0 0.0
    %4098 = vmatmul.mubr.f32.gmra.mrb[0].mxu0 %v3727
    %v4099 = vpop.f32.mrb[0].mxu0
    %v4100 = vadd.f32 0.0, %v4099
    %v4101 = vpop.f32.mrb[0].mxu0
    %4102 = vmatprep.mubr.f32.mxu0 0.0
    %4103 = vmatmul.mubr.f32.gmra.mrb[0].mxu0 %v3730
    %v4104 = vpop.f32.mrb[0].mxu0
    %v4105 = vadd.f32 0.0, %v4104
    %v4106 = vpop.f32.mrb[0].mxu0
    %4107 = vmatprep.mubr.f32.mxu0 0.0
    %4108 = vmatmul.mubr.f32.gmra.mrb[0].mxu0 %v3733
    %v4109 = vpop.f32.mrb[0].mxu0
    %v4110 = vadd.f32 0.0, %v4109
    %v4111 = vpop.f32.mrb[0].mxu0
    %4112 = vmatprep.mubr.f32.mxu0 0.0
    %4113 = vmatmul.mubr.f32.gmra.mrb[0].mxu0 %v3736
    %v4114 = vpop.f32.mrb[0].mxu0
    %v4115 = vadd.f32 0.0, %v4114
    %v4116 = vpop.f32.mrb[0].mxu0
    %4117 = vmatprep.mubr.f32.mxu0 0.0
    %4118 = vmatmul.mubr.f32.gmra.mrb[0].mxu0 %v3739
    %v4119 = vpop.f32.mrb[0].mxu0
    %v4120 = vadd.f32 0.0, %v4119
    %v4121 = vpop.f32.mrb[0].mxu0
    %4122 = vmatprep.mubr.f32.mxu0 0.0
    %4123 = vmatmul.mubr.f32.gmra.mrb[0].mxu0 %v3742
    %v4124 = vpop.f32.mrb[0].mxu0
    %v4125 = vadd.f32 0.0, %v4124
    %v4126 = vpop.f32.mrb[0].mxu0
    %4127 = vmatprep.mubr.f32.mxu0 0.0
    %4128 = vmatmul.mubr.f32.gmra.mrb[0].mxu0 %v3745
    %v4129 = vpop.f32.mrb[0].mxu0
    %v4130 = vadd.f32 0.0, %v4129
    %v4131 = vpop.f32.mrb[0].mxu0
    %4132 = vmatprep.mubr.f32.mxu0 0.0
    %4133 = vmatmul.mubr.f32.gmra.mrb[0].mxu0 %v3748
    %v4134 = vpop.f32.mrb[0].mxu0
    %v4135 = vadd.f32 0.0, %v4134
    %v4136 = vpop.f32.mrb[0].mxu0
    %4137 = vdwg.mxu0
    %v4138 = vadd.f32 %v3428, %v3820
    %v4139 = vadd.f32 %v3429, %v3825
    %v4140 = vadd.f32 %v3430, %v3830
    %v4141 = vadd.f32 %v3431, %v3835
    %v4142 = vadd.f32 %v3432, %v3840
    %v4143 = vadd.f32 %v3433, %v3845
    %v4144 = vadd.f32 %v3434, %v3850
    %v4145 = vadd.f32 %v3435, %v3855
    %v4146 = vadd.f32 %v3436, %v3860
    %v4147 = vadd.f32 %v3437, %v3865
    %v4148 = vadd.f32 %v3438, %v3870
    %v4149 = vadd.f32 %v3439, %v3875
    %v4150 = vadd.f32 %v3440, %v3880
    %v4151 = vadd.f32 %v3441, %v3885
    %v4152 = vadd.f32 %v3442, %v3890
    %v4153 = vadd.f32 %v3443, %v3895
    %v4154 = vadd.f32 %v3444, %v3900
    %v4155 = vadd.f32 %v3445, %v3905
    %v4156 = vadd.f32 %v3446, %v3910
    %v4157 = vadd.f32 %v3447, %v3915
    %v4158 = vadd.f32 %v3448, %v3920
    %v4159 = vadd.f32 %v3449, %v3925
    %v4160 = vadd.f32 %v3450, %v3930
    %v4161 = vadd.f32 %v3451, %v3935
    %v4162 = vadd.f32 %v3452, %v3940
    %v4163 = vadd.f32 %v3453, %v3945
    %v4164 = vadd.f32 %v3454, %v3950
    %v4165 = vadd.f32 %v3455, %v3955
    %v4166 = vadd.f32 %v3456, %v3960
    %v4167 = vadd.f32 %v3457, %v3965
    %v4168 = vadd.f32 %v3458, %v3970
    %v4169 = vadd.f32 %v3459, %v3975
    %v4170 = vadd.f32 %v3460, %v3980
    %v4171 = vadd.f32 %v3461, %v3985
    %v4172 = vadd.f32 %v3462, %v3990
    %v4173 = vadd.f32 %v3463, %v3995
    %v4174 = vadd.f32 %v3464, %v4000
    %v4175 = vadd.f32 %v3465, %v4005
    %v4176 = vadd.f32 %v3466, %v4010
    %v4177 = vadd.f32 %v3467, %v4015
    %v4178 = vadd.f32 %v3468, %v4020
    %v4179 = vadd.f32 %v3469, %v4025
    %v4180 = vadd.f32 %v3470, %v4030
    %v4181 = vadd.f32 %v3471, %v4035
    %v4182 = vadd.f32 %v3472, %v4040
    %v4183 = vadd.f32 %v3473, %v4045
    %v4184 = vadd.f32 %v3474, %v4050
    %v4185 = vadd.f32 %v3475, %v4055
    %v4186 = vadd.f32 %v3476, %v4060
    %v4187 = vadd.f32 %v3477, %v4065
    %v4188 = vadd.f32 %v3478, %v4070
    %v4189 = vadd.f32 %v3479, %v4075
    %v4190 = vadd.f32 %v3480, %v4080
    %v4191 = vadd.f32 %v3481, %v4085
    %v4192 = vadd.f32 %v3482, %v4090
    %v4193 = vadd.f32 %v3483, %v4095
    %v4194 = vadd.f32 %v3484, %v4100
    %v4195 = vadd.f32 %v3485, %v4105
    %v4196 = vadd.f32 %v3486, %v4110
    %v4197 = vadd.f32 %v3487, %v4115
    %v4198 = vadd.f32 %v3488, %v4120
    %v4199 = vadd.f32 %v3489, %v4125
    %v4200 = vadd.f32 %v3490, %v4130
    %v4201 = vadd.f32 %v3491, %v4135
    %v4202 = vld [vmem:[%s715 + $0x2] sm:$0xff]
    %v4203 = vld [vmem:[%s715 + $0xa] sm:$0xff]
    %v4204 = vld [vmem:[%s715 + $0x1a] sm:$0xff]
    %v4205 = vld [vmem:[%s715 + $0x22] sm:$0xff]
    %v4206 = vld [vmem:[%s715 + $0x32] sm:$0xff]
    %v4207 = vld [vmem:[%s715 + $0x3a] sm:$0xff]
    %v4208 = vld [vmem:[%s715 + $0x4a] sm:$0xff]
    %v4209 = vld [vmem:[%s715 + $0x52] sm:$0xff]
    %v4210 = vld [vmem:[%s715 + $0x62] sm:$0xff]
    %v4211 = vld [vmem:[%s715 + $0x6a] sm:$0xff]
    %v4212 = vld [vmem:[%s715 + $0x7a] sm:$0xff]
    %v4213 = vld [vmem:[%s715 + $0x82] sm:$0xff]
    %v4214 = vld [vmem:[%s715 + $0x92] sm:$0xff]
    %v4215 = vld [vmem:[%s715 + $0x9a] sm:$0xff]
    %v4216 = vld [vmem:[%s715 + $0xaa] sm:$0xff]
    %v4217 = vld [vmem:[%s715 + $0xb2] sm:$0xff]
    %v4218 = vld [vmem:[%s715 + $0xc2] sm:$0xff]
    %v4219 = vld [vmem:[%s715 + $0xca] sm:$0xff]
    %v4220 = vld [vmem:[%s715 + $0xda] sm:$0xff]
    %v4221 = vld [vmem:[%s715 + $0xe2] sm:$0xff]
    %v4222 = vld [vmem:[%s715 + $0xf2] sm:$0xff]
    %v4223 = vld [vmem:[%s715 + $0xfa] sm:$0xff]
    %v4224 = vld [vmem:[%s715 + $0x10a] sm:$0xff]
    %v4225 = vld [vmem:[%s715 + $0x112] sm:$0xff]
    %v4226 = vld [vmem:[%s715 + $0x122] sm:$0xff]
    %v4227 = vld [vmem:[%s715 + $0x12a] sm:$0xff]
    %v4228 = vld [vmem:[%s715 + $0x13a] sm:$0xff]
    %v4229 = vld [vmem:[%s715 + $0x142] sm:$0xff]
    %v4230 = vld [vmem:[%s715 + $0x152] sm:$0xff]
    %v4231 = vld [vmem:[%s715 + $0x15a] sm:$0xff]
    %v4232 = vld [vmem:[%s715 + $0x16a] sm:$0xff]
    %v4233 = vld [vmem:[%s715 + $0x172] sm:$0xff]
    %v4234 = vld [vmem:[%s715 + $0x1b2] sm:$0xff]
    %v4235 = vld [vmem:[%s715 + $0x1ba] sm:$0xff]
    %v4236 = vld [vmem:[%s715 + $0x1ca] sm:$0xff]
    %v4237 = vld [vmem:[%s715 + $0x1d2] sm:$0xff]
    %v4238 = vld [vmem:[%s715 + $0x1e2] sm:$0xff]
    %v4239 = vld [vmem:[%s715 + $0x1ea] sm:$0xff]
    %v4240 = vld [vmem:[%s715 + $0x1fa] sm:$0xff]
    %v4241 = vld [vmem:[%s715 + $0x202] sm:$0xff]
    %v4242 = vld [vmem:[%s715 + $0x212] sm:$0xff]
    %v4243 = vld [vmem:[%s715 + $0x21a] sm:$0xff]
    %v4244 = vld [vmem:[%s715 + $0x22a] sm:$0xff]
    %v4245 = vld [vmem:[%s715 + $0x232] sm:$0xff]
    %v4246 = vld [vmem:[%s715 + $0x242] sm:$0xff]
    %v4247 = vld [vmem:[%s715 + $0x24a] sm:$0xff]
    %v4248 = vld [vmem:[%s715 + $0x25a] sm:$0xff]
    %v4249 = vld [vmem:[%s715 + $0x262] sm:$0xff]
    %v4250 = vld [vmem:[%s715 + $0x272] sm:$0xff]
    %v4251 = vld [vmem:[%s715 + $0x27a] sm:$0xff]
    %v4252 = vld [vmem:[%s715 + $0x28a] sm:$0xff]
    %v4253 = vld [vmem:[%s715 + $0x292] sm:$0xff]
    %v4254 = vld [vmem:[%s715 + $0x2a2] sm:$0xff]
    %v4255 = vld [vmem:[%s715 + $0x2aa] sm:$0xff]
    %v4256 = vld [vmem:[%s715 + $0x2ba] sm:$0xff]
    %v4257 = vld [vmem:[%s715 + $0x2c2] sm:$0xff]
    %v4258 = vld [vmem:[%s715 + $0x2d2] sm:$0xff]
    %v4259 = vld [vmem:[%s715 + $0x2da] sm:$0xff]
    %v4260 = vld [vmem:[%s715 + $0x2ea] sm:$0xff]
    %v4261 = vld [vmem:[%s715 + $0x2f2] sm:$0xff]
    %v4262 = vld [vmem:[%s715 + $0x302] sm:$0xff]
    %v4263 = vld [vmem:[%s715 + $0x30a] sm:$0xff]
    %v4264 = vld [vmem:[%s715 + $0x31a] sm:$0xff]
    %v4265 = vld [vmem:[%s715 + $0x322] sm:$0xff]
    %s4266 = scalar_lea.vmem %s2, 20
    %v4267 = vld [vmem:[%s4266] sm:$0xf]
    %v4269 = vsel %vm87, %v4202, 0
    %v4272 = vsel %vm87, %v4203, 0
    %v4275 = vsel %vm87, %v4204, 0
    %v4278 = vsel %vm87, %v4205, 0
    %v4281 = vsel %vm87, %v4206, 0
    %v4284 = vsel %vm87, %v4207, 0
    %v4287 = vsel %vm87, %v4208, 0
    %v4290 = vsel %vm87, %v4209, 0
    %v4293 = vsel %vm87, %v4210, 0
    %v4296 = vsel %vm87, %v4211, 0
    %v4299 = vsel %vm87, %v4212, 0
    %v4302 = vsel %vm87, %v4213, 0
    %v4305 = vsel %vm87, %v4214, 0
    %v4308 = vsel %vm87, %v4215, 0
    %v4311 = vsel %vm87, %v4216, 0
    %v4314 = vsel %vm87, %v4217, 0
    %v4317 = vsel %vm87, %v4218, 0
    %v4320 = vsel %vm87, %v4219, 0
    %v4323 = vsel %vm87, %v4220, 0
    %v4326 = vsel %vm87, %v4221, 0
    %v4329 = vsel %vm87, %v4222, 0
    %v4332 = vsel %vm87, %v4223, 0
    %v4335 = vsel %vm87, %v4224, 0
    %v4338 = vsel %vm87, %v4225, 0
    %v4341 = vsel %vm87, %v4226, 0
    %v4344 = vsel %vm87, %v4227, 0
    %v4347 = vsel %vm87, %v4228, 0
    %v4350 = vsel %vm87, %v4229, 0
    %v4353 = vsel %vm87, %v4230, 0
    %v4356 = vsel %vm87, %v4231, 0
    %v4359 = vsel %vm87, %v4232, 0
    %v4362 = vsel %vm87, %v4233, 0
    %v4365 = vsel %vm87, %v4234, 0
    %v4368 = vsel %vm87, %v4235, 0
    %v4371 = vsel %vm87, %v4236, 0
    %v4374 = vsel %vm87, %v4237, 0
    %v4377 = vsel %vm87, %v4238, 0
    %v4380 = vsel %vm87, %v4239, 0
    %v4383 = vsel %vm87, %v4240, 0
    %v4386 = vsel %vm87, %v4241, 0
    %v4389 = vsel %vm87, %v4242, 0
    %v4392 = vsel %vm87, %v4243, 0
    %v4395 = vsel %vm87, %v4244, 0
    %v4398 = vsel %vm87, %v4245, 0
    %v4401 = vsel %vm87, %v4246, 0
    %v4404 = vsel %vm87, %v4247, 0
    %v4407 = vsel %vm87, %v4248, 0
    %v4410 = vsel %vm87, %v4249, 0
    %v4413 = vsel %vm87, %v4250, 0
    %v4416 = vsel %vm87, %v4251, 0
    %v4419 = vsel %vm87, %v4252, 0
    %v4422 = vsel %vm87, %v4253, 0
    %v4425 = vsel %vm87, %v4254, 0
    %v4428 = vsel %vm87, %v4255, 0
    %v4431 = vsel %vm87, %v4256, 0
    %v4434 = vsel %vm87, %v4257, 0
    %v4437 = vsel %vm87, %v4258, 0
    %v4440 = vsel %vm87, %v4259, 0
    %v4443 = vsel %vm87, %v4260, 0
    %v4446 = vsel %vm87, %v4261, 0
    %v4449 = vsel %vm87, %v4262, 0
    %v4452 = vsel %vm87, %v4263, 0
    %v4455 = vsel %vm87, %v4264, 0
    %v4458 = vsel %vm87, %v4265, 0
    %v4461 = vsel %vm1103, %v4267, 0
    %4463 = vmatprep.subr.mxu0 0.0
    %4464 = vmatpush1.msra.mxu0 %v4461
    %4465 = vmatprep.subr.mxu0 0.0
    %4466 = vmatpush1.msra.mxu0 0.0
    %4467 = vmatprep.subr.mxu0 0.0
    %4468 = vmatpush1.msra.mxu0 0.0
    %4469 = vmatprep.subr.mxu0 0.0
    %4470 = vmatpush1.msra.mxu0 0.0
    %4471 = vmatprep.subr.mxu0 0.0
    %4472 = vmatpush1.msra.mxu0 0.0
    %4473 = vmatprep.subr.mxu0 0.0
    %4474 = vmatpush1.msra.mxu0 0.0
    %4475 = vmatprep.subr.mxu0 0.0
    %4476 = vmatpush1.msra.mxu0 0.0
    %4477 = vmatprep.subr.mxu0 0.0
    %4478 = vmatpush1.msra.mxu0 0.0
    %4479 = vmatprep.subr.mxu0 0.0
    %4480 = vmatpush1.msra.mxu0 0.0
    %4481 = vmatprep.subr.mxu0 0.0
    %4482 = vmatpush1.msra.mxu0 0.0
    %4483 = vmatprep.subr.mxu0 0.0
    %4484 = vmatpush1.msra.mxu0 0.0
    %4485 = vmatprep.subr.mxu0 0.0
    %4486 = vmatpush1.msra.mxu0 0.0
    %4487 = vmatprep.subr.mxu0 0.0
    %4488 = vmatpush1.msra.mxu0 0.0
    %4489 = vmatprep.subr.mxu0 0.0
    %4490 = vmatpush1.msra.mxu0 0.0
    %4491 = vmatprep.subr.mxu0 0.0
    %4492 = vmatpush1.msra.mxu0 0.0
    %4493 = vmatprep.subr.mxu0 0.0
    %4494 = vmatpush1.msra.mxu0 0.0
    %4495 = vmatprep.subr.mxu0 0.0
    %4496 = vmatpush1.msra.mxu0 0.0
    %4497 = vmatprep.subr.mxu0 0.0
    %4498 = vmatpush1.msra.mxu0 0.0
    %4499 = vmatprep.subr.mxu0 0.0
    %4500 = vmatpush1.msra.mxu0 0.0
    %4501 = vmatprep.subr.mxu0 0.0
    %4502 = vmatpush1.msra.mxu0 0.0
    %4503 = vmatprep.subr.mxu0 0.0
    %4504 = vmatpush1.msra.mxu0 0.0
    %4505 = vmatprep.subr.mxu0 0.0
    %4506 = vmatpush1.msra.mxu0 0.0
    %4507 = vmatprep.subr.mxu0 0.0
    %4508 = vmatpush1.msra.mxu0 0.0
    %4509 = vmatprep.subr.mxu0 0.0
    %4510 = vmatpush1.msra.mxu0 0.0
    %4511 = vmatprep.subr.mxu0 0.0
    %4512 = vmatpush1.msra.mxu0 0.0
    %4513 = vmatprep.subr.mxu0 0.0
    %4514 = vmatpush1.msra.mxu0 0.0
    %4515 = vmatprep.subr.mxu0 0.0
    %4516 = vmatpush1.msra.mxu0 0.0
    %4517 = vmatprep.subr.mxu0 0.0
    %4518 = vmatpush1.msra.mxu0 0.0
    %4519 = vmatprep.subr.mxu0 0.0
    %4520 = vmatpush1.msra.mxu0 0.0
    %4521 = vmatprep.subr.mxu0 0.0
    %4522 = vmatpush1.msra.mxu0 0.0
    %4523 = vmatprep.subr.mxu0 0.0
    %4524 = vmatpush1.msra.mxu0 0.0
    %4525 = vmatprep.subr.mxu0 0.0
    %4526 = vmatpush1.msra.mxu0 0.0
    %4527 = vmatprep.mubr.f32.mxu0 0.0
    %4528 = vmatmul.mubr.f32.gmra.mrb[0].mxu0 %v4269
    %v4529 = vpop.f32.mrb[0].mxu0
    %v4530 = vadd.f32 0.0, %v4529
    %v4531 = vpop.f32.mrb[0].mxu0
    %4532 = vmatprep.mubr.f32.mxu0 0.0
    %4533 = vmatmul.mubr.f32.gmra.mrb[0].mxu0 %v4272
    %v4534 = vpop.f32.mrb[0].mxu0
    %v4535 = vadd.f32 0.0, %v4534
    %v4536 = vpop.f32.mrb[0].mxu0
    %4537 = vmatprep.mubr.f32.mxu0 0.0
    %4538 = vmatmul.mubr.f32.gmra.mrb[0].mxu0 %v4275
    %v4539 = vpop.f32.mrb[0].mxu0
    %v4540 = vadd.f32 0.0, %v4539
    %v4541 = vpop.f32.mrb[0].mxu0
    %4542 = vmatprep.mubr.f32.mxu0 0.0
    %4543 = vmatmul.mubr.f32.gmra.mrb[0].mxu0 %v4278
    %v4544 = vpop.f32.mrb[0].mxu0
    %v4545 = vadd.f32 0.0, %v4544
    %v4546 = vpop.f32.mrb[0].mxu0
    %4547 = vmatprep.mubr.f32.mxu0 0.0
    %4548 = vmatmul.mubr.f32.gmra.mrb[0].mxu0 %v4281
    %v4549 = vpop.f32.mrb[0].mxu0
    %v4550 = vadd.f32 0.0, %v4549
    %v4551 = vpop.f32.mrb[0].mxu0
    %4552 = vmatprep.mubr.f32.mxu0 0.0
    %4553 = vmatmul.mubr.f32.gmra.mrb[0].mxu0 %v4284
    %v4554 = vpop.f32.mrb[0].mxu0
    %v4555 = vadd.f32 0.0, %v4554
    %v4556 = vpop.f32.mrb[0].mxu0
    %4557 = vmatprep.mubr.f32.mxu0 0.0
    %4558 = vmatmul.mubr.f32.gmra.mrb[0].mxu0 %v4287
    %v4559 = vpop.f32.mrb[0].mxu0
    %v4560 = vadd.f32 0.0, %v4559
    %v4561 = vpop.f32.mrb[0].mxu0
    %4562 = vmatprep.mubr.f32.mxu0 0.0
    %4563 = vmatmul.mubr.f32.gmra.mrb[0].mxu0 %v4290
    %v4564 = vpop.f32.mrb[0].mxu0
    %v4565 = vadd.f32 0.0, %v4564
    %v4566 = vpop.f32.mrb[0].mxu0
    %4567 = vmatprep.mubr.f32.mxu0 0.0
    %4568 = vmatmul.mubr.f32.gmra.mrb[0].mxu0 %v4293
    %v4569 = vpop.f32.mrb[0].mxu0
    %v4570 = vadd.f32 0.0, %v4569
    %v4571 = vpop.f32.mrb[0].mxu0
    %4572 = vmatprep.mubr.f32.mxu0 0.0
    %4573 = vmatmul.mubr.f32.gmra.mrb[0].mxu0 %v4296
    %v4574 = vpop.f32.mrb[0].mxu0
    %v4575 = vadd.f32 0.0, %v4574
    %v4576 = vpop.f32.mrb[0].mxu0
    %4577 = vmatprep.mubr.f32.mxu0 0.0
    %4578 = vmatmul.mubr.f32.gmra.mrb[0].mxu0 %v4299
    %v4579 = vpop.f32.mrb[0].mxu0
    %v4580 = vadd.f32 0.0, %v4579
    %v4581 = vpop.f32.mrb[0].mxu0
    %4582 = vmatprep.mubr.f32.mxu0 0.0
    %4583 = vmatmul.mubr.f32.gmra.mrb[0].mxu0 %v4302
    %v4584 = vpop.f32.mrb[0].mxu0
    %v4585 = vadd.f32 0.0, %v4584
    %v4586 = vpop.f32.mrb[0].mxu0
    %4587 = vmatprep.mubr.f32.mxu0 0.0
    %4588 = vmatmul.mubr.f32.gmra.mrb[0].mxu0 %v4305
    %v4589 = vpop.f32.mrb[0].mxu0
    %v4590 = vadd.f32 0.0, %v4589
    %v4591 = vpop.f32.mrb[0].mxu0
    %4592 = vmatprep.mubr.f32.mxu0 0.0
    %4593 = vmatmul.mubr.f32.gmra.mrb[0].mxu0 %v4308
    %v4594 = vpop.f32.mrb[0].mxu0
    %v4595 = vadd.f32 0.0, %v4594
    %v4596 = vpop.f32.mrb[0].mxu0
    %4597 = vmatprep.mubr.f32.mxu0 0.0
    %4598 = vmatmul.mubr.f32.gmra.mrb[0].mxu0 %v4311
    %v4599 = vpop.f32.mrb[0].mxu0
    %v4600 = vadd.f32 0.0, %v4599
    %v4601 = vpop.f32.mrb[0].mxu0
    %4602 = vmatprep.mubr.f32.mxu0 0.0
    %4603 = vmatmul.mubr.f32.gmra.mrb[0].mxu0 %v4314
    %v4604 = vpop.f32.mrb[0].mxu0
    %v4605 = vadd.f32 0.0, %v4604
    %v4606 = vpop.f32.mrb[0].mxu0
    %4607 = vmatprep.mubr.f32.mxu0 0.0
    %4608 = vmatmul.mubr.f32.gmra.mrb[0].mxu0 %v4317
    %v4609 = vpop.f32.mrb[0].mxu0
    %v4610 = vadd.f32 0.0, %v4609
    %v4611 = vpop.f32.mrb[0].mxu0
    %4612 = vmatprep.mubr.f32.mxu0 0.0
    %4613 = vmatmul.mubr.f32.gmra.mrb[0].mxu0 %v4320
    %v4614 = vpop.f32.mrb[0].mxu0
    %v4615 = vadd.f32 0.0, %v4614
    %v4616 = vpop.f32.mrb[0].mxu0
    %4617 = vmatprep.mubr.f32.mxu0 0.0
    %4618 = vmatmul.mubr.f32.gmra.mrb[0].mxu0 %v4323
    %v4619 = vpop.f32.mrb[0].mxu0
    %v4620 = vadd.f32 0.0, %v4619
    %v4621 = vpop.f32.mrb[0].mxu0
    %4622 = vmatprep.mubr.f32.mxu0 0.0
    %4623 = vmatmul.mubr.f32.gmra.mrb[0].mxu0 %v4326
    %v4624 = vpop.f32.mrb[0].mxu0
    %v4625 = vadd.f32 0.0, %v4624
    %v4626 = vpop.f32.mrb[0].mxu0
    %4627 = vmatprep.mubr.f32.mxu0 0.0
    %4628 = vmatmul.mubr.f32.gmra.mrb[0].mxu0 %v4329
    %v4629 = vpop.f32.mrb[0].mxu0
    %v4630 = vadd.f32 0.0, %v4629
    %v4631 = vpop.f32.mrb[0].mxu0
    %4632 = vmatprep.mubr.f32.mxu0 0.0
    %4633 = vmatmul.mubr.f32.gmra.mrb[0].mxu0 %v4332
    %v4634 = vpop.f32.mrb[0].mxu0
    %v4635 = vadd.f32 0.0, %v4634
    %v4636 = vpop.f32.mrb[0].mxu0
    %4637 = vmatprep.mubr.f32.mxu0 0.0
    %4638 = vmatmul.mubr.f32.gmra.mrb[0].mxu0 %v4335
    %v4639 = vpop.f32.mrb[0].mxu0
    %v4640 = vadd.f32 0.0, %v4639
    %v4641 = vpop.f32.mrb[0].mxu0
    %4642 = vmatprep.mubr.f32.mxu0 0.0
    %4643 = vmatmul.mubr.f32.gmra.mrb[0].mxu0 %v4338
    %v4644 = vpop.f32.mrb[0].mxu0
    %v4645 = vadd.f32 0.0, %v4644
    %v4646 = vpop.f32.mrb[0].mxu0
    %4647 = vmatprep.mubr.f32.mxu0 0.0
    %4648 = vmatmul.mubr.f32.gmra.mrb[0].mxu0 %v4341
    %v4649 = vpop.f32.mrb[0].mxu0
    %v4650 = vadd.f32 0.0, %v4649
    %v4651 = vpop.f32.mrb[0].mxu0
    %4652 = vmatprep.mubr.f32.mxu0 0.0
    %4653 = vmatmul.mubr.f32.gmra.mrb[0].mxu0 %v4344
    %v4654 = vpop.f32.mrb[0].mxu0
    %v4655 = vadd.f32 0.0, %v4654
    %v4656 = vpop.f32.mrb[0].mxu0
    %4657 = vmatprep.mubr.f32.mxu0 0.0
    %4658 = vmatmul.mubr.f32.gmra.mrb[0].mxu0 %v4347
    %v4659 = vpop.f32.mrb[0].mxu0
    %v4660 = vadd.f32 0.0, %v4659
    %v4661 = vpop.f32.mrb[0].mxu0
    %4662 = vmatprep.mubr.f32.mxu0 0.0
    %4663 = vmatmul.mubr.f32.gmra.mrb[0].mxu0 %v4350
    %v4664 = vpop.f32.mrb[0].mxu0
    %v4665 = vadd.f32 0.0, %v4664
    %v4666 = vpop.f32.mrb[0].mxu0
    %4667 = vmatprep.mubr.f32.mxu0 0.0
    %4668 = vmatmul.mubr.f32.gmra.mrb[0].mxu0 %v4353
    %v4669 = vpop.f32.mrb[0].mxu0
    %v4670 = vadd.f32 0.0, %v4669
    %v4671 = vpop.f32.mrb[0].mxu0
    %4672 = vmatprep.mubr.f32.mxu0 0.0
    %4673 = vmatmul.mubr.f32.gmra.mrb[0].mxu0 %v4356
    %v4674 = vpop.f32.mrb[0].mxu0
    %v4675 = vadd.f32 0.0, %v4674
    %v4676 = vpop.f32.mrb[0].mxu0
    %4677 = vmatprep.mubr.f32.mxu0 0.0
    %4678 = vmatmul.mubr.f32.gmra.mrb[0].mxu0 %v4359
    %v4679 = vpop.f32.mrb[0].mxu0
    %v4680 = vadd.f32 0.0, %v4679
    %v4681 = vpop.f32.mrb[0].mxu0
    %4682 = vmatprep.mubr.f32.mxu0 0.0
    %4683 = vmatmul.mubr.f32.gmra.mrb[0].mxu0 %v4362
    %v4684 = vpop.f32.mrb[0].mxu0
    %v4685 = vadd.f32 0.0, %v4684
    %v4686 = vpop.f32.mrb[0].mxu0
    %4687 = vmatprep.mubr.f32.mxu0 0.0
    %4688 = vmatmul.mubr.f32.gmra.mrb[0].mxu0 %v4365
    %v4689 = vpop.f32.mrb[0].mxu0
    %v4690 = vadd.f32 0.0, %v4689
    %v4691 = vpop.f32.mrb[0].mxu0
    %4692 = vmatprep.mubr.f32.mxu0 0.0
    %4693 = vmatmul.mubr.f32.gmra.mrb[0].mxu0 %v4368
    %v4694 = vpop.f32.mrb[0].mxu0
    %v4695 = vadd.f32 0.0, %v4694
    %v4696 = vpop.f32.mrb[0].mxu0
    %4697 = vmatprep.mubr.f32.mxu0 0.0
    %4698 = vmatmul.mubr.f32.gmra.mrb[0].mxu0 %v4371
    %v4699 = vpop.f32.mrb[0].mxu0
    %v4700 = vadd.f32 0.0, %v4699
    %v4701 = vpop.f32.mrb[0].mxu0
    %4702 = vmatprep.mubr.f32.mxu0 0.0
    %4703 = vmatmul.mubr.f32.gmra.mrb[0].mxu0 %v4374
    %v4704 = vpop.f32.mrb[0].mxu0
    %v4705 = vadd.f32 0.0, %v4704
    %v4706 = vpop.f32.mrb[0].mxu0
    %4707 = vmatprep.mubr.f32.mxu0 0.0
    %4708 = vmatmul.mubr.f32.gmra.mrb[0].mxu0 %v4377
    %v4709 = vpop.f32.mrb[0].mxu0
    %v4710 = vadd.f32 0.0, %v4709
    %v4711 = vpop.f32.mrb[0].mxu0
    %4712 = vmatprep.mubr.f32.mxu0 0.0
    %4713 = vmatmul.mubr.f32.gmra.mrb[0].mxu0 %v4380
    %v4714 = vpop.f32.mrb[0].mxu0
    %v4715 = vadd.f32 0.0, %v4714
    %v4716 = vpop.f32.mrb[0].mxu0
    %4717 = vmatprep.mubr.f32.mxu0 0.0
    %4718 = vmatmul.mubr.f32.gmra.mrb[0].mxu0 %v4383
    %v4719 = vpop.f32.mrb[0].mxu0
    %v4720 = vadd.f32 0.0, %v4719
    %v4721 = vpop.f32.mrb[0].mxu0
    %4722 = vmatprep.mubr.f32.mxu0 0.0
    %4723 = vmatmul.mubr.f32.gmra.mrb[0].mxu0 %v4386
    %v4724 = vpop.f32.mrb[0].mxu0
    %v4725 = vadd.f32 0.0, %v4724
    %v4726 = vpop.f32.mrb[0].mxu0
    %4727 = vmatprep.mubr.f32.mxu0 0.0
    %4728 = vmatmul.mubr.f32.gmra.mrb[0].mxu0 %v4389
    %v4729 = vpop.f32.mrb[0].mxu0
    %v4730 = vadd.f32 0.0, %v4729
    %v4731 = vpop.f32.mrb[0].mxu0
    %4732 = vmatprep.mubr.f32.mxu0 0.0
    %4733 = vmatmul.mubr.f32.gmra.mrb[0].mxu0 %v4392
    %v4734 = vpop.f32.mrb[0].mxu0
    %v4735 = vadd.f32 0.0, %v4734
    %v4736 = vpop.f32.mrb[0].mxu0
    %4737 = vmatprep.mubr.f32.mxu0 0.0
    %4738 = vmatmul.mubr.f32.gmra.mrb[0].mxu0 %v4395
    %v4739 = vpop.f32.mrb[0].mxu0
    %v4740 = vadd.f32 0.0, %v4739
    %v4741 = vpop.f32.mrb[0].mxu0
    %4742 = vmatprep.mubr.f32.mxu0 0.0
    %4743 = vmatmul.mubr.f32.gmra.mrb[0].mxu0 %v4398
    %v4744 = vpop.f32.mrb[0].mxu0
    %v4745 = vadd.f32 0.0, %v4744
    %v4746 = vpop.f32.mrb[0].mxu0
    %4747 = vmatprep.mubr.f32.mxu0 0.0
    %4748 = vmatmul.mubr.f32.gmra.mrb[0].mxu0 %v4401
    %v4749 = vpop.f32.mrb[0].mxu0
    %v4750 = vadd.f32 0.0, %v4749
    %v4751 = vpop.f32.mrb[0].mxu0
    %4752 = vmatprep.mubr.f32.mxu0 0.0
    %4753 = vmatmul.mubr.f32.gmra.mrb[0].mxu0 %v4404
    %v4754 = vpop.f32.mrb[0].mxu0
    %v4755 = vadd.f32 0.0, %v4754
    %v4756 = vpop.f32.mrb[0].mxu0
    %4757 = vmatprep.mubr.f32.mxu0 0.0
    %4758 = vmatmul.mubr.f32.gmra.mrb[0].mxu0 %v4407
    %v4759 = vpop.f32.mrb[0].mxu0
    %v4760 = vadd.f32 0.0, %v4759
    %v4761 = vpop.f32.mrb[0].mxu0
    %4762 = vmatprep.mubr.f32.mxu0 0.0
    %4763 = vmatmul.mubr.f32.gmra.mrb[0].mxu0 %v4410
    %v4764 = vpop.f32.mrb[0].mxu0
    %v4765 = vadd.f32 0.0, %v4764
    %v4766 = vpop.f32.mrb[0].mxu0
    %4767 = vmatprep.mubr.f32.mxu0 0.0
    %4768 = vmatmul.mubr.f32.gmra.mrb[0].mxu0 %v4413
    %v4769 = vpop.f32.mrb[0].mxu0
    %v4770 = vadd.f32 0.0, %v4769
    %v4771 = vpop.f32.mrb[0].mxu0
    %4772 = vmatprep.mubr.f32.mxu0 0.0
    %4773 = vmatmul.mubr.f32.gmra.mrb[0].mxu0 %v4416
    %v4774 = vpop.f32.mrb[0].mxu0
    %v4775 = vadd.f32 0.0, %v4774
    %v4776 = vpop.f32.mrb[0].mxu0
    %4777 = vmatprep.mubr.f32.mxu0 0.0
    %4778 = vmatmul.mubr.f32.gmra.mrb[0].mxu0 %v4419
    %v4779 = vpop.f32.mrb[0].mxu0
    %v4780 = vadd.f32 0.0, %v4779
    %v4781 = vpop.f32.mrb[0].mxu0
    %4782 = vmatprep.mubr.f32.mxu0 0.0
    %4783 = vmatmul.mubr.f32.gmra.mrb[0].mxu0 %v4422
    %v4784 = vpop.f32.mrb[0].mxu0
    %v4785 = vadd.f32 0.0, %v4784
    %v4786 = vpop.f32.mrb[0].mxu0
    %4787 = vmatprep.mubr.f32.mxu0 0.0
    %4788 = vmatmul.mubr.f32.gmra.mrb[0].mxu0 %v4425
    %v4789 = vpop.f32.mrb[0].mxu0
    %v4790 = vadd.f32 0.0, %v4789
    %v4791 = vpop.f32.mrb[0].mxu0
    %4792 = vmatprep.mubr.f32.mxu0 0.0
    %4793 = vmatmul.mubr.f32.gmra.mrb[0].mxu0 %v4428
    %v4794 = vpop.f32.mrb[0].mxu0
    %v4795 = vadd.f32 0.0, %v4794
    %v4796 = vpop.f32.mrb[0].mxu0
    %4797 = vmatprep.mubr.f32.mxu0 0.0
    %4798 = vmatmul.mubr.f32.gmra.mrb[0].mxu0 %v4431
    %v4799 = vpop.f32.mrb[0].mxu0
    %v4800 = vadd.f32 0.0, %v4799
    %v4801 = vpop.f32.mrb[0].mxu0
    %4802 = vmatprep.mubr.f32.mxu0 0.0
    %4803 = vmatmul.mubr.f32.gmra.mrb[0].mxu0 %v4434
    %v4804 = vpop.f32.mrb[0].mxu0
    %v4805 = vadd.f32 0.0, %v4804
    %v4806 = vpop.f32.mrb[0].mxu0
    %4807 = vmatprep.mubr.f32.mxu0 0.0
    %4808 = vmatmul.mubr.f32.gmra.mrb[0].mxu0 %v4437
    %v4809 = vpop.f32.mrb[0].mxu0
    %v4810 = vadd.f32 0.0, %v4809
    %v4811 = vpop.f32.mrb[0].mxu0
    %4812 = vmatprep.mubr.f32.mxu0 0.0
    %4813 = vmatmul.mubr.f32.gmra.mrb[0].mxu0 %v4440
    %v4814 = vpop.f32.mrb[0].mxu0
    %v4815 = vadd.f32 0.0, %v4814
    %v4816 = vpop.f32.mrb[0].mxu0
    %4817 = vmatprep.mubr.f32.mxu0 0.0
    %4818 = vmatmul.mubr.f32.gmra.mrb[0].mxu0 %v4443
    %v4819 = vpop.f32.mrb[0].mxu0
    %v4820 = vadd.f32 0.0, %v4819
    %v4821 = vpop.f32.mrb[0].mxu0
    %4822 = vmatprep.mubr.f32.mxu0 0.0
    %4823 = vmatmul.mubr.f32.gmra.mrb[0].mxu0 %v4446
    %v4824 = vpop.f32.mrb[0].mxu0
    %v4825 = vadd.f32 0.0, %v4824
    %v4826 = vpop.f32.mrb[0].mxu0
    %4827 = vmatprep.mubr.f32.mxu0 0.0
    %4828 = vmatmul.mubr.f32.gmra.mrb[0].mxu0 %v4449
    %v4829 = vpop.f32.mrb[0].mxu0
    %v4830 = vadd.f32 0.0, %v4829
    %v4831 = vpop.f32.mrb[0].mxu0
    %4832 = vmatprep.mubr.f32.mxu0 0.0
    %4833 = vmatmul.mubr.f32.gmra.mrb[0].mxu0 %v4452
    %v4834 = vpop.f32.mrb[0].mxu0
    %v4835 = vadd.f32 0.0, %v4834
    %v4836 = vpop.f32.mrb[0].mxu0
    %4837 = vmatprep.mubr.f32.mxu0 0.0
    %4838 = vmatmul.mubr.f32.gmra.mrb[0].mxu0 %v4455
    %v4839 = vpop.f32.mrb[0].mxu0
    %v4840 = vadd.f32 0.0, %v4839
    %v4841 = vpop.f32.mrb[0].mxu0
    %4842 = vmatprep.mubr.f32.mxu0 0.0
    %4843 = vmatmul.mubr.f32.gmra.mrb[0].mxu0 %v4458
    %v4844 = vpop.f32.mrb[0].mxu0
    %v4845 = vadd.f32 0.0, %v4844
    %v4846 = vpop.f32.mrb[0].mxu0
    %4847 = vdwg.mxu0
    %v4848 = vadd.f32 %v4138, %v4530
    %v4849 = vadd.f32 %v4139, %v4535
    %v4850 = vadd.f32 %v4140, %v4540
    %v4851 = vadd.f32 %v4141, %v4545
    %v4852 = vadd.f32 %v4142, %v4550
    %v4853 = vadd.f32 %v4143, %v4555
    %v4854 = vadd.f32 %v4144, %v4560
    %v4855 = vadd.f32 %v4145, %v4565
    %v4856 = vadd.f32 %v4146, %v4570
    %v4857 = vadd.f32 %v4147, %v4575
    %v4858 = vadd.f32 %v4148, %v4580
    %v4859 = vadd.f32 %v4149, %v4585
    %v4860 = vadd.f32 %v4150, %v4590
    %v4861 = vadd.f32 %v4151, %v4595
    %v4862 = vadd.f32 %v4152, %v4600
    %v4863 = vadd.f32 %v4153, %v4605
    %v4864 = vadd.f32 %v4154, %v4610
    %v4865 = vadd.f32 %v4155, %v4615
    %v4866 = vadd.f32 %v4156, %v4620
    %v4867 = vadd.f32 %v4157, %v4625
    %v4868 = vadd.f32 %v4158, %v4630
    %v4869 = vadd.f32 %v4159, %v4635
    %v4870 = vadd.f32 %v4160, %v4640
    %v4871 = vadd.f32 %v4161, %v4645
    %v4872 = vadd.f32 %v4162, %v4650
    %v4873 = vadd.f32 %v4163, %v4655
    %v4874 = vadd.f32 %v4164, %v4660
    %v4875 = vadd.f32 %v4165, %v4665
    %v4876 = vadd.f32 %v4166, %v4670
    %v4877 = vadd.f32 %v4167, %v4675
    %v4878 = vadd.f32 %v4168, %v4680
    %v4879 = vadd.f32 %v4169, %v4685
    %v4880 = vadd.f32 %v4170, %v4690
    %v4881 = vadd.f32 %v4171, %v4695
    %v4882 = vadd.f32 %v4172, %v4700
    %v4883 = vadd.f32 %v4173, %v4705
    %v4884 = vadd.f32 %v4174, %v4710
    %v4885 = vadd.f32 %v4175, %v4715
    %v4886 = vadd.f32 %v4176, %v4720
    %v4887 = vadd.f32 %v4177, %v4725
    %v4888 = vadd.f32 %v4178, %v4730
    %v4889 = vadd.f32 %v4179, %v4735
    %v4890 = vadd.f32 %v4180, %v4740
    %v4891 = vadd.f32 %v4181, %v4745
    %v4892 = vadd.f32 %v4182, %v4750
    %v4893 = vadd.f32 %v4183, %v4755
    %v4894 = vadd.f32 %v4184, %v4760
    %v4895 = vadd.f32 %v4185, %v4765
    %v4896 = vadd.f32 %v4186, %v4770
    %v4897 = vadd.f32 %v4187, %v4775
    %v4898 = vadd.f32 %v4188, %v4780
    %v4899 = vadd.f32 %v4189, %v4785
    %v4900 = vadd.f32 %v4190, %v4790
    %v4901 = vadd.f32 %v4191, %v4795
    %v4902 = vadd.f32 %v4192, %v4800
    %v4903 = vadd.f32 %v4193, %v4805
    %v4904 = vadd.f32 %v4194, %v4810
    %v4905 = vadd.f32 %v4195, %v4815
    %v4906 = vadd.f32 %v4196, %v4820
    %v4907 = vadd.f32 %v4197, %v4825
    %v4908 = vadd.f32 %v4198, %v4830
    %v4909 = vadd.f32 %v4199, %v4835
    %v4910 = vadd.f32 %v4200, %v4840
    %v4911 = vadd.f32 %v4201, %v4845
    %s4912 = scalar_lea.vmem [#allocation2], 48
    %v4913 = vld [vmem:[%s4912] sm:$0xff]
    %v4914 = vld [vmem:[%s4912 + $0x8] sm:$0xff]
    %v4915 = vld [vmem:[%s4912 + $0x18] sm:$0xff]
    %v4916 = vld [vmem:[%s4912 + $0x20] sm:$0xff]
    %v4917 = vld [vmem:[%s4912 + $0x30] sm:$0xff]
    %v4918 = vld [vmem:[%s4912 + $0x38] sm:$0xff]
    %v4919 = vld [vmem:[%s4912 + $0x48] sm:$0xff]
    %v4920 = vld [vmem:[%s4912 + $0x50] sm:$0xff]
    %v4921 = vld [vmem:[%s4912 + $0x60] sm:$0xff]
    %v4922 = vld [vmem:[%s4912 + $0x68] sm:$0xff]
    %v4923 = vld [vmem:[%s4912 + $0x78] sm:$0xff]
    %v4924 = vld [vmem:[%s4912 + $0x80] sm:$0xff]
    %v4925 = vld [vmem:[%s4912 + $0x90] sm:$0xff]
    %v4926 = vld [vmem:[%s4912 + $0x98] sm:$0xff]
    %v4927 = vld [vmem:[%s4912 + $0xa8] sm:$0xff]
    %v4928 = vld [vmem:[%s4912 + $0xb0] sm:$0xff]
    %v4929 = vld [vmem:[%s4912 + $0xc0] sm:$0xff]
    %v4930 = vld [vmem:[%s4912 + $0xc8] sm:$0xff]
    %v4931 = vld [vmem:[%s4912 + $0xd8] sm:$0xff]
    %v4932 = vld [vmem:[%s4912 + $0xe0] sm:$0xff]
    %v4933 = vld [vmem:[%s4912 + $0xf0] sm:$0xff]
    %v4934 = vld [vmem:[%s4912 + $0xf8] sm:$0xff]
    %v4935 = vld [vmem:[%s4912 + $0x108] sm:$0xff]
    %v4936 = vld [vmem:[%s4912 + $0x110] sm:$0xff]
    %v4937 = vld [vmem:[%s4912 + $0x120] sm:$0xff]
    %v4938 = vld [vmem:[%s4912 + $0x128] sm:$0xff]
    %v4939 = vld [vmem:[%s4912 + $0x138] sm:$0xff]
    %v4940 = vld [vmem:[%s4912 + $0x140] sm:$0xff]
    %v4941 = vld [vmem:[%s4912 + $0x150] sm:$0xff]
    %v4942 = vld [vmem:[%s4912 + $0x158] sm:$0xff]
    %v4943 = vld [vmem:[%s4912 + $0x168] sm:$0xff]
    %v4944 = vld [vmem:[%s4912 + $0x170] sm:$0xff]
    %v4945 = vld [vmem:[%s4912 + $0x1b0] sm:$0xff]
    %v4946 = vld [vmem:[%s4912 + $0x1b8] sm:$0xff]
    %v4947 = vld [vmem:[%s4912 + $0x1c8] sm:$0xff]
    %v4948 = vld [vmem:[%s4912 + $0x1d0] sm:$0xff]
    %v4949 = vld [vmem:[%s4912 + $0x1e0] sm:$0xff]
    %v4950 = vld [vmem:[%s4912 + $0x1e8] sm:$0xff]
    %v4951 = vld [vmem:[%s4912 + $0x1f8] sm:$0xff]
    %v4952 = vld [vmem:[%s4912 + $0x200] sm:$0xff]
    %v4953 = vld [vmem:[%s4912 + $0x210] sm:$0xff]
    %v4954 = vld [vmem:[%s4912 + $0x218] sm:$0xff]
    %v4955 = vld [vmem:[%s4912 + $0x228] sm:$0xff]
    %v4956 = vld [vmem:[%s4912 + $0x230] sm:$0xff]
    %v4957 = vld [vmem:[%s4912 + $0x240] sm:$0xff]
    %v4958 = vld [vmem:[%s4912 + $0x248] sm:$0xff]
    %v4959 = vld [vmem:[%s4912 + $0x258] sm:$0xff]
    %v4960 = vld [vmem:[%s4912 + $0x260] sm:$0xff]
    %v4961 = vld [vmem:[%s4912 + $0x270] sm:$0xff]
    %v4962 = vld [vmem:[%s4912 + $0x278] sm:$0xff]
    %v4963 = vld [vmem:[%s4912 + $0x288] sm:$0xff]
    %v4964 = vld [vmem:[%s4912 + $0x290] sm:$0xff]
    %v4965 = vld [vmem:[%s4912 + $0x2a0] sm:$0xff]
    %v4966 = vld [vmem:[%s4912 + $0x2a8] sm:$0xff]
    %v4967 = vld [vmem:[%s4912 + $0x2b8] sm:$0xff]
    %v4968 = vld [vmem:[%s4912 + $0x2c0] sm:$0xff]
    %v4969 = vld [vmem:[%s4912 + $0x2d0] sm:$0xff]
    %v4970 = vld [vmem:[%s4912 + $0x2d8] sm:$0xff]
    %v4971 = vld [vmem:[%s4912 + $0x2e8] sm:$0xff]
    %v4972 = vld [vmem:[%s4912 + $0x2f0] sm:$0xff]
    %v4973 = vld [vmem:[%s4912 + $0x300] sm:$0xff]
    %v4974 = vld [vmem:[%s4912 + $0x308] sm:$0xff]
    %v4975 = vld [vmem:[%s4912 + $0x318] sm:$0xff]
    %v4976 = vld [vmem:[%s4912 + $0x320] sm:$0xff]
    %s4977 = scalar_lea.vmem %s2, 24
    %v4978 = vld [vmem:[%s4977] sm:$0xf]
    %v4980 = vsel %vm87, %v4913, 0
    %v4983 = vsel %vm87, %v4914, 0
    %v4986 = vsel %vm87, %v4915, 0
    %v4989 = vsel %vm87, %v4916, 0
    %v4992 = vsel %vm87, %v4917, 0
    %v4995 = vsel %vm87, %v4918, 0
    %v4998 = vsel %vm87, %v4919, 0
    %v5001 = vsel %vm87, %v4920, 0
    %v5004 = vsel %vm87, %v4921, 0
    %v5007 = vsel %vm87, %v4922, 0
    %v5010 = vsel %vm87, %v4923, 0
    %v5013 = vsel %vm87, %v4924, 0
    %v5016 = vsel %vm87, %v4925, 0
    %v5019 = vsel %vm87, %v4926, 0
    %v5022 = vsel %vm87, %v4927, 0
    %v5025 = vsel %vm87, %v4928, 0
    %v5028 = vsel %vm87, %v4929, 0
    %v5031 = vsel %vm87, %v4930, 0
    %v5034 = vsel %vm87, %v4931, 0
    %v5037 = vsel %vm87, %v4932, 0
    %v5040 = vsel %vm87, %v4933, 0
    %v5043 = vsel %vm87, %v4934, 0
    %v5046 = vsel %vm87, %v4935, 0
    %v5049 = vsel %vm87, %v4936, 0
    %v5052 = vsel %vm87, %v4937, 0
    %v5055 = vsel %vm87, %v4938, 0
    %v5058 = vsel %vm87, %v4939, 0
    %v5061 = vsel %vm87, %v4940, 0
    %v5064 = vsel %vm87, %v4941, 0
    %v5067 = vsel %vm87, %v4942, 0
    %v5070 = vsel %vm87, %v4943, 0
    %v5073 = vsel %vm87, %v4944, 0
    %v5076 = vsel %vm87, %v4945, 0
    %v5079 = vsel %vm87, %v4946, 0
    %v5082 = vsel %vm87, %v4947, 0
    %v5085 = vsel %vm87, %v4948, 0
    %v5088 = vsel %vm87, %v4949, 0
    %v5091 = vsel %vm87, %v4950, 0
    %v5094 = vsel %vm87, %v4951, 0
    %v5097 = vsel %vm87, %v4952, 0
    %v5100 = vsel %vm87, %v4953, 0
    %v5103 = vsel %vm87, %v4954, 0
    %v5106 = vsel %vm87, %v4955, 0
    %v5109 = vsel %vm87, %v4956, 0
    %v5112 = vsel %vm87, %v4957, 0
    %v5115 = vsel %vm87, %v4958, 0
    %v5118 = vsel %vm87, %v4959, 0
    %v5121 = vsel %vm87, %v4960, 0
    %v5124 = vsel %vm87, %v4961, 0
    %v5127 = vsel %vm87, %v4962, 0
    %v5130 = vsel %vm87, %v4963, 0
    %v5133 = vsel %vm87, %v4964, 0
    %v5136 = vsel %vm87, %v4965, 0
    %v5139 = vsel %vm87, %v4966, 0
    %v5142 = vsel %vm87, %v4967, 0
    %v5145 = vsel %vm87, %v4968, 0
    %v5148 = vsel %vm87, %v4969, 0
    %v5151 = vsel %vm87, %v4970, 0
    %v5154 = vsel %vm87, %v4971, 0
    %v5157 = vsel %vm87, %v4972, 0
    %v5160 = vsel %vm87, %v4973, 0
    %v5163 = vsel %vm87, %v4974, 0
    %v5166 = vsel %vm87, %v4975, 0
    %v5169 = vsel %vm87, %v4976, 0
    %v5172 = vsel %vm1103, %v4978, 0
    %5174 = vmatprep.subr.mxu0 0.0
    %5175 = vmatpush1.msra.mxu0 %v5172
    %5176 = vmatprep.subr.mxu0 0.0
    %5177 = vmatpush1.msra.mxu0 0.0
    %5178 = vmatprep.subr.mxu0 0.0
    %5179 = vmatpush1.msra.mxu0 0.0
    %5180 = vmatprep.subr.mxu0 0.0
    %5181 = vmatpush1.msra.mxu0 0.0
    %5182 = vmatprep.subr.mxu0 0.0
    %5183 = vmatpush1.msra.mxu0 0.0
    %5184 = vmatprep.subr.mxu0 0.0
    %5185 = vmatpush1.msra.mxu0 0.0
    %5186 = vmatprep.subr.mxu0 0.0
    %5187 = vmatpush1.msra.mxu0 0.0
    %5188 = vmatprep.subr.mxu0 0.0
    %5189 = vmatpush1.msra.mxu0 0.0
    %5190 = vmatprep.subr.mxu0 0.0
    %5191 = vmatpush1.msra.mxu0 0.0
    %5192 = vmatprep.subr.mxu0 0.0
    %5193 = vmatpush1.msra.mxu0 0.0
    %5194 = vmatprep.subr.mxu0 0.0
    %5195 = vmatpush1.msra.mxu0 0.0
    %5196 = vmatprep.subr.mxu0 0.0
    %5197 = vmatpush1.msra.mxu0 0.0
    %5198 = vmatprep.subr.mxu0 0.0
    %5199 = vmatpush1.msra.mxu0 0.0
    %5200 = vmatprep.subr.mxu0 0.0
    %5201 = vmatpush1.msra.mxu0 0.0
    %5202 = vmatprep.subr.mxu0 0.0
    %5203 = vmatpush1.msra.mxu0 0.0
    %5204 = vmatprep.subr.mxu0 0.0
    %5205 = vmatpush1.msra.mxu0 0.0
    %5206 = vmatprep.subr.mxu0 0.0
    %5207 = vmatpush1.msra.mxu0 0.0
    %5208 = vmatprep.subr.mxu0 0.0
    %5209 = vmatpush1.msra.mxu0 0.0
    %5210 = vmatprep.subr.mxu0 0.0
    %5211 = vmatpush1.msra.mxu0 0.0
    %5212 = vmatprep.subr.mxu0 0.0
    %5213 = vmatpush1.msra.mxu0 0.0
    %5214 = vmatprep.subr.mxu0 0.0
    %5215 = vmatpush1.msra.mxu0 0.0
    %5216 = vmatprep.subr.mxu0 0.0
    %5217 = vmatpush1.msra.mxu0 0.0
    %5218 = vmatprep.subr.mxu0 0.0
    %5219 = vmatpush1.msra.mxu0 0.0
    %5220 = vmatprep.subr.mxu0 0.0
    %5221 = vmatpush1.msra.mxu0 0.0
    %5222 = vmatprep.subr.mxu0 0.0
    %5223 = vmatpush1.msra.mxu0 0.0
    %5224 = vmatprep.subr.mxu0 0.0
    %5225 = vmatpush1.msra.mxu0 0.0
    %5226 = vmatprep.subr.mxu0 0.0
    %5227 = vmatpush1.msra.mxu0 0.0
    %5228 = vmatprep.subr.mxu0 0.0
    %5229 = vmatpush1.msra.mxu0 0.0
    %5230 = vmatprep.subr.mxu0 0.0
    %5231 = vmatpush1.msra.mxu0 0.0
    %5232 = vmatprep.subr.mxu0 0.0
    %5233 = vmatpush1.msra.mxu0 0.0
    %5234 = vmatprep.subr.mxu0 0.0
    %5235 = vmatpush1.msra.mxu0 0.0
    %5236 = vmatprep.subr.mxu0 0.0
    %5237 = vmatpush1.msra.mxu0 0.0
    %5238 = vmatprep.mubr.f32.mxu0 0.0
    %5239 = vmatmul.mubr.f32.gmra.mrb[0].mxu0 %v4980
    %v5240 = vpop.f32.mrb[0].mxu0
    %v5241 = vadd.f32 0.0, %v5240
    %v5242 = vpop.f32.mrb[0].mxu0
    %5243 = vmatprep.mubr.f32.mxu0 0.0
    %5244 = vmatmul.mubr.f32.gmra.mrb[0].mxu0 %v4983
    %v5245 = vpop.f32.mrb[0].mxu0
    %v5246 = vadd.f32 0.0, %v5245
    %v5247 = vpop.f32.mrb[0].mxu0
    %5248 = vmatprep.mubr.f32.mxu0 0.0
    %5249 = vmatmul.mubr.f32.gmra.mrb[0].mxu0 %v4986
    %v5250 = vpop.f32.mrb[0].mxu0
    %v5251 = vadd.f32 0.0, %v5250
    %v5252 = vpop.f32.mrb[0].mxu0
    %5253 = vmatprep.mubr.f32.mxu0 0.0
    %5254 = vmatmul.mubr.f32.gmra.mrb[0].mxu0 %v4989
    %v5255 = vpop.f32.mrb[0].mxu0
    %v5256 = vadd.f32 0.0, %v5255
    %v5257 = vpop.f32.mrb[0].mxu0
    %5258 = vmatprep.mubr.f32.mxu0 0.0
    %5259 = vmatmul.mubr.f32.gmra.mrb[0].mxu0 %v4992
    %v5260 = vpop.f32.mrb[0].mxu0
    %v5261 = vadd.f32 0.0, %v5260
    %v5262 = vpop.f32.mrb[0].mxu0
    %5263 = vmatprep.mubr.f32.mxu0 0.0
    %5264 = vmatmul.mubr.f32.gmra.mrb[0].mxu0 %v4995
    %v5265 = vpop.f32.mrb[0].mxu0
    %v5266 = vadd.f32 0.0, %v5265
    %v5267 = vpop.f32.mrb[0].mxu0
    %5268 = vmatprep.mubr.f32.mxu0 0.0
    %5269 = vmatmul.mubr.f32.gmra.mrb[0].mxu0 %v4998
    %v5270 = vpop.f32.mrb[0].mxu0
    %v5271 = vadd.f32 0.0, %v5270
    %v5272 = vpop.f32.mrb[0].mxu0
    %5273 = vmatprep.mubr.f32.mxu0 0.0
    %5274 = vmatmul.mubr.f32.gmra.mrb[0].mxu0 %v5001
    %v5275 = vpop.f32.mrb[0].mxu0
    %v5276 = vadd.f32 0.0, %v5275
    %v5277 = vpop.f32.mrb[0].mxu0
    %5278 = vmatprep.mubr.f32.mxu0 0.0
    %5279 = vmatmul.mubr.f32.gmra.mrb[0].mxu0 %v5004
    %v5280 = vpop.f32.mrb[0].mxu0
    %v5281 = vadd.f32 0.0, %v5280
    %v5282 = vpop.f32.mrb[0].mxu0
    %5283 = vmatprep.mubr.f32.mxu0 0.0
    %5284 = vmatmul.mubr.f32.gmra.mrb[0].mxu0 %v5007
    %v5285 = vpop.f32.mrb[0].mxu0
    %v5286 = vadd.f32 0.0, %v5285
    %v5287 = vpop.f32.mrb[0].mxu0
    %5288 = vmatprep.mubr.f32.mxu0 0.0
    %5289 = vmatmul.mubr.f32.gmra.mrb[0].mxu0 %v5010
    %v5290 = vpop.f32.mrb[0].mxu0
    %v5291 = vadd.f32 0.0, %v5290
    %v5292 = vpop.f32.mrb[0].mxu0
    %5293 = vmatprep.mubr.f32.mxu0 0.0
    %5294 = vmatmul.mubr.f32.gmra.mrb[0].mxu0 %v5013
    %v5295 = vpop.f32.mrb[0].mxu0
    %v5296 = vadd.f32 0.0, %v5295
    %v5297 = vpop.f32.mrb[0].mxu0
    %5298 = vmatprep.mubr.f32.mxu0 0.0
    %5299 = vmatmul.mubr.f32.gmra.mrb[0].mxu0 %v5016
    %v5300 = vpop.f32.mrb[0].mxu0
    %v5301 = vadd.f32 0.0, %v5300
    %v5302 = vpop.f32.mrb[0].mxu0
    %5303 = vmatprep.mubr.f32.mxu0 0.0
    %5304 = vmatmul.mubr.f32.gmra.mrb[0].mxu0 %v5019
    %v5305 = vpop.f32.mrb[0].mxu0
    %v5306 = vadd.f32 0.0, %v5305
    %v5307 = vpop.f32.mrb[0].mxu0
    %5308 = vmatprep.mubr.f32.mxu0 0.0
    %5309 = vmatmul.mubr.f32.gmra.mrb[0].mxu0 %v5022
    %v5310 = vpop.f32.mrb[0].mxu0
    %v5311 = vadd.f32 0.0, %v5310
    %v5312 = vpop.f32.mrb[0].mxu0
    %5313 = vmatprep.mubr.f32.mxu0 0.0
    %5314 = vmatmul.mubr.f32.gmra.mrb[0].mxu0 %v5025
    %v5315 = vpop.f32.mrb[0].mxu0
    %v5316 = vadd.f32 0.0, %v5315
    %v5317 = vpop.f32.mrb[0].mxu0
    %5318 = vmatprep.mubr.f32.mxu0 0.0
    %5319 = vmatmul.mubr.f32.gmra.mrb[0].mxu0 %v5028
    %v5320 = vpop.f32.mrb[0].mxu0
    %v5321 = vadd.f32 0.0, %v5320
    %v5322 = vpop.f32.mrb[0].mxu0
    %5323 = vmatprep.mubr.f32.mxu0 0.0
    %5324 = vmatmul.mubr.f32.gmra.mrb[0].mxu0 %v5031
    %v5325 = vpop.f32.mrb[0].mxu0
    %v5326 = vadd.f32 0.0, %v5325
    %v5327 = vpop.f32.mrb[0].mxu0
    %5328 = vmatprep.mubr.f32.mxu0 0.0
    %5329 = vmatmul.mubr.f32.gmra.mrb[0].mxu0 %v5034
    %v5330 = vpop.f32.mrb[0].mxu0
    %v5331 = vadd.f32 0.0, %v5330
    %v5332 = vpop.f32.mrb[0].mxu0
    %5333 = vmatprep.mubr.f32.mxu0 0.0
    %5334 = vmatmul.mubr.f32.gmra.mrb[0].mxu0 %v5037
    %v5335 = vpop.f32.mrb[0].mxu0
    %v5336 = vadd.f32 0.0, %v5335
    %v5337 = vpop.f32.mrb[0].mxu0
    %5338 = vmatprep.mubr.f32.mxu0 0.0
    %5339 = vmatmul.mubr.f32.gmra.mrb[0].mxu0 %v5040
    %v5340 = vpop.f32.mrb[0].mxu0
    %v5341 = vadd.f32 0.0, %v5340
    %v5342 = vpop.f32.mrb[0].mxu0
    %5343 = vmatprep.mubr.f32.mxu0 0.0
    %5344 = vmatmul.mubr.f32.gmra.mrb[0].mxu0 %v5043
    %v5345 = vpop.f32.mrb[0].mxu0
    %v5346 = vadd.f32 0.0, %v5345
    %v5347 = vpop.f32.mrb[0].mxu0
    %5348 = vmatprep.mubr.f32.mxu0 0.0
    %5349 = vmatmul.mubr.f32.gmra.mrb[0].mxu0 %v5046
    %v5350 = vpop.f32.mrb[0].mxu0
    %v5351 = vadd.f32 0.0, %v5350
    %v5352 = vpop.f32.mrb[0].mxu0
    %5353 = vmatprep.mubr.f32.mxu0 0.0
    %5354 = vmatmul.mubr.f32.gmra.mrb[0].mxu0 %v5049
    %v5355 = vpop.f32.mrb[0].mxu0
    %v5356 = vadd.f32 0.0, %v5355
    %v5357 = vpop.f32.mrb[0].mxu0
    %5358 = vmatprep.mubr.f32.mxu0 0.0
    %5359 = vmatmul.mubr.f32.gmra.mrb[0].mxu0 %v5052
    %v5360 = vpop.f32.mrb[0].mxu0
    %v5361 = vadd.f32 0.0, %v5360
    %v5362 = vpop.f32.mrb[0].mxu0
    %5363 = vmatprep.mubr.f32.mxu0 0.0
    %5364 = vmatmul.mubr.f32.gmra.mrb[0].mxu0 %v5055
    %v5365 = vpop.f32.mrb[0].mxu0
    %v5366 = vadd.f32 0.0, %v5365
    %v5367 = vpop.f32.mrb[0].mxu0
    %5368 = vmatprep.mubr.f32.mxu0 0.0
    %5369 = vmatmul.mubr.f32.gmra.mrb[0].mxu0 %v5058
    %v5370 = vpop.f32.mrb[0].mxu0
    %v5371 = vadd.f32 0.0, %v5370
    %v5372 = vpop.f32.mrb[0].mxu0
    %5373 = vmatprep.mubr.f32.mxu0 0.0
    %5374 = vmatmul.mubr.f32.gmra.mrb[0].mxu0 %v5061
    %v5375 = vpop.f32.mrb[0].mxu0
    %v5376 = vadd.f32 0.0, %v5375
    %v5377 = vpop.f32.mrb[0].mxu0
    %5378 = vmatprep.mubr.f32.mxu0 0.0
    %5379 = vmatmul.mubr.f32.gmra.mrb[0].mxu0 %v5064
    %v5380 = vpop.f32.mrb[0].mxu0
    %v5381 = vadd.f32 0.0, %v5380
    %v5382 = vpop.f32.mrb[0].mxu0
    %5383 = vmatprep.mubr.f32.mxu0 0.0
    %5384 = vmatmul.mubr.f32.gmra.mrb[0].mxu0 %v5067
    %v5385 = vpop.f32.mrb[0].mxu0
    %v5386 = vadd.f32 0.0, %v5385
    %v5387 = vpop.f32.mrb[0].mxu0
    %5388 = vmatprep.mubr.f32.mxu0 0.0
    %5389 = vmatmul.mubr.f32.gmra.mrb[0].mxu0 %v5070
    %v5390 = vpop.f32.mrb[0].mxu0
    %v5391 = vadd.f32 0.0, %v5390
    %v5392 = vpop.f32.mrb[0].mxu0
    %5393 = vmatprep.mubr.f32.mxu0 0.0
    %5394 = vmatmul.mubr.f32.gmra.mrb[0].mxu0 %v5073
    %v5395 = vpop.f32.mrb[0].mxu0
    %v5396 = vadd.f32 0.0, %v5395
    %v5397 = vpop.f32.mrb[0].mxu0
    %5398 = vmatprep.mubr.f32.mxu0 0.0
    %5399 = vmatmul.mubr.f32.gmra.mrb[0].mxu0 %v5076
    %v5400 = vpop.f32.mrb[0].mxu0
    %v5401 = vadd.f32 0.0, %v5400
    %v5402 = vpop.f32.mrb[0].mxu0
    %5403 = vmatprep.mubr.f32.mxu0 0.0
    %5404 = vmatmul.mubr.f32.gmra.mrb[0].mxu0 %v5079
    %v5405 = vpop.f32.mrb[0].mxu0
    %v5406 = vadd.f32 0.0, %v5405
    %v5407 = vpop.f32.mrb[0].mxu0
    %5408 = vmatprep.mubr.f32.mxu0 0.0
    %5409 = vmatmul.mubr.f32.gmra.mrb[0].mxu0 %v5082
    %v5410 = vpop.f32.mrb[0].mxu0
    %v5411 = vadd.f32 0.0, %v5410
    %v5412 = vpop.f32.mrb[0].mxu0
    %5413 = vmatprep.mubr.f32.mxu0 0.0
    %5414 = vmatmul.mubr.f32.gmra.mrb[0].mxu0 %v5085
    %v5415 = vpop.f32.mrb[0].mxu0
    %v5416 = vadd.f32 0.0, %v5415
    %v5417 = vpop.f32.mrb[0].mxu0
    %5418 = vmatprep.mubr.f32.mxu0 0.0
    %5419 = vmatmul.mubr.f32.gmra.mrb[0].mxu0 %v5088
    %v5420 = vpop.f32.mrb[0].mxu0
    %v5421 = vadd.f32 0.0, %v5420
    %v5422 = vpop.f32.mrb[0].mxu0
    %5423 = vmatprep.mubr.f32.mxu0 0.0
    %5424 = vmatmul.mubr.f32.gmra.mrb[0].mxu0 %v5091
    %v5425 = vpop.f32.mrb[0].mxu0
    %v5426 = vadd.f32 0.0, %v5425
    %v5427 = vpop.f32.mrb[0].mxu0
    %5428 = vmatprep.mubr.f32.mxu0 0.0
    %5429 = vmatmul.mubr.f32.gmra.mrb[0].mxu0 %v5094
    %v5430 = vpop.f32.mrb[0].mxu0
    %v5431 = vadd.f32 0.0, %v5430
    %v5432 = vpop.f32.mrb[0].mxu0
    %5433 = vmatprep.mubr.f32.mxu0 0.0
    %5434 = vmatmul.mubr.f32.gmra.mrb[0].mxu0 %v5097
    %v5435 = vpop.f32.mrb[0].mxu0
    %v5436 = vadd.f32 0.0, %v5435
    %v5437 = vpop.f32.mrb[0].mxu0
    %5438 = vmatprep.mubr.f32.mxu0 0.0
    %5439 = vmatmul.mubr.f32.gmra.mrb[0].mxu0 %v5100
    %v5440 = vpop.f32.mrb[0].mxu0
    %v5441 = vadd.f32 0.0, %v5440
    %v5442 = vpop.f32.mrb[0].mxu0
    %5443 = vmatprep.mubr.f32.mxu0 0.0
    %5444 = vmatmul.mubr.f32.gmra.mrb[0].mxu0 %v5103
    %v5445 = vpop.f32.mrb[0].mxu0
    %v5446 = vadd.f32 0.0, %v5445
    %v5447 = vpop.f32.mrb[0].mxu0
    %5448 = vmatprep.mubr.f32.mxu0 0.0
    %5449 = vmatmul.mubr.f32.gmra.mrb[0].mxu0 %v5106
    %v5450 = vpop.f32.mrb[0].mxu0
    %v5451 = vadd.f32 0.0, %v5450
    %v5452 = vpop.f32.mrb[0].mxu0
    %5453 = vmatprep.mubr.f32.mxu0 0.0
    %5454 = vmatmul.mubr.f32.gmra.mrb[0].mxu0 %v5109
    %v5455 = vpop.f32.mrb[0].mxu0
    %v5456 = vadd.f32 0.0, %v5455
    %v5457 = vpop.f32.mrb[0].mxu0
    %5458 = vmatprep.mubr.f32.mxu0 0.0
    %5459 = vmatmul.mubr.f32.gmra.mrb[0].mxu0 %v5112
    %v5460 = vpop.f32.mrb[0].mxu0
    %v5461 = vadd.f32 0.0, %v5460
    %v5462 = vpop.f32.mrb[0].mxu0
    %5463 = vmatprep.mubr.f32.mxu0 0.0
    %5464 = vmatmul.mubr.f32.gmra.mrb[0].mxu0 %v5115
    %v5465 = vpop.f32.mrb[0].mxu0
    %v5466 = vadd.f32 0.0, %v5465
    %v5467 = vpop.f32.mrb[0].mxu0
    %5468 = vmatprep.mubr.f32.mxu0 0.0
    %5469 = vmatmul.mubr.f32.gmra.mrb[0].mxu0 %v5118
    %v5470 = vpop.f32.mrb[0].mxu0
    %v5471 = vadd.f32 0.0, %v5470
    %v5472 = vpop.f32.mrb[0].mxu0
    %5473 = vmatprep.mubr.f32.mxu0 0.0
    %5474 = vmatmul.mubr.f32.gmra.mrb[0].mxu0 %v5121
    %v5475 = vpop.f32.mrb[0].mxu0
    %v5476 = vadd.f32 0.0, %v5475
    %v5477 = vpop.f32.mrb[0].mxu0
    %5478 = vmatprep.mubr.f32.mxu0 0.0
    %5479 = vmatmul.mubr.f32.gmra.mrb[0].mxu0 %v5124
    %v5480 = vpop.f32.mrb[0].mxu0
    %v5481 = vadd.f32 0.0, %v5480
    %v5482 = vpop.f32.mrb[0].mxu0
    %5483 = vmatprep.mubr.f32.mxu0 0.0
    %5484 = vmatmul.mubr.f32.gmra.mrb[0].mxu0 %v5127
    %v5485 = vpop.f32.mrb[0].mxu0
    %v5486 = vadd.f32 0.0, %v5485
    %v5487 = vpop.f32.mrb[0].mxu0
    %5488 = vmatprep.mubr.f32.mxu0 0.0
    %5489 = vmatmul.mubr.f32.gmra.mrb[0].mxu0 %v5130
    %v5490 = vpop.f32.mrb[0].mxu0
    %v5491 = vadd.f32 0.0, %v5490
    %v5492 = vpop.f32.mrb[0].mxu0
    %5493 = vmatprep.mubr.f32.mxu0 0.0
    %5494 = vmatmul.mubr.f32.gmra.mrb[0].mxu0 %v5133
    %v5495 = vpop.f32.mrb[0].mxu0
    %v5496 = vadd.f32 0.0, %v5495
    %v5497 = vpop.f32.mrb[0].mxu0
    %5498 = vmatprep.mubr.f32.mxu0 0.0
    %5499 = vmatmul.mubr.f32.gmra.mrb[0].mxu0 %v5136
    %v5500 = vpop.f32.mrb[0].mxu0
    %v5501 = vadd.f32 0.0, %v5500
    %v5502 = vpop.f32.mrb[0].mxu0
    %5503 = vmatprep.mubr.f32.mxu0 0.0
    %5504 = vmatmul.mubr.f32.gmra.mrb[0].mxu0 %v5139
    %v5505 = vpop.f32.mrb[0].mxu0
    %v5506 = vadd.f32 0.0, %v5505
    %v5507 = vpop.f32.mrb[0].mxu0
    %5508 = vmatprep.mubr.f32.mxu0 0.0
    %5509 = vmatmul.mubr.f32.gmra.mrb[0].mxu0 %v5142
    %v5510 = vpop.f32.mrb[0].mxu0
    %v5511 = vadd.f32 0.0, %v5510
    %v5512 = vpop.f32.mrb[0].mxu0
    %5513 = vmatprep.mubr.f32.mxu0 0.0
    %5514 = vmatmul.mubr.f32.gmra.mrb[0].mxu0 %v5145
    %v5515 = vpop.f32.mrb[0].mxu0
    %v5516 = vadd.f32 0.0, %v5515
    %v5517 = vpop.f32.mrb[0].mxu0
    %5518 = vmatprep.mubr.f32.mxu0 0.0
    %5519 = vmatmul.mubr.f32.gmra.mrb[0].mxu0 %v5148
    %v5520 = vpop.f32.mrb[0].mxu0
    %v5521 = vadd.f32 0.0, %v5520
    %v5522 = vpop.f32.mrb[0].mxu0
    %5523 = vmatprep.mubr.f32.mxu0 0.0
    %5524 = vmatmul.mubr.f32.gmra.mrb[0].mxu0 %v5151
    %v5525 = vpop.f32.mrb[0].mxu0
    %v5526 = vadd.f32 0.0, %v5525
    %v5527 = vpop.f32.mrb[0].mxu0
    %5528 = vmatprep.mubr.f32.mxu0 0.0
    %5529 = vmatmul.mubr.f32.gmra.mrb[0].mxu0 %v5154
    %v5530 = vpop.f32.mrb[0].mxu0
    %v5531 = vadd.f32 0.0, %v5530
    %v5532 = vpop.f32.mrb[0].mxu0
    %5533 = vmatprep.mubr.f32.mxu0 0.0
    %5534 = vmatmul.mubr.f32.gmra.mrb[0].mxu0 %v5157
    %v5535 = vpop.f32.mrb[0].mxu0
    %v5536 = vadd.f32 0.0, %v5535
    %v5537 = vpop.f32.mrb[0].mxu0
    %5538 = vmatprep.mubr.f32.mxu0 0.0
    %5539 = vmatmul.mubr.f32.gmra.mrb[0].mxu0 %v5160
    %v5540 = vpop.f32.mrb[0].mxu0
    %v5541 = vadd.f32 0.0, %v5540
    %v5542 = vpop.f32.mrb[0].mxu0
    %5543 = vmatprep.mubr.f32.mxu0 0.0
    %5544 = vmatmul.mubr.f32.gmra.mrb[0].mxu0 %v5163
    %v5545 = vpop.f32.mrb[0].mxu0
    %v5546 = vadd.f32 0.0, %v5545
    %v5547 = vpop.f32.mrb[0].mxu0
    %5548 = vmatprep.mubr.f32.mxu0 0.0
    %5549 = vmatmul.mubr.f32.gmra.mrb[0].mxu0 %v5166
    %v5550 = vpop.f32.mrb[0].mxu0
    %v5551 = vadd.f32 0.0, %v5550
    %v5552 = vpop.f32.mrb[0].mxu0
    %5553 = vmatprep.mubr.f32.mxu0 0.0
    %5554 = vmatmul.mubr.f32.gmra.mrb[0].mxu0 %v5169
    %v5555 = vpop.f32.mrb[0].mxu0
    %v5556 = vadd.f32 0.0, %v5555
    %v5557 = vpop.f32.mrb[0].mxu0
    %5558 = vdwg.mxu0
    %v5559 = vadd.f32 %v4848, %v5241
    %v5560 = vadd.f32 %v4849, %v5246
    %v5561 = vadd.f32 %v4850, %v5251
    %v5562 = vadd.f32 %v4851, %v5256
    %v5563 = vadd.f32 %v4852, %v5261
    %v5564 = vadd.f32 %v4853, %v5266
    %v5565 = vadd.f32 %v4854, %v5271
    %v5566 = vadd.f32 %v4855, %v5276
    %v5567 = vadd.f32 %v4856, %v5281
    %v5568 = vadd.f32 %v4857, %v5286
    %v5569 = vadd.f32 %v4858, %v5291
    %v5570 = vadd.f32 %v4859, %v5296
    %v5571 = vadd.f32 %v4860, %v5301
    %v5572 = vadd.f32 %v4861, %v5306
    %v5573 = vadd.f32 %v4862, %v5311
    %v5574 = vadd.f32 %v4863, %v5316
    %v5575 = vadd.f32 %v4864, %v5321
    %v5576 = vadd.f32 %v4865, %v5326
    %v5577 = vadd.f32 %v4866, %v5331
    %v5578 = vadd.f32 %v4867, %v5336
    %v5579 = vadd.f32 %v4868, %v5341
    %v5580 = vadd.f32 %v4869, %v5346
    %v5581 = vadd.f32 %v4870, %v5351
    %v5582 = vadd.f32 %v4871, %v5356
    %v5583 = vadd.f32 %v4872, %v5361
    %v5584 = vadd.f32 %v4873, %v5366
    %v5585 = vadd.f32 %v4874, %v5371
    %v5586 = vadd.f32 %v4875, %v5376
    %v5587 = vadd.f32 %v4876, %v5381
    %v5588 = vadd.f32 %v4877, %v5386
    %v5589 = vadd.f32 %v4878, %v5391
    %v5590 = vadd.f32 %v4879, %v5396
    %v5591 = vadd.f32 %v4880, %v5401
    %v5592 = vadd.f32 %v4881, %v5406
    %v5593 = vadd.f32 %v4882, %v5411
    %v5594 = vadd.f32 %v4883, %v5416
    %v5595 = vadd.f32 %v4884, %v5421
    %v5596 = vadd.f32 %v4885, %v5426
    %v5597 = vadd.f32 %v4886, %v5431
    %v5598 = vadd.f32 %v4887, %v5436
    %v5599 = vadd.f32 %v4888, %v5441
    %v5600 = vadd.f32 %v4889, %v5446
    %v5601 = vadd.f32 %v4890, %v5451
    %v5602 = vadd.f32 %v4891, %v5456
    %v5603 = vadd.f32 %v4892, %v5461
    %v5604 = vadd.f32 %v4893, %v5466
    %v5605 = vadd.f32 %v4894, %v5471
    %v5606 = vadd.f32 %v4895, %v5476
    %v5607 = vadd.f32 %v4896, %v5481
    %v5608 = vadd.f32 %v4897, %v5486
    %v5609 = vadd.f32 %v4898, %v5491
    %v5610 = vadd.f32 %v4899, %v5496
    %v5611 = vadd.f32 %v4900, %v5501
    %v5612 = vadd.f32 %v4901, %v5506
    %v5613 = vadd.f32 %v4902, %v5511
    %v5614 = vadd.f32 %v4903, %v5516
    %v5615 = vadd.f32 %v4904, %v5521
    %v5616 = vadd.f32 %v4905, %v5526
    %v5617 = vadd.f32 %v4906, %v5531
    %v5618 = vadd.f32 %v4907, %v5536
    %v5619 = vadd.f32 %v4908, %v5541
    %v5620 = vadd.f32 %v4909, %v5546
    %v5621 = vadd.f32 %v4910, %v5551
    %v5622 = vadd.f32 %v4911, %v5556
    %v5623 = vld [vmem:[%s4912 + $0x1] sm:$0xff]
    %v5624 = vld [vmem:[%s4912 + $0x9] sm:$0xff]
    %v5625 = vld [vmem:[%s4912 + $0x19] sm:$0xff]
    %v5626 = vld [vmem:[%s4912 + $0x21] sm:$0xff]
    %v5627 = vld [vmem:[%s4912 + $0x31] sm:$0xff]
    %v5628 = vld [vmem:[%s4912 + $0x39] sm:$0xff]
    %v5629 = vld [vmem:[%s4912 + $0x49] sm:$0xff]
    %v5630 = vld [vmem:[%s4912 + $0x51] sm:$0xff]
    %v5631 = vld [vmem:[%s4912 + $0x61] sm:$0xff]
    %v5632 = vld [vmem:[%s4912 + $0x69] sm:$0xff]
    %v5633 = vld [vmem:[%s4912 + $0x79] sm:$0xff]
    %v5634 = vld [vmem:[%s4912 + $0x81] sm:$0xff]
    %v5635 = vld [vmem:[%s4912 + $0x91] sm:$0xff]
    %v5636 = vld [vmem:[%s4912 + $0x99] sm:$0xff]
    %v5637 = vld [vmem:[%s4912 + $0xa9] sm:$0xff]
    %v5638 = vld [vmem:[%s4912 + $0xb1] sm:$0xff]
    %v5639 = vld [vmem:[%s4912 + $0xc1] sm:$0xff]
    %v5640 = vld [vmem:[%s4912 + $0xc9] sm:$0xff]
    %v5641 = vld [vmem:[%s4912 + $0xd9] sm:$0xff]
    %v5642 = vld [vmem:[%s4912 + $0xe1] sm:$0xff]
    %v5643 = vld [vmem:[%s4912 + $0xf1] sm:$0xff]
    %v5644 = vld [vmem:[%s4912 + $0xf9] sm:$0xff]
    %v5645 = vld [vmem:[%s4912 + $0x109] sm:$0xff]
    %v5646 = vld [vmem:[%s4912 + $0x111] sm:$0xff]
    %v5647 = vld [vmem:[%s4912 + $0x121] sm:$0xff]
    %v5648 = vld [vmem:[%s4912 + $0x129] sm:$0xff]
    %v5649 = vld [vmem:[%s4912 + $0x139] sm:$0xff]
    %v5650 = vld [vmem:[%s4912 + $0x141] sm:$0xff]
    %v5651 = vld [vmem:[%s4912 + $0x151] sm:$0xff]
    %v5652 = vld [vmem:[%s4912 + $0x159] sm:$0xff]
    %v5653 = vld [vmem:[%s4912 + $0x169] sm:$0xff]
    %v5654 = vld [vmem:[%s4912 + $0x171] sm:$0xff]
    %v5655 = vld [vmem:[%s4912 + $0x1b1] sm:$0xff]
    %v5656 = vld [vmem:[%s4912 + $0x1b9] sm:$0xff]
    %v5657 = vld [vmem:[%s4912 + $0x1c9] sm:$0xff]
    %v5658 = vld [vmem:[%s4912 + $0x1d1] sm:$0xff]
    %v5659 = vld [vmem:[%s4912 + $0x1e1] sm:$0xff]
    %v5660 = vld [vmem:[%s4912 + $0x1e9] sm:$0xff]
    %v5661 = vld [vmem:[%s4912 + $0x1f9] sm:$0xff]
    %v5662 = vld [vmem:[%s4912 + $0x201] sm:$0xff]
    %v5663 = vld [vmem:[%s4912 + $0x211] sm:$0xff]
    %v5664 = vld [vmem:[%s4912 + $0x219] sm:$0xff]
    %v5665 = vld [vmem:[%s4912 + $0x229] sm:$0xff]
    %v5666 = vld [vmem:[%s4912 + $0x231] sm:$0xff]
    %v5667 = vld [vmem:[%s4912 + $0x241] sm:$0xff]
    %v5668 = vld [vmem:[%s4912 + $0x249] sm:$0xff]
    %v5669 = vld [vmem:[%s4912 + $0x259] sm:$0xff]
    %v5670 = vld [vmem:[%s4912 + $0x261] sm:$0xff]
    %v5671 = vld [vmem:[%s4912 + $0x271] sm:$0xff]
    %v5672 = vld [vmem:[%s4912 + $0x279] sm:$0xff]
    %v5673 = vld [vmem:[%s4912 + $0x289] sm:$0xff]
    %v5674 = vld [vmem:[%s4912 + $0x291] sm:$0xff]
    %v5675 = vld [vmem:[%s4912 + $0x2a1] sm:$0xff]
    %v5676 = vld [vmem:[%s4912 + $0x2a9] sm:$0xff]
    %v5677 = vld [vmem:[%s4912 + $0x2b9] sm:$0xff]
    %v5678 = vld [vmem:[%s4912 + $0x2c1] sm:$0xff]
    %v5679 = vld [vmem:[%s4912 + $0x2d1] sm:$0xff]
    %v5680 = vld [vmem:[%s4912 + $0x2d9] sm:$0xff]
    %v5681 = vld [vmem:[%s4912 + $0x2e9] sm:$0xff]
    %v5682 = vld [vmem:[%s4912 + $0x2f1] sm:$0xff]
    %v5683 = vld [vmem:[%s4912 + $0x301] sm:$0xff]
    %v5684 = vld [vmem:[%s4912 + $0x309] sm:$0xff]
    %v5685 = vld [vmem:[%s4912 + $0x319] sm:$0xff]
    %v5686 = vld [vmem:[%s4912 + $0x321] sm:$0xff]
    %s5687 = scalar_lea.vmem %s2, 28
    %v5688 = vld [vmem:[%s5687] sm:$0xf]
    %v5690 = vsel %vm87, %v5623, 0
    %v5693 = vsel %vm87, %v5624, 0
    %v5696 = vsel %vm87, %v5625, 0
    %v5699 = vsel %vm87, %v5626, 0
    %v5702 = vsel %vm87, %v5627, 0
    %v5705 = vsel %vm87, %v5628, 0
    %v5708 = vsel %vm87, %v5629, 0
    %v5711 = vsel %vm87, %v5630, 0
    %v5714 = vsel %vm87, %v5631, 0
    %v5717 = vsel %vm87, %v5632, 0
    %v5720 = vsel %vm87, %v5633, 0
    %v5723 = vsel %vm87, %v5634, 0
    %v5726 = vsel %vm87, %v5635, 0
    %v5729 = vsel %vm87, %v5636, 0
    %v5732 = vsel %vm87, %v5637, 0
    %v5735 = vsel %vm87, %v5638, 0
    %v5738 = vsel %vm87, %v5639, 0
    %v5741 = vsel %vm87, %v5640, 0
    %v5744 = vsel %vm87, %v5641, 0
    %v5747 = vsel %vm87, %v5642, 0
    %v5750 = vsel %vm87, %v5643, 0
    %v5753 = vsel %vm87, %v5644, 0
    %v5756 = vsel %vm87, %v5645, 0
    %v5759 = vsel %vm87, %v5646, 0
    %v5762 = vsel %vm87, %v5647, 0
    %v5765 = vsel %vm87, %v5648, 0
    %v5768 = vsel %vm87, %v5649, 0
    %v5771 = vsel %vm87, %v5650, 0
    %v5774 = vsel %vm87, %v5651, 0
    %v5777 = vsel %vm87, %v5652, 0
    %v5780 = vsel %vm87, %v5653, 0
    %v5783 = vsel %vm87, %v5654, 0
    %v5786 = vsel %vm87, %v5655, 0
    %v5789 = vsel %vm87, %v5656, 0
    %v5792 = vsel %vm87, %v5657, 0
    %v5795 = vsel %vm87, %v5658, 0
    %v5798 = vsel %vm87, %v5659, 0
    %v5801 = vsel %vm87, %v5660, 0
    %v5804 = vsel %vm87, %v5661, 0
    %v5807 = vsel %vm87, %v5662, 0
    %v5810 = vsel %vm87, %v5663, 0
    %v5813 = vsel %vm87, %v5664, 0
    %v5816 = vsel %vm87, %v5665, 0
    %v5819 = vsel %vm87, %v5666, 0
    %v5822 = vsel %vm87, %v5667, 0
    %v5825 = vsel %vm87, %v5668, 0
    %v5828 = vsel %vm87, %v5669, 0
    %v5831 = vsel %vm87, %v5670, 0
    %v5834 = vsel %vm87, %v5671, 0
    %v5837 = vsel %vm87, %v5672, 0
    %v5840 = vsel %vm87, %v5673, 0
    %v5843 = vsel %vm87, %v5674, 0
    %v5846 = vsel %vm87, %v5675, 0
    %v5849 = vsel %vm87, %v5676, 0
    %v5852 = vsel %vm87, %v5677, 0
    %v5855 = vsel %vm87, %v5678, 0
    %v5858 = vsel %vm87, %v5679, 0
    %v5861 = vsel %vm87, %v5680, 0
    %v5864 = vsel %vm87, %v5681, 0
    %v5867 = vsel %vm87, %v5682, 0
    %v5870 = vsel %vm87, %v5683, 0
    %v5873 = vsel %vm87, %v5684, 0
    %v5876 = vsel %vm87, %v5685, 0
    %v5879 = vsel %vm87, %v5686, 0
    %v5882 = vsel %vm1103, %v5688, 0
    %5884 = vmatprep.subr.mxu0 0.0
    %5885 = vmatpush1.msra.mxu0 %v5882
    %5886 = vmatprep.subr.mxu0 0.0
    %5887 = vmatpush1.msra.mxu0 0.0
    %5888 = vmatprep.subr.mxu0 0.0
    %5889 = vmatpush1.msra.mxu0 0.0
    %5890 = vmatprep.subr.mxu0 0.0
    %5891 = vmatpush1.msra.mxu0 0.0
    %5892 = vmatprep.subr.mxu0 0.0
    %5893 = vmatpush1.msra.mxu0 0.0
    %5894 = vmatprep.subr.mxu0 0.0
    %5895 = vmatpush1.msra.mxu0 0.0
    %5896 = vmatprep.subr.mxu0 0.0
    %5897 = vmatpush1.msra.mxu0 0.0
    %5898 = vmatprep.subr.mxu0 0.0
    %5899 = vmatpush1.msra.mxu0 0.0
    %5900 = vmatprep.subr.mxu0 0.0
    %5901 = vmatpush1.msra.mxu0 0.0
    %5902 = vmatprep.subr.mxu0 0.0
    %5903 = vmatpush1.msra.mxu0 0.0
    %5904 = vmatprep.subr.mxu0 0.0
    %5905 = vmatpush1.msra.mxu0 0.0
    %5906 = vmatprep.subr.mxu0 0.0
    %5907 = vmatpush1.msra.mxu0 0.0
    %5908 = vmatprep.subr.mxu0 0.0
    %5909 = vmatpush1.msra.mxu0 0.0
    %5910 = vmatprep.subr.mxu0 0.0
    %5911 = vmatpush1.msra.mxu0 0.0
    %5912 = vmatprep.subr.mxu0 0.0
    %5913 = vmatpush1.msra.mxu0 0.0
    %5914 = vmatprep.subr.mxu0 0.0
    %5915 = vmatpush1.msra.mxu0 0.0
    %5916 = vmatprep.subr.mxu0 0.0
    %5917 = vmatpush1.msra.mxu0 0.0
    %5918 = vmatprep.subr.mxu0 0.0
    %5919 = vmatpush1.msra.mxu0 0.0
    %5920 = vmatprep.subr.mxu0 0.0
    %5921 = vmatpush1.msra.mxu0 0.0
    %5922 = vmatprep.subr.mxu0 0.0
    %5923 = vmatpush1.msra.mxu0 0.0
    %5924 = vmatprep.subr.mxu0 0.0
    %5925 = vmatpush1.msra.mxu0 0.0
    %5926 = vmatprep.subr.mxu0 0.0
    %5927 = vmatpush1.msra.mxu0 0.0
    %5928 = vmatprep.subr.mxu0 0.0
    %5929 = vmatpush1.msra.mxu0 0.0
    %5930 = vmatprep.subr.mxu0 0.0
    %5931 = vmatpush1.msra.mxu0 0.0
    %5932 = vmatprep.subr.mxu0 0.0
    %5933 = vmatpush1.msra.mxu0 0.0
    %5934 = vmatprep.subr.mxu0 0.0
    %5935 = vmatpush1.msra.mxu0 0.0
    %5936 = vmatprep.subr.mxu0 0.0
    %5937 = vmatpush1.msra.mxu0 0.0
    %5938 = vmatprep.subr.mxu0 0.0
    %5939 = vmatpush1.msra.mxu0 0.0
    %5940 = vmatprep.subr.mxu0 0.0
    %5941 = vmatpush1.msra.mxu0 0.0
    %5942 = vmatprep.subr.mxu0 0.0
    %5943 = vmatpush1.msra.mxu0 0.0
    %5944 = vmatprep.subr.mxu0 0.0
    %5945 = vmatpush1.msra.mxu0 0.0
    %5946 = vmatprep.subr.mxu0 0.0
    %5947 = vmatpush1.msra.mxu0 0.0
    %5948 = vmatprep.mubr.f32.mxu0 0.0
    %5949 = vmatmul.mubr.f32.gmra.mrb[0].mxu0 %v5690
    %v5950 = vpop.f32.mrb[0].mxu0
    %v5951 = vadd.f32 0.0, %v5950
    %v5952 = vpop.f32.mrb[0].mxu0
    %5953 = vmatprep.mubr.f32.mxu0 0.0
    %5954 = vmatmul.mubr.f32.gmra.mrb[0].mxu0 %v5693
    %v5955 = vpop.f32.mrb[0].mxu0
    %v5956 = vadd.f32 0.0, %v5955
    %v5957 = vpop.f32.mrb[0].mxu0
    %5958 = vmatprep.mubr.f32.mxu0 0.0
    %5959 = vmatmul.mubr.f32.gmra.mrb[0].mxu0 %v5696
    %v5960 = vpop.f32.mrb[0].mxu0
    %v5961 = vadd.f32 0.0, %v5960
    %v5962 = vpop.f32.mrb[0].mxu0
    %5963 = vmatprep.mubr.f32.mxu0 0.0
    %5964 = vmatmul.mubr.f32.gmra.mrb[0].mxu0 %v5699
    %v5965 = vpop.f32.mrb[0].mxu0
    %v5966 = vadd.f32 0.0, %v5965
    %v5967 = vpop.f32.mrb[0].mxu0
    %5968 = vmatprep.mubr.f32.mxu0 0.0
    %5969 = vmatmul.mubr.f32.gmra.mrb[0].mxu0 %v5702
    %v5970 = vpop.f32.mrb[0].mxu0
    %v5971 = vadd.f32 0.0, %v5970
    %v5972 = vpop.f32.mrb[0].mxu0
    %5973 = vmatprep.mubr.f32.mxu0 0.0
    %5974 = vmatmul.mubr.f32.gmra.mrb[0].mxu0 %v5705
    %v5975 = vpop.f32.mrb[0].mxu0
    %v5976 = vadd.f32 0.0, %v5975
    %v5977 = vpop.f32.mrb[0].mxu0
    %5978 = vmatprep.mubr.f32.mxu0 0.0
    %5979 = vmatmul.mubr.f32.gmra.mrb[0].mxu0 %v5708
    %v5980 = vpop.f32.mrb[0].mxu0
    %v5981 = vadd.f32 0.0, %v5980
    %v5982 = vpop.f32.mrb[0].mxu0
    %5983 = vmatprep.mubr.f32.mxu0 0.0
    %5984 = vmatmul.mubr.f32.gmra.mrb[0].mxu0 %v5711
    %v5985 = vpop.f32.mrb[0].mxu0
    %v5986 = vadd.f32 0.0, %v5985
    %v5987 = vpop.f32.mrb[0].mxu0
    %5988 = vmatprep.mubr.f32.mxu0 0.0
    %5989 = vmatmul.mubr.f32.gmra.mrb[0].mxu0 %v5714
    %v5990 = vpop.f32.mrb[0].mxu0
    %v5991 = vadd.f32 0.0, %v5990
    %v5992 = vpop.f32.mrb[0].mxu0
    %5993 = vmatprep.mubr.f32.mxu0 0.0
    %5994 = vmatmul.mubr.f32.gmra.mrb[0].mxu0 %v5717
    %v5995 = vpop.f32.mrb[0].mxu0
    %v5996 = vadd.f32 0.0, %v5995
    %v5997 = vpop.f32.mrb[0].mxu0
    %5998 = vmatprep.mubr.f32.mxu0 0.0
    %5999 = vmatmul.mubr.f32.gmra.mrb[0].mxu0 %v5720
    %v6000 = vpop.f32.mrb[0].mxu0
    %v6001 = vadd.f32 0.0, %v6000
    %v6002 = vpop.f32.mrb[0].mxu0
    %6003 = vmatprep.mubr.f32.mxu0 0.0
    %6004 = vmatmul.mubr.f32.gmra.mrb[0].mxu0 %v5723
    %v6005 = vpop.f32.mrb[0].mxu0
    %v6006 = vadd.f32 0.0, %v6005
    %v6007 = vpop.f32.mrb[0].mxu0
    %6008 = vmatprep.mubr.f32.mxu0 0.0
    %6009 = vmatmul.mubr.f32.gmra.mrb[0].mxu0 %v5726
    %v6010 = vpop.f32.mrb[0].mxu0
    %v6011 = vadd.f32 0.0, %v6010
    %v6012 = vpop.f32.mrb[0].mxu0
    %6013 = vmatprep.mubr.f32.mxu0 0.0
    %6014 = vmatmul.mubr.f32.gmra.mrb[0].mxu0 %v5729
    %v6015 = vpop.f32.mrb[0].mxu0
    %v6016 = vadd.f32 0.0, %v6015
    %v6017 = vpop.f32.mrb[0].mxu0
    %6018 = vmatprep.mubr.f32.mxu0 0.0
    %6019 = vmatmul.mubr.f32.gmra.mrb[0].mxu0 %v5732
    %v6020 = vpop.f32.mrb[0].mxu0
    %v6021 = vadd.f32 0.0, %v6020
    %v6022 = vpop.f32.mrb[0].mxu0
    %6023 = vmatprep.mubr.f32.mxu0 0.0
    %6024 = vmatmul.mubr.f32.gmra.mrb[0].mxu0 %v5735
    %v6025 = vpop.f32.mrb[0].mxu0
    %v6026 = vadd.f32 0.0, %v6025
    %v6027 = vpop.f32.mrb[0].mxu0
    %6028 = vmatprep.mubr.f32.mxu0 0.0
    %6029 = vmatmul.mubr.f32.gmra.mrb[0].mxu0 %v5738
    %v6030 = vpop.f32.mrb[0].mxu0
    %v6031 = vadd.f32 0.0, %v6030
    %v6032 = vpop.f32.mrb[0].mxu0
    %6033 = vmatprep.mubr.f32.mxu0 0.0
    %6034 = vmatmul.mubr.f32.gmra.mrb[0].mxu0 %v5741
    %v6035 = vpop.f32.mrb[0].mxu0
    %v6036 = vadd.f32 0.0, %v6035
    %v6037 = vpop.f32.mrb[0].mxu0
    %6038 = vmatprep.mubr.f32.mxu0 0.0
    %6039 = vmatmul.mubr.f32.gmra.mrb[0].mxu0 %v5744
    %v6040 = vpop.f32.mrb[0].mxu0
    %v6041 = vadd.f32 0.0, %v6040
    %v6042 = vpop.f32.mrb[0].mxu0
    %6043 = vmatprep.mubr.f32.mxu0 0.0
    %6044 = vmatmul.mubr.f32.gmra.mrb[0].mxu0 %v5747
    %v6045 = vpop.f32.mrb[0].mxu0
    %v6046 = vadd.f32 0.0, %v6045
    %v6047 = vpop.f32.mrb[0].mxu0
    %6048 = vmatprep.mubr.f32.mxu0 0.0
    %6049 = vmatmul.mubr.f32.gmra.mrb[0].mxu0 %v5750
    %v6050 = vpop.f32.mrb[0].mxu0
    %v6051 = vadd.f32 0.0, %v6050
    %v6052 = vpop.f32.mrb[0].mxu0
    %6053 = vmatprep.mubr.f32.mxu0 0.0
    %6054 = vmatmul.mubr.f32.gmra.mrb[0].mxu0 %v5753
    %v6055 = vpop.f32.mrb[0].mxu0
    %v6056 = vadd.f32 0.0, %v6055
    %v6057 = vpop.f32.mrb[0].mxu0
    %6058 = vmatprep.mubr.f32.mxu0 0.0
    %6059 = vmatmul.mubr.f32.gmra.mrb[0].mxu0 %v5756
    %v6060 = vpop.f32.mrb[0].mxu0
    %v6061 = vadd.f32 0.0, %v6060
    %v6062 = vpop.f32.mrb[0].mxu0
    %6063 = vmatprep.mubr.f32.mxu0 0.0
    %6064 = vmatmul.mubr.f32.gmra.mrb[0].mxu0 %v5759
    %v6065 = vpop.f32.mrb[0].mxu0
    %v6066 = vadd.f32 0.0, %v6065
    %v6067 = vpop.f32.mrb[0].mxu0
    %6068 = vmatprep.mubr.f32.mxu0 0.0
    %6069 = vmatmul.mubr.f32.gmra.mrb[0].mxu0 %v5762
    %v6070 = vpop.f32.mrb[0].mxu0
    %v6071 = vadd.f32 0.0, %v6070
    %v6072 = vpop.f32.mrb[0].mxu0
    %6073 = vmatprep.mubr.f32.mxu0 0.0
    %6074 = vmatmul.mubr.f32.gmra.mrb[0].mxu0 %v5765
    %v6075 = vpop.f32.mrb[0].mxu0
    %v6076 = vadd.f32 0.0, %v6075
    %v6077 = vpop.f32.mrb[0].mxu0
    %6078 = vmatprep.mubr.f32.mxu0 0.0
    %6079 = vmatmul.mubr.f32.gmra.mrb[0].mxu0 %v5768
    %v6080 = vpop.f32.mrb[0].mxu0
    %v6081 = vadd.f32 0.0, %v6080
    %v6082 = vpop.f32.mrb[0].mxu0
    %6083 = vmatprep.mubr.f32.mxu0 0.0
    %6084 = vmatmul.mubr.f32.gmra.mrb[0].mxu0 %v5771
    %v6085 = vpop.f32.mrb[0].mxu0
    %v6086 = vadd.f32 0.0, %v6085
    %v6087 = vpop.f32.mrb[0].mxu0
    %6088 = vmatprep.mubr.f32.mxu0 0.0
    %6089 = vmatmul.mubr.f32.gmra.mrb[0].mxu0 %v5774
    %v6090 = vpop.f32.mrb[0].mxu0
    %v6091 = vadd.f32 0.0, %v6090
    %v6092 = vpop.f32.mrb[0].mxu0
    %6093 = vmatprep.mubr.f32.mxu0 0.0
    %6094 = vmatmul.mubr.f32.gmra.mrb[0].mxu0 %v5777
    %v6095 = vpop.f32.mrb[0].mxu0
    %v6096 = vadd.f32 0.0, %v6095
    %v6097 = vpop.f32.mrb[0].mxu0
    %6098 = vmatprep.mubr.f32.mxu0 0.0
    %6099 = vmatmul.mubr.f32.gmra.mrb[0].mxu0 %v5780
    %v6100 = vpop.f32.mrb[0].mxu0
    %v6101 = vadd.f32 0.0, %v6100
    %v6102 = vpop.f32.mrb[0].mxu0
    %6103 = vmatprep.mubr.f32.mxu0 0.0
    %6104 = vmatmul.mubr.f32.gmra.mrb[0].mxu0 %v5783
    %v6105 = vpop.f32.mrb[0].mxu0
    %v6106 = vadd.f32 0.0, %v6105
    %v6107 = vpop.f32.mrb[0].mxu0
    %6108 = vmatprep.mubr.f32.mxu0 0.0
    %6109 = vmatmul.mubr.f32.gmra.mrb[0].mxu0 %v5786
    %v6110 = vpop.f32.mrb[0].mxu0
    %v6111 = vadd.f32 0.0, %v6110
    %v6112 = vpop.f32.mrb[0].mxu0
    %6113 = vmatprep.mubr.f32.mxu0 0.0
    %6114 = vmatmul.mubr.f32.gmra.mrb[0].mxu0 %v5789
    %v6115 = vpop.f32.mrb[0].mxu0
    %v6116 = vadd.f32 0.0, %v6115
    %v6117 = vpop.f32.mrb[0].mxu0
    %6118 = vmatprep.mubr.f32.mxu0 0.0
    %6119 = vmatmul.mubr.f32.gmra.mrb[0].mxu0 %v5792
    %v6120 = vpop.f32.mrb[0].mxu0
    %v6121 = vadd.f32 0.0, %v6120
    %v6122 = vpop.f32.mrb[0].mxu0
    %6123 = vmatprep.mubr.f32.mxu0 0.0
    %6124 = vmatmul.mubr.f32.gmra.mrb[0].mxu0 %v5795
    %v6125 = vpop.f32.mrb[0].mxu0
    %v6126 = vadd.f32 0.0, %v6125
    %v6127 = vpop.f32.mrb[0].mxu0
    %6128 = vmatprep.mubr.f32.mxu0 0.0
    %6129 = vmatmul.mubr.f32.gmra.mrb[0].mxu0 %v5798
    %v6130 = vpop.f32.mrb[0].mxu0
    %v6131 = vadd.f32 0.0, %v6130
    %v6132 = vpop.f32.mrb[0].mxu0
    %6133 = vmatprep.mubr.f32.mxu0 0.0
    %6134 = vmatmul.mubr.f32.gmra.mrb[0].mxu0 %v5801
    %v6135 = vpop.f32.mrb[0].mxu0
    %v6136 = vadd.f32 0.0, %v6135
    %v6137 = vpop.f32.mrb[0].mxu0
    %6138 = vmatprep.mubr.f32.mxu0 0.0
    %6139 = vmatmul.mubr.f32.gmra.mrb[0].mxu0 %v5804
    %v6140 = vpop.f32.mrb[0].mxu0
    %v6141 = vadd.f32 0.0, %v6140
    %v6142 = vpop.f32.mrb[0].mxu0
    %6143 = vmatprep.mubr.f32.mxu0 0.0
    %6144 = vmatmul.mubr.f32.gmra.mrb[0].mxu0 %v5807
    %v6145 = vpop.f32.mrb[0].mxu0
    %v6146 = vadd.f32 0.0, %v6145
    %v6147 = vpop.f32.mrb[0].mxu0
    %6148 = vmatprep.mubr.f32.mxu0 0.0
    %6149 = vmatmul.mubr.f32.gmra.mrb[0].mxu0 %v5810
    %v6150 = vpop.f32.mrb[0].mxu0
    %v6151 = vadd.f32 0.0, %v6150
    %v6152 = vpop.f32.mrb[0].mxu0
    %6153 = vmatprep.mubr.f32.mxu0 0.0
    %6154 = vmatmul.mubr.f32.gmra.mrb[0].mxu0 %v5813
    %v6155 = vpop.f32.mrb[0].mxu0
    %v6156 = vadd.f32 0.0, %v6155
    %v6157 = vpop.f32.mrb[0].mxu0
    %6158 = vmatprep.mubr.f32.mxu0 0.0
    %6159 = vmatmul.mubr.f32.gmra.mrb[0].mxu0 %v5816
    %v6160 = vpop.f32.mrb[0].mxu0
    %v6161 = vadd.f32 0.0, %v6160
    %v6162 = vpop.f32.mrb[0].mxu0
    %6163 = vmatprep.mubr.f32.mxu0 0.0
    %6164 = vmatmul.mubr.f32.gmra.mrb[0].mxu0 %v5819
    %v6165 = vpop.f32.mrb[0].mxu0
    %v6166 = vadd.f32 0.0, %v6165
    %v6167 = vpop.f32.mrb[0].mxu0
    %6168 = vmatprep.mubr.f32.mxu0 0.0
    %6169 = vmatmul.mubr.f32.gmra.mrb[0].mxu0 %v5822
    %v6170 = vpop.f32.mrb[0].mxu0
    %v6171 = vadd.f32 0.0, %v6170
    %v6172 = vpop.f32.mrb[0].mxu0
    %6173 = vmatprep.mubr.f32.mxu0 0.0
    %6174 = vmatmul.mubr.f32.gmra.mrb[0].mxu0 %v5825
    %v6175 = vpop.f32.mrb[0].mxu0
    %v6176 = vadd.f32 0.0, %v6175
    %v6177 = vpop.f32.mrb[0].mxu0
    %6178 = vmatprep.mubr.f32.mxu0 0.0
    %6179 = vmatmul.mubr.f32.gmra.mrb[0].mxu0 %v5828
    %v6180 = vpop.f32.mrb[0].mxu0
    %v6181 = vadd.f32 0.0, %v6180
    %v6182 = vpop.f32.mrb[0].mxu0
    %6183 = vmatprep.mubr.f32.mxu0 0.0
    %6184 = vmatmul.mubr.f32.gmra.mrb[0].mxu0 %v5831
    %v6185 = vpop.f32.mrb[0].mxu0
    %v6186 = vadd.f32 0.0, %v6185
    %v6187 = vpop.f32.mrb[0].mxu0
    %6188 = vmatprep.mubr.f32.mxu0 0.0
    %6189 = vmatmul.mubr.f32.gmra.mrb[0].mxu0 %v5834
    %v6190 = vpop.f32.mrb[0].mxu0
    %v6191 = vadd.f32 0.0, %v6190
    %v6192 = vpop.f32.mrb[0].mxu0
    %6193 = vmatprep.mubr.f32.mxu0 0.0
    %6194 = vmatmul.mubr.f32.gmra.mrb[0].mxu0 %v5837
    %v6195 = vpop.f32.mrb[0].mxu0
    %v6196 = vadd.f32 0.0, %v6195
    %v6197 = vpop.f32.mrb[0].mxu0
    %6198 = vmatprep.mubr.f32.mxu0 0.0
    %6199 = vmatmul.mubr.f32.gmra.mrb[0].mxu0 %v5840
    %v6200 = vpop.f32.mrb[0].mxu0
    %v6201 = vadd.f32 0.0, %v6200
    %v6202 = vpop.f32.mrb[0].mxu0
    %6203 = vmatprep.mubr.f32.mxu0 0.0
    %6204 = vmatmul.mubr.f32.gmra.mrb[0].mxu0 %v5843
    %v6205 = vpop.f32.mrb[0].mxu0
    %v6206 = vadd.f32 0.0, %v6205
    %v6207 = vpop.f32.mrb[0].mxu0
    %6208 = vmatprep.mubr.f32.mxu0 0.0
    %6209 = vmatmul.mubr.f32.gmra.mrb[0].mxu0 %v5846
    %v6210 = vpop.f32.mrb[0].mxu0
    %v6211 = vadd.f32 0.0, %v6210
    %v6212 = vpop.f32.mrb[0].mxu0
    %6213 = vmatprep.mubr.f32.mxu0 0.0
    %6214 = vmatmul.mubr.f32.gmra.mrb[0].mxu0 %v5849
    %v6215 = vpop.f32.mrb[0].mxu0
    %v6216 = vadd.f32 0.0, %v6215
    %v6217 = vpop.f32.mrb[0].mxu0
    %6218 = vmatprep.mubr.f32.mxu0 0.0
    %6219 = vmatmul.mubr.f32.gmra.mrb[0].mxu0 %v5852
    %v6220 = vpop.f32.mrb[0].mxu0
    %v6221 = vadd.f32 0.0, %v6220
    %v6222 = vpop.f32.mrb[0].mxu0
    %6223 = vmatprep.mubr.f32.mxu0 0.0
    %6224 = vmatmul.mubr.f32.gmra.mrb[0].mxu0 %v5855
    %v6225 = vpop.f32.mrb[0].mxu0
    %v6226 = vadd.f32 0.0, %v6225
    %v6227 = vpop.f32.mrb[0].mxu0
    %6228 = vmatprep.mubr.f32.mxu0 0.0
    %6229 = vmatmul.mubr.f32.gmra.mrb[0].mxu0 %v5858
    %v6230 = vpop.f32.mrb[0].mxu0
    %v6231 = vadd.f32 0.0, %v6230
    %v6232 = vpop.f32.mrb[0].mxu0
    %6233 = vmatprep.mubr.f32.mxu0 0.0
    %6234 = vmatmul.mubr.f32.gmra.mrb[0].mxu0 %v5861
    %v6235 = vpop.f32.mrb[0].mxu0
    %v6236 = vadd.f32 0.0, %v6235
    %v6237 = vpop.f32.mrb[0].mxu0
    %6238 = vmatprep.mubr.f32.mxu0 0.0
    %6239 = vmatmul.mubr.f32.gmra.mrb[0].mxu0 %v5864
    %v6240 = vpop.f32.mrb[0].mxu0
    %v6241 = vadd.f32 0.0, %v6240
    %v6242 = vpop.f32.mrb[0].mxu0
    %6243 = vmatprep.mubr.f32.mxu0 0.0
    %6244 = vmatmul.mubr.f32.gmra.mrb[0].mxu0 %v5867
    %v6245 = vpop.f32.mrb[0].mxu0
    %v6246 = vadd.f32 0.0, %v6245
    %v6247 = vpop.f32.mrb[0].mxu0
    %6248 = vmatprep.mubr.f32.mxu0 0.0
    %6249 = vmatmul.mubr.f32.gmra.mrb[0].mxu0 %v5870
    %v6250 = vpop.f32.mrb[0].mxu0
    %v6251 = vadd.f32 0.0, %v6250
    %v6252 = vpop.f32.mrb[0].mxu0
    %6253 = vmatprep.mubr.f32.mxu0 0.0
    %6254 = vmatmul.mubr.f32.gmra.mrb[0].mxu0 %v5873
    %v6255 = vpop.f32.mrb[0].mxu0
    %v6256 = vadd.f32 0.0, %v6255
    %v6257 = vpop.f32.mrb[0].mxu0
    %6258 = vmatprep.mubr.f32.mxu0 0.0
    %6259 = vmatmul.mubr.f32.gmra.mrb[0].mxu0 %v5876
    %v6260 = vpop.f32.mrb[0].mxu0
    %v6261 = vadd.f32 0.0, %v6260
    %v6262 = vpop.f32.mrb[0].mxu0
    %6263 = vmatprep.mubr.f32.mxu0 0.0
    %6264 = vmatmul.mubr.f32.gmra.mrb[0].mxu0 %v5879
    %v6265 = vpop.f32.mrb[0].mxu0
    %v6266 = vadd.f32 0.0, %v6265
    %v6267 = vpop.f32.mrb[0].mxu0
    %6268 = vdwg.mxu0
    %v6269 = vadd.f32 %v5559, %v5951
    %v6270 = vadd.f32 %v5560, %v5956
    %v6271 = vadd.f32 %v5561, %v5961
    %v6272 = vadd.f32 %v5562, %v5966
    %v6273 = vadd.f32 %v5563, %v5971
    %v6274 = vadd.f32 %v5564, %v5976
    %v6275 = vadd.f32 %v5565, %v5981
    %v6276 = vadd.f32 %v5566, %v5986
    %v6277 = vadd.f32 %v5567, %v5991
    %v6278 = vadd.f32 %v5568, %v5996
    %v6279 = vadd.f32 %v5569, %v6001
    %v6280 = vadd.f32 %v5570, %v6006
    %v6281 = vadd.f32 %v5571, %v6011
    %v6282 = vadd.f32 %v5572, %v6016
    %v6283 = vadd.f32 %v5573, %v6021
    %v6284 = vadd.f32 %v5574, %v6026
    %v6285 = vadd.f32 %v5575, %v6031
    %v6286 = vadd.f32 %v5576, %v6036
    %v6287 = vadd.f32 %v5577, %v6041
    %v6288 = vadd.f32 %v5578, %v6046
    %v6289 = vadd.f32 %v5579, %v6051
    %v6290 = vadd.f32 %v5580, %v6056
    %v6291 = vadd.f32 %v5581, %v6061
    %v6292 = vadd.f32 %v5582, %v6066
    %v6293 = vadd.f32 %v5583, %v6071
    %v6294 = vadd.f32 %v5584, %v6076
    %v6295 = vadd.f32 %v5585, %v6081
    %v6296 = vadd.f32 %v5586, %v6086
    %v6297 = vadd.f32 %v5587, %v6091
    %v6298 = vadd.f32 %v5588, %v6096
    %v6299 = vadd.f32 %v5589, %v6101
    %v6300 = vadd.f32 %v5590, %v6106
    %v6301 = vadd.f32 %v5591, %v6111
    %v6302 = vadd.f32 %v5592, %v6116
    %v6303 = vadd.f32 %v5593, %v6121
    %v6304 = vadd.f32 %v5594, %v6126
    %v6305 = vadd.f32 %v5595, %v6131
    %v6306 = vadd.f32 %v5596, %v6136
    %v6307 = vadd.f32 %v5597, %v6141
    %v6308 = vadd.f32 %v5598, %v6146
    %v6309 = vadd.f32 %v5599, %v6151
    %v6310 = vadd.f32 %v5600, %v6156
    %v6311 = vadd.f32 %v5601, %v6161
    %v6312 = vadd.f32 %v5602, %v6166
    %v6313 = vadd.f32 %v5603, %v6171
    %v6314 = vadd.f32 %v5604, %v6176
    %v6315 = vadd.f32 %v5605, %v6181
    %v6316 = vadd.f32 %v5606, %v6186
    %v6317 = vadd.f32 %v5607, %v6191
    %v6318 = vadd.f32 %v5608, %v6196
    %v6319 = vadd.f32 %v5609, %v6201
    %v6320 = vadd.f32 %v5610, %v6206
    %v6321 = vadd.f32 %v5611, %v6211
    %v6322 = vadd.f32 %v5612, %v6216
    %v6323 = vadd.f32 %v5613, %v6221
    %v6324 = vadd.f32 %v5614, %v6226
    %v6325 = vadd.f32 %v5615, %v6231
    %v6326 = vadd.f32 %v5616, %v6236
    %v6327 = vadd.f32 %v5617, %v6241
    %v6328 = vadd.f32 %v5618, %v6246
    %v6329 = vadd.f32 %v5619, %v6251
    %v6330 = vadd.f32 %v5620, %v6256
    %v6331 = vadd.f32 %v5621, %v6261
    %v6332 = vadd.f32 %v5622, %v6266
    %v6333 = vld [vmem:[%s4912 + $0x2] sm:$0xff]
    %v6334 = vld [vmem:[%s4912 + $0xa] sm:$0xff]
    %v6335 = vld [vmem:[%s4912 + $0x1a] sm:$0xff]
    %v6336 = vld [vmem:[%s4912 + $0x22] sm:$0xff]
    %v6337 = vld [vmem:[%s4912 + $0x32] sm:$0xff]
    %v6338 = vld [vmem:[%s4912 + $0x3a] sm:$0xff]
    %v6339 = vld [vmem:[%s4912 + $0x4a] sm:$0xff]
    %v6340 = vld [vmem:[%s4912 + $0x52] sm:$0xff]
    %v6341 = vld [vmem:[%s4912 + $0x62] sm:$0xff]
    %v6342 = vld [vmem:[%s4912 + $0x6a] sm:$0xff]
    %v6343 = vld [vmem:[%s4912 + $0x7a] sm:$0xff]
    %v6344 = vld [vmem:[%s4912 + $0x82] sm:$0xff]
    %v6345 = vld [vmem:[%s4912 + $0x92] sm:$0xff]
    %v6346 = vld [vmem:[%s4912 + $0x9a] sm:$0xff]
    %v6347 = vld [vmem:[%s4912 + $0xaa] sm:$0xff]
    %v6348 = vld [vmem:[%s4912 + $0xb2] sm:$0xff]
    %v6349 = vld [vmem:[%s4912 + $0xc2] sm:$0xff]
    %v6350 = vld [vmem:[%s4912 + $0xca] sm:$0xff]
    %v6351 = vld [vmem:[%s4912 + $0xda] sm:$0xff]
    %v6352 = vld [vmem:[%s4912 + $0xe2] sm:$0xff]
    %v6353 = vld [vmem:[%s4912 + $0xf2] sm:$0xff]
    %v6354 = vld [vmem:[%s4912 + $0xfa] sm:$0xff]
    %v6355 = vld [vmem:[%s4912 + $0x10a] sm:$0xff]
    %v6356 = vld [vmem:[%s4912 + $0x112] sm:$0xff]
    %v6357 = vld [vmem:[%s4912 + $0x122] sm:$0xff]
    %v6358 = vld [vmem:[%s4912 + $0x12a] sm:$0xff]
    %v6359 = vld [vmem:[%s4912 + $0x13a] sm:$0xff]
    %v6360 = vld [vmem:[%s4912 + $0x142] sm:$0xff]
    %v6361 = vld [vmem:[%s4912 + $0x152] sm:$0xff]
    %v6362 = vld [vmem:[%s4912 + $0x15a] sm:$0xff]
    %v6363 = vld [vmem:[%s4912 + $0x16a] sm:$0xff]
    %v6364 = vld [vmem:[%s4912 + $0x172] sm:$0xff]
    %v6365 = vld [vmem:[%s4912 + $0x1b2] sm:$0xff]
    %v6366 = vld [vmem:[%s4912 + $0x1ba] sm:$0xff]
    %v6367 = vld [vmem:[%s4912 + $0x1ca] sm:$0xff]
    %v6368 = vld [vmem:[%s4912 + $0x1d2] sm:$0xff]
    %v6369 = vld [vmem:[%s4912 + $0x1e2] sm:$0xff]
    %v6370 = vld [vmem:[%s4912 + $0x1ea] sm:$0xff]
    %v6371 = vld [vmem:[%s4912 + $0x1fa] sm:$0xff]
    %v6372 = vld [vmem:[%s4912 + $0x202] sm:$0xff]
    %v6373 = vld [vmem:[%s4912 + $0x212] sm:$0xff]
    %v6374 = vld [vmem:[%s4912 + $0x21a] sm:$0xff]
    %v6375 = vld [vmem:[%s4912 + $0x22a] sm:$0xff]
    %v6376 = vld [vmem:[%s4912 + $0x232] sm:$0xff]
    %v6377 = vld [vmem:[%s4912 + $0x242] sm:$0xff]
    %v6378 = vld [vmem:[%s4912 + $0x24a] sm:$0xff]
    %v6379 = vld [vmem:[%s4912 + $0x25a] sm:$0xff]
    %v6380 = vld [vmem:[%s4912 + $0x262] sm:$0xff]
    %v6381 = vld [vmem:[%s4912 + $0x272] sm:$0xff]
    %v6382 = vld [vmem:[%s4912 + $0x27a] sm:$0xff]
    %v6383 = vld [vmem:[%s4912 + $0x28a] sm:$0xff]
    %v6384 = vld [vmem:[%s4912 + $0x292] sm:$0xff]
    %v6385 = vld [vmem:[%s4912 + $0x2a2] sm:$0xff]
    %v6386 = vld [vmem:[%s4912 + $0x2aa] sm:$0xff]
    %v6387 = vld [vmem:[%s4912 + $0x2ba] sm:$0xff]
    %v6388 = vld [vmem:[%s4912 + $0x2c2] sm:$0xff]
    %v6389 = vld [vmem:[%s4912 + $0x2d2] sm:$0xff]
    %v6390 = vld [vmem:[%s4912 + $0x2da] sm:$0xff]
    %v6391 = vld [vmem:[%s4912 + $0x2ea] sm:$0xff]
    %v6392 = vld [vmem:[%s4912 + $0x2f2] sm:$0xff]
    %v6393 = vld [vmem:[%s4912 + $0x302] sm:$0xff]
    %v6394 = vld [vmem:[%s4912 + $0x30a] sm:$0xff]
    %v6395 = vld [vmem:[%s4912 + $0x31a] sm:$0xff]
    %v6396 = vld [vmem:[%s4912 + $0x322] sm:$0xff]
    %s6397 = scalar_lea.vmem %s2, 32
    %v6398 = vld [vmem:[%s6397] sm:$0xf]
    %v6400 = vsel %vm87, %v6333, 0
    %v6403 = vsel %vm87, %v6334, 0
    %v6406 = vsel %vm87, %v6335, 0
    %v6409 = vsel %vm87, %v6336, 0
    %v6412 = vsel %vm87, %v6337, 0
    %v6415 = vsel %vm87, %v6338, 0
    %v6418 = vsel %vm87, %v6339, 0
    %v6421 = vsel %vm87, %v6340, 0
    %v6424 = vsel %vm87, %v6341, 0
    %v6427 = vsel %vm87, %v6342, 0
    %v6430 = vsel %vm87, %v6343, 0
    %v6433 = vsel %vm87, %v6344, 0
    %v6436 = vsel %vm87, %v6345, 0
    %v6439 = vsel %vm87, %v6346, 0
    %v6442 = vsel %vm87, %v6347, 0
    %v6445 = vsel %vm87, %v6348, 0
    %v6448 = vsel %vm87, %v6349, 0
    %v6451 = vsel %vm87, %v6350, 0
    %v6454 = vsel %vm87, %v6351, 0
    %v6457 = vsel %vm87, %v6352, 0
    %v6460 = vsel %vm87, %v6353, 0
    %v6463 = vsel %vm87, %v6354, 0
    %v6466 = vsel %vm87, %v6355, 0
    %v6469 = vsel %vm87, %v6356, 0
    %v6472 = vsel %vm87, %v6357, 0
    %v6475 = vsel %vm87, %v6358, 0
    %v6478 = vsel %vm87, %v6359, 0
    %v6481 = vsel %vm87, %v6360, 0
    %v6484 = vsel %vm87, %v6361, 0
    %v6487 = vsel %vm87, %v6362, 0
    %v6490 = vsel %vm87, %v6363, 0
    %v6493 = vsel %vm87, %v6364, 0
    %v6496 = vsel %vm87, %v6365, 0
    %v6499 = vsel %vm87, %v6366, 0
    %v6502 = vsel %vm87, %v6367, 0
    %v6505 = vsel %vm87, %v6368, 0
    %v6508 = vsel %vm87, %v6369, 0
    %v6511 = vsel %vm87, %v6370, 0
    %v6514 = vsel %vm87, %v6371, 0
    %v6517 = vsel %vm87, %v6372, 0
    %v6520 = vsel %vm87, %v6373, 0
    %v6523 = vsel %vm87, %v6374, 0
    %v6526 = vsel %vm87, %v6375, 0
    %v6529 = vsel %vm87, %v6376, 0
    %v6532 = vsel %vm87, %v6377, 0
    %v6535 = vsel %vm87, %v6378, 0
    %v6538 = vsel %vm87, %v6379, 0
    %v6541 = vsel %vm87, %v6380, 0
    %v6544 = vsel %vm87, %v6381, 0
    %v6547 = vsel %vm87, %v6382, 0
    %v6550 = vsel %vm87, %v6383, 0
    %v6553 = vsel %vm87, %v6384, 0
    %v6556 = vsel %vm87, %v6385, 0
    %v6559 = vsel %vm87, %v6386, 0
    %v6562 = vsel %vm87, %v6387, 0
    %v6565 = vsel %vm87, %v6388, 0
    %v6568 = vsel %vm87, %v6389, 0
    %v6571 = vsel %vm87, %v6390, 0
    %v6574 = vsel %vm87, %v6391, 0
    %v6577 = vsel %vm87, %v6392, 0
    %v6580 = vsel %vm87, %v6393, 0
    %v6583 = vsel %vm87, %v6394, 0
    %v6586 = vsel %vm87, %v6395, 0
    %v6589 = vsel %vm87, %v6396, 0
    %v6592 = vsel %vm1103, %v6398, 0
    %6594 = vmatprep.subr.mxu0 0.0
    %6595 = vmatpush1.msra.mxu0 %v6592
    %6596 = vmatprep.subr.mxu0 0.0
    %6597 = vmatpush1.msra.mxu0 0.0
    %6598 = vmatprep.subr.mxu0 0.0
    %6599 = vmatpush1.msra.mxu0 0.0
    %6600 = vmatprep.subr.mxu0 0.0
    %6601 = vmatpush1.msra.mxu0 0.0
    %6602 = vmatprep.subr.mxu0 0.0
    %6603 = vmatpush1.msra.mxu0 0.0
    %6604 = vmatprep.subr.mxu0 0.0
    %6605 = vmatpush1.msra.mxu0 0.0
    %6606 = vmatprep.subr.mxu0 0.0
    %6607 = vmatpush1.msra.mxu0 0.0
    %6608 = vmatprep.subr.mxu0 0.0
    %6609 = vmatpush1.msra.mxu0 0.0
    %6610 = vmatprep.subr.mxu0 0.0
    %6611 = vmatpush1.msra.mxu0 0.0
    %6612 = vmatprep.subr.mxu0 0.0
    %6613 = vmatpush1.msra.mxu0 0.0
    %6614 = vmatprep.subr.mxu0 0.0
    %6615 = vmatpush1.msra.mxu0 0.0
    %6616 = vmatprep.subr.mxu0 0.0
    %6617 = vmatpush1.msra.mxu0 0.0
    %6618 = vmatprep.subr.mxu0 0.0
    %6619 = vmatpush1.msra.mxu0 0.0
    %6620 = vmatprep.subr.mxu0 0.0
    %6621 = vmatpush1.msra.mxu0 0.0
    %6622 = vmatprep.subr.mxu0 0.0
    %6623 = vmatpush1.msra.mxu0 0.0
    %6624 = vmatprep.subr.mxu0 0.0
    %6625 = vmatpush1.msra.mxu0 0.0
    %6626 = vmatprep.subr.mxu0 0.0
    %6627 = vmatpush1.msra.mxu0 0.0
    %6628 = vmatprep.subr.mxu0 0.0
    %6629 = vmatpush1.msra.mxu0 0.0
    %6630 = vmatprep.subr.mxu0 0.0
    %6631 = vmatpush1.msra.mxu0 0.0
    %6632 = vmatprep.subr.mxu0 0.0
    %6633 = vmatpush1.msra.mxu0 0.0
    %6634 = vmatprep.subr.mxu0 0.0
    %6635 = vmatpush1.msra.mxu0 0.0
    %6636 = vmatprep.subr.mxu0 0.0
    %6637 = vmatpush1.msra.mxu0 0.0
    %6638 = vmatprep.subr.mxu0 0.0
    %6639 = vmatpush1.msra.mxu0 0.0
    %6640 = vmatprep.subr.mxu0 0.0
    %6641 = vmatpush1.msra.mxu0 0.0
    %6642 = vmatprep.subr.mxu0 0.0
    %6643 = vmatpush1.msra.mxu0 0.0
    %6644 = vmatprep.subr.mxu0 0.0
    %6645 = vmatpush1.msra.mxu0 0.0
    %6646 = vmatprep.subr.mxu0 0.0
    %6647 = vmatpush1.msra.mxu0 0.0
    %6648 = vmatprep.subr.mxu0 0.0
    %6649 = vmatpush1.msra.mxu0 0.0
    %6650 = vmatprep.subr.mxu0 0.0
    %6651 = vmatpush1.msra.mxu0 0.0
    %6652 = vmatprep.subr.mxu0 0.0
    %6653 = vmatpush1.msra.mxu0 0.0
    %6654 = vmatprep.subr.mxu0 0.0
    %6655 = vmatpush1.msra.mxu0 0.0
    %6656 = vmatprep.subr.mxu0 0.0
    %6657 = vmatpush1.msra.mxu0 0.0
    %6658 = vmatprep.mubr.f32.mxu0 0.0
    %6659 = vmatmul.mubr.f32.gmra.mrb[0].mxu0 %v6400
    %v6660 = vpop.f32.mrb[0].mxu0
    %v6661 = vadd.f32 0.0, %v6660
    %v6662 = vpop.f32.mrb[0].mxu0
    %6663 = vmatprep.mubr.f32.mxu0 0.0
    %6664 = vmatmul.mubr.f32.gmra.mrb[0].mxu0 %v6403
    %v6665 = vpop.f32.mrb[0].mxu0
    %v6666 = vadd.f32 0.0, %v6665
    %v6667 = vpop.f32.mrb[0].mxu0
    %6668 = vmatprep.mubr.f32.mxu0 0.0
    %6669 = vmatmul.mubr.f32.gmra.mrb[0].mxu0 %v6406
    %v6670 = vpop.f32.mrb[0].mxu0
    %v6671 = vadd.f32 0.0, %v6670
    %v6672 = vpop.f32.mrb[0].mxu0
    %6673 = vmatprep.mubr.f32.mxu0 0.0
    %6674 = vmatmul.mubr.f32.gmra.mrb[0].mxu0 %v6409
    %v6675 = vpop.f32.mrb[0].mxu0
    %v6676 = vadd.f32 0.0, %v6675
    %v6677 = vpop.f32.mrb[0].mxu0
    %6678 = vmatprep.mubr.f32.mxu0 0.0
    %6679 = vmatmul.mubr.f32.gmra.mrb[0].mxu0 %v6412
    %v6680 = vpop.f32.mrb[0].mxu0
    %v6681 = vadd.f32 0.0, %v6680
    %v6682 = vpop.f32.mrb[0].mxu0
    %6683 = vmatprep.mubr.f32.mxu0 0.0
    %6684 = vmatmul.mubr.f32.gmra.mrb[0].mxu0 %v6415
    %v6685 = vpop.f32.mrb[0].mxu0
    %v6686 = vadd.f32 0.0, %v6685
    %v6687 = vpop.f32.mrb[0].mxu0
    %6688 = vmatprep.mubr.f32.mxu0 0.0
    %6689 = vmatmul.mubr.f32.gmra.mrb[0].mxu0 %v6418
    %v6690 = vpop.f32.mrb[0].mxu0
    %v6691 = vadd.f32 0.0, %v6690
    %v6692 = vpop.f32.mrb[0].mxu0
    %6693 = vmatprep.mubr.f32.mxu0 0.0
    %6694 = vmatmul.mubr.f32.gmra.mrb[0].mxu0 %v6421
    %v6695 = vpop.f32.mrb[0].mxu0
    %v6696 = vadd.f32 0.0, %v6695
    %v6697 = vpop.f32.mrb[0].mxu0
    %6698 = vmatprep.mubr.f32.mxu0 0.0
    %6699 = vmatmul.mubr.f32.gmra.mrb[0].mxu0 %v6424
    %v6700 = vpop.f32.mrb[0].mxu0
    %v6701 = vadd.f32 0.0, %v6700
    %v6702 = vpop.f32.mrb[0].mxu0
    %6703 = vmatprep.mubr.f32.mxu0 0.0
    %6704 = vmatmul.mubr.f32.gmra.mrb[0].mxu0 %v6427
    %v6705 = vpop.f32.mrb[0].mxu0
    %v6706 = vadd.f32 0.0, %v6705
    %v6707 = vpop.f32.mrb[0].mxu0
    %6708 = vmatprep.mubr.f32.mxu0 0.0
    %6709 = vmatmul.mubr.f32.gmra.mrb[0].mxu0 %v6430
    %v6710 = vpop.f32.mrb[0].mxu0
    %v6711 = vadd.f32 0.0, %v6710
    %v6712 = vpop.f32.mrb[0].mxu0
    %6713 = vmatprep.mubr.f32.mxu0 0.0
    %6714 = vmatmul.mubr.f32.gmra.mrb[0].mxu0 %v6433
    %v6715 = vpop.f32.mrb[0].mxu0
    %v6716 = vadd.f32 0.0, %v6715
    %v6717 = vpop.f32.mrb[0].mxu0
    %6718 = vmatprep.mubr.f32.mxu0 0.0
    %6719 = vmatmul.mubr.f32.gmra.mrb[0].mxu0 %v6436
    %v6720 = vpop.f32.mrb[0].mxu0
    %v6721 = vadd.f32 0.0, %v6720
    %v6722 = vpop.f32.mrb[0].mxu0
    %6723 = vmatprep.mubr.f32.mxu0 0.0
    %6724 = vmatmul.mubr.f32.gmra.mrb[0].mxu0 %v6439
    %v6725 = vpop.f32.mrb[0].mxu0
    %v6726 = vadd.f32 0.0, %v6725
    %v6727 = vpop.f32.mrb[0].mxu0
    %6728 = vmatprep.mubr.f32.mxu0 0.0
    %6729 = vmatmul.mubr.f32.gmra.mrb[0].mxu0 %v6442
    %v6730 = vpop.f32.mrb[0].mxu0
    %v6731 = vadd.f32 0.0, %v6730
    %v6732 = vpop.f32.mrb[0].mxu0
    %6733 = vmatprep.mubr.f32.mxu0 0.0
    %6734 = vmatmul.mubr.f32.gmra.mrb[0].mxu0 %v6445
    %v6735 = vpop.f32.mrb[0].mxu0
    %v6736 = vadd.f32 0.0, %v6735
    %v6737 = vpop.f32.mrb[0].mxu0
    %6738 = vmatprep.mubr.f32.mxu0 0.0
    %6739 = vmatmul.mubr.f32.gmra.mrb[0].mxu0 %v6448
    %v6740 = vpop.f32.mrb[0].mxu0
    %v6741 = vadd.f32 0.0, %v6740
    %v6742 = vpop.f32.mrb[0].mxu0
    %6743 = vmatprep.mubr.f32.mxu0 0.0
    %6744 = vmatmul.mubr.f32.gmra.mrb[0].mxu0 %v6451
    %v6745 = vpop.f32.mrb[0].mxu0
    %v6746 = vadd.f32 0.0, %v6745
    %v6747 = vpop.f32.mrb[0].mxu0
    %6748 = vmatprep.mubr.f32.mxu0 0.0
    %6749 = vmatmul.mubr.f32.gmra.mrb[0].mxu0 %v6454
    %v6750 = vpop.f32.mrb[0].mxu0
    %v6751 = vadd.f32 0.0, %v6750
    %v6752 = vpop.f32.mrb[0].mxu0
    %6753 = vmatprep.mubr.f32.mxu0 0.0
    %6754 = vmatmul.mubr.f32.gmra.mrb[0].mxu0 %v6457
    %v6755 = vpop.f32.mrb[0].mxu0
    %v6756 = vadd.f32 0.0, %v6755
    %v6757 = vpop.f32.mrb[0].mxu0
    %6758 = vmatprep.mubr.f32.mxu0 0.0
    %6759 = vmatmul.mubr.f32.gmra.mrb[0].mxu0 %v6460
    %v6760 = vpop.f32.mrb[0].mxu0
    %v6761 = vadd.f32 0.0, %v6760
    %v6762 = vpop.f32.mrb[0].mxu0
    %6763 = vmatprep.mubr.f32.mxu0 0.0
    %6764 = vmatmul.mubr.f32.gmra.mrb[0].mxu0 %v6463
    %v6765 = vpop.f32.mrb[0].mxu0
    %v6766 = vadd.f32 0.0, %v6765
    %v6767 = vpop.f32.mrb[0].mxu0
    %6768 = vmatprep.mubr.f32.mxu0 0.0
    %6769 = vmatmul.mubr.f32.gmra.mrb[0].mxu0 %v6466
    %v6770 = vpop.f32.mrb[0].mxu0
    %v6771 = vadd.f32 0.0, %v6770
    %v6772 = vpop.f32.mrb[0].mxu0
    %6773 = vmatprep.mubr.f32.mxu0 0.0
    %6774 = vmatmul.mubr.f32.gmra.mrb[0].mxu0 %v6469
    %v6775 = vpop.f32.mrb[0].mxu0
    %v6776 = vadd.f32 0.0, %v6775
    %v6777 = vpop.f32.mrb[0].mxu0
    %6778 = vmatprep.mubr.f32.mxu0 0.0
    %6779 = vmatmul.mubr.f32.gmra.mrb[0].mxu0 %v6472
    %v6780 = vpop.f32.mrb[0].mxu0
    %v6781 = vadd.f32 0.0, %v6780
    %v6782 = vpop.f32.mrb[0].mxu0
    %6783 = vmatprep.mubr.f32.mxu0 0.0
    %6784 = vmatmul.mubr.f32.gmra.mrb[0].mxu0 %v6475
    %v6785 = vpop.f32.mrb[0].mxu0
    %v6786 = vadd.f32 0.0, %v6785
    %v6787 = vpop.f32.mrb[0].mxu0
    %6788 = vmatprep.mubr.f32.mxu0 0.0
    %6789 = vmatmul.mubr.f32.gmra.mrb[0].mxu0 %v6478
    %v6790 = vpop.f32.mrb[0].mxu0
    %v6791 = vadd.f32 0.0, %v6790
    %v6792 = vpop.f32.mrb[0].mxu0
    %6793 = vmatprep.mubr.f32.mxu0 0.0
    %6794 = vmatmul.mubr.f32.gmra.mrb[0].mxu0 %v6481
    %v6795 = vpop.f32.mrb[0].mxu0
    %v6796 = vadd.f32 0.0, %v6795
    %v6797 = vpop.f32.mrb[0].mxu0
    %6798 = vmatprep.mubr.f32.mxu0 0.0
    %6799 = vmatmul.mubr.f32.gmra.mrb[0].mxu0 %v6484
    %v6800 = vpop.f32.mrb[0].mxu0
    %v6801 = vadd.f32 0.0, %v6800
    %v6802 = vpop.f32.mrb[0].mxu0
    %6803 = vmatprep.mubr.f32.mxu0 0.0
    %6804 = vmatmul.mubr.f32.gmra.mrb[0].mxu0 %v6487
    %v6805 = vpop.f32.mrb[0].mxu0
    %v6806 = vadd.f32 0.0, %v6805
    %v6807 = vpop.f32.mrb[0].mxu0
    %6808 = vmatprep.mubr.f32.mxu0 0.0
    %6809 = vmatmul.mubr.f32.gmra.mrb[0].mxu0 %v6490
    %v6810 = vpop.f32.mrb[0].mxu0
    %v6811 = vadd.f32 0.0, %v6810
    %v6812 = vpop.f32.mrb[0].mxu0
    %6813 = vmatprep.mubr.f32.mxu0 0.0
    %6814 = vmatmul.mubr.f32.gmra.mrb[0].mxu0 %v6493
    %v6815 = vpop.f32.mrb[0].mxu0
    %v6816 = vadd.f32 0.0, %v6815
    %v6817 = vpop.f32.mrb[0].mxu0
    %6818 = vmatprep.mubr.f32.mxu0 0.0
    %6819 = vmatmul.mubr.f32.gmra.mrb[0].mxu0 %v6496
    %v6820 = vpop.f32.mrb[0].mxu0
    %v6821 = vadd.f32 0.0, %v6820
    %v6822 = vpop.f32.mrb[0].mxu0
    %6823 = vmatprep.mubr.f32.mxu0 0.0
    %6824 = vmatmul.mubr.f32.gmra.mrb[0].mxu0 %v6499
    %v6825 = vpop.f32.mrb[0].mxu0
    %v6826 = vadd.f32 0.0, %v6825
    %v6827 = vpop.f32.mrb[0].mxu0
    %6828 = vmatprep.mubr.f32.mxu0 0.0
    %6829 = vmatmul.mubr.f32.gmra.mrb[0].mxu0 %v6502
    %v6830 = vpop.f32.mrb[0].mxu0
    %v6831 = vadd.f32 0.0, %v6830
    %v6832 = vpop.f32.mrb[0].mxu0
    %6833 = vmatprep.mubr.f32.mxu0 0.0
    %6834 = vmatmul.mubr.f32.gmra.mrb[0].mxu0 %v6505
    %v6835 = vpop.f32.mrb[0].mxu0
    %v6836 = vadd.f32 0.0, %v6835
    %v6837 = vpop.f32.mrb[0].mxu0
    %6838 = vmatprep.mubr.f32.mxu0 0.0
    %6839 = vmatmul.mubr.f32.gmra.mrb[0].mxu0 %v6508
    %v6840 = vpop.f32.mrb[0].mxu0
    %v6841 = vadd.f32 0.0, %v6840
    %v6842 = vpop.f32.mrb[0].mxu0
    %6843 = vmatprep.mubr.f32.mxu0 0.0
    %6844 = vmatmul.mubr.f32.gmra.mrb[0].mxu0 %v6511
    %v6845 = vpop.f32.mrb[0].mxu0
    %v6846 = vadd.f32 0.0, %v6845
    %v6847 = vpop.f32.mrb[0].mxu0
    %6848 = vmatprep.mubr.f32.mxu0 0.0
    %6849 = vmatmul.mubr.f32.gmra.mrb[0].mxu0 %v6514
    %v6850 = vpop.f32.mrb[0].mxu0
    %v6851 = vadd.f32 0.0, %v6850
    %v6852 = vpop.f32.mrb[0].mxu0
    %6853 = vmatprep.mubr.f32.mxu0 0.0
    %6854 = vmatmul.mubr.f32.gmra.mrb[0].mxu0 %v6517
    %v6855 = vpop.f32.mrb[0].mxu0
    %v6856 = vadd.f32 0.0, %v6855
    %v6857 = vpop.f32.mrb[0].mxu0
    %6858 = vmatprep.mubr.f32.mxu0 0.0
    %6859 = vmatmul.mubr.f32.gmra.mrb[0].mxu0 %v6520
    %v6860 = vpop.f32.mrb[0].mxu0
    %v6861 = vadd.f32 0.0, %v6860
    %v6862 = vpop.f32.mrb[0].mxu0
    %6863 = vmatprep.mubr.f32.mxu0 0.0
    %6864 = vmatmul.mubr.f32.gmra.mrb[0].mxu0 %v6523
    %v6865 = vpop.f32.mrb[0].mxu0
    %v6866 = vadd.f32 0.0, %v6865
    %v6867 = vpop.f32.mrb[0].mxu0
    %6868 = vmatprep.mubr.f32.mxu0 0.0
    %6869 = vmatmul.mubr.f32.gmra.mrb[0].mxu0 %v6526
    %v6870 = vpop.f32.mrb[0].mxu0
    %v6871 = vadd.f32 0.0, %v6870
    %v6872 = vpop.f32.mrb[0].mxu0
    %6873 = vmatprep.mubr.f32.mxu0 0.0
    %6874 = vmatmul.mubr.f32.gmra.mrb[0].mxu0 %v6529
    %v6875 = vpop.f32.mrb[0].mxu0
    %v6876 = vadd.f32 0.0, %v6875
    %v6877 = vpop.f32.mrb[0].mxu0
    %6878 = vmatprep.mubr.f32.mxu0 0.0
    %6879 = vmatmul.mubr.f32.gmra.mrb[0].mxu0 %v6532
    %v6880 = vpop.f32.mrb[0].mxu0
    %v6881 = vadd.f32 0.0, %v6880
    %v6882 = vpop.f32.mrb[0].mxu0
    %6883 = vmatprep.mubr.f32.mxu0 0.0
    %6884 = vmatmul.mubr.f32.gmra.mrb[0].mxu0 %v6535
    %v6885 = vpop.f32.mrb[0].mxu0
    %v6886 = vadd.f32 0.0, %v6885
    %v6887 = vpop.f32.mrb[0].mxu0
    %6888 = vmatprep.mubr.f32.mxu0 0.0
    %6889 = vmatmul.mubr.f32.gmra.mrb[0].mxu0 %v6538
    %v6890 = vpop.f32.mrb[0].mxu0
    %v6891 = vadd.f32 0.0, %v6890
    %v6892 = vpop.f32.mrb[0].mxu0
    %6893 = vmatprep.mubr.f32.mxu0 0.0
    %6894 = vmatmul.mubr.f32.gmra.mrb[0].mxu0 %v6541
    %v6895 = vpop.f32.mrb[0].mxu0
    %v6896 = vadd.f32 0.0, %v6895
    %v6897 = vpop.f32.mrb[0].mxu0
    %6898 = vmatprep.mubr.f32.mxu0 0.0
    %6899 = vmatmul.mubr.f32.gmra.mrb[0].mxu0 %v6544
    %v6900 = vpop.f32.mrb[0].mxu0
    %v6901 = vadd.f32 0.0, %v6900
    %v6902 = vpop.f32.mrb[0].mxu0
    %6903 = vmatprep.mubr.f32.mxu0 0.0
    %6904 = vmatmul.mubr.f32.gmra.mrb[0].mxu0 %v6547
    %v6905 = vpop.f32.mrb[0].mxu0
    %v6906 = vadd.f32 0.0, %v6905
    %v6907 = vpop.f32.mrb[0].mxu0
    %6908 = vmatprep.mubr.f32.mxu0 0.0
    %6909 = vmatmul.mubr.f32.gmra.mrb[0].mxu0 %v6550
    %v6910 = vpop.f32.mrb[0].mxu0
    %v6911 = vadd.f32 0.0, %v6910
    %v6912 = vpop.f32.mrb[0].mxu0
    %6913 = vmatprep.mubr.f32.mxu0 0.0
    %6914 = vmatmul.mubr.f32.gmra.mrb[0].mxu0 %v6553
    %v6915 = vpop.f32.mrb[0].mxu0
    %v6916 = vadd.f32 0.0, %v6915
    %v6917 = vpop.f32.mrb[0].mxu0
    %6918 = vmatprep.mubr.f32.mxu0 0.0
    %6919 = vmatmul.mubr.f32.gmra.mrb[0].mxu0 %v6556
    %v6920 = vpop.f32.mrb[0].mxu0
    %v6921 = vadd.f32 0.0, %v6920
    %v6922 = vpop.f32.mrb[0].mxu0
    %6923 = vmatprep.mubr.f32.mxu0 0.0
    %6924 = vmatmul.mubr.f32.gmra.mrb[0].mxu0 %v6559
    %v6925 = vpop.f32.mrb[0].mxu0
    %v6926 = vadd.f32 0.0, %v6925
    %v6927 = vpop.f32.mrb[0].mxu0
    %6928 = vmatprep.mubr.f32.mxu0 0.0
    %6929 = vmatmul.mubr.f32.gmra.mrb[0].mxu0 %v6562
    %v6930 = vpop.f32.mrb[0].mxu0
    %v6931 = vadd.f32 0.0, %v6930
    %v6932 = vpop.f32.mrb[0].mxu0
    %6933 = vmatprep.mubr.f32.mxu0 0.0
    %6934 = vmatmul.mubr.f32.gmra.mrb[0].mxu0 %v6565
    %v6935 = vpop.f32.mrb[0].mxu0
    %v6936 = vadd.f32 0.0, %v6935
    %v6937 = vpop.f32.mrb[0].mxu0
    %6938 = vmatprep.mubr.f32.mxu0 0.0
    %6939 = vmatmul.mubr.f32.gmra.mrb[0].mxu0 %v6568
    %v6940 = vpop.f32.mrb[0].mxu0
    %v6941 = vadd.f32 0.0, %v6940
    %v6942 = vpop.f32.mrb[0].mxu0
    %6943 = vmatprep.mubr.f32.mxu0 0.0
    %6944 = vmatmul.mubr.f32.gmra.mrb[0].mxu0 %v6571
    %v6945 = vpop.f32.mrb[0].mxu0
    %v6946 = vadd.f32 0.0, %v6945
    %v6947 = vpop.f32.mrb[0].mxu0
    %6948 = vmatprep.mubr.f32.mxu0 0.0
    %6949 = vmatmul.mubr.f32.gmra.mrb[0].mxu0 %v6574
    %v6950 = vpop.f32.mrb[0].mxu0
    %v6951 = vadd.f32 0.0, %v6950
    %v6952 = vpop.f32.mrb[0].mxu0
    %6953 = vmatprep.mubr.f32.mxu0 0.0
    %6954 = vmatmul.mubr.f32.gmra.mrb[0].mxu0 %v6577
    %v6955 = vpop.f32.mrb[0].mxu0
    %v6956 = vadd.f32 0.0, %v6955
    %v6957 = vpop.f32.mrb[0].mxu0
    %6958 = vmatprep.mubr.f32.mxu0 0.0
    %6959 = vmatmul.mubr.f32.gmra.mrb[0].mxu0 %v6580
    %v6960 = vpop.f32.mrb[0].mxu0
    %v6961 = vadd.f32 0.0, %v6960
    %v6962 = vpop.f32.mrb[0].mxu0
    %6963 = vmatprep.mubr.f32.mxu0 0.0
    %6964 = vmatmul.mubr.f32.gmra.mrb[0].mxu0 %v6583
    %v6965 = vpop.f32.mrb[0].mxu0
    %v6966 = vadd.f32 0.0, %v6965
    %v6967 = vpop.f32.mrb[0].mxu0
    %6968 = vmatprep.mubr.f32.mxu0 0.0
    %6969 = vmatmul.mubr.f32.gmra.mrb[0].mxu0 %v6586
    %v6970 = vpop.f32.mrb[0].mxu0
    %v6971 = vadd.f32 0.0, %v6970
    %v6972 = vpop.f32.mrb[0].mxu0
    %6973 = vmatprep.mubr.f32.mxu0 0.0
    %6974 = vmatmul.mubr.f32.gmra.mrb[0].mxu0 %v6589
    %v6975 = vpop.f32.mrb[0].mxu0
    %v6976 = vadd.f32 0.0, %v6975
    %v6977 = vpop.f32.mrb[0].mxu0
    %6978 = vdwg.mxu0
    %v6979 = vadd.f32 %v6269, %v6661
    %v6980 = vadd.f32 %v6270, %v6666
    %v6981 = vadd.f32 %v6271, %v6671
    %v6982 = vadd.f32 %v6272, %v6676
    %v6983 = vadd.f32 %v6273, %v6681
    %v6984 = vadd.f32 %v6274, %v6686
    %v6985 = vadd.f32 %v6275, %v6691
    %v6986 = vadd.f32 %v6276, %v6696
    %v6987 = vadd.f32 %v6277, %v6701
    %v6988 = vadd.f32 %v6278, %v6706
    %v6989 = vadd.f32 %v6279, %v6711
    %v6990 = vadd.f32 %v6280, %v6716
    %v6991 = vadd.f32 %v6281, %v6721
    %v6992 = vadd.f32 %v6282, %v6726
    %v6993 = vadd.f32 %v6283, %v6731
    %v6994 = vadd.f32 %v6284, %v6736
    %v6995 = vadd.f32 %v6285, %v6741
    %v6996 = vadd.f32 %v6286, %v6746
    %v6997 = vadd.f32 %v6287, %v6751
    %v6998 = vadd.f32 %v6288, %v6756
    %v6999 = vadd.f32 %v6289, %v6761
    %v7000 = vadd.f32 %v6290, %v6766
    %v7001 = vadd.f32 %v6291, %v6771
    %v7002 = vadd.f32 %v6292, %v6776
    %v7003 = vadd.f32 %v6293, %v6781
    %v7004 = vadd.f32 %v6294, %v6786
    %v7005 = vadd.f32 %v6295, %v6791
    %v7006 = vadd.f32 %v6296, %v6796
    %v7007 = vadd.f32 %v6297, %v6801
    %v7008 = vadd.f32 %v6298, %v6806
    %v7009 = vadd.f32 %v6299, %v6811
    %v7010 = vadd.f32 %v6300, %v6816
    %v7011 = vadd.f32 %v6301, %v6821
    %v7012 = vadd.f32 %v6302, %v6826
    %v7013 = vadd.f32 %v6303, %v6831
    %v7014 = vadd.f32 %v6304, %v6836
    %v7015 = vadd.f32 %v6305, %v6841
    %v7016 = vadd.f32 %v6306, %v6846
    %v7017 = vadd.f32 %v6307, %v6851
    %v7018 = vadd.f32 %v6308, %v6856
    %v7019 = vadd.f32 %v6309, %v6861
    %v7020 = vadd.f32 %v6310, %v6866
    %v7021 = vadd.f32 %v6311, %v6871
    %v7022 = vadd.f32 %v6312, %v6876
    %v7023 = vadd.f32 %v6313, %v6881
    %v7024 = vadd.f32 %v6314, %v6886
    %v7025 = vadd.f32 %v6315, %v6891
    %v7026 = vadd.f32 %v6316, %v6896
    %v7027 = vadd.f32 %v6317, %v6901
    %v7028 = vadd.f32 %v6318, %v6906
    %v7029 = vadd.f32 %v6319, %v6911
    %v7030 = vadd.f32 %v6320, %v6916
    %v7031 = vadd.f32 %v6321, %v6921
    %v7032 = vadd.f32 %v6322, %v6926
    %v7033 = vadd.f32 %v6323, %v6931
    %v7034 = vadd.f32 %v6324, %v6936
    %v7035 = vadd.f32 %v6325, %v6941
    %v7036 = vadd.f32 %v6326, %v6946
    %v7037 = vadd.f32 %v6327, %v6951
    %v7038 = vadd.f32 %v6328, %v6956
    %v7039 = vadd.f32 %v6329, %v6961
    %v7040 = vadd.f32 %v6330, %v6966
    %v7041 = vadd.f32 %v6331, %v6971
    %v7042 = vadd.f32 %v6332, %v6976
    %vm7043 = vcmask 64512
    %v7044 = vsel %vm7043, %v6979, 0.0
    %v7045 = vsel %vm7043, %v6980, 0.0
    %v7046 = vadd.f32 %v7044, %v7045
    %v7047 = vsel %vm7043, %v6981, 0.0
    %v7048 = vadd.f32 %v7046, %v7047
    %v7049 = vsel %vm7043, %v6982, 0.0
    %v7050 = vadd.f32 %v7048, %v7049
    %v7051 = vsel %vm7043, %v6983, 0.0
    %v7052 = vadd.f32 %v7050, %v7051
    %v7053 = vsel %vm7043, %v6984, 0.0
    %v7054 = vadd.f32 %v7052, %v7053
    %v7055 = vsel %vm7043, %v6985, 0.0
    %v7056 = vadd.f32 %v7054, %v7055
    %v7057 = vsel %vm7043, %v6986, 0.0
    %v7058 = vadd.f32 %v7056, %v7057
    %v7059 = vsel %vm7043, %v6987, 0.0
    %v7060 = vadd.f32 %v7058, %v7059
    %v7061 = vsel %vm7043, %v6988, 0.0
    %v7062 = vadd.f32 %v7060, %v7061
    %v7063 = vsel %vm7043, %v6989, 0.0
    %v7064 = vadd.f32 %v7062, %v7063
    %v7065 = vsel %vm7043, %v6990, 0.0
    %v7066 = vadd.f32 %v7064, %v7065
    %v7067 = vsel %vm7043, %v6991, 0.0
    %v7068 = vadd.f32 %v7066, %v7067
    %v7069 = vsel %vm7043, %v6992, 0.0
    %v7070 = vadd.f32 %v7068, %v7069
    %v7071 = vsel %vm7043, %v6993, 0.0
    %v7072 = vadd.f32 %v7070, %v7071
    %v7073 = vsel %vm7043, %v6994, 0.0
    %v7074 = vadd.f32 %v7072, %v7073
    %v7075 = vsel %vm7043, %v6995, 0.0
    %v7076 = vadd.f32 %v7074, %v7075
    %v7077 = vsel %vm7043, %v6996, 0.0
    %v7078 = vadd.f32 %v7076, %v7077
    %v7079 = vsel %vm7043, %v6997, 0.0
    %v7080 = vadd.f32 %v7078, %v7079
    %v7081 = vsel %vm7043, %v6998, 0.0
    %v7082 = vadd.f32 %v7080, %v7081
    %v7083 = vsel %vm7043, %v6999, 0.0
    %v7084 = vadd.f32 %v7082, %v7083
    %v7085 = vsel %vm7043, %v7000, 0.0
    %v7086 = vadd.f32 %v7084, %v7085
    %v7087 = vsel %vm7043, %v7001, 0.0
    %v7088 = vadd.f32 %v7086, %v7087
    %v7089 = vsel %vm7043, %v7002, 0.0
    %v7090 = vadd.f32 %v7088, %v7089
    %v7091 = vsel %vm7043, %v7003, 0.0
    %v7092 = vadd.f32 %v7090, %v7091
    %v7093 = vsel %vm7043, %v7004, 0.0
    %v7094 = vadd.f32 %v7092, %v7093
    %v7095 = vsel %vm7043, %v7005, 0.0
    %v7096 = vadd.f32 %v7094, %v7095
    %v7097 = vsel %vm7043, %v7006, 0.0
    %v7098 = vadd.f32 %v7096, %v7097
    %v7099 = vsel %vm7043, %v7007, 0.0
    %v7100 = vadd.f32 %v7098, %v7099
    %v7101 = vsel %vm7043, %v7008, 0.0
    %v7102 = vadd.f32 %v7100, %v7101
    %v7103 = vsel %vm7043, %v7009, 0.0
    %v7104 = vadd.f32 %v7102, %v7103
    %v7105 = vsel %vm7043, %v7010, 0.0
    %v7106 = vadd.f32 %v7104, %v7105
    %v7107 = vsel %vm7043, %v7011, 0.0
    %v7108 = vadd.f32 %v7106, %v7107
    %v7109 = vsel %vm7043, %v7012, 0.0
    %v7110 = vadd.f32 %v7108, %v7109
    %v7111 = vsel %vm7043, %v7013, 0.0
    %v7112 = vadd.f32 %v7110, %v7111
    %v7113 = vsel %vm7043, %v7014, 0.0
    %v7114 = vadd.f32 %v7112, %v7113
    %v7115 = vsel %vm7043, %v7015, 0.0
    %v7116 = vadd.f32 %v7114, %v7115
    %v7117 = vsel %vm7043, %v7016, 0.0
    %v7118 = vadd.f32 %v7116, %v7117
    %v7119 = vsel %vm7043, %v7017, 0.0
    %v7120 = vadd.f32 %v7118, %v7119
    %v7121 = vsel %vm7043, %v7018, 0.0
    %v7122 = vadd.f32 %v7120, %v7121
    %v7123 = vsel %vm7043, %v7019, 0.0
    %v7124 = vadd.f32 %v7122, %v7123
    %v7125 = vsel %vm7043, %v7020, 0.0
    %v7126 = vadd.f32 %v7124, %v7125
    %v7127 = vsel %vm7043, %v7021, 0.0
    %v7128 = vadd.f32 %v7126, %v7127
    %v7129 = vsel %vm7043, %v7022, 0.0
    %v7130 = vadd.f32 %v7128, %v7129
    %v7131 = vsel %vm7043, %v7023, 0.0
    %v7132 = vadd.f32 %v7130, %v7131
    %v7133 = vsel %vm7043, %v7024, 0.0
    %v7134 = vadd.f32 %v7132, %v7133
    %v7135 = vsel %vm7043, %v7025, 0.0
    %v7136 = vadd.f32 %v7134, %v7135
    %v7137 = vsel %vm7043, %v7026, 0.0
    %v7138 = vadd.f32 %v7136, %v7137
    %v7139 = vsel %vm7043, %v7027, 0.0
    %v7140 = vadd.f32 %v7138, %v7139
    %v7141 = vsel %vm7043, %v7028, 0.0
    %v7142 = vadd.f32 %v7140, %v7141
    %v7143 = vsel %vm7043, %v7029, 0.0
    %v7144 = vadd.f32 %v7142, %v7143
    %v7145 = vsel %vm7043, %v7030, 0.0
    %v7146 = vadd.f32 %v7144, %v7145
    %v7147 = vsel %vm7043, %v7031, 0.0
    %v7148 = vadd.f32 %v7146, %v7147
    %v7149 = vsel %vm7043, %v7032, 0.0
    %v7150 = vadd.f32 %v7148, %v7149
    %v7151 = vsel %vm7043, %v7033, 0.0
    %v7152 = vadd.f32 %v7150, %v7151
    %v7153 = vsel %vm7043, %v7034, 0.0
    %v7154 = vadd.f32 %v7152, %v7153
    %v7155 = vsel %vm7043, %v7035, 0.0
    %v7156 = vadd.f32 %v7154, %v7155
    %v7157 = vsel %vm7043, %v7036, 0.0
    %v7158 = vadd.f32 %v7156, %v7157
    %v7159 = vsel %vm7043, %v7037, 0.0
    %v7160 = vadd.f32 %v7158, %v7159
    %v7161 = vsel %vm7043, %v7038, 0.0
    %v7162 = vadd.f32 %v7160, %v7161
    %v7163 = vsel %vm7043, %v7039, 0.0
    %v7164 = vadd.f32 %v7162, %v7163
    %v7165 = vsel %vm7043, %v7040, 0.0
    %v7166 = vadd.f32 %v7164, %v7165
    %v7167 = vsel %vm7043, %v7041, 0.0
    %v7168 = vadd.f32 %v7166, %v7167
    %v7169 = vsel %vm7043, %v7042, 0.0
    %v7170 = vadd.f32 %v7168, %v7169
    %v7171 = vrot.slane %v7170, 4
    %v7172 = vadd.f32 %v7170, %v7171
    %v7173 = vrot.slane %v7172, 2
    %v7174 = vadd.f32 %v7172, %v7173
    %v7175 = vrot.slane %v7174, 1
    %v7176 = vadd.f32 %v7174, %v7175
    %v7177 = vmul.f32 %v7176, 0.001953125
    %v7178 = vsub.f32 %v6979, %v7177
    %v7179 = vsub.f32 %v6980, %v7177
    %v7180 = vsub.f32 %v6981, %v7177
    %v7181 = vsub.f32 %v6982, %v7177
    %v7182 = vsub.f32 %v6983, %v7177
    %v7183 = vsub.f32 %v6984, %v7177
    %v7184 = vsub.f32 %v6985, %v7177
    %v7185 = vsub.f32 %v6986, %v7177
    %v7186 = vsub.f32 %v6987, %v7177
    %v7187 = vsub.f32 %v6988, %v7177
    %v7188 = vsub.f32 %v6989, %v7177
    %v7189 = vsub.f32 %v6990, %v7177
    %v7190 = vsub.f32 %v6991, %v7177
    %v7191 = vsub.f32 %v6992, %v7177
    %v7192 = vsub.f32 %v6993, %v7177
    %v7193 = vsub.f32 %v6994, %v7177
    %v7194 = vsub.f32 %v6995, %v7177
    %v7195 = vsub.f32 %v6996, %v7177
    %v7196 = vsub.f32 %v6997, %v7177
    %v7197 = vsub.f32 %v6998, %v7177
    %v7198 = vsub.f32 %v6999, %v7177
    %v7199 = vsub.f32 %v7000, %v7177
    %v7200 = vsub.f32 %v7001, %v7177
    %v7201 = vsub.f32 %v7002, %v7177
    %v7202 = vsub.f32 %v7003, %v7177
    %v7203 = vsub.f32 %v7004, %v7177
    %v7204 = vsub.f32 %v7005, %v7177
    %v7205 = vsub.f32 %v7006, %v7177
    %v7206 = vsub.f32 %v7007, %v7177
    %v7207 = vsub.f32 %v7008, %v7177
    %v7208 = vsub.f32 %v7009, %v7177
    %v7209 = vsub.f32 %v7010, %v7177
    %v7210 = vsub.f32 %v7011, %v7177
    %v7211 = vsub.f32 %v7012, %v7177
    %v7212 = vsub.f32 %v7013, %v7177
    %v7213 = vsub.f32 %v7014, %v7177
    %v7214 = vsub.f32 %v7015, %v7177
    %v7215 = vsub.f32 %v7016, %v7177
    %v7216 = vsub.f32 %v7017, %v7177
    %v7217 = vsub.f32 %v7018, %v7177
    %v7218 = vsub.f32 %v7019, %v7177
    %v7219 = vsub.f32 %v7020, %v7177
    %v7220 = vsub.f32 %v7021, %v7177
    %v7221 = vsub.f32 %v7022, %v7177
    %v7222 = vsub.f32 %v7023, %v7177
    %v7223 = vsub.f32 %v7024, %v7177
    %v7224 = vsub.f32 %v7025, %v7177
    %v7225 = vsub.f32 %v7026, %v7177
    %v7226 = vsub.f32 %v7027, %v7177
    %v7227 = vsub.f32 %v7028, %v7177
    %v7228 = vsub.f32 %v7029, %v7177
    %v7229 = vsub.f32 %v7030, %v7177
    %v7230 = vsub.f32 %v7031, %v7177
    %v7231 = vsub.f32 %v7032, %v7177
    %v7232 = vsub.f32 %v7033, %v7177
    %v7233 = vsub.f32 %v7034, %v7177
    %v7234 = vsub.f32 %v7035, %v7177
    %v7235 = vsub.f32 %v7036, %v7177
    %v7236 = vsub.f32 %v7037, %v7177
    %v7237 = vsub.f32 %v7038, %v7177
    %v7238 = vsub.f32 %v7039, %v7177
    %v7239 = vsub.f32 %v7040, %v7177
    %v7240 = vsub.f32 %v7041, %v7177
    %v7241 = vsub.f32 %v7042, %v7177
    %v7242 = vmul.f32 %v7178, %v7178
    %v7243 = vmul.f32 %v7179, %v7179
    %v7244 = vmul.f32 %v7180, %v7180
    %v7245 = vmul.f32 %v7181, %v7181
    %v7246 = vmul.f32 %v7182, %v7182
    %v7247 = vmul.f32 %v7183, %v7183
    %v7248 = vmul.f32 %v7184, %v7184
    %v7249 = vmul.f32 %v7185, %v7185
    %v7250 = vmul.f32 %v7186, %v7186
    %v7251 = vmul.f32 %v7187, %v7187
    %v7252 = vmul.f32 %v7188, %v7188
    %v7253 = vmul.f32 %v7189, %v7189
    %v7254 = vmul.f32 %v7190, %v7190
    %v7255 = vmul.f32 %v7191, %v7191
    %v7256 = vmul.f32 %v7192, %v7192
    %v7257 = vmul.f32 %v7193, %v7193
    %v7258 = vmul.f32 %v7194, %v7194
    %v7259 = vmul.f32 %v7195, %v7195
    %v7260 = vmul.f32 %v7196, %v7196
    %v7261 = vmul.f32 %v7197, %v7197
    %v7262 = vmul.f32 %v7198, %v7198
    %v7263 = vmul.f32 %v7199, %v7199
    %v7264 = vmul.f32 %v7200, %v7200
    %v7265 = vmul.f32 %v7201, %v7201
    %v7266 = vmul.f32 %v7202, %v7202
    %v7267 = vmul.f32 %v7203, %v7203
    %v7268 = vmul.f32 %v7204, %v7204
    %v7269 = vmul.f32 %v7205, %v7205
    %v7270 = vmul.f32 %v7206, %v7206
    %v7271 = vmul.f32 %v7207, %v7207
    %v7272 = vmul.f32 %v7208, %v7208
    %v7273 = vmul.f32 %v7209, %v7209
    %v7274 = vmul.f32 %v7210, %v7210
    %v7275 = vmul.f32 %v7211, %v7211
    %v7276 = vmul.f32 %v7212, %v7212
    %v7277 = vmul.f32 %v7213, %v7213
    %v7278 = vmul.f32 %v7214, %v7214
    %v7279 = vmul.f32 %v7215, %v7215
    %v7280 = vmul.f32 %v7216, %v7216
    %v7281 = vmul.f32 %v7217, %v7217
    %v7282 = vmul.f32 %v7218, %v7218
    %v7283 = vmul.f32 %v7219, %v7219
    %v7284 = vmul.f32 %v7220, %v7220
    %v7285 = vmul.f32 %v7221, %v7221
    %v7286 = vmul.f32 %v7222, %v7222
    %v7287 = vmul.f32 %v7223, %v7223
    %v7288 = vmul.f32 %v7224, %v7224
    %v7289 = vmul.f32 %v7225, %v7225
    %v7290 = vmul.f32 %v7226, %v7226
    %v7291 = vmul.f32 %v7227, %v7227
    %v7292 = vmul.f32 %v7228, %v7228
    %v7293 = vmul.f32 %v7229, %v7229
    %v7294 = vmul.f32 %v7230, %v7230
    %v7295 = vmul.f32 %v7231, %v7231
    %v7296 = vmul.f32 %v7232, %v7232
    %v7297 = vmul.f32 %v7233, %v7233
    %v7298 = vmul.f32 %v7234, %v7234
    %v7299 = vmul.f32 %v7235, %v7235
    %v7300 = vmul.f32 %v7236, %v7236
    %v7301 = vmul.f32 %v7237, %v7237
    %v7302 = vmul.f32 %v7238, %v7238
    %v7303 = vmul.f32 %v7239, %v7239
    %v7304 = vmul.f32 %v7240, %v7240
    %v7305 = vmul.f32 %v7241, %v7241
    %v7306 = vsel %vm7043, %v7242, 0.0
    %v7307 = vsel %vm7043, %v7243, 0.0
    %v7308 = vadd.f32 %v7306, %v7307
    %v7309 = vsel %vm7043, %v7244, 0.0
    %v7310 = vadd.f32 %v7308, %v7309
    %v7311 = vsel %vm7043, %v7245, 0.0
    %v7312 = vadd.f32 %v7310, %v7311
    %v7313 = vsel %vm7043, %v7246, 0.0
    %v7314 = vadd.f32 %v7312, %v7313
    %v7315 = vsel %vm7043, %v7247, 0.0
    %v7316 = vadd.f32 %v7314, %v7315
    %v7317 = vsel %vm7043, %v7248, 0.0
    %v7318 = vadd.f32 %v7316, %v7317
    %v7319 = vsel %vm7043, %v7249, 0.0
    %v7320 = vadd.f32 %v7318, %v7319
    %v7321 = vsel %vm7043, %v7250, 0.0
    %v7322 = vadd.f32 %v7320, %v7321
    %v7323 = vsel %vm7043, %v7251, 0.0
    %v7324 = vadd.f32 %v7322, %v7323
    %v7325 = vsel %vm7043, %v7252, 0.0
    %v7326 = vadd.f32 %v7324, %v7325
    %v7327 = vsel %vm7043, %v7253, 0.0
    %v7328 = vadd.f32 %v7326, %v7327
    %v7329 = vsel %vm7043, %v7254, 0.0
    %v7330 = vadd.f32 %v7328, %v7329
    %v7331 = vsel %vm7043, %v7255, 0.0
    %v7332 = vadd.f32 %v7330, %v7331
    %v7333 = vsel %vm7043, %v7256, 0.0
    %v7334 = vadd.f32 %v7332, %v7333
    %v7335 = vsel %vm7043, %v7257, 0.0
    %v7336 = vadd.f32 %v7334, %v7335
    %v7337 = vsel %vm7043, %v7258, 0.0
    %v7338 = vadd.f32 %v7336, %v7337
    %v7339 = vsel %vm7043, %v7259, 0.0
    %v7340 = vadd.f32 %v7338, %v7339
    %v7341 = vsel %vm7043, %v7260, 0.0
    %v7342 = vadd.f32 %v7340, %v7341
    %v7343 = vsel %vm7043, %v7261, 0.0
    %v7344 = vadd.f32 %v7342, %v7343
    %v7345 = vsel %vm7043, %v7262, 0.0
    %v7346 = vadd.f32 %v7344, %v7345
    %v7347 = vsel %vm7043, %v7263, 0.0
    %v7348 = vadd.f32 %v7346, %v7347
    %v7349 = vsel %vm7043, %v7264, 0.0
    %v7350 = vadd.f32 %v7348, %v7349
    %v7351 = vsel %vm7043, %v7265, 0.0
    %v7352 = vadd.f32 %v7350, %v7351
    %v7353 = vsel %vm7043, %v7266, 0.0
    %v7354 = vadd.f32 %v7352, %v7353
    %v7355 = vsel %vm7043, %v7267, 0.0
    %v7356 = vadd.f32 %v7354, %v7355
    %v7357 = vsel %vm7043, %v7268, 0.0
    %v7358 = vadd.f32 %v7356, %v7357
    %v7359 = vsel %vm7043, %v7269, 0.0
    %v7360 = vadd.f32 %v7358, %v7359
    %v7361 = vsel %vm7043, %v7270, 0.0
    %v7362 = vadd.f32 %v7360, %v7361
    %v7363 = vsel %vm7043, %v7271, 0.0
    %v7364 = vadd.f32 %v7362, %v7363
    %v7365 = vsel %vm7043, %v7272, 0.0
    %v7366 = vadd.f32 %v7364, %v7365
    %v7367 = vsel %vm7043, %v7273, 0.0
    %v7368 = vadd.f32 %v7366, %v7367
    %v7369 = vsel %vm7043, %v7274, 0.0
    %v7370 = vadd.f32 %v7368, %v7369
    %v7371 = vsel %vm7043, %v7275, 0.0
    %v7372 = vadd.f32 %v7370, %v7371
    %v7373 = vsel %vm7043, %v7276, 0.0
    %v7374 = vadd.f32 %v7372, %v7373
    %v7375 = vsel %vm7043, %v7277, 0.0
    %v7376 = vadd.f32 %v7374, %v7375
    %v7377 = vsel %vm7043, %v7278, 0.0
    %v7378 = vadd.f32 %v7376, %v7377
    %v7379 = vsel %vm7043, %v7279, 0.0
    %v7380 = vadd.f32 %v7378, %v7379
    %v7381 = vsel %vm7043, %v7280, 0.0
    %v7382 = vadd.f32 %v7380, %v7381
    %v7383 = vsel %vm7043, %v7281, 0.0
    %v7384 = vadd.f32 %v7382, %v7383
    %v7385 = vsel %vm7043, %v7282, 0.0
    %v7386 = vadd.f32 %v7384, %v7385
    %v7387 = vsel %vm7043, %v7283, 0.0
    %v7388 = vadd.f32 %v7386, %v7387
    %v7389 = vsel %vm7043, %v7284, 0.0
    %v7390 = vadd.f32 %v7388, %v7389
    %v7391 = vsel %vm7043, %v7285, 0.0
    %v7392 = vadd.f32 %v7390, %v7391
    %v7393 = vsel %vm7043, %v7286, 0.0
    %v7394 = vadd.f32 %v7392, %v7393
    %v7395 = vsel %vm7043, %v7287, 0.0
    %v7396 = vadd.f32 %v7394, %v7395
    %v7397 = vsel %vm7043, %v7288, 0.0
    %v7398 = vadd.f32 %v7396, %v7397
    %v7399 = vsel %vm7043, %v7289, 0.0
    %v7400 = vadd.f32 %v7398, %v7399
    %v7401 = vsel %vm7043, %v7290, 0.0
    %v7402 = vadd.f32 %v7400, %v7401
    %v7403 = vsel %vm7043, %v7291, 0.0
    %v7404 = vadd.f32 %v7402, %v7403
    %v7405 = vsel %vm7043, %v7292, 0.0
    %v7406 = vadd.f32 %v7404, %v7405
    %v7407 = vsel %vm7043, %v7293, 0.0
    %v7408 = vadd.f32 %v7406, %v7407
    %v7409 = vsel %vm7043, %v7294, 0.0
    %v7410 = vadd.f32 %v7408, %v7409
    %v7411 = vsel %vm7043, %v7295, 0.0
    %v7412 = vadd.f32 %v7410, %v7411
    %v7413 = vsel %vm7043, %v7296, 0.0
    %v7414 = vadd.f32 %v7412, %v7413
    %v7415 = vsel %vm7043, %v7297, 0.0
    %v7416 = vadd.f32 %v7414, %v7415
    %v7417 = vsel %vm7043, %v7298, 0.0
    %v7418 = vadd.f32 %v7416, %v7417
    %v7419 = vsel %vm7043, %v7299, 0.0
    %v7420 = vadd.f32 %v7418, %v7419
    %v7421 = vsel %vm7043, %v7300, 0.0
    %v7422 = vadd.f32 %v7420, %v7421
    %v7423 = vsel %vm7043, %v7301, 0.0
    %v7424 = vadd.f32 %v7422, %v7423
    %v7425 = vsel %vm7043, %v7302, 0.0
    %v7426 = vadd.f32 %v7424, %v7425
    %v7427 = vsel %vm7043, %v7303, 0.0
    %v7428 = vadd.f32 %v7426, %v7427
    %v7429 = vsel %vm7043, %v7304, 0.0
    %v7430 = vadd.f32 %v7428, %v7429
    %v7431 = vsel %vm7043, %v7305, 0.0
    %v7432 = vadd.f32 %v7430, %v7431
    %v7433 = vrot.slane %v7432, 4
    %v7434 = vadd.f32 %v7432, %v7433
    %v7435 = vrot.slane %v7434, 2
    %v7436 = vadd.f32 %v7434, %v7435
    %v7437 = vrot.slane %v7436, 1
    %v7438 = vadd.f32 %v7436, %v7437
    %v7439 = vmul.f32 %v7438, 0.001953125
    %v7440 = vadd.f32 %v7439, 1e-05
    %v7441 = vrsqrt.pop %v7440
    %v7442 = vmul.f32 %v21, %v7441
    %v7443 = vmul.f32 %v7177, %v7442
    %v7445 = vrot.slane %v7443, 7
    %v7447 = vsub.f32 %v21, %v7445
    %v7448 = vlaneseq
    %v7449 = vshrl.u32 %v7448, 7
    %v7450 = vsub.s32 2, %v7449
    %v7451 = vrot.slane %v7442, %v7450
    %v7452 = vmul.f32 %v6979, %v7451
    %v7453 = vmul.f32 %v6980, %v7451
    %v7454 = vmul.f32 %v6981, %v7451
    %v7455 = vmul.f32 %v6982, %v7451
    %v7456 = vmul.f32 %v6983, %v7451
    %v7457 = vmul.f32 %v6984, %v7451
    %v7458 = vmul.f32 %v6985, %v7451
    %v7459 = vmul.f32 %v6986, %v7451
    %v7460 = vmul.f32 %v6987, %v7451
    %v7461 = vmul.f32 %v6988, %v7451
    %v7462 = vmul.f32 %v6989, %v7451
    %v7463 = vmul.f32 %v6990, %v7451
    %v7464 = vmul.f32 %v6991, %v7451
    %v7465 = vmul.f32 %v6992, %v7451
    %v7466 = vmul.f32 %v6993, %v7451
    %v7467 = vmul.f32 %v6994, %v7451
    %v7468 = vmul.f32 %v6995, %v7451
    %v7469 = vmul.f32 %v6996, %v7451
    %v7470 = vmul.f32 %v6997, %v7451
    %v7471 = vmul.f32 %v6998, %v7451
    %v7472 = vmul.f32 %v6999, %v7451
    %v7473 = vmul.f32 %v7000, %v7451
    %v7474 = vmul.f32 %v7001, %v7451
    %v7475 = vmul.f32 %v7002, %v7451
    %v7476 = vmul.f32 %v7003, %v7451
    %v7477 = vmul.f32 %v7004, %v7451
    %v7478 = vmul.f32 %v7005, %v7451
    %v7479 = vmul.f32 %v7006, %v7451
    %v7480 = vmul.f32 %v7007, %v7451
    %v7481 = vmul.f32 %v7008, %v7451
    %v7482 = vmul.f32 %v7009, %v7451
    %v7483 = vmul.f32 %v7010, %v7451
    %v7484 = vmul.f32 %v7011, %v7451
    %v7485 = vmul.f32 %v7012, %v7451
    %v7486 = vmul.f32 %v7013, %v7451
    %v7487 = vmul.f32 %v7014, %v7451
    %v7488 = vmul.f32 %v7015, %v7451
    %v7489 = vmul.f32 %v7016, %v7451
    %v7490 = vmul.f32 %v7017, %v7451
    %v7491 = vmul.f32 %v7018, %v7451
    %v7492 = vmul.f32 %v7019, %v7451
    %v7493 = vmul.f32 %v7020, %v7451
    %v7494 = vmul.f32 %v7021, %v7451
    %v7495 = vmul.f32 %v7022, %v7451
    %v7496 = vmul.f32 %v7023, %v7451
    %v7497 = vmul.f32 %v7024, %v7451
    %v7498 = vmul.f32 %v7025, %v7451
    %v7499 = vmul.f32 %v7026, %v7451
    %v7500 = vmul.f32 %v7027, %v7451
    %v7501 = vmul.f32 %v7028, %v7451
    %v7502 = vmul.f32 %v7029, %v7451
    %v7503 = vmul.f32 %v7030, %v7451
    %v7504 = vmul.f32 %v7031, %v7451
    %v7505 = vmul.f32 %v7032, %v7451
    %v7506 = vmul.f32 %v7033, %v7451
    %v7507 = vmul.f32 %v7034, %v7451
    %v7508 = vmul.f32 %v7035, %v7451
    %v7509 = vmul.f32 %v7036, %v7451
    %v7510 = vmul.f32 %v7037, %v7451
    %v7511 = vmul.f32 %v7038, %v7451
    %v7512 = vmul.f32 %v7039, %v7451
    %v7513 = vmul.f32 %v7040, %v7451
    %v7514 = vmul.f32 %v7041, %v7451
    %v7515 = vmul.f32 %v7042, %v7451
    %v7516 = vlaneseq
    %v7517 = vshrl.u32 %v7516, 7
    %v7518 = vsub.s32 3, %v7517
    %v7519 = vrot.slane %v7447, %v7518
    %v7520 = vadd.f32 %v7452, %v7519
    %v7521 = vadd.f32 %v7453, %v7519
    %v7522 = vadd.f32 %v7454, %v7519
    %v7523 = vadd.f32 %v7455, %v7519
    %v7524 = vadd.f32 %v7456, %v7519
    %v7525 = vadd.f32 %v7457, %v7519
    %v7526 = vadd.f32 %v7458, %v7519
    %v7527 = vadd.f32 %v7459, %v7519
    %v7528 = vadd.f32 %v7460, %v7519
    %v7529 = vadd.f32 %v7461, %v7519
    %v7530 = vadd.f32 %v7462, %v7519
    %v7531 = vadd.f32 %v7463, %v7519
    %v7532 = vadd.f32 %v7464, %v7519
    %v7533 = vadd.f32 %v7465, %v7519
    %v7534 = vadd.f32 %v7466, %v7519
    %v7535 = vadd.f32 %v7467, %v7519
    %v7536 = vadd.f32 %v7468, %v7519
    %v7537 = vadd.f32 %v7469, %v7519
    %v7538 = vadd.f32 %v7470, %v7519
    %v7539 = vadd.f32 %v7471, %v7519
    %v7540 = vadd.f32 %v7472, %v7519
    %v7541 = vadd.f32 %v7473, %v7519
    %v7542 = vadd.f32 %v7474, %v7519
    %v7543 = vadd.f32 %v7475, %v7519
    %v7544 = vadd.f32 %v7476, %v7519
    %v7545 = vadd.f32 %v7477, %v7519
    %v7546 = vadd.f32 %v7478, %v7519
    %v7547 = vadd.f32 %v7479, %v7519
    %v7548 = vadd.f32 %v7480, %v7519
    %v7549 = vadd.f32 %v7481, %v7519
    %v7550 = vadd.f32 %v7482, %v7519
    %v7551 = vadd.f32 %v7483, %v7519
    %v7552 = vadd.f32 %v7484, %v7519
    %v7553 = vadd.f32 %v7485, %v7519
    %v7554 = vadd.f32 %v7486, %v7519
    %v7555 = vadd.f32 %v7487, %v7519
    %v7556 = vadd.f32 %v7488, %v7519
    %v7557 = vadd.f32 %v7489, %v7519
    %v7558 = vadd.f32 %v7490, %v7519
    %v7559 = vadd.f32 %v7491, %v7519
    %v7560 = vadd.f32 %v7492, %v7519
    %v7561 = vadd.f32 %v7493, %v7519
    %v7562 = vadd.f32 %v7494, %v7519
    %v7563 = vadd.f32 %v7495, %v7519
    %v7564 = vadd.f32 %v7496, %v7519
    %v7565 = vadd.f32 %v7497, %v7519
    %v7566 = vadd.f32 %v7498, %v7519
    %v7567 = vadd.f32 %v7499, %v7519
    %v7568 = vadd.f32 %v7500, %v7519
    %v7569 = vadd.f32 %v7501, %v7519
    %v7570 = vadd.f32 %v7502, %v7519
    %v7571 = vadd.f32 %v7503, %v7519
    %v7572 = vadd.f32 %v7504, %v7519
    %v7573 = vadd.f32 %v7505, %v7519
    %v7574 = vadd.f32 %v7506, %v7519
    %v7575 = vadd.f32 %v7507, %v7519
    %v7576 = vadd.f32 %v7508, %v7519
    %v7577 = vadd.f32 %v7509, %v7519
    %v7578 = vadd.f32 %v7510, %v7519
    %v7579 = vadd.f32 %v7511, %v7519
    %v7580 = vadd.f32 %v7512, %v7519
    %v7581 = vadd.f32 %v7513, %v7519
    %v7582 = vadd.f32 %v7514, %v7519
    %v7583 = vadd.f32 %v7515, %v7519
    %vm7584 = vcmp.ge.f32.partialorder %v7520, 0.0
    %vm7585 = vcmp.ge.f32.partialorder %v7521, 0.0
    %vm7586 = vcmp.ge.f32.partialorder %v7522, 0.0
    %vm7587 = vcmp.ge.f32.partialorder %v7523, 0.0
    %vm7588 = vcmp.ge.f32.partialorder %v7524, 0.0
    %vm7589 = vcmp.ge.f32.partialorder %v7525, 0.0
    %vm7590 = vcmp.ge.f32.partialorder %v7526, 0.0
    %vm7591 = vcmp.ge.f32.partialorder %v7527, 0.0
    %vm7592 = vcmp.ge.f32.partialorder %v7528, 0.0
    %vm7593 = vcmp.ge.f32.partialorder %v7529, 0.0
    %vm7594 = vcmp.ge.f32.partialorder %v7530, 0.0
    %vm7595 = vcmp.ge.f32.partialorder %v7531, 0.0
    %vm7596 = vcmp.ge.f32.partialorder %v7532, 0.0
    %vm7597 = vcmp.ge.f32.partialorder %v7533, 0.0
    %vm7598 = vcmp.ge.f32.partialorder %v7534, 0.0
    %vm7599 = vcmp.ge.f32.partialorder %v7535, 0.0
    %vm7600 = vcmp.ge.f32.partialorder %v7536, 0.0
    %vm7601 = vcmp.ge.f32.partialorder %v7537, 0.0
    %vm7602 = vcmp.ge.f32.partialorder %v7538, 0.0
    %vm7603 = vcmp.ge.f32.partialorder %v7539, 0.0
    %vm7604 = vcmp.ge.f32.partialorder %v7540, 0.0
    %vm7605 = vcmp.ge.f32.partialorder %v7541, 0.0
    %vm7606 = vcmp.ge.f32.partialorder %v7542, 0.0
    %vm7607 = vcmp.ge.f32.partialorder %v7543, 0.0
    %vm7608 = vcmp.ge.f32.partialorder %v7544, 0.0
    %vm7609 = vcmp.ge.f32.partialorder %v7545, 0.0
    %vm7610 = vcmp.ge.f32.partialorder %v7546, 0.0
    %vm7611 = vcmp.ge.f32.partialorder %v7547, 0.0
    %vm7612 = vcmp.ge.f32.partialorder %v7548, 0.0
    %vm7613 = vcmp.ge.f32.partialorder %v7549, 0.0
    %vm7614 = vcmp.ge.f32.partialorder %v7550, 0.0
    %vm7615 = vcmp.ge.f32.partialorder %v7551, 0.0
    %vm7616 = vcmp.ge.f32.partialorder %v7552, 0.0
    %vm7617 = vcmp.ge.f32.partialorder %v7553, 0.0
    %vm7618 = vcmp.ge.f32.partialorder %v7554, 0.0
    %vm7619 = vcmp.ge.f32.partialorder %v7555, 0.0
    %vm7620 = vcmp.ge.f32.partialorder %v7556, 0.0
    %vm7621 = vcmp.ge.f32.partialorder %v7557, 0.0
    %vm7622 = vcmp.ge.f32.partialorder %v7558, 0.0
    %vm7623 = vcmp.ge.f32.partialorder %v7559, 0.0
    %vm7624 = vcmp.ge.f32.partialorder %v7560, 0.0
    %vm7625 = vcmp.ge.f32.partialorder %v7561, 0.0
    %vm7626 = vcmp.ge.f32.partialorder %v7562, 0.0
    %vm7627 = vcmp.ge.f32.partialorder %v7563, 0.0
    %vm7628 = vcmp.ge.f32.partialorder %v7564, 0.0
    %vm7629 = vcmp.ge.f32.partialorder %v7565, 0.0
    %vm7630 = vcmp.ge.f32.partialorder %v7566, 0.0
    %vm7631 = vcmp.ge.f32.partialorder %v7567, 0.0
    %vm7632 = vcmp.ge.f32.partialorder %v7568, 0.0
    %vm7633 = vcmp.ge.f32.partialorder %v7569, 0.0
    %vm7634 = vcmp.ge.f32.partialorder %v7570, 0.0
    %vm7635 = vcmp.ge.f32.partialorder %v7571, 0.0
    %vm7636 = vcmp.ge.f32.partialorder %v7572, 0.0
    %vm7637 = vcmp.ge.f32.partialorder %v7573, 0.0
    %vm7638 = vcmp.ge.f32.partialorder %v7574, 0.0
    %vm7639 = vcmp.ge.f32.partialorder %v7575, 0.0
    %vm7640 = vcmp.ge.f32.partialorder %v7576, 0.0
    %vm7641 = vcmp.ge.f32.partialorder %v7577, 0.0
    %vm7642 = vcmp.ge.f32.partialorder %v7578, 0.0
    %vm7643 = vcmp.ge.f32.partialorder %v7579, 0.0
    %vm7644 = vcmp.ge.f32.partialorder %v7580, 0.0
    %vm7645 = vcmp.ge.f32.partialorder %v7581, 0.0
    %vm7646 = vcmp.ge.f32.partialorder %v7582, 0.0
    %vm7647 = vcmp.ge.f32.partialorder %v7583, 0.0
    %v7648 = vlaneseq
    %v7649 = vshrl.u32 %v7648, 7
    %v7650 = vsub.s32 4, %v7649
    %v7651 = vrot.slane %v21, %v7650
    %v7652 = vmul.f32 %v7651, %v7520
    %v7653 = vmul.f32 %v7651, %v7521
    %v7654 = vmul.f32 %v7651, %v7522
    %v7655 = vmul.f32 %v7651, %v7523
    %v7656 = vmul.f32 %v7651, %v7524
    %v7657 = vmul.f32 %v7651, %v7525
    %v7658 = vmul.f32 %v7651, %v7526
    %v7659 = vmul.f32 %v7651, %v7527
    %v7660 = vmul.f32 %v7651, %v7528
    %v7661 = vmul.f32 %v7651, %v7529
    %v7662 = vmul.f32 %v7651, %v7530
    %v7663 = vmul.f32 %v7651, %v7531
    %v7664 = vmul.f32 %v7651, %v7532
    %v7665 = vmul.f32 %v7651, %v7533
    %v7666 = vmul.f32 %v7651, %v7534
    %v7667 = vmul.f32 %v7651, %v7535
    %v7668 = vmul.f32 %v7651, %v7536
    %v7669 = vmul.f32 %v7651, %v7537
    %v7670 = vmul.f32 %v7651, %v7538
    %v7671 = vmul.f32 %v7651, %v7539
    %v7672 = vmul.f32 %v7651, %v7540
    %v7673 = vmul.f32 %v7651, %v7541
    %v7674 = vmul.f32 %v7651, %v7542
    %v7675 = vmul.f32 %v7651, %v7543
    %v7676 = vmul.f32 %v7651, %v7544
    %v7677 = vmul.f32 %v7651, %v7545
    %v7678 = vmul.f32 %v7651, %v7546
    %v7679 = vmul.f32 %v7651, %v7547
    %v7680 = vmul.f32 %v7651, %v7548
    %v7681 = vmul.f32 %v7651, %v7549
    %v7682 = vmul.f32 %v7651, %v7550
    %v7683 = vmul.f32 %v7651, %v7551
    %v7684 = vmul.f32 %v7651, %v7552
    %v7685 = vmul.f32 %v7651, %v7553
    %v7686 = vmul.f32 %v7651, %v7554
    %v7687 = vmul.f32 %v7651, %v7555
    %v7688 = vmul.f32 %v7651, %v7556
    %v7689 = vmul.f32 %v7651, %v7557
    %v7690 = vmul.f32 %v7651, %v7558
    %v7691 = vmul.f32 %v7651, %v7559
    %v7692 = vmul.f32 %v7651, %v7560
    %v7693 = vmul.f32 %v7651, %v7561
    %v7694 = vmul.f32 %v7651, %v7562
    %v7695 = vmul.f32 %v7651, %v7563
    %v7696 = vmul.f32 %v7651, %v7564
    %v7697 = vmul.f32 %v7651, %v7565
    %v7698 = vmul.f32 %v7651, %v7566
    %v7699 = vmul.f32 %v7651, %v7567
    %v7700 = vmul.f32 %v7651, %v7568
    %v7701 = vmul.f32 %v7651, %v7569
    %v7702 = vmul.f32 %v7651, %v7570
    %v7703 = vmul.f32 %v7651, %v7571
    %v7704 = vmul.f32 %v7651, %v7572
    %v7705 = vmul.f32 %v7651, %v7573
    %v7706 = vmul.f32 %v7651, %v7574
    %v7707 = vmul.f32 %v7651, %v7575
    %v7708 = vmul.f32 %v7651, %v7576
    %v7709 = vmul.f32 %v7651, %v7577
    %v7710 = vmul.f32 %v7651, %v7578
    %v7711 = vmul.f32 %v7651, %v7579
    %v7712 = vmul.f32 %v7651, %v7580
    %v7713 = vmul.f32 %v7651, %v7581
    %v7714 = vmul.f32 %v7651, %v7582
    %v7715 = vmul.f32 %v7651, %v7583
    %v7716 = vsel %vm7584, %v7520, %v7652
    %v7717 = vsel %vm7585, %v7521, %v7653
    %v7718 = vsel %vm7586, %v7522, %v7654
    %v7719 = vsel %vm7587, %v7523, %v7655
    %v7720 = vsel %vm7588, %v7524, %v7656
    %v7721 = vsel %vm7589, %v7525, %v7657
    %v7722 = vsel %vm7590, %v7526, %v7658
    %v7723 = vsel %vm7591, %v7527, %v7659
    %v7724 = vsel %vm7592, %v7528, %v7660
    %v7725 = vsel %vm7593, %v7529, %v7661
    %v7726 = vsel %vm7594, %v7530, %v7662
    %v7727 = vsel %vm7595, %v7531, %v7663
    %v7728 = vsel %vm7596, %v7532, %v7664
    %v7729 = vsel %vm7597, %v7533, %v7665
    %v7730 = vsel %vm7598, %v7534, %v7666
    %v7731 = vsel %vm7599, %v7535, %v7667
    %v7732 = vsel %vm7600, %v7536, %v7668
    %v7733 = vsel %vm7601, %v7537, %v7669
    %v7734 = vsel %vm7602, %v7538, %v7670
    %v7735 = vsel %vm7603, %v7539, %v7671
    %v7736 = vsel %vm7604, %v7540, %v7672
    %v7737 = vsel %vm7605, %v7541, %v7673
    %v7738 = vsel %vm7606, %v7542, %v7674
    %v7739 = vsel %vm7607, %v7543, %v7675
    %v7740 = vsel %vm7608, %v7544, %v7676
    %v7741 = vsel %vm7609, %v7545, %v7677
    %v7742 = vsel %vm7610, %v7546, %v7678
    %v7743 = vsel %vm7611, %v7547, %v7679
    %v7744 = vsel %vm7612, %v7548, %v7680
    %v7745 = vsel %vm7613, %v7549, %v7681
    %v7746 = vsel %vm7614, %v7550, %v7682
    %v7747 = vsel %vm7615, %v7551, %v7683
    %v7748 = vsel %vm7616, %v7552, %v7684
    %v7749 = vsel %vm7617, %v7553, %v7685
    %v7750 = vsel %vm7618, %v7554, %v7686
    %v7751 = vsel %vm7619, %v7555, %v7687
    %v7752 = vsel %vm7620, %v7556, %v7688
    %v7753 = vsel %vm7621, %v7557, %v7689
    %v7754 = vsel %vm7622, %v7558, %v7690
    %v7755 = vsel %vm7623, %v7559, %v7691
    %v7756 = vsel %vm7624, %v7560, %v7692
    %v7757 = vsel %vm7625, %v7561, %v7693
    %v7758 = vsel %vm7626, %v7562, %v7694
    %v7759 = vsel %vm7627, %v7563, %v7695
    %v7760 = vsel %vm7628, %v7564, %v7696
    %v7761 = vsel %vm7629, %v7565, %v7697
    %v7762 = vsel %vm7630, %v7566, %v7698
    %v7763 = vsel %vm7631, %v7567, %v7699
    %v7764 = vsel %vm7632, %v7568, %v7700
    %v7765 = vsel %vm7633, %v7569, %v7701
    %v7766 = vsel %vm7634, %v7570, %v7702
    %v7767 = vsel %vm7635, %v7571, %v7703
    %v7768 = vsel %vm7636, %v7572, %v7704
    %v7769 = vsel %vm7637, %v7573, %v7705
    %v7770 = vsel %vm7638, %v7574, %v7706
    %v7771 = vsel %vm7639, %v7575, %v7707
    %v7772 = vsel %vm7640, %v7576, %v7708
    %v7773 = vsel %vm7641, %v7577, %v7709
    %v7774 = vsel %vm7642, %v7578, %v7710
    %v7775 = vsel %vm7643, %v7579, %v7711
    %v7776 = vsel %vm7644, %v7580, %v7712
    %v7777 = vsel %vm7645, %v7581, %v7713
    %v7778 = vsel %vm7646, %v7582, %v7714
    %v7779 = vsel %vm7647, %v7583, %v7715
    %7780 = vst.msk [vmem:[#allocation3] sm:$0xff] %vm7043, 0.0
    %7781 = vst.msk [vmem:[#allocation3 + $0x8] sm:$0xff] %vm7043, 0.0
    %vm7782 = vcmask 58368
    %7783 = vst.msk [vmem:[#allocation3 + $0x10] sm:$0x3] %vm7782, 0.0
    %7784 = vst.msk [vmem:[#allocation3 + $0x1b0] sm:$0xff] %vm7043, 0.0
    %7785 = vst.msk [vmem:[#allocation3 + $0x1b8] sm:$0xff] %vm7043, 0.0
    %7786 = vst.msk [vmem:[#allocation3 + $0x1c0] sm:$0x3] %vm7782, 0.0
    %s7787 = scalar_lea.vmem [#allocation3], 408
    %7788 = vst.msk [vmem:[%s7787] sm:$0xff] %vm7043, 0.0
    %7789 = vst.msk [vmem:[%s7787 + $0x8] sm:$0xff] %vm7043, 0.0
    %7790 = vst.msk [vmem:[%s7787 + $0x10] sm:$0x3] %vm7782, 0.0
    %7791 = vst.msk [vmem:[%s7787 + $0x1b0] sm:$0xff] %vm7043, 0.0
    %7792 = vst.msk [vmem:[%s7787 + $0x1b8] sm:$0xff] %vm7043, 0.0
    %7793 = vst.msk [vmem:[%s7787 + $0x1c0] sm:$0x3] %vm7782, 0.0
    %vm7794 = vcmask 57344
    %7795 = vst.msk [vmem:[#allocation3] sm:$0x1] %vm7794, 0.0
    %7796 = vst.msk [vmem:[#allocation3 + $0x18] sm:$0x1] %vm7794, 0.0
    %7797 = vst.msk [vmem:[#allocation3 + $0x30] sm:$0x1] %vm7794, 0.0
    %7798 = vst.msk [vmem:[#allocation3 + $0x48] sm:$0x1] %vm7794, 0.0
    %7799 = vst.msk [vmem:[#allocation3 + $0x60] sm:$0x1] %vm7794, 0.0
    %7800 = vst.msk [vmem:[#allocation3 + $0x78] sm:$0x1] %vm7794, 0.0
    %7801 = vst.msk [vmem:[#allocation3 + $0x90] sm:$0x1] %vm7794, 0.0
    %7802 = vst.msk [vmem:[#allocation3 + $0xa8] sm:$0x1] %vm7794, 0.0
    %7803 = vst.msk [vmem:[#allocation3 + $0xc0] sm:$0x1] %vm7794, 0.0
    %7804 = vst.msk [vmem:[#allocation3 + $0xd8] sm:$0x1] %vm7794, 0.0
    %7805 = vst.msk [vmem:[#allocation3 + $0xf0] sm:$0x1] %vm7794, 0.0
    %7806 = vst.msk [vmem:[#allocation3 + $0x108] sm:$0x1] %vm7794, 0.0
    %7807 = vst.msk [vmem:[#allocation3 + $0x120] sm:$0x1] %vm7794, 0.0
    %7808 = vst.msk [vmem:[#allocation3 + $0x138] sm:$0x1] %vm7794, 0.0
    %7809 = vst.msk [vmem:[#allocation3 + $0x150] sm:$0x1] %vm7794, 0.0
    %7810 = vst.msk [vmem:[#allocation3 + $0x168] sm:$0x1] %vm7794, 0.0
    %7811 = vst.msk [vmem:[#allocation3 + $0x180] sm:$0x1] %vm7794, 0.0
    %7812 = vst.msk [vmem:[#allocation3 + $0x198] sm:$0x1] %vm7794, 0.0
    %7813 = vst.msk [vmem:[#allocation3 + $0x1b0] sm:$0x1] %vm7794, 0.0
    %7814 = vst.msk [vmem:[#allocation3 + $0x1c8] sm:$0x1] %vm7794, 0.0
    %7815 = vst.msk [vmem:[#allocation3 + $0x1e0] sm:$0x1] %vm7794, 0.0
    %7816 = vst.msk [vmem:[#allocation3 + $0x1f8] sm:$0x1] %vm7794, 0.0
    %7817 = vst.msk [vmem:[#allocation3 + $0x210] sm:$0x1] %vm7794, 0.0
    %7818 = vst.msk [vmem:[#allocation3 + $0x228] sm:$0x1] %vm7794, 0.0
    %7819 = vst.msk [vmem:[#allocation3 + $0x240] sm:$0x1] %vm7794, 0.0
    %7820 = vst.msk [vmem:[#allocation3 + $0x258] sm:$0x1] %vm7794, 0.0
    %7821 = vst.msk [vmem:[#allocation3 + $0x270] sm:$0x1] %vm7794, 0.0
    %7822 = vst.msk [vmem:[#allocation3 + $0x288] sm:$0x1] %vm7794, 0.0
    %7823 = vst.msk [vmem:[#allocation3 + $0x2a0] sm:$0x1] %vm7794, 0.0
    %7824 = vst.msk [vmem:[#allocation3 + $0x2b8] sm:$0x1] %vm7794, 0.0
    %7825 = vst.msk [vmem:[#allocation3 + $0x2d0] sm:$0x1] %vm7794, 0.0
    %7826 = vst.msk [vmem:[#allocation3 + $0x2e8] sm:$0x1] %vm7794, 0.0
    %7827 = vst.msk [vmem:[#allocation3 + $0x300] sm:$0x1] %vm7794, 0.0
    %7828 = vst.msk [vmem:[#allocation3 + $0x318] sm:$0x1] %vm7794, 0.0
    %7829 = vst.msk [vmem:[#allocation3 + $0x330] sm:$0x1] %vm7794, 0.0
    %7830 = vst.msk [vmem:[#allocation3 + $0x348] sm:$0x1] %vm7794, 0.0
    %7831 = vst.msk [vmem:[#allocation3 + $0x11] sm:$0x1] %vm7794, 0.0
    %7832 = vst.msk [vmem:[#allocation3 + $0x29] sm:$0x1] %vm7794, 0.0
    %7833 = vst.msk [vmem:[#allocation3 + $0x41] sm:$0x1] %vm7794, 0.0
    %7834 = vst.msk [vmem:[#allocation3 + $0x59] sm:$0x1] %vm7794, 0.0
    %7835 = vst.msk [vmem:[#allocation3 + $0x71] sm:$0x1] %vm7794, 0.0
    %7836 = vst.msk [vmem:[#allocation3 + $0x89] sm:$0x1] %vm7794, 0.0
    %7837 = vst.msk [vmem:[#allocation3 + $0xa1] sm:$0x1] %vm7794, 0.0
    %7838 = vst.msk [vmem:[#allocation3 + $0xb9] sm:$0x1] %vm7794, 0.0
    %7839 = vst.msk [vmem:[#allocation3 + $0xd1] sm:$0x1] %vm7794, 0.0
    %7840 = vst.msk [vmem:[#allocation3 + $0xe9] sm:$0x1] %vm7794, 0.0
    %7841 = vst.msk [vmem:[#allocation3 + $0x101] sm:$0x1] %vm7794, 0.0
    %7842 = vst.msk [vmem:[#allocation3 + $0x119] sm:$0x1] %vm7794, 0.0
    %7843 = vst.msk [vmem:[#allocation3 + $0x131] sm:$0x1] %vm7794, 0.0
    %7844 = vst.msk [vmem:[#allocation3 + $0x149] sm:$0x1] %vm7794, 0.0
    %7845 = vst.msk [vmem:[#allocation3 + $0x161] sm:$0x1] %vm7794, 0.0
    %7846 = vst.msk [vmem:[#allocation3 + $0x179] sm:$0x1] %vm7794, 0.0
    %7847 = vst.msk [vmem:[#allocation3 + $0x191] sm:$0x1] %vm7794, 0.0
    %7848 = vst.msk [vmem:[#allocation3 + $0x1a9] sm:$0x1] %vm7794, 0.0
    %7849 = vst.msk [vmem:[#allocation3 + $0x1c1] sm:$0x1] %vm7794, 0.0
    %7850 = vst.msk [vmem:[#allocation3 + $0x1d9] sm:$0x1] %vm7794, 0.0
    %7851 = vst.msk [vmem:[#allocation3 + $0x1f1] sm:$0x1] %vm7794, 0.0
    %7852 = vst.msk [vmem:[#allocation3 + $0x209] sm:$0x1] %vm7794, 0.0
    %7853 = vst.msk [vmem:[#allocation3 + $0x221] sm:$0x1] %vm7794, 0.0
    %7854 = vst.msk [vmem:[#allocation3 + $0x239] sm:$0x1] %vm7794, 0.0
    %7855 = vst.msk [vmem:[#allocation3 + $0x251] sm:$0x1] %vm7794, 0.0
    %7856 = vst.msk [vmem:[#allocation3 + $0x269] sm:$0x1] %vm7794, 0.0
    %7857 = vst.msk [vmem:[#allocation3 + $0x281] sm:$0x1] %vm7794, 0.0
    %7858 = vst.msk [vmem:[#allocation3 + $0x299] sm:$0x1] %vm7794, 0.0
    %7859 = vst.msk [vmem:[#allocation3 + $0x2b1] sm:$0x1] %vm7794, 0.0
    %7860 = vst.msk [vmem:[#allocation3 + $0x2c9] sm:$0x1] %vm7794, 0.0
    %7861 = vst.msk [vmem:[#allocation3 + $0x2e1] sm:$0x1] %vm7794, 0.0
    %7862 = vst.msk [vmem:[#allocation3 + $0x2f9] sm:$0x1] %vm7794, 0.0
    %7863 = vst.msk [vmem:[#allocation3 + $0x311] sm:$0x1] %vm7794, 0.0
    %7864 = vst.msk [vmem:[#allocation3 + $0x329] sm:$0x1] %vm7794, 0.0
    %7865 = vst.msk [vmem:[#allocation3 + $0x341] sm:$0x1] %vm7794, 0.0
    %7866 = vst.msk [vmem:[#allocation3 + $0x359] sm:$0x1] %vm7794, 0.0
    %s7867 = scalar_lea.vmem [#allocation3], 24
    %7868 = vst.msk [vmem:[%s7867 + $0x1] sm:$0xff] %vm7043, %v7716
    %7869 = vst.msk [vmem:[%s7867 + $0x9] sm:$0xff] %vm7043, %v7717
    %7870 = vst.msk [vmem:[%s7867 + $0x19] sm:$0xff] %vm7043, %v7718
    %7871 = vst.msk [vmem:[%s7867 + $0x21] sm:$0xff] %vm7043, %v7719
    %7872 = vst.msk [vmem:[%s7867 + $0x31] sm:$0xff] %vm7043, %v7720
    %7873 = vst.msk [vmem:[%s7867 + $0x39] sm:$0xff] %vm7043, %v7721
    %7874 = vst.msk [vmem:[%s7867 + $0x49] sm:$0xff] %vm7043, %v7722
    %7875 = vst.msk [vmem:[%s7867 + $0x51] sm:$0xff] %vm7043, %v7723
    %7876 = vst.msk [vmem:[%s7867 + $0x61] sm:$0xff] %vm7043, %v7724
    %7877 = vst.msk [vmem:[%s7867 + $0x69] sm:$0xff] %vm7043, %v7725
    %7878 = vst.msk [vmem:[%s7867 + $0x79] sm:$0xff] %vm7043, %v7726
    %7879 = vst.msk [vmem:[%s7867 + $0x81] sm:$0xff] %vm7043, %v7727
    %7880 = vst.msk [vmem:[%s7867 + $0x91] sm:$0xff] %vm7043, %v7728
    %7881 = vst.msk [vmem:[%s7867 + $0x99] sm:$0xff] %vm7043, %v7729
    %7882 = vst.msk [vmem:[%s7867 + $0xa9] sm:$0xff] %vm7043, %v7730
    %7883 = vst.msk [vmem:[%s7867 + $0xb1] sm:$0xff] %vm7043, %v7731
    %7884 = vst.msk [vmem:[%s7867 + $0xc1] sm:$0xff] %vm7043, %v7732
    %7885 = vst.msk [vmem:[%s7867 + $0xc9] sm:$0xff] %vm7043, %v7733
    %7886 = vst.msk [vmem:[%s7867 + $0xd9] sm:$0xff] %vm7043, %v7734
    %7887 = vst.msk [vmem:[%s7867 + $0xe1] sm:$0xff] %vm7043, %v7735
    %7888 = vst.msk [vmem:[%s7867 + $0xf1] sm:$0xff] %vm7043, %v7736
    %7889 = vst.msk [vmem:[%s7867 + $0xf9] sm:$0xff] %vm7043, %v7737
    %7890 = vst.msk [vmem:[%s7867 + $0x109] sm:$0xff] %vm7043, %v7738
    %7891 = vst.msk [vmem:[%s7867 + $0x111] sm:$0xff] %vm7043, %v7739
    %7892 = vst.msk [vmem:[%s7867 + $0x121] sm:$0xff] %vm7043, %v7740
    %7893 = vst.msk [vmem:[%s7867 + $0x129] sm:$0xff] %vm7043, %v7741
    %7894 = vst.msk [vmem:[%s7867 + $0x139] sm:$0xff] %vm7043, %v7742
    %7895 = vst.msk [vmem:[%s7867 + $0x141] sm:$0xff] %vm7043, %v7743
    %7896 = vst.msk [vmem:[%s7867 + $0x151] sm:$0xff] %vm7043, %v7744
    %7897 = vst.msk [vmem:[%s7867 + $0x159] sm:$0xff] %vm7043, %v7745
    %7898 = vst.msk [vmem:[%s7867 + $0x169] sm:$0xff] %vm7043, %v7746
    %7899 = vst.msk [vmem:[%s7867 + $0x171] sm:$0xff] %vm7043, %v7747
    %7900 = vst.msk [vmem:[%s7867 + $0x1b1] sm:$0xff] %vm7043, %v7748
    %7901 = vst.msk [vmem:[%s7867 + $0x1b9] sm:$0xff] %vm7043, %v7749
    %7902 = vst.msk [vmem:[%s7867 + $0x1c9] sm:$0xff] %vm7043, %v7750
    %7903 = vst.msk [vmem:[%s7867 + $0x1d1] sm:$0xff] %vm7043, %v7751
    %7904 = vst.msk [vmem:[%s7867 + $0x1e1] sm:$0xff] %vm7043, %v7752
    %7905 = vst.msk [vmem:[%s7867 + $0x1e9] sm:$0xff] %vm7043, %v7753
    %7906 = vst.msk [vmem:[%s7867 + $0x1f9] sm:$0xff] %vm7043, %v7754
    %7907 = vst.msk [vmem:[%s7867 + $0x201] sm:$0xff] %vm7043, %v7755
    %7908 = vst.msk [vmem:[%s7867 + $0x211] sm:$0xff] %vm7043, %v7756
    %7909 = vst.msk [vmem:[%s7867 + $0x219] sm:$0xff] %vm7043, %v7757
    %7910 = vst.msk [vmem:[%s7867 + $0x229] sm:$0xff] %vm7043, %v7758
    %7911 = vst.msk [vmem:[%s7867 + $0x231] sm:$0xff] %vm7043, %v7759
    %7912 = vst.msk [vmem:[%s7867 + $0x241] sm:$0xff] %vm7043, %v7760
    %7913 = vst.msk [vmem:[%s7867 + $0x249] sm:$0xff] %vm7043, %v7761
    %7914 = vst.msk [vmem:[%s7867 + $0x259] sm:$0xff] %vm7043, %v7762
    %7915 = vst.msk [vmem:[%s7867 + $0x261] sm:$0xff] %vm7043, %v7763
    %7916 = vst.msk [vmem:[%s7867 + $0x271] sm:$0xff] %vm7043, %v7764
    %7917 = vst.msk [vmem:[%s7867 + $0x279] sm:$0xff] %vm7043, %v7765
    %7918 = vst.msk [vmem:[%s7867 + $0x289] sm:$0xff] %vm7043, %v7766
    %7919 = vst.msk [vmem:[%s7867 + $0x291] sm:$0xff] %vm7043, %v7767
    %7920 = vst.msk [vmem:[%s7867 + $0x2a1] sm:$0xff] %vm7043, %v7768
    %7921 = vst.msk [vmem:[%s7867 + $0x2a9] sm:$0xff] %vm7043, %v7769
    %7922 = vst.msk [vmem:[%s7867 + $0x2b9] sm:$0xff] %vm7043, %v7770
    %7923 = vst.msk [vmem:[%s7867 + $0x2c1] sm:$0xff] %vm7043, %v7771
    %7924 = vst.msk [vmem:[%s7867 + $0x2d1] sm:$0xff] %vm7043, %v7772
    %7925 = vst.msk [vmem:[%s7867 + $0x2d9] sm:$0xff] %vm7043, %v7773
    %7926 = vst.msk [vmem:[%s7867 + $0x2e9] sm:$0xff] %vm7043, %v7774
    %7927 = vst.msk [vmem:[%s7867 + $0x2f1] sm:$0xff] %vm7043, %v7775
    %7928 = vst.msk [vmem:[%s7867 + $0x301] sm:$0xff] %vm7043, %v7776
    %7929 = vst.msk [vmem:[%s7867 + $0x309] sm:$0xff] %vm7043, %v7777
    %7930 = vst.msk [vmem:[%s7867 + $0x319] sm:$0xff] %vm7043, %v7778
    %7931 = vst.msk [vmem:[%s7867 + $0x321] sm:$0xff] %vm7043, %v7779
    %v7932 = vld [vmem:[#allocation3] ss:$2 sm:$0xff]
    %s7933 = scalar_lea.vmem [#allocation3], 48
    %v7934 = vld [vmem:[%s7933] ss:$2 sm:$0xff]
    %s7935 = scalar_lea.vmem [#allocation3], 96
    %v7936 = vld [vmem:[%s7935] ss:$2 sm:$0xff]
    %s7937 = scalar_lea.vmem [#allocation3], 144
    %v7938 = vld [vmem:[%s7937] ss:$2 sm:$0xff]
    %s7939 = scalar_lea.vmem [#allocation3], 192
    %v7940 = vld [vmem:[%s7939] ss:$2 sm:$0xff]
    %s7941 = scalar_lea.vmem [#allocation3], 240
    %v7942 = vld [vmem:[%s7941] ss:$2 sm:$0xff]
    %s7943 = scalar_lea.vmem [#allocation3], 288
    %v7944 = vld [vmem:[%s7943] ss:$2 sm:$0xff]
    %s7945 = scalar_lea.vmem [#allocation3], 336
    %v7946 = vld [vmem:[%s7945] ss:$2 sm:$0xff]
    %s7947 = scalar_lea.vmem [#allocation3], 432
    %v7948 = vld [vmem:[%s7947] ss:$2 sm:$0xff]
    %s7949 = scalar_lea.vmem [#allocation3], 480
    %v7950 = vld [vmem:[%s7949] ss:$2 sm:$0xff]
    %s7951 = scalar_lea.vmem [#allocation3], 528
    %v7952 = vld [vmem:[%s7951] ss:$2 sm:$0xff]
    %s7953 = scalar_lea.vmem [#allocation3], 576
    %v7954 = vld [vmem:[%s7953] ss:$2 sm:$0xff]
    %s7955 = scalar_lea.vmem [#allocation3], 624
    %v7956 = vld [vmem:[%s7955] ss:$2 sm:$0xff]
    %s7957 = scalar_lea.vmem [#allocation3], 672
    %v7958 = vld [vmem:[%s7957] ss:$2 sm:$0xff]
    %s7959 = scalar_lea.vmem [#allocation3], 720
    %v7960 = vld [vmem:[%s7959] ss:$2 sm:$0xff]
    %s7961 = scalar_lea.vmem [#allocation3], 768
    %v7962 = vld [vmem:[%s7961] ss:$2 sm:$0xff]
    %v7963 = vld [vmem:[%s3] sm:$0xff]
    %s7964 = scalar_lea.vmem [#allocation3], 1
    %v7965 = vld [vmem:[%s7964] ss:$2 sm:$0xff]
    %s7966 = scalar_lea.vmem [#allocation3], 49
    %v7967 = vld [vmem:[%s7966] ss:$2 sm:$0xff]
    %s7968 = scalar_lea.vmem [#allocation3], 97
    %v7969 = vld [vmem:[%s7968] ss:$2 sm:$0xff]
    %s7970 = scalar_lea.vmem [#allocation3], 145
    %v7971 = vld [vmem:[%s7970] ss:$2 sm:$0xff]
    %s7972 = scalar_lea.vmem [#allocation3], 193
    %v7973 = vld [vmem:[%s7972] ss:$2 sm:$0xff]
    %s7974 = scalar_lea.vmem [#allocation3], 241
    %v7975 = vld [vmem:[%s7974] ss:$2 sm:$0xff]
    %s7976 = scalar_lea.vmem [#allocation3], 289
    %v7977 = vld [vmem:[%s7976] ss:$2 sm:$0xff]
    %s7978 = scalar_lea.vmem [#allocation3], 337
    %v7979 = vld [vmem:[%s7978] ss:$2 sm:$0xff]
    %s7980 = scalar_lea.vmem [#allocation3], 433
    %v7981 = vld [vmem:[%s7980] ss:$2 sm:$0xff]
    %s7982 = scalar_lea.vmem [#allocation3], 481
    %v7983 = vld [vmem:[%s7982] ss:$2 sm:$0xff]
    %s7984 = scalar_lea.vmem [#allocation3], 529
    %v7985 = vld [vmem:[%s7984] ss:$2 sm:$0xff]
    %s7986 = scalar_lea.vmem [#allocation3], 577
    %v7987 = vld [vmem:[%s7986] ss:$2 sm:$0xff]
    %s7988 = scalar_lea.vmem [#allocation3], 625
    %v7989 = vld [vmem:[%s7988] ss:$2 sm:$0xff]
    %s7990 = scalar_lea.vmem [#allocation3], 673
    %v7991 = vld [vmem:[%s7990] ss:$2 sm:$0xff]
    %s7992 = scalar_lea.vmem [#allocation3], 721
    %v7993 = vld [vmem:[%s7992] ss:$2 sm:$0xff]
    %s7994 = scalar_lea.vmem [#allocation3], 769
    %v7995 = vld [vmem:[%s7994] ss:$2 sm:$0xff]
    %s7996 = scalar_lea.vmem %s3, 8
    %v7997 = vld [vmem:[%s7996] sm:$0xff]
    %v7999 = vsel %vm7043, %v7965, 0
    %v8002 = vsel %vm7043, %v7967, 0
    %v8005 = vsel %vm7043, %v7969, 0
    %v8008 = vsel %vm7043, %v7971, 0
    %v8011 = vsel %vm7043, %v7973, 0
    %v8014 = vsel %vm7043, %v7975, 0
    %v8017 = vsel %vm7043, %v7977, 0
    %v8020 = vsel %vm7043, %v7979, 0
    %v8023 = vsel %vm7043, %v7981, 0
    %v8026 = vsel %vm7043, %v7983, 0
    %v8029 = vsel %vm7043, %v7985, 0
    %v8032 = vsel %vm7043, %v7987, 0
    %v8035 = vsel %vm7043, %v7989, 0
    %v8038 = vsel %vm7043, %v7991, 0
    %v8041 = vsel %vm7043, %v7993, 0
    %v8044 = vsel %vm7043, %v7995, 0
    %8046 = vmatprep.subr.mxu0 0.0
    %8047 = vmatpush1.msra.mxu0 %v7997
    %8048 = vmatprep.subr.mxu0 0.0
    %8049 = vmatpush1.msra.mxu0 0.0
    %8050 = vmatprep.subr.mxu0 0.0
    %8051 = vmatpush1.msra.mxu0 0.0
    %8052 = vmatprep.subr.mxu0 0.0
    %8053 = vmatpush1.msra.mxu0 0.0
    %8054 = vmatprep.subr.mxu0 0.0
    %8055 = vmatpush1.msra.mxu0 0.0
    %8056 = vmatprep.subr.mxu0 0.0
    %8057 = vmatpush1.msra.mxu0 0.0
    %8058 = vmatprep.subr.mxu0 0.0
    %8059 = vmatpush1.msra.mxu0 0.0
    %8060 = vmatprep.subr.mxu0 0.0
    %8061 = vmatpush1.msra.mxu0 0.0
    %8062 = vmatprep.subr.mxu0 0.0
    %8063 = vmatpush1.msra.mxu0 0.0
    %8064 = vmatprep.subr.mxu0 0.0
    %8065 = vmatpush1.msra.mxu0 0.0
    %8066 = vmatprep.subr.mxu0 0.0
    %8067 = vmatpush1.msra.mxu0 0.0
    %8068 = vmatprep.subr.mxu0 0.0
    %8069 = vmatpush1.msra.mxu0 0.0
    %8070 = vmatprep.subr.mxu0 0.0
    %8071 = vmatpush1.msra.mxu0 0.0
    %8072 = vmatprep.subr.mxu0 0.0
    %8073 = vmatpush1.msra.mxu0 0.0
    %8074 = vmatprep.subr.mxu0 0.0
    %8075 = vmatpush1.msra.mxu0 0.0
    %8076 = vmatprep.subr.mxu0 0.0
    %8077 = vmatpush1.msra.mxu0 0.0
    %8078 = vmatprep.subr.mxu0 0.0
    %8079 = vmatpush1.msra.mxu0 0.0
    %8080 = vmatprep.subr.mxu0 0.0
    %8081 = vmatpush1.msra.mxu0 0.0
    %8082 = vmatprep.subr.mxu0 0.0
    %8083 = vmatpush1.msra.mxu0 0.0
    %8084 = vmatprep.subr.mxu0 0.0
    %8085 = vmatpush1.msra.mxu0 0.0
    %8086 = vmatprep.subr.mxu0 0.0
    %8087 = vmatpush1.msra.mxu0 0.0
    %8088 = vmatprep.subr.mxu0 0.0
    %8089 = vmatpush1.msra.mxu0 0.0
    %8090 = vmatprep.subr.mxu0 0.0
    %8091 = vmatpush1.msra.mxu0 0.0
    %8092 = vmatprep.subr.mxu0 0.0
    %8093 = vmatpush1.msra.mxu0 0.0
    %8094 = vmatprep.subr.mxu0 0.0
    %8095 = vmatpush1.msra.mxu0 0.0
    %8096 = vmatprep.subr.mxu0 0.0
    %8097 = vmatpush1.msra.mxu0 0.0
    %8098 = vmatprep.subr.mxu0 0.0
    %8099 = vmatpush1.msra.mxu0 0.0
    %8100 = vmatprep.subr.mxu0 0.0
    %8101 = vmatpush1.msra.mxu0 0.0
    %8102 = vmatprep.subr.mxu0 0.0
    %8103 = vmatpush1.msra.mxu0 0.0
    %8104 = vmatprep.subr.mxu0 0.0
    %8105 = vmatpush1.msra.mxu0 0.0
    %8106 = vmatprep.subr.mxu0 0.0
    %8107 = vmatpush1.msra.mxu0 0.0
    %8108 = vmatprep.subr.mxu0 0.0
    %8109 = vmatpush1.msra.mxu0 0.0
    %8110 = vmatprep.mubr.f32.mxu0 0.0
    %8111 = vmatmul.mubr.f32.gmra.mrb[0].mxu0 %v7999
    %v8112 = vpop.f32.mrb[0].mxu0
    %v8113 = vadd.f32 0.0, %v8112
    %v8114 = vpop.f32.mrb[0].mxu0
    %8115 = vmatprep.mubr.f32.mxu0 0.0
    %8116 = vmatmul.mubr.f32.gmra.mrb[0].mxu0 %v8002
    %v8117 = vpop.f32.mrb[0].mxu0
    %v8118 = vadd.f32 0.0, %v8117
    %v8119 = vpop.f32.mrb[0].mxu0
    %8120 = vmatprep.mubr.f32.mxu0 0.0
    %8121 = vmatmul.mubr.f32.gmra.mrb[0].mxu0 %v8005
    %v8122 = vpop.f32.mrb[0].mxu0
    %v8123 = vadd.f32 0.0, %v8122
    %v8124 = vpop.f32.mrb[0].mxu0
    %8125 = vmatprep.mubr.f32.mxu0 0.0
    %8126 = vmatmul.mubr.f32.gmra.mrb[0].mxu0 %v8008
    %v8127 = vpop.f32.mrb[0].mxu0
    %v8128 = vadd.f32 0.0, %v8127
    %v8129 = vpop.f32.mrb[0].mxu0
    %8130 = vmatprep.mubr.f32.mxu0 0.0
    %8131 = vmatmul.mubr.f32.gmra.mrb[0].mxu0 %v8011
    %v8132 = vpop.f32.mrb[0].mxu0
    %v8133 = vadd.f32 0.0, %v8132
    %v8134 = vpop.f32.mrb[0].mxu0
    %8135 = vmatprep.mubr.f32.mxu0 0.0
    %8136 = vmatmul.mubr.f32.gmra.mrb[0].mxu0 %v8014
    %v8137 = vpop.f32.mrb[0].mxu0
    %v8138 = vadd.f32 0.0, %v8137
    %v8139 = vpop.f32.mrb[0].mxu0
    %8140 = vmatprep.mubr.f32.mxu0 0.0
    %8141 = vmatmul.mubr.f32.gmra.mrb[0].mxu0 %v8017
    %v8142 = vpop.f32.mrb[0].mxu0
    %v8143 = vadd.f32 0.0, %v8142
    %v8144 = vpop.f32.mrb[0].mxu0
    %8145 = vmatprep.mubr.f32.mxu0 0.0
    %8146 = vmatmul.mubr.f32.gmra.mrb[0].mxu0 %v8020
    %v8147 = vpop.f32.mrb[0].mxu0
    %v8148 = vadd.f32 0.0, %v8147
    %v8149 = vpop.f32.mrb[0].mxu0
    %8150 = vmatprep.mubr.f32.mxu0 0.0
    %8151 = vmatmul.mubr.f32.gmra.mrb[0].mxu0 %v8023
    %v8152 = vpop.f32.mrb[0].mxu0
    %v8153 = vadd.f32 0.0, %v8152
    %v8154 = vpop.f32.mrb[0].mxu0
    %8155 = vmatprep.mubr.f32.mxu0 0.0
    %8156 = vmatmul.mubr.f32.gmra.mrb[0].mxu0 %v8026
    %v8157 = vpop.f32.mrb[0].mxu0
    %v8158 = vadd.f32 0.0, %v8157
    %v8159 = vpop.f32.mrb[0].mxu0
    %8160 = vmatprep.mubr.f32.mxu0 0.0
    %8161 = vmatmul.mubr.f32.gmra.mrb[0].mxu0 %v8029
    %v8162 = vpop.f32.mrb[0].mxu0
    %v8163 = vadd.f32 0.0, %v8162
    %v8164 = vpop.f32.mrb[0].mxu0
    %8165 = vmatprep.mubr.f32.mxu0 0.0
    %8166 = vmatmul.mubr.f32.gmra.mrb[0].mxu0 %v8032
    %v8167 = vpop.f32.mrb[0].mxu0
    %v8168 = vadd.f32 0.0, %v8167
    %v8169 = vpop.f32.mrb[0].mxu0
    %8170 = vmatprep.mubr.f32.mxu0 0.0
    %8171 = vmatmul.mubr.f32.gmra.mrb[0].mxu0 %v8035
    %v8172 = vpop.f32.mrb[0].mxu0
    %v8173 = vadd.f32 0.0, %v8172
    %v8174 = vpop.f32.mrb[0].mxu0
    %8175 = vmatprep.mubr.f32.mxu0 0.0
    %8176 = vmatmul.mubr.f32.gmra.mrb[0].mxu0 %v8038
    %v8177 = vpop.f32.mrb[0].mxu0
    %v8178 = vadd.f32 0.0, %v8177
    %v8179 = vpop.f32.mrb[0].mxu0
    %8180 = vmatprep.mubr.f32.mxu0 0.0
    %8181 = vmatmul.mubr.f32.gmra.mrb[0].mxu0 %v8041
    %v8182 = vpop.f32.mrb[0].mxu0
    %v8183 = vadd.f32 0.0, %v8182
    %v8184 = vpop.f32.mrb[0].mxu0
    %8185 = vmatprep.mubr.f32.mxu0 0.0
    %8186 = vmatmul.mubr.f32.gmra.mrb[0].mxu0 %v8044
    %v8187 = vpop.f32.mrb[0].mxu0
    %v8188 = vadd.f32 0.0, %v8187
    %v8189 = vpop.f32.mrb[0].mxu0
    %8190 = vdwg.mxu0
    %v8192 = vsel %vm7043, %v7932, 0
    %v8195 = vsel %vm7043, %v7934, 0
    %v8198 = vsel %vm7043, %v7936, 0
    %v8201 = vsel %vm7043, %v7938, 0
    %v8204 = vsel %vm7043, %v7940, 0
    %v8207 = vsel %vm7043, %v7942, 0
    %v8210 = vsel %vm7043, %v7944, 0
    %v8213 = vsel %vm7043, %v7946, 0
    %v8216 = vsel %vm7043, %v7948, 0
    %v8219 = vsel %vm7043, %v7950, 0
    %v8222 = vsel %vm7043, %v7952, 0
    %v8225 = vsel %vm7043, %v7954, 0
    %v8228 = vsel %vm7043, %v7956, 0
    %v8231 = vsel %vm7043, %v7958, 0
    %v8234 = vsel %vm7043, %v7960, 0
    %v8237 = vsel %vm7043, %v7962, 0
    %8239 = vmatprep.subr.mxu0 0.0
    %8240 = vmatpush1.msra.mxu0 %v7963
    %8241 = vmatprep.subr.mxu0 0.0
    %8242 = vmatpush1.msra.mxu0 0.0
    %8243 = vmatprep.subr.mxu0 0.0
    %8244 = vmatpush1.msra.mxu0 0.0
    %8245 = vmatprep.subr.mxu0 0.0
    %8246 = vmatpush1.msra.mxu0 0.0
    %8247 = vmatprep.subr.mxu0 0.0
    %8248 = vmatpush1.msra.mxu0 0.0
    %8249 = vmatprep.subr.mxu0 0.0
    %8250 = vmatpush1.msra.mxu0 0.0
    %8251 = vmatprep.subr.mxu0 0.0
    %8252 = vmatpush1.msra.mxu0 0.0
    %8253 = vmatprep.subr.mxu0 0.0
    %8254 = vmatpush1.msra.mxu0 0.0
    %8255 = vmatprep.subr.mxu0 0.0
    %8256 = vmatpush1.msra.mxu0 0.0
    %8257 = vmatprep.subr.mxu0 0.0
    %8258 = vmatpush1.msra.mxu0 0.0
    %8259 = vmatprep.subr.mxu0 0.0
    %8260 = vmatpush1.msra.mxu0 0.0
    %8261 = vmatprep.subr.mxu0 0.0
    %8262 = vmatpush1.msra.mxu0 0.0
    %8263 = vmatprep.subr.mxu0 0.0
    %8264 = vmatpush1.msra.mxu0 0.0
    %8265 = vmatprep.subr.mxu0 0.0
    %8266 = vmatpush1.msra.mxu0 0.0
    %8267 = vmatprep.subr.mxu0 0.0
    %8268 = vmatpush1.msra.mxu0 0.0
    %8269 = vmatprep.subr.mxu0 0.0
    %8270 = vmatpush1.msra.mxu0 0.0
    %8271 = vmatprep.subr.mxu0 0.0
    %8272 = vmatpush1.msra.mxu0 0.0
    %8273 = vmatprep.subr.mxu0 0.0
    %8274 = vmatpush1.msra.mxu0 0.0
    %8275 = vmatprep.subr.mxu0 0.0
    %8276 = vmatpush1.msra.mxu0 0.0
    %8277 = vmatprep.subr.mxu0 0.0
    %8278 = vmatpush1.msra.mxu0 0.0
    %8279 = vmatprep.subr.mxu0 0.0
    %8280 = vmatpush1.msra.mxu0 0.0
    %8281 = vmatprep.subr.mxu0 0.0
    %8282 = vmatpush1.msra.mxu0 0.0
    %8283 = vmatprep.subr.mxu0 0.0
    %8284 = vmatpush1.msra.mxu0 0.0
    %8285 = vmatprep.subr.mxu0 0.0
    %8286 = vmatpush1.msra.mxu0 0.0
    %8287 = vmatprep.subr.mxu0 0.0
    %8288 = vmatpush1.msra.mxu0 0.0
    %8289 = vmatprep.subr.mxu0 0.0
    %8290 = vmatpush1.msra.mxu0 0.0
    %8291 = vmatprep.subr.mxu0 0.0
    %8292 = vmatpush1.msra.mxu0 0.0
    %8293 = vmatprep.subr.mxu0 0.0
    %8294 = vmatpush1.msra.mxu0 0.0
    %8295 = vmatprep.subr.mxu0 0.0
    %8296 = vmatpush1.msra.mxu0 0.0
    %8297 = vmatprep.subr.mxu0 0.0
    %8298 = vmatpush1.msra.mxu0 0.0
    %8299 = vmatprep.subr.mxu0 0.0
    %8300 = vmatpush1.msra.mxu0 0.0
    %8301 = vmatprep.subr.mxu0 0.0
    %8302 = vmatpush1.msra.mxu0 0.0
    %8303 = vmatprep.mubr.f32.mxu0 0.0
    %8304 = vmatmul.mubr.f32.gmra.mrb[0].mxu0 %v8192
    %v8305 = vpop.f32.mrb[0].mxu0
    %v8306 = vadd.f32 %v8113, %v8305
    %v8307 = vpop.f32.mrb[0].mxu0
    %8308 = vmatprep.mubr.f32.mxu0 0.0
    %8309 = vmatmul.mubr.f32.gmra.mrb[0].mxu0 %v8195
    %v8310 = vpop.f32.mrb[0].mxu0
    %v8311 = vadd.f32 %v8118, %v8310
    %v8312 = vpop.f32.mrb[0].mxu0
    %8313 = vmatprep.mubr.f32.mxu0 0.0
    %8314 = vmatmul.mubr.f32.gmra.mrb[0].mxu0 %v8198
    %v8315 = vpop.f32.mrb[0].mxu0
    %v8316 = vadd.f32 %v8123, %v8315
    %v8317 = vpop.f32.mrb[0].mxu0
    %8318 = vmatprep.mubr.f32.mxu0 0.0
    %8319 = vmatmul.mubr.f32.gmra.mrb[0].mxu0 %v8201
    %v8320 = vpop.f32.mrb[0].mxu0
    %v8321 = vadd.f32 %v8128, %v8320
    %v8322 = vpop.f32.mrb[0].mxu0
    %8323 = vmatprep.mubr.f32.mxu0 0.0
    %8324 = vmatmul.mubr.f32.gmra.mrb[0].mxu0 %v8204
    %v8325 = vpop.f32.mrb[0].mxu0
    %v8326 = vadd.f32 %v8133, %v8325
    %v8327 = vpop.f32.mrb[0].mxu0
    %8328 = vmatprep.mubr.f32.mxu0 0.0
    %8329 = vmatmul.mubr.f32.gmra.mrb[0].mxu0 %v8207
    %v8330 = vpop.f32.mrb[0].mxu0
    %v8331 = vadd.f32 %v8138, %v8330
    %v8332 = vpop.f32.mrb[0].mxu0
    %8333 = vmatprep.mubr.f32.mxu0 0.0
    %8334 = vmatmul.mubr.f32.gmra.mrb[0].mxu0 %v8210
    %v8335 = vpop.f32.mrb[0].mxu0
    %v8336 = vadd.f32 %v8143, %v8335
    %v8337 = vpop.f32.mrb[0].mxu0
    %8338 = vmatprep.mubr.f32.mxu0 0.0
    %8339 = vmatmul.mubr.f32.gmra.mrb[0].mxu0 %v8213
    %v8340 = vpop.f32.mrb[0].mxu0
    %v8341 = vadd.f32 %v8148, %v8340
    %v8342 = vpop.f32.mrb[0].mxu0
    %8343 = vmatprep.mubr.f32.mxu0 0.0
    %8344 = vmatmul.mubr.f32.gmra.mrb[0].mxu0 %v8216
    %v8345 = vpop.f32.mrb[0].mxu0
    %v8346 = vadd.f32 %v8153, %v8345
    %v8347 = vpop.f32.mrb[0].mxu0
    %8348 = vmatprep.mubr.f32.mxu0 0.0
    %8349 = vmatmul.mubr.f32.gmra.mrb[0].mxu0 %v8219
    %v8350 = vpop.f32.mrb[0].mxu0
    %v8351 = vadd.f32 %v8158, %v8350
    %v8352 = vpop.f32.mrb[0].mxu0
    %8353 = vmatprep.mubr.f32.mxu0 0.0
    %8354 = vmatmul.mubr.f32.gmra.mrb[0].mxu0 %v8222
    %v8355 = vpop.f32.mrb[0].mxu0
    %v8356 = vadd.f32 %v8163, %v8355
    %v8357 = vpop.f32.mrb[0].mxu0
    %8358 = vmatprep.mubr.f32.mxu0 0.0
    %8359 = vmatmul.mubr.f32.gmra.mrb[0].mxu0 %v8225
    %v8360 = vpop.f32.mrb[0].mxu0
    %v8361 = vadd.f32 %v8168, %v8360
    %v8362 = vpop.f32.mrb[0].mxu0
    %8363 = vmatprep.mubr.f32.mxu0 0.0
    %8364 = vmatmul.mubr.f32.gmra.mrb[0].mxu0 %v8228
    %v8365 = vpop.f32.mrb[0].mxu0
    %v8366 = vadd.f32 %v8173, %v8365
    %v8367 = vpop.f32.mrb[0].mxu0
    %8368 = vmatprep.mubr.f32.mxu0 0.0
    %8369 = vmatmul.mubr.f32.gmra.mrb[0].mxu0 %v8231
    %v8370 = vpop.f32.mrb[0].mxu0
    %v8371 = vadd.f32 %v8178, %v8370
    %v8372 = vpop.f32.mrb[0].mxu0
    %8373 = vmatprep.mubr.f32.mxu0 0.0
    %8374 = vmatmul.mubr.f32.gmra.mrb[0].mxu0 %v8234
    %v8375 = vpop.f32.mrb[0].mxu0
    %v8376 = vadd.f32 %v8183, %v8375
    %v8377 = vpop.f32.mrb[0].mxu0
    %8378 = vmatprep.mubr.f32.mxu0 0.0
    %8379 = vmatmul.mubr.f32.gmra.mrb[0].mxu0 %v8237
    %v8380 = vpop.f32.mrb[0].mxu0
    %v8381 = vadd.f32 %v8188, %v8380
    %v8382 = vpop.f32.mrb[0].mxu0
    %8383 = vdwg.mxu0
    %s8384 = scalar_lea.vmem [#allocation3], 2
    %v8385 = vld [vmem:[%s8384] ss:$2 sm:$0xff]
    %s8386 = scalar_lea.vmem [#allocation3], 50
    %v8387 = vld [vmem:[%s8386] ss:$2 sm:$0xff]
    %s8388 = scalar_lea.vmem [#allocation3], 98
    %v8389 = vld [vmem:[%s8388] ss:$2 sm:$0xff]
    %s8390 = scalar_lea.vmem [#allocation3], 146
    %v8391 = vld [vmem:[%s8390] ss:$2 sm:$0xff]
    %s8392 = scalar_lea.vmem [#allocation3], 194
    %v8393 = vld [vmem:[%s8392] ss:$2 sm:$0xff]
    %s8394 = scalar_lea.vmem [#allocation3], 242
    %v8395 = vld [vmem:[%s8394] ss:$2 sm:$0xff]
    %s8396 = scalar_lea.vmem [#allocation3], 290
    %v8397 = vld [vmem:[%s8396] ss:$2 sm:$0xff]
    %s8398 = scalar_lea.vmem [#allocation3], 338
    %v8399 = vld [vmem:[%s8398] ss:$2 sm:$0xff]
    %s8400 = scalar_lea.vmem [#allocation3], 434
    %v8401 = vld [vmem:[%s8400] ss:$2 sm:$0xff]
    %s8402 = scalar_lea.vmem [#allocation3], 482
    %v8403 = vld [vmem:[%s8402] ss:$2 sm:$0xff]
    %s8404 = scalar_lea.vmem [#allocation3], 530
    %v8405 = vld [vmem:[%s8404] ss:$2 sm:$0xff]
    %s8406 = scalar_lea.vmem [#allocation3], 578
    %v8407 = vld [vmem:[%s8406] ss:$2 sm:$0xff]
    %s8408 = scalar_lea.vmem [#allocation3], 626
    %v8409 = vld [vmem:[%s8408] ss:$2 sm:$0xff]
    %s8410 = scalar_lea.vmem [#allocation3], 674
    %v8411 = vld [vmem:[%s8410] ss:$2 sm:$0xff]
    %s8412 = scalar_lea.vmem [#allocation3], 722
    %v8413 = vld [vmem:[%s8412] ss:$2 sm:$0xff]
    %s8414 = scalar_lea.vmem [#allocation3], 770
    %v8415 = vld [vmem:[%s8414] ss:$2 sm:$0xff]
    %s8416 = scalar_lea.vmem %s3, 16
    %v8417 = vld [vmem:[%s8416] sm:$0xff]
    %v8419 = vsel %vm7043, %v8385, 0
    %v8422 = vsel %vm7043, %v8387, 0
    %v8425 = vsel %vm7043, %v8389, 0
    %v8428 = vsel %vm7043, %v8391, 0
    %v8431 = vsel %vm7043, %v8393, 0
    %v8434 = vsel %vm7043, %v8395, 0
    %v8437 = vsel %vm7043, %v8397, 0
    %v8440 = vsel %vm7043, %v8399, 0
    %v8443 = vsel %vm7043, %v8401, 0
    %v8446 = vsel %vm7043, %v8403, 0
    %v8449 = vsel %vm7043, %v8405, 0
    %v8452 = vsel %vm7043, %v8407, 0
    %v8455 = vsel %vm7043, %v8409, 0
    %v8458 = vsel %vm7043, %v8411, 0
    %v8461 = vsel %vm7043, %v8413, 0
    %v8464 = vsel %vm7043, %v8415, 0
    %8466 = vmatprep.subr.mxu0 0.0
    %8467 = vmatpush1.msra.mxu0 %v8417
    %8468 = vmatprep.subr.mxu0 0.0
    %8469 = vmatpush1.msra.mxu0 0.0
    %8470 = vmatprep.subr.mxu0 0.0
    %8471 = vmatpush1.msra.mxu0 0.0
    %8472 = vmatprep.subr.mxu0 0.0
    %8473 = vmatpush1.msra.mxu0 0.0
    %8474 = vmatprep.subr.mxu0 0.0
    %8475 = vmatpush1.msra.mxu0 0.0
    %8476 = vmatprep.subr.mxu0 0.0
    %8477 = vmatpush1.msra.mxu0 0.0
    %8478 = vmatprep.subr.mxu0 0.0
    %8479 = vmatpush1.msra.mxu0 0.0
    %8480 = vmatprep.subr.mxu0 0.0
    %8481 = vmatpush1.msra.mxu0 0.0
    %8482 = vmatprep.subr.mxu0 0.0
    %8483 = vmatpush1.msra.mxu0 0.0
    %8484 = vmatprep.subr.mxu0 0.0
    %8485 = vmatpush1.msra.mxu0 0.0
    %8486 = vmatprep.subr.mxu0 0.0
    %8487 = vmatpush1.msra.mxu0 0.0
    %8488 = vmatprep.subr.mxu0 0.0
    %8489 = vmatpush1.msra.mxu0 0.0
    %8490 = vmatprep.subr.mxu0 0.0
    %8491 = vmatpush1.msra.mxu0 0.0
    %8492 = vmatprep.subr.mxu0 0.0
    %8493 = vmatpush1.msra.mxu0 0.0
    %8494 = vmatprep.subr.mxu0 0.0
    %8495 = vmatpush1.msra.mxu0 0.0
    %8496 = vmatprep.subr.mxu0 0.0
    %8497 = vmatpush1.msra.mxu0 0.0
    %8498 = vmatprep.subr.mxu0 0.0
    %8499 = vmatpush1.msra.mxu0 0.0
    %8500 = vmatprep.subr.mxu0 0.0
    %8501 = vmatpush1.msra.mxu0 0.0
    %8502 = vmatprep.subr.mxu0 0.0
    %8503 = vmatpush1.msra.mxu0 0.0
    %8504 = vmatprep.subr.mxu0 0.0
    %8505 = vmatpush1.msra.mxu0 0.0
    %8506 = vmatprep.subr.mxu0 0.0
    %8507 = vmatpush1.msra.mxu0 0.0
    %8508 = vmatprep.subr.mxu0 0.0
    %8509 = vmatpush1.msra.mxu0 0.0
    %8510 = vmatprep.subr.mxu0 0.0
    %8511 = vmatpush1.msra.mxu0 0.0
    %8512 = vmatprep.subr.mxu0 0.0
    %8513 = vmatpush1.msra.mxu0 0.0
    %8514 = vmatprep.subr.mxu0 0.0
    %8515 = vmatpush1.msra.mxu0 0.0
    %8516 = vmatprep.subr.mxu0 0.0
    %8517 = vmatpush1.msra.mxu0 0.0
    %8518 = vmatprep.subr.mxu0 0.0
    %8519 = vmatpush1.msra.mxu0 0.0
    %8520 = vmatprep.subr.mxu0 0.0
    %8521 = vmatpush1.msra.mxu0 0.0
    %8522 = vmatprep.subr.mxu0 0.0
    %8523 = vmatpush1.msra.mxu0 0.0
    %8524 = vmatprep.subr.mxu0 0.0
    %8525 = vmatpush1.msra.mxu0 0.0
    %8526 = vmatprep.subr.mxu0 0.0
    %8527 = vmatpush1.msra.mxu0 0.0
    %8528 = vmatprep.subr.mxu0 0.0
    %8529 = vmatpush1.msra.mxu0 0.0
    %8530 = vmatprep.mubr.f32.mxu0 0.0
    %8531 = vmatmul.mubr.f32.gmra.mrb[0].mxu0 %v8419
    %v8532 = vpop.f32.mrb[0].mxu0
    %v8533 = vadd.f32 0.0, %v8532
    %v8534 = vpop.f32.mrb[0].mxu0
    %8535 = vmatprep.mubr.f32.mxu0 0.0
    %8536 = vmatmul.mubr.f32.gmra.mrb[0].mxu0 %v8422
    %v8537 = vpop.f32.mrb[0].mxu0
    %v8538 = vadd.f32 0.0, %v8537
    %v8539 = vpop.f32.mrb[0].mxu0
    %8540 = vmatprep.mubr.f32.mxu0 0.0
    %8541 = vmatmul.mubr.f32.gmra.mrb[0].mxu0 %v8425
    %v8542 = vpop.f32.mrb[0].mxu0
    %v8543 = vadd.f32 0.0, %v8542
    %v8544 = vpop.f32.mrb[0].mxu0
    %8545 = vmatprep.mubr.f32.mxu0 0.0
    %8546 = vmatmul.mubr.f32.gmra.mrb[0].mxu0 %v8428
    %v8547 = vpop.f32.mrb[0].mxu0
    %v8548 = vadd.f32 0.0, %v8547
    %v8549 = vpop.f32.mrb[0].mxu0
    %8550 = vmatprep.mubr.f32.mxu0 0.0
    %8551 = vmatmul.mubr.f32.gmra.mrb[0].mxu0 %v8431
    %v8552 = vpop.f32.mrb[0].mxu0
    %v8553 = vadd.f32 0.0, %v8552
    %v8554 = vpop.f32.mrb[0].mxu0
    %8555 = vmatprep.mubr.f32.mxu0 0.0
    %8556 = vmatmul.mubr.f32.gmra.mrb[0].mxu0 %v8434
    %v8557 = vpop.f32.mrb[0].mxu0
    %v8558 = vadd.f32 0.0, %v8557
    %v8559 = vpop.f32.mrb[0].mxu0
    %8560 = vmatprep.mubr.f32.mxu0 0.0
    %8561 = vmatmul.mubr.f32.gmra.mrb[0].mxu0 %v8437
    %v8562 = vpop.f32.mrb[0].mxu0
    %v8563 = vadd.f32 0.0, %v8562
    %v8564 = vpop.f32.mrb[0].mxu0
    %8565 = vmatprep.mubr.f32.mxu0 0.0
    %8566 = vmatmul.mubr.f32.gmra.mrb[0].mxu0 %v8440
    %v8567 = vpop.f32.mrb[0].mxu0
    %v8568 = vadd.f32 0.0, %v8567
    %v8569 = vpop.f32.mrb[0].mxu0
    %8570 = vmatprep.mubr.f32.mxu0 0.0
    %8571 = vmatmul.mubr.f32.gmra.mrb[0].mxu0 %v8443
    %v8572 = vpop.f32.mrb[0].mxu0
    %v8573 = vadd.f32 0.0, %v8572
    %v8574 = vpop.f32.mrb[0].mxu0
    %8575 = vmatprep.mubr.f32.mxu0 0.0
    %8576 = vmatmul.mubr.f32.gmra.mrb[0].mxu0 %v8446
    %v8577 = vpop.f32.mrb[0].mxu0
    %v8578 = vadd.f32 0.0, %v8577
    %v8579 = vpop.f32.mrb[0].mxu0
    %8580 = vmatprep.mubr.f32.mxu0 0.0
    %8581 = vmatmul.mubr.f32.gmra.mrb[0].mxu0 %v8449
    %v8582 = vpop.f32.mrb[0].mxu0
    %v8583 = vadd.f32 0.0, %v8582
    %v8584 = vpop.f32.mrb[0].mxu0
    %8585 = vmatprep.mubr.f32.mxu0 0.0
    %8586 = vmatmul.mubr.f32.gmra.mrb[0].mxu0 %v8452
    %v8587 = vpop.f32.mrb[0].mxu0
    %v8588 = vadd.f32 0.0, %v8587
    %v8589 = vpop.f32.mrb[0].mxu0
    %8590 = vmatprep.mubr.f32.mxu0 0.0
    %8591 = vmatmul.mubr.f32.gmra.mrb[0].mxu0 %v8455
    %v8592 = vpop.f32.mrb[0].mxu0
    %v8593 = vadd.f32 0.0, %v8592
    %v8594 = vpop.f32.mrb[0].mxu0
    %8595 = vmatprep.mubr.f32.mxu0 0.0
    %8596 = vmatmul.mubr.f32.gmra.mrb[0].mxu0 %v8458
    %v8597 = vpop.f32.mrb[0].mxu0
    %v8598 = vadd.f32 0.0, %v8597
    %v8599 = vpop.f32.mrb[0].mxu0
    %8600 = vmatprep.mubr.f32.mxu0 0.0
    %8601 = vmatmul.mubr.f32.gmra.mrb[0].mxu0 %v8461
    %v8602 = vpop.f32.mrb[0].mxu0
    %v8603 = vadd.f32 0.0, %v8602
    %v8604 = vpop.f32.mrb[0].mxu0
    %8605 = vmatprep.mubr.f32.mxu0 0.0
    %8606 = vmatmul.mubr.f32.gmra.mrb[0].mxu0 %v8464
    %v8607 = vpop.f32.mrb[0].mxu0
    %v8608 = vadd.f32 0.0, %v8607
    %v8609 = vpop.f32.mrb[0].mxu0
    %8610 = vdwg.mxu0
    %v8611 = vadd.f32 %v8306, %v8533
    %v8612 = vadd.f32 %v8311, %v8538
    %v8613 = vadd.f32 %v8316, %v8543
    %v8614 = vadd.f32 %v8321, %v8548
    %v8615 = vadd.f32 %v8326, %v8553
    %v8616 = vadd.f32 %v8331, %v8558
    %v8617 = vadd.f32 %v8336, %v8563
    %v8618 = vadd.f32 %v8341, %v8568
    %v8619 = vadd.f32 %v8346, %v8573
    %v8620 = vadd.f32 %v8351, %v8578
    %v8621 = vadd.f32 %v8356, %v8583
    %v8622 = vadd.f32 %v8361, %v8588
    %v8623 = vadd.f32 %v8366, %v8593
    %v8624 = vadd.f32 %v8371, %v8598
    %v8625 = vadd.f32 %v8376, %v8603
    %v8626 = vadd.f32 %v8381, %v8608
    %v8627 = vld [vmem:[%s7867] ss:$2 sm:$0xff]
    %s8628 = scalar_lea.vmem %s7867, 48 [#allocation3]
    %v8629 = vld [vmem:[%s8628] ss:$2 sm:$0xff]
    %s8630 = scalar_lea.vmem %s7867, 96 [#allocation3]
    %v8631 = vld [vmem:[%s8630] ss:$2 sm:$0xff]
    %s8632 = scalar_lea.vmem %s7867, 144 [#allocation3]
    %v8633 = vld [vmem:[%s8632] ss:$2 sm:$0xff]
    %s8634 = scalar_lea.vmem %s7867, 192 [#allocation3]
    %v8635 = vld [vmem:[%s8634] ss:$2 sm:$0xff]
    %s8636 = scalar_lea.vmem %s7867, 240 [#allocation3]
    %v8637 = vld [vmem:[%s8636] ss:$2 sm:$0xff]
    %s8638 = scalar_lea.vmem %s7867, 288 [#allocation3]
    %v8639 = vld [vmem:[%s8638] ss:$2 sm:$0xff]
    %s8640 = scalar_lea.vmem %s7867, 336 [#allocation3]
    %v8641 = vld [vmem:[%s8640] ss:$2 sm:$0xff]
    %s8642 = scalar_lea.vmem %s7867, 432 [#allocation3]
    %v8643 = vld [vmem:[%s8642] ss:$2 sm:$0xff]
    %s8644 = scalar_lea.vmem %s7867, 480 [#allocation3]
    %v8645 = vld [vmem:[%s8644] ss:$2 sm:$0xff]
    %s8646 = scalar_lea.vmem %s7867, 528 [#allocation3]
    %v8647 = vld [vmem:[%s8646] ss:$2 sm:$0xff]
    %s8648 = scalar_lea.vmem %s7867, 576 [#allocation3]
    %v8649 = vld [vmem:[%s8648] ss:$2 sm:$0xff]
    %s8650 = scalar_lea.vmem %s7867, 624 [#allocation3]
    %v8651 = vld [vmem:[%s8650] ss:$2 sm:$0xff]
    %s8652 = scalar_lea.vmem %s7867, 672 [#allocation3]
    %v8653 = vld [vmem:[%s8652] ss:$2 sm:$0xff]
    %s8654 = scalar_lea.vmem %s7867, 720 [#allocation3]
    %v8655 = vld [vmem:[%s8654] ss:$2 sm:$0xff]
    %s8656 = scalar_lea.vmem %s7867, 768 [#allocation3]
    %v8657 = vld [vmem:[%s8656] ss:$2 sm:$0xff]
    %s8658 = scalar_lea.vmem %s3, 24
    %v8659 = vld [vmem:[%s8658] sm:$0xff]
    %v8661 = vsel %vm7043, %v8627, 0
    %v8664 = vsel %vm7043, %v8629, 0
    %v8667 = vsel %vm7043, %v8631, 0
    %v8670 = vsel %vm7043, %v8633, 0
    %v8673 = vsel %vm7043, %v8635, 0
    %v8676 = vsel %vm7043, %v8637, 0
    %v8679 = vsel %vm7043, %v8639, 0
    %v8682 = vsel %vm7043, %v8641, 0
    %v8685 = vsel %vm7043, %v8643, 0
    %v8688 = vsel %vm7043, %v8645, 0
    %v8691 = vsel %vm7043, %v8647, 0
    %v8694 = vsel %vm7043, %v8649, 0
    %v8697 = vsel %vm7043, %v8651, 0
    %v8700 = vsel %vm7043, %v8653, 0
    %v8703 = vsel %vm7043, %v8655, 0
    %v8706 = vsel %vm7043, %v8657, 0
    %8708 = vmatprep.subr.mxu0 0.0
    %8709 = vmatpush1.msra.mxu0 %v8659
    %8710 = vmatprep.subr.mxu0 0.0
    %8711 = vmatpush1.msra.mxu0 0.0
    %8712 = vmatprep.subr.mxu0 0.0
    %8713 = vmatpush1.msra.mxu0 0.0
    %8714 = vmatprep.subr.mxu0 0.0
    %8715 = vmatpush1.msra.mxu0 0.0
    %8716 = vmatprep.subr.mxu0 0.0
    %8717 = vmatpush1.msra.mxu0 0.0
    %8718 = vmatprep.subr.mxu0 0.0
    %8719 = vmatpush1.msra.mxu0 0.0
    %8720 = vmatprep.subr.mxu0 0.0
    %8721 = vmatpush1.msra.mxu0 0.0
    %8722 = vmatprep.subr.mxu0 0.0
    %8723 = vmatpush1.msra.mxu0 0.0
    %8724 = vmatprep.subr.mxu0 0.0
    %8725 = vmatpush1.msra.mxu0 0.0
    %8726 = vmatprep.subr.mxu0 0.0
    %8727 = vmatpush1.msra.mxu0 0.0
    %8728 = vmatprep.subr.mxu0 0.0
    %8729 = vmatpush1.msra.mxu0 0.0
    %8730 = vmatprep.subr.mxu0 0.0
    %8731 = vmatpush1.msra.mxu0 0.0
    %8732 = vmatprep.subr.mxu0 0.0
    %8733 = vmatpush1.msra.mxu0 0.0
    %8734 = vmatprep.subr.mxu0 0.0
    %8735 = vmatpush1.msra.mxu0 0.0
    %8736 = vmatprep.subr.mxu0 0.0
    %8737 = vmatpush1.msra.mxu0 0.0
    %8738 = vmatprep.subr.mxu0 0.0
    %8739 = vmatpush1.msra.mxu0 0.0
    %8740 = vmatprep.subr.mxu0 0.0
    %8741 = vmatpush1.msra.mxu0 0.0
    %8742 = vmatprep.subr.mxu0 0.0
    %8743 = vmatpush1.msra.mxu0 0.0
    %8744 = vmatprep.subr.mxu0 0.0
    %8745 = vmatpush1.msra.mxu0 0.0
    %8746 = vmatprep.subr.mxu0 0.0
    %8747 = vmatpush1.msra.mxu0 0.0
    %8748 = vmatprep.subr.mxu0 0.0
    %8749 = vmatpush1.msra.mxu0 0.0
    %8750 = vmatprep.subr.mxu0 0.0
    %8751 = vmatpush1.msra.mxu0 0.0
    %8752 = vmatprep.subr.mxu0 0.0
    %8753 = vmatpush1.msra.mxu0 0.0
    %8754 = vmatprep.subr.mxu0 0.0
    %8755 = vmatpush1.msra.mxu0 0.0
    %8756 = vmatprep.subr.mxu0 0.0
    %8757 = vmatpush1.msra.mxu0 0.0
    %8758 = vmatprep.subr.mxu0 0.0
    %8759 = vmatpush1.msra.mxu0 0.0
    %8760 = vmatprep.subr.mxu0 0.0
    %8761 = vmatpush1.msra.mxu0 0.0
    %8762 = vmatprep.subr.mxu0 0.0
    %8763 = vmatpush1.msra.mxu0 0.0
    %8764 = vmatprep.subr.mxu0 0.0
    %8765 = vmatpush1.msra.mxu0 0.0
    %8766 = vmatprep.subr.mxu0 0.0
    %8767 = vmatpush1.msra.mxu0 0.0
    %8768 = vmatprep.subr.mxu0 0.0
    %8769 = vmatpush1.msra.mxu0 0.0
    %8770 = vmatprep.subr.mxu0 0.0
    %8771 = vmatpush1.msra.mxu0 0.0
    %8772 = vmatprep.mubr.f32.mxu0 0.0
    %8773 = vmatmul.mubr.f32.gmra.mrb[0].mxu0 %v8661
    %v8774 = vpop.f32.mrb[0].mxu0
    %v8775 = vadd.f32 0.0, %v8774
    %v8776 = vpop.f32.mrb[0].mxu0
    %8777 = vmatprep.mubr.f32.mxu0 0.0
    %8778 = vmatmul.mubr.f32.gmra.mrb[0].mxu0 %v8664
    %v8779 = vpop.f32.mrb[0].mxu0
    %v8780 = vadd.f32 0.0, %v8779
    %v8781 = vpop.f32.mrb[0].mxu0
    %8782 = vmatprep.mubr.f32.mxu0 0.0
    %8783 = vmatmul.mubr.f32.gmra.mrb[0].mxu0 %v8667
    %v8784 = vpop.f32.mrb[0].mxu0
    %v8785 = vadd.f32 0.0, %v8784
    %v8786 = vpop.f32.mrb[0].mxu0
    %8787 = vmatprep.mubr.f32.mxu0 0.0
    %8788 = vmatmul.mubr.f32.gmra.mrb[0].mxu0 %v8670
    %v8789 = vpop.f32.mrb[0].mxu0
    %v8790 = vadd.f32 0.0, %v8789
    %v8791 = vpop.f32.mrb[0].mxu0
    %8792 = vmatprep.mubr.f32.mxu0 0.0
    %8793 = vmatmul.mubr.f32.gmra.mrb[0].mxu0 %v8673
    %v8794 = vpop.f32.mrb[0].mxu0
    %v8795 = vadd.f32 0.0, %v8794
    %v8796 = vpop.f32.mrb[0].mxu0
    %8797 = vmatprep.mubr.f32.mxu0 0.0
    %8798 = vmatmul.mubr.f32.gmra.mrb[0].mxu0 %v8676
    %v8799 = vpop.f32.mrb[0].mxu0
    %v8800 = vadd.f32 0.0, %v8799
    %v8801 = vpop.f32.mrb[0].mxu0
    %8802 = vmatprep.mubr.f32.mxu0 0.0
    %8803 = vmatmul.mubr.f32.gmra.mrb[0].mxu0 %v8679
    %v8804 = vpop.f32.mrb[0].mxu0
    %v8805 = vadd.f32 0.0, %v8804
    %v8806 = vpop.f32.mrb[0].mxu0
    %8807 = vmatprep.mubr.f32.mxu0 0.0
    %8808 = vmatmul.mubr.f32.gmra.mrb[0].mxu0 %v8682
    %v8809 = vpop.f32.mrb[0].mxu0
    %v8810 = vadd.f32 0.0, %v8809
    %v8811 = vpop.f32.mrb[0].mxu0
    %8812 = vmatprep.mubr.f32.mxu0 0.0
    %8813 = vmatmul.mubr.f32.gmra.mrb[0].mxu0 %v8685
    %v8814 = vpop.f32.mrb[0].mxu0
    %v8815 = vadd.f32 0.0, %v8814
    %v8816 = vpop.f32.mrb[0].mxu0
    %8817 = vmatprep.mubr.f32.mxu0 0.0
    %8818 = vmatmul.mubr.f32.gmra.mrb[0].mxu0 %v8688
    %v8819 = vpop.f32.mrb[0].mxu0
    %v8820 = vadd.f32 0.0, %v8819
    %v8821 = vpop.f32.mrb[0].mxu0
    %8822 = vmatprep.mubr.f32.mxu0 0.0
    %8823 = vmatmul.mubr.f32.gmra.mrb[0].mxu0 %v8691
    %v8824 = vpop.f32.mrb[0].mxu0
    %v8825 = vadd.f32 0.0, %v8824
    %v8826 = vpop.f32.mrb[0].mxu0
    %8827 = vmatprep.mubr.f32.mxu0 0.0
    %8828 = vmatmul.mubr.f32.gmra.mrb[0].mxu0 %v8694
    %v8829 = vpop.f32.mrb[0].mxu0
    %v8830 = vadd.f32 0.0, %v8829
    %v8831 = vpop.f32.mrb[0].mxu0
    %8832 = vmatprep.mubr.f32.mxu0 0.0
    %8833 = vmatmul.mubr.f32.gmra.mrb[0].mxu0 %v8697
    %v8834 = vpop.f32.mrb[0].mxu0
    %v8835 = vadd.f32 0.0, %v8834
    %v8836 = vpop.f32.mrb[0].mxu0
    %8837 = vmatprep.mubr.f32.mxu0 0.0
    %8838 = vmatmul.mubr.f32.gmra.mrb[0].mxu0 %v8700
    %v8839 = vpop.f32.mrb[0].mxu0
    %v8840 = vadd.f32 0.0, %v8839
    %v8841 = vpop.f32.mrb[0].mxu0
    %8842 = vmatprep.mubr.f32.mxu0 0.0
    %8843 = vmatmul.mubr.f32.gmra.mrb[0].mxu0 %v8703
    %v8844 = vpop.f32.mrb[0].mxu0
    %v8845 = vadd.f32 0.0, %v8844
    %v8846 = vpop.f32.mrb[0].mxu0
    %8847 = vmatprep.mubr.f32.mxu0 0.0
    %8848 = vmatmul.mubr.f32.gmra.mrb[0].mxu0 %v8706
    %v8849 = vpop.f32.mrb[0].mxu0
    %v8850 = vadd.f32 0.0, %v8849
    %v8851 = vpop.f32.mrb[0].mxu0
    %8852 = vdwg.mxu0
    %v8853 = vadd.f32 %v8611, %v8775
    %v8854 = vadd.f32 %v8612, %v8780
    %v8855 = vadd.f32 %v8613, %v8785
    %v8856 = vadd.f32 %v8614, %v8790
    %v8857 = vadd.f32 %v8615, %v8795
    %v8858 = vadd.f32 %v8616, %v8800
    %v8859 = vadd.f32 %v8617, %v8805
    %v8860 = vadd.f32 %v8618, %v8810
    %v8861 = vadd.f32 %v8619, %v8815
    %v8862 = vadd.f32 %v8620, %v8820
    %v8863 = vadd.f32 %v8621, %v8825
    %v8864 = vadd.f32 %v8622, %v8830
    %v8865 = vadd.f32 %v8623, %v8835
    %v8866 = vadd.f32 %v8624, %v8840
    %v8867 = vadd.f32 %v8625, %v8845
    %v8868 = vadd.f32 %v8626, %v8850
    %s8869 = scalar_lea.vmem %s7867, 1 [#allocation3]
    %v8870 = vld [vmem:[%s8869] ss:$2 sm:$0xff]
    %s8871 = scalar_lea.vmem %s7867, 49 [#allocation3]
    %v8872 = vld [vmem:[%s8871] ss:$2 sm:$0xff]
    %s8873 = scalar_lea.vmem %s7867, 97 [#allocation3]
    %v8874 = vld [vmem:[%s8873] ss:$2 sm:$0xff]
    %s8875 = scalar_lea.vmem %s7867, 145 [#allocation3]
    %v8876 = vld [vmem:[%s8875] ss:$2 sm:$0xff]
    %s8877 = scalar_lea.vmem %s7867, 193 [#allocation3]
    %v8878 = vld [vmem:[%s8877] ss:$2 sm:$0xff]
    %s8879 = scalar_lea.vmem %s7867, 241 [#allocation3]
    %v8880 = vld [vmem:[%s8879] ss:$2 sm:$0xff]
    %s8881 = scalar_lea.vmem %s7867, 289 [#allocation3]
    %v8882 = vld [vmem:[%s8881] ss:$2 sm:$0xff]
    %s8883 = scalar_lea.vmem %s7867, 337 [#allocation3]
    %v8884 = vld [vmem:[%s8883] ss:$2 sm:$0xff]
    %s8885 = scalar_lea.vmem %s7867, 433 [#allocation3]
    %v8886 = vld [vmem:[%s8885] ss:$2 sm:$0xff]
    %s8887 = scalar_lea.vmem %s7867, 481 [#allocation3]
    %v8888 = vld [vmem:[%s8887] ss:$2 sm:$0xff]
    %s8889 = scalar_lea.vmem %s7867, 529 [#allocation3]
    %v8890 = vld [vmem:[%s8889] ss:$2 sm:$0xff]
    %s8891 = scalar_lea.vmem %s7867, 577 [#allocation3]
    %v8892 = vld [vmem:[%s8891] ss:$2 sm:$0xff]
    %s8893 = scalar_lea.vmem %s7867, 625 [#allocation3]
    %v8894 = vld [vmem:[%s8893] ss:$2 sm:$0xff]
    %s8895 = scalar_lea.vmem %s7867, 673 [#allocation3]
    %v8896 = vld [vmem:[%s8895] ss:$2 sm:$0xff]
    %s8897 = scalar_lea.vmem %s7867, 721 [#allocation3]
    %v8898 = vld [vmem:[%s8897] ss:$2 sm:$0xff]
    %s8899 = scalar_lea.vmem %s7867, 769 [#allocation3]
    %v8900 = vld [vmem:[%s8899] ss:$2 sm:$0xff]
    %s8901 = scalar_lea.vmem %s3, 32
    %v8902 = vld [vmem:[%s8901] sm:$0xff]
    %v8904 = vsel %vm7043, %v8870, 0
    %v8907 = vsel %vm7043, %v8872, 0
    %v8910 = vsel %vm7043, %v8874, 0
    %v8913 = vsel %vm7043, %v8876, 0
    %v8916 = vsel %vm7043, %v8878, 0
    %v8919 = vsel %vm7043, %v8880, 0
    %v8922 = vsel %vm7043, %v8882, 0
    %v8925 = vsel %vm7043, %v8884, 0
    %v8928 = vsel %vm7043, %v8886, 0
    %v8931 = vsel %vm7043, %v8888, 0
    %v8934 = vsel %vm7043, %v8890, 0
    %v8937 = vsel %vm7043, %v8892, 0
    %v8940 = vsel %vm7043, %v8894, 0
    %v8943 = vsel %vm7043, %v8896, 0
    %v8946 = vsel %vm7043, %v8898, 0
    %v8949 = vsel %vm7043, %v8900, 0
    %8951 = vmatprep.subr.mxu0 0.0
    %8952 = vmatpush1.msra.mxu0 %v8902
    %8953 = vmatprep.subr.mxu0 0.0
    %8954 = vmatpush1.msra.mxu0 0.0
    %8955 = vmatprep.subr.mxu0 0.0
    %8956 = vmatpush1.msra.mxu0 0.0
    %8957 = vmatprep.subr.mxu0 0.0
    %8958 = vmatpush1.msra.mxu0 0.0
    %8959 = vmatprep.subr.mxu0 0.0
    %8960 = vmatpush1.msra.mxu0 0.0
    %8961 = vmatprep.subr.mxu0 0.0
    %8962 = vmatpush1.msra.mxu0 0.0
    %8963 = vmatprep.subr.mxu0 0.0
    %8964 = vmatpush1.msra.mxu0 0.0
    %8965 = vmatprep.subr.mxu0 0.0
    %8966 = vmatpush1.msra.mxu0 0.0
    %8967 = vmatprep.subr.mxu0 0.0
    %8968 = vmatpush1.msra.mxu0 0.0
    %8969 = vmatprep.subr.mxu0 0.0
    %8970 = vmatpush1.msra.mxu0 0.0
    %8971 = vmatprep.subr.mxu0 0.0
    %8972 = vmatpush1.msra.mxu0 0.0
    %8973 = vmatprep.subr.mxu0 0.0
    %8974 = vmatpush1.msra.mxu0 0.0
    %8975 = vmatprep.subr.mxu0 0.0
    %8976 = vmatpush1.msra.mxu0 0.0
    %8977 = vmatprep.subr.mxu0 0.0
    %8978 = vmatpush1.msra.mxu0 0.0
    %8979 = vmatprep.subr.mxu0 0.0
    %8980 = vmatpush1.msra.mxu0 0.0
    %8981 = vmatprep.subr.mxu0 0.0
    %8982 = vmatpush1.msra.mxu0 0.0
    %8983 = vmatprep.subr.mxu0 0.0
    %8984 = vmatpush1.msra.mxu0 0.0
    %8985 = vmatprep.subr.mxu0 0.0
    %8986 = vmatpush1.msra.mxu0 0.0
    %8987 = vmatprep.subr.mxu0 0.0
    %8988 = vmatpush1.msra.mxu0 0.0
    %8989 = vmatprep.subr.mxu0 0.0
    %8990 = vmatpush1.msra.mxu0 0.0
    %8991 = vmatprep.subr.mxu0 0.0
    %8992 = vmatpush1.msra.mxu0 0.0
    %8993 = vmatprep.subr.mxu0 0.0
    %8994 = vmatpush1.msra.mxu0 0.0
    %8995 = vmatprep.subr.mxu0 0.0
    %8996 = vmatpush1.msra.mxu0 0.0
    %8997 = vmatprep.subr.mxu0 0.0
    %8998 = vmatpush1.msra.mxu0 0.0
    %8999 = vmatprep.subr.mxu0 0.0
    %9000 = vmatpush1.msra.mxu0 0.0
    %9001 = vmatprep.subr.mxu0 0.0
    %9002 = vmatpush1.msra.mxu0 0.0
    %9003 = vmatprep.subr.mxu0 0.0
    %9004 = vmatpush1.msra.mxu0 0.0
    %9005 = vmatprep.subr.mxu0 0.0
    %9006 = vmatpush1.msra.mxu0 0.0
    %9007 = vmatprep.subr.mxu0 0.0
    %9008 = vmatpush1.msra.mxu0 0.0
    %9009 = vmatprep.subr.mxu0 0.0
    %9010 = vmatpush1.msra.mxu0 0.0
    %9011 = vmatprep.subr.mxu0 0.0
    %9012 = vmatpush1.msra.mxu0 0.0
    %9013 = vmatprep.subr.mxu0 0.0
    %9014 = vmatpush1.msra.mxu0 0.0
    %9015 = vmatprep.mubr.f32.mxu0 0.0
    %9016 = vmatmul.mubr.f32.gmra.mrb[0].mxu0 %v8904
    %v9017 = vpop.f32.mrb[0].mxu0
    %v9018 = vadd.f32 0.0, %v9017
    %v9019 = vpop.f32.mrb[0].mxu0
    %9020 = vmatprep.mubr.f32.mxu0 0.0
    %9021 = vmatmul.mubr.f32.gmra.mrb[0].mxu0 %v8907
    %v9022 = vpop.f32.mrb[0].mxu0
    %v9023 = vadd.f32 0.0, %v9022
    %v9024 = vpop.f32.mrb[0].mxu0
    %9025 = vmatprep.mubr.f32.mxu0 0.0
    %9026 = vmatmul.mubr.f32.gmra.mrb[0].mxu0 %v8910
    %v9027 = vpop.f32.mrb[0].mxu0
    %v9028 = vadd.f32 0.0, %v9027
    %v9029 = vpop.f32.mrb[0].mxu0
    %9030 = vmatprep.mubr.f32.mxu0 0.0
    %9031 = vmatmul.mubr.f32.gmra.mrb[0].mxu0 %v8913
    %v9032 = vpop.f32.mrb[0].mxu0
    %v9033 = vadd.f32 0.0, %v9032
    %v9034 = vpop.f32.mrb[0].mxu0
    %9035 = vmatprep.mubr.f32.mxu0 0.0
    %9036 = vmatmul.mubr.f32.gmra.mrb[0].mxu0 %v8916
    %v9037 = vpop.f32.mrb[0].mxu0
    %v9038 = vadd.f32 0.0, %v9037
    %v9039 = vpop.f32.mrb[0].mxu0
    %9040 = vmatprep.mubr.f32.mxu0 0.0
    %9041 = vmatmul.mubr.f32.gmra.mrb[0].mxu0 %v8919
    %v9042 = vpop.f32.mrb[0].mxu0
    %v9043 = vadd.f32 0.0, %v9042
    %v9044 = vpop.f32.mrb[0].mxu0
    %9045 = vmatprep.mubr.f32.mxu0 0.0
    %9046 = vmatmul.mubr.f32.gmra.mrb[0].mxu0 %v8922
    %v9047 = vpop.f32.mrb[0].mxu0
    %v9048 = vadd.f32 0.0, %v9047
    %v9049 = vpop.f32.mrb[0].mxu0
    %9050 = vmatprep.mubr.f32.mxu0 0.0
    %9051 = vmatmul.mubr.f32.gmra.mrb[0].mxu0 %v8925
    %v9052 = vpop.f32.mrb[0].mxu0
    %v9053 = vadd.f32 0.0, %v9052
    %v9054 = vpop.f32.mrb[0].mxu0
    %9055 = vmatprep.mubr.f32.mxu0 0.0
    %9056 = vmatmul.mubr.f32.gmra.mrb[0].mxu0 %v8928
    %v9057 = vpop.f32.mrb[0].mxu0
    %v9058 = vadd.f32 0.0, %v9057
    %v9059 = vpop.f32.mrb[0].mxu0
    %9060 = vmatprep.mubr.f32.mxu0 0.0
    %9061 = vmatmul.mubr.f32.gmra.mrb[0].mxu0 %v8931
    %v9062 = vpop.f32.mrb[0].mxu0
    %v9063 = vadd.f32 0.0, %v9062
    %v9064 = vpop.f32.mrb[0].mxu0
    %9065 = vmatprep.mubr.f32.mxu0 0.0
    %9066 = vmatmul.mubr.f32.gmra.mrb[0].mxu0 %v8934
    %v9067 = vpop.f32.mrb[0].mxu0
    %v9068 = vadd.f32 0.0, %v9067
    %v9069 = vpop.f32.mrb[0].mxu0
    %9070 = vmatprep.mubr.f32.mxu0 0.0
    %9071 = vmatmul.mubr.f32.gmra.mrb[0].mxu0 %v8937
    %v9072 = vpop.f32.mrb[0].mxu0
    %v9073 = vadd.f32 0.0, %v9072
    %v9074 = vpop.f32.mrb[0].mxu0
    %9075 = vmatprep.mubr.f32.mxu0 0.0
    %9076 = vmatmul.mubr.f32.gmra.mrb[0].mxu0 %v8940
    %v9077 = vpop.f32.mrb[0].mxu0
    %v9078 = vadd.f32 0.0, %v9077
    %v9079 = vpop.f32.mrb[0].mxu0
    %9080 = vmatprep.mubr.f32.mxu0 0.0
    %9081 = vmatmul.mubr.f32.gmra.mrb[0].mxu0 %v8943
    %v9082 = vpop.f32.mrb[0].mxu0
    %v9083 = vadd.f32 0.0, %v9082
    %v9084 = vpop.f32.mrb[0].mxu0
    %9085 = vmatprep.mubr.f32.mxu0 0.0
    %9086 = vmatmul.mubr.f32.gmra.mrb[0].mxu0 %v8946
    %v9087 = vpop.f32.mrb[0].mxu0
    %v9088 = vadd.f32 0.0, %v9087
    %v9089 = vpop.f32.mrb[0].mxu0
    %9090 = vmatprep.mubr.f32.mxu0 0.0
    %9091 = vmatmul.mubr.f32.gmra.mrb[0].mxu0 %v8949
    %v9092 = vpop.f32.mrb[0].mxu0
    %v9093 = vadd.f32 0.0, %v9092
    %v9094 = vpop.f32.mrb[0].mxu0
    %9095 = vdwg.mxu0
    %v9096 = vadd.f32 %v8853, %v9018
    %v9097 = vadd.f32 %v8854, %v9023
    %v9098 = vadd.f32 %v8855, %v9028
    %v9099 = vadd.f32 %v8856, %v9033
    %v9100 = vadd.f32 %v8857, %v9038
    %v9101 = vadd.f32 %v8858, %v9043
    %v9102 = vadd.f32 %v8859, %v9048
    %v9103 = vadd.f32 %v8860, %v9053
    %v9104 = vadd.f32 %v8861, %v9058
    %v9105 = vadd.f32 %v8862, %v9063
    %v9106 = vadd.f32 %v8863, %v9068
    %v9107 = vadd.f32 %v8864, %v9073
    %v9108 = vadd.f32 %v8865, %v9078
    %v9109 = vadd.f32 %v8866, %v9083
    %v9110 = vadd.f32 %v8867, %v9088
    %v9111 = vadd.f32 %v8868, %v9093
    %s9112 = scalar_lea.vmem %s7867, 2 [#allocation3]
    %v9113 = vld [vmem:[%s9112] ss:$2 sm:$0xff]
    %s9114 = scalar_lea.vmem %s7867, 50 [#allocation3]
    %v9115 = vld [vmem:[%s9114] ss:$2 sm:$0xff]
    %s9116 = scalar_lea.vmem %s7867, 98 [#allocation3]
    %v9117 = vld [vmem:[%s9116] ss:$2 sm:$0xff]
    %s9118 = scalar_lea.vmem %s7867, 146 [#allocation3]
    %v9119 = vld [vmem:[%s9118] ss:$2 sm:$0xff]
    %s9120 = scalar_lea.vmem %s7867, 194 [#allocation3]
    %v9121 = vld [vmem:[%s9120] ss:$2 sm:$0xff]
    %s9122 = scalar_lea.vmem %s7867, 242 [#allocation3]
    %v9123 = vld [vmem:[%s9122] ss:$2 sm:$0xff]
    %s9124 = scalar_lea.vmem %s7867, 290 [#allocation3]
    %v9125 = vld [vmem:[%s9124] ss:$2 sm:$0xff]
    %s9126 = scalar_lea.vmem %s7867, 338 [#allocation3]
    %v9127 = vld [vmem:[%s9126] ss:$2 sm:$0xff]
    %s9128 = scalar_lea.vmem %s7867, 434 [#allocation3]
    %v9129 = vld [vmem:[%s9128] ss:$2 sm:$0xff]
    %s9130 = scalar_lea.vmem %s7867, 482 [#allocation3]
    %v9131 = vld [vmem:[%s9130] ss:$2 sm:$0xff]
    %s9132 = scalar_lea.vmem %s7867, 530 [#allocation3]
    %v9133 = vld [vmem:[%s9132] ss:$2 sm:$0xff]
    %s9134 = scalar_lea.vmem %s7867, 578 [#allocation3]
    %v9135 = vld [vmem:[%s9134] ss:$2 sm:$0xff]
    %s9136 = scalar_lea.vmem %s7867, 626 [#allocation3]
    %v9137 = vld [vmem:[%s9136] ss:$2 sm:$0xff]
    %s9138 = scalar_lea.vmem %s7867, 674 [#allocation3]
    %v9139 = vld [vmem:[%s9138] ss:$2 sm:$0xff]
    %s9140 = scalar_lea.vmem %s7867, 722 [#allocation3]
    %v9141 = vld [vmem:[%s9140] ss:$2 sm:$0xff]
    %s9142 = scalar_lea.vmem %s7867, 770 [#allocation3]
    %v9143 = vld [vmem:[%s9142] ss:$2 sm:$0xff]
    %s9144 = scalar_lea.vmem %s3, 40
    %v9145 = vld [vmem:[%s9144] sm:$0xff]
    %v9147 = vsel %vm7043, %v9113, 0
    %v9150 = vsel %vm7043, %v9115, 0
    %v9153 = vsel %vm7043, %v9117, 0
    %v9156 = vsel %vm7043, %v9119, 0
    %v9159 = vsel %vm7043, %v9121, 0
    %v9162 = vsel %vm7043, %v9123, 0
    %v9165 = vsel %vm7043, %v9125, 0
    %v9168 = vsel %vm7043, %v9127, 0
    %v9171 = vsel %vm7043, %v9129, 0
    %v9174 = vsel %vm7043, %v9131, 0
    %v9177 = vsel %vm7043, %v9133, 0
    %v9180 = vsel %vm7043, %v9135, 0
    %v9183 = vsel %vm7043, %v9137, 0
    %v9186 = vsel %vm7043, %v9139, 0
    %v9189 = vsel %vm7043, %v9141, 0
    %v9192 = vsel %vm7043, %v9143, 0
    %9194 = vmatprep.subr.mxu0 0.0
    %9195 = vmatpush1.msra.mxu0 %v9145
    %9196 = vmatprep.subr.mxu0 0.0
    %9197 = vmatpush1.msra.mxu0 0.0
    %9198 = vmatprep.subr.mxu0 0.0
    %9199 = vmatpush1.msra.mxu0 0.0
    %9200 = vmatprep.subr.mxu0 0.0
    %9201 = vmatpush1.msra.mxu0 0.0
    %9202 = vmatprep.subr.mxu0 0.0
    %9203 = vmatpush1.msra.mxu0 0.0
    %9204 = vmatprep.subr.mxu0 0.0
    %9205 = vmatpush1.msra.mxu0 0.0
    %9206 = vmatprep.subr.mxu0 0.0
    %9207 = vmatpush1.msra.mxu0 0.0
    %9208 = vmatprep.subr.mxu0 0.0
    %9209 = vmatpush1.msra.mxu0 0.0
    %9210 = vmatprep.subr.mxu0 0.0
    %9211 = vmatpush1.msra.mxu0 0.0
    %9212 = vmatprep.subr.mxu0 0.0
    %9213 = vmatpush1.msra.mxu0 0.0
    %9214 = vmatprep.subr.mxu0 0.0
    %9215 = vmatpush1.msra.mxu0 0.0
    %9216 = vmatprep.subr.mxu0 0.0
    %9217 = vmatpush1.msra.mxu0 0.0
    %9218 = vmatprep.subr.mxu0 0.0
    %9219 = vmatpush1.msra.mxu0 0.0
    %9220 = vmatprep.subr.mxu0 0.0
    %9221 = vmatpush1.msra.mxu0 0.0
    %9222 = vmatprep.subr.mxu0 0.0
    %9223 = vmatpush1.msra.mxu0 0.0
    %9224 = vmatprep.subr.mxu0 0.0
    %9225 = vmatpush1.msra.mxu0 0.0
    %9226 = vmatprep.subr.mxu0 0.0
    %9227 = vmatpush1.msra.mxu0 0.0
    %9228 = vmatprep.subr.mxu0 0.0
    %9229 = vmatpush1.msra.mxu0 0.0
    %9230 = vmatprep.subr.mxu0 0.0
    %9231 = vmatpush1.msra.mxu0 0.0
    %9232 = vmatprep.subr.mxu0 0.0
    %9233 = vmatpush1.msra.mxu0 0.0
    %9234 = vmatprep.subr.mxu0 0.0
    %9235 = vmatpush1.msra.mxu0 0.0
    %9236 = vmatprep.subr.mxu0 0.0
    %9237 = vmatpush1.msra.mxu0 0.0
    %9238 = vmatprep.subr.mxu0 0.0
    %9239 = vmatpush1.msra.mxu0 0.0
    %9240 = vmatprep.subr.mxu0 0.0
    %9241 = vmatpush1.msra.mxu0 0.0
    %9242 = vmatprep.subr.mxu0 0.0
    %9243 = vmatpush1.msra.mxu0 0.0
    %9244 = vmatprep.subr.mxu0 0.0
    %9245 = vmatpush1.msra.mxu0 0.0
    %9246 = vmatprep.subr.mxu0 0.0
    %9247 = vmatpush1.msra.mxu0 0.0
    %9248 = vmatprep.subr.mxu0 0.0
    %9249 = vmatpush1.msra.mxu0 0.0
    %9250 = vmatprep.subr.mxu0 0.0
    %9251 = vmatpush1.msra.mxu0 0.0
    %9252 = vmatprep.subr.mxu0 0.0
    %9253 = vmatpush1.msra.mxu0 0.0
    %9254 = vmatprep.subr.mxu0 0.0
    %9255 = vmatpush1.msra.mxu0 0.0
    %9256 = vmatprep.subr.mxu0 0.0
    %9257 = vmatpush1.msra.mxu0 0.0
    %9258 = vmatprep.mubr.f32.mxu0 0.0
    %9259 = vmatmul.mubr.f32.gmra.mrb[0].mxu0 %v9147
    %v9260 = vpop.f32.mrb[0].mxu0
    %v9261 = vadd.f32 0.0, %v9260
    %v9262 = vpop.f32.mrb[0].mxu0
    %9263 = vmatprep.mubr.f32.mxu0 0.0
    %9264 = vmatmul.mubr.f32.gmra.mrb[0].mxu0 %v9150
    %v9265 = vpop.f32.mrb[0].mxu0
    %v9266 = vadd.f32 0.0, %v9265
    %v9267 = vpop.f32.mrb[0].mxu0
    %9268 = vmatprep.mubr.f32.mxu0 0.0
    %9269 = vmatmul.mubr.f32.gmra.mrb[0].mxu0 %v9153
    %v9270 = vpop.f32.mrb[0].mxu0
    %v9271 = vadd.f32 0.0, %v9270
    %v9272 = vpop.f32.mrb[0].mxu0
    %9273 = vmatprep.mubr.f32.mxu0 0.0
    %9274 = vmatmul.mubr.f32.gmra.mrb[0].mxu0 %v9156
    %v9275 = vpop.f32.mrb[0].mxu0
    %v9276 = vadd.f32 0.0, %v9275
    %v9277 = vpop.f32.mrb[0].mxu0
    %9278 = vmatprep.mubr.f32.mxu0 0.0
    %9279 = vmatmul.mubr.f32.gmra.mrb[0].mxu0 %v9159
    %v9280 = vpop.f32.mrb[0].mxu0
    %v9281 = vadd.f32 0.0, %v9280
    %v9282 = vpop.f32.mrb[0].mxu0
    %9283 = vmatprep.mubr.f32.mxu0 0.0
    %9284 = vmatmul.mubr.f32.gmra.mrb[0].mxu0 %v9162
    %v9285 = vpop.f32.mrb[0].mxu0
    %v9286 = vadd.f32 0.0, %v9285
    %v9287 = vpop.f32.mrb[0].mxu0
    %9288 = vmatprep.mubr.f32.mxu0 0.0
    %9289 = vmatmul.mubr.f32.gmra.mrb[0].mxu0 %v9165
    %v9290 = vpop.f32.mrb[0].mxu0
    %v9291 = vadd.f32 0.0, %v9290
    %v9292 = vpop.f32.mrb[0].mxu0
    %9293 = vmatprep.mubr.f32.mxu0 0.0
    %9294 = vmatmul.mubr.f32.gmra.mrb[0].mxu0 %v9168
    %v9295 = vpop.f32.mrb[0].mxu0
    %v9296 = vadd.f32 0.0, %v9295
    %v9297 = vpop.f32.mrb[0].mxu0
    %9298 = vmatprep.mubr.f32.mxu0 0.0
    %9299 = vmatmul.mubr.f32.gmra.mrb[0].mxu0 %v9171
    %v9300 = vpop.f32.mrb[0].mxu0
    %v9301 = vadd.f32 0.0, %v9300
    %v9302 = vpop.f32.mrb[0].mxu0
    %9303 = vmatprep.mubr.f32.mxu0 0.0
    %9304 = vmatmul.mubr.f32.gmra.mrb[0].mxu0 %v9174
    %v9305 = vpop.f32.mrb[0].mxu0
    %v9306 = vadd.f32 0.0, %v9305
    %v9307 = vpop.f32.mrb[0].mxu0
    %9308 = vmatprep.mubr.f32.mxu0 0.0
    %9309 = vmatmul.mubr.f32.gmra.mrb[0].mxu0 %v9177
    %v9310 = vpop.f32.mrb[0].mxu0
    %v9311 = vadd.f32 0.0, %v9310
    %v9312 = vpop.f32.mrb[0].mxu0
    %9313 = vmatprep.mubr.f32.mxu0 0.0
    %9314 = vmatmul.mubr.f32.gmra.mrb[0].mxu0 %v9180
    %v9315 = vpop.f32.mrb[0].mxu0
    %v9316 = vadd.f32 0.0, %v9315
    %v9317 = vpop.f32.mrb[0].mxu0
    %9318 = vmatprep.mubr.f32.mxu0 0.0
    %9319 = vmatmul.mubr.f32.gmra.mrb[0].mxu0 %v9183
    %v9320 = vpop.f32.mrb[0].mxu0
    %v9321 = vadd.f32 0.0, %v9320
    %v9322 = vpop.f32.mrb[0].mxu0
    %9323 = vmatprep.mubr.f32.mxu0 0.0
    %9324 = vmatmul.mubr.f32.gmra.mrb[0].mxu0 %v9186
    %v9325 = vpop.f32.mrb[0].mxu0
    %v9326 = vadd.f32 0.0, %v9325
    %v9327 = vpop.f32.mrb[0].mxu0
    %9328 = vmatprep.mubr.f32.mxu0 0.0
    %9329 = vmatmul.mubr.f32.gmra.mrb[0].mxu0 %v9189
    %v9330 = vpop.f32.mrb[0].mxu0
    %v9331 = vadd.f32 0.0, %v9330
    %v9332 = vpop.f32.mrb[0].mxu0
    %9333 = vmatprep.mubr.f32.mxu0 0.0
    %9334 = vmatmul.mubr.f32.gmra.mrb[0].mxu0 %v9192
    %v9335 = vpop.f32.mrb[0].mxu0
    %v9336 = vadd.f32 0.0, %v9335
    %v9337 = vpop.f32.mrb[0].mxu0
    %9338 = vdwg.mxu0
    %v9339 = vadd.f32 %v9096, %v9261
    %v9340 = vadd.f32 %v9097, %v9266
    %v9341 = vadd.f32 %v9098, %v9271
    %v9342 = vadd.f32 %v9099, %v9276
    %v9343 = vadd.f32 %v9100, %v9281
    %v9344 = vadd.f32 %v9101, %v9286
    %v9345 = vadd.f32 %v9102, %v9291
    %v9346 = vadd.f32 %v9103, %v9296
    %v9347 = vadd.f32 %v9104, %v9301
    %v9348 = vadd.f32 %v9105, %v9306
    %v9349 = vadd.f32 %v9106, %v9311
    %v9350 = vadd.f32 %v9107, %v9316
    %v9351 = vadd.f32 %v9108, %v9321
    %v9352 = vadd.f32 %v9109, %v9326
    %v9353 = vadd.f32 %v9110, %v9331
    %v9354 = vadd.f32 %v9111, %v9336
    %s9355 = scalar_lea.vmem [#allocation3], 48
    %v9356 = vld [vmem:[%s9355] ss:$2 sm:$0xff]
    %s9357 = scalar_lea.vmem %s9355, 48 [#allocation3]
    %v9358 = vld [vmem:[%s9357] ss:$2 sm:$0xff]
    %s9359 = scalar_lea.vmem %s9355, 96 [#allocation3]
    %v9360 = vld [vmem:[%s9359] ss:$2 sm:$0xff]
    %s9361 = scalar_lea.vmem %s9355, 144 [#allocation3]
    %v9362 = vld [vmem:[%s9361] ss:$2 sm:$0xff]
    %s9363 = scalar_lea.vmem %s9355, 192 [#allocation3]
    %v9364 = vld [vmem:[%s9363] ss:$2 sm:$0xff]
    %s9365 = scalar_lea.vmem %s9355, 240 [#allocation3]
    %v9366 = vld [vmem:[%s9365] ss:$2 sm:$0xff]
    %s9367 = scalar_lea.vmem %s9355, 288 [#allocation3]
    %v9368 = vld [vmem:[%s9367] ss:$2 sm:$0xff]
    %s9369 = scalar_lea.vmem %s9355, 336 [#allocation3]
    %v9370 = vld [vmem:[%s9369] ss:$2 sm:$0xff]
    %s9371 = scalar_lea.vmem %s9355, 432 [#allocation3]
    %v9372 = vld [vmem:[%s9371] ss:$2 sm:$0xff]
    %s9373 = scalar_lea.vmem %s9355, 480 [#allocation3]
    %v9374 = vld [vmem:[%s9373] ss:$2 sm:$0xff]
    %s9375 = scalar_lea.vmem %s9355, 528 [#allocation3]
    %v9376 = vld [vmem:[%s9375] ss:$2 sm:$0xff]
    %s9377 = scalar_lea.vmem %s9355, 576 [#allocation3]
    %v9378 = vld [vmem:[%s9377] ss:$2 sm:$0xff]
    %s9379 = scalar_lea.vmem %s9355, 624 [#allocation3]
    %v9380 = vld [vmem:[%s9379] ss:$2 sm:$0xff]
    %s9381 = scalar_lea.vmem %s9355, 672 [#allocation3]
    %v9382 = vld [vmem:[%s9381] ss:$2 sm:$0xff]
    %s9383 = scalar_lea.vmem %s9355, 720 [#allocation3]
    %v9384 = vld [vmem:[%s9383] ss:$2 sm:$0xff]
    %s9385 = scalar_lea.vmem %s9355, 768 [#allocation3]
    %v9386 = vld [vmem:[%s9385] ss:$2 sm:$0xff]
    %s9387 = scalar_lea.vmem %s3, 48
    %v9388 = vld [vmem:[%s9387] sm:$0xff]
    %v9390 = vsel %vm7043, %v9356, 0
    %v9393 = vsel %vm7043, %v9358, 0
    %v9396 = vsel %vm7043, %v9360, 0
    %v9399 = vsel %vm7043, %v9362, 0
    %v9402 = vsel %vm7043, %v9364, 0
    %v9405 = vsel %vm7043, %v9366, 0
    %v9408 = vsel %vm7043, %v9368, 0
    %v9411 = vsel %vm7043, %v9370, 0
    %v9414 = vsel %vm7043, %v9372, 0
    %v9417 = vsel %vm7043, %v9374, 0
    %v9420 = vsel %vm7043, %v9376, 0
    %v9423 = vsel %vm7043, %v9378, 0
    %v9426 = vsel %vm7043, %v9380, 0
    %v9429 = vsel %vm7043, %v9382, 0
    %v9432 = vsel %vm7043, %v9384, 0
    %v9435 = vsel %vm7043, %v9386, 0
    %9437 = vmatprep.subr.mxu0 0.0
    %9438 = vmatpush1.msra.mxu0 %v9388
    %9439 = vmatprep.subr.mxu0 0.0
    %9440 = vmatpush1.msra.mxu0 0.0
    %9441 = vmatprep.subr.mxu0 0.0
    %9442 = vmatpush1.msra.mxu0 0.0
    %9443 = vmatprep.subr.mxu0 0.0
    %9444 = vmatpush1.msra.mxu0 0.0
    %9445 = vmatprep.subr.mxu0 0.0
    %9446 = vmatpush1.msra.mxu0 0.0
    %9447 = vmatprep.subr.mxu0 0.0
    %9448 = vmatpush1.msra.mxu0 0.0
    %9449 = vmatprep.subr.mxu0 0.0
    %9450 = vmatpush1.msra.mxu0 0.0
    %9451 = vmatprep.subr.mxu0 0.0
    %9452 = vmatpush1.msra.mxu0 0.0
    %9453 = vmatprep.subr.mxu0 0.0
    %9454 = vmatpush1.msra.mxu0 0.0
    %9455 = vmatprep.subr.mxu0 0.0
    %9456 = vmatpush1.msra.mxu0 0.0
    %9457 = vmatprep.subr.mxu0 0.0
    %9458 = vmatpush1.msra.mxu0 0.0
    %9459 = vmatprep.subr.mxu0 0.0
    %9460 = vmatpush1.msra.mxu0 0.0
    %9461 = vmatprep.subr.mxu0 0.0
    %9462 = vmatpush1.msra.mxu0 0.0
    %9463 = vmatprep.subr.mxu0 0.0
    %9464 = vmatpush1.msra.mxu0 0.0
    %9465 = vmatprep.subr.mxu0 0.0
    %9466 = vmatpush1.msra.mxu0 0.0
    %9467 = vmatprep.subr.mxu0 0.0
    %9468 = vmatpush1.msra.mxu0 0.0
    %9469 = vmatprep.subr.mxu0 0.0
    %9470 = vmatpush1.msra.mxu0 0.0
    %9471 = vmatprep.subr.mxu0 0.0
    %9472 = vmatpush1.msra.mxu0 0.0
    %9473 = vmatprep.subr.mxu0 0.0
    %9474 = vmatpush1.msra.mxu0 0.0
    %9475 = vmatprep.subr.mxu0 0.0
    %9476 = vmatpush1.msra.mxu0 0.0
    %9477 = vmatprep.subr.mxu0 0.0
    %9478 = vmatpush1.msra.mxu0 0.0
    %9479 = vmatprep.subr.mxu0 0.0
    %9480 = vmatpush1.msra.mxu0 0.0
    %9481 = vmatprep.subr.mxu0 0.0
    %9482 = vmatpush1.msra.mxu0 0.0
    %9483 = vmatprep.subr.mxu0 0.0
    %9484 = vmatpush1.msra.mxu0 0.0
    %9485 = vmatprep.subr.mxu0 0.0
    %9486 = vmatpush1.msra.mxu0 0.0
    %9487 = vmatprep.subr.mxu0 0.0
    %9488 = vmatpush1.msra.mxu0 0.0
    %9489 = vmatprep.subr.mxu0 0.0
    %9490 = vmatpush1.msra.mxu0 0.0
    %9491 = vmatprep.subr.mxu0 0.0
    %9492 = vmatpush1.msra.mxu0 0.0
    %9493 = vmatprep.subr.mxu0 0.0
    %9494 = vmatpush1.msra.mxu0 0.0
    %9495 = vmatprep.subr.mxu0 0.0
    %9496 = vmatpush1.msra.mxu0 0.0
    %9497 = vmatprep.subr.mxu0 0.0
    %9498 = vmatpush1.msra.mxu0 0.0
    %9499 = vmatprep.subr.mxu0 0.0
    %9500 = vmatpush1.msra.mxu0 0.0
    %9501 = vmatprep.mubr.f32.mxu0 0.0
    %9502 = vmatmul.mubr.f32.gmra.mrb[0].mxu0 %v9390
    %v9503 = vpop.f32.mrb[0].mxu0
    %v9504 = vadd.f32 0.0, %v9503
    %v9505 = vpop.f32.mrb[0].mxu0
    %9506 = vmatprep.mubr.f32.mxu0 0.0
    %9507 = vmatmul.mubr.f32.gmra.mrb[0].mxu0 %v9393
    %v9508 = vpop.f32.mrb[0].mxu0
    %v9509 = vadd.f32 0.0, %v9508
    %v9510 = vpop.f32.mrb[0].mxu0
    %9511 = vmatprep.mubr.f32.mxu0 0.0
    %9512 = vmatmul.mubr.f32.gmra.mrb[0].mxu0 %v9396
    %v9513 = vpop.f32.mrb[0].mxu0
    %v9514 = vadd.f32 0.0, %v9513
    %v9515 = vpop.f32.mrb[0].mxu0
    %9516 = vmatprep.mubr.f32.mxu0 0.0
    %9517 = vmatmul.mubr.f32.gmra.mrb[0].mxu0 %v9399
    %v9518 = vpop.f32.mrb[0].mxu0
    %v9519 = vadd.f32 0.0, %v9518
    %v9520 = vpop.f32.mrb[0].mxu0
    %9521 = vmatprep.mubr.f32.mxu0 0.0
    %9522 = vmatmul.mubr.f32.gmra.mrb[0].mxu0 %v9402
    %v9523 = vpop.f32.mrb[0].mxu0
    %v9524 = vadd.f32 0.0, %v9523
    %v9525 = vpop.f32.mrb[0].mxu0
    %9526 = vmatprep.mubr.f32.mxu0 0.0
    %9527 = vmatmul.mubr.f32.gmra.mrb[0].mxu0 %v9405
    %v9528 = vpop.f32.mrb[0].mxu0
    %v9529 = vadd.f32 0.0, %v9528
    %v9530 = vpop.f32.mrb[0].mxu0
    %9531 = vmatprep.mubr.f32.mxu0 0.0
    %9532 = vmatmul.mubr.f32.gmra.mrb[0].mxu0 %v9408
    %v9533 = vpop.f32.mrb[0].mxu0
    %v9534 = vadd.f32 0.0, %v9533
    %v9535 = vpop.f32.mrb[0].mxu0
    %9536 = vmatprep.mubr.f32.mxu0 0.0
    %9537 = vmatmul.mubr.f32.gmra.mrb[0].mxu0 %v9411
    %v9538 = vpop.f32.mrb[0].mxu0
    %v9539 = vadd.f32 0.0, %v9538
    %v9540 = vpop.f32.mrb[0].mxu0
    %9541 = vmatprep.mubr.f32.mxu0 0.0
    %9542 = vmatmul.mubr.f32.gmra.mrb[0].mxu0 %v9414
    %v9543 = vpop.f32.mrb[0].mxu0
    %v9544 = vadd.f32 0.0, %v9543
    %v9545 = vpop.f32.mrb[0].mxu0
    %9546 = vmatprep.mubr.f32.mxu0 0.0
    %9547 = vmatmul.mubr.f32.gmra.mrb[0].mxu0 %v9417
    %v9548 = vpop.f32.mrb[0].mxu0
    %v9549 = vadd.f32 0.0, %v9548
    %v9550 = vpop.f32.mrb[0].mxu0
    %9551 = vmatprep.mubr.f32.mxu0 0.0
    %9552 = vmatmul.mubr.f32.gmra.mrb[0].mxu0 %v9420
    %v9553 = vpop.f32.mrb[0].mxu0
    %v9554 = vadd.f32 0.0, %v9553
    %v9555 = vpop.f32.mrb[0].mxu0
    %9556 = vmatprep.mubr.f32.mxu0 0.0
    %9557 = vmatmul.mubr.f32.gmra.mrb[0].mxu0 %v9423
    %v9558 = vpop.f32.mrb[0].mxu0
    %v9559 = vadd.f32 0.0, %v9558
    %v9560 = vpop.f32.mrb[0].mxu0
    %9561 = vmatprep.mubr.f32.mxu0 0.0
    %9562 = vmatmul.mubr.f32.gmra.mrb[0].mxu0 %v9426
    %v9563 = vpop.f32.mrb[0].mxu0
    %v9564 = vadd.f32 0.0, %v9563
    %v9565 = vpop.f32.mrb[0].mxu0
    %9566 = vmatprep.mubr.f32.mxu0 0.0
    %9567 = vmatmul.mubr.f32.gmra.mrb[0].mxu0 %v9429
    %v9568 = vpop.f32.mrb[0].mxu0
    %v9569 = vadd.f32 0.0, %v9568
    %v9570 = vpop.f32.mrb[0].mxu0
    %9571 = vmatprep.mubr.f32.mxu0 0.0
    %9572 = vmatmul.mubr.f32.gmra.mrb[0].mxu0 %v9432
    %v9573 = vpop.f32.mrb[0].mxu0
    %v9574 = vadd.f32 0.0, %v9573
    %v9575 = vpop.f32.mrb[0].mxu0
    %9576 = vmatprep.mubr.f32.mxu0 0.0
    %9577 = vmatmul.mubr.f32.gmra.mrb[0].mxu0 %v9435
    %v9578 = vpop.f32.mrb[0].mxu0
    %v9579 = vadd.f32 0.0, %v9578
    %v9580 = vpop.f32.mrb[0].mxu0
    %9581 = vdwg.mxu0
    %v9582 = vadd.f32 %v9339, %v9504
    %v9583 = vadd.f32 %v9340, %v9509
    %v9584 = vadd.f32 %v9341, %v9514
    %v9585 = vadd.f32 %v9342, %v9519
    %v9586 = vadd.f32 %v9343, %v9524
    %v9587 = vadd.f32 %v9344, %v9529
    %v9588 = vadd.f32 %v9345, %v9534
    %v9589 = vadd.f32 %v9346, %v9539
    %v9590 = vadd.f32 %v9347, %v9544
    %v9591 = vadd.f32 %v9348, %v9549
    %v9592 = vadd.f32 %v9349, %v9554
    %v9593 = vadd.f32 %v9350, %v9559
    %v9594 = vadd.f32 %v9351, %v9564
    %v9595 = vadd.f32 %v9352, %v9569
    %v9596 = vadd.f32 %v9353, %v9574
    %v9597 = vadd.f32 %v9354, %v9579
    %s9598 = scalar_lea.vmem %s9355, 1 [#allocation3]
    %v9599 = vld [vmem:[%s9598] ss:$2 sm:$0xff]
    %s9600 = scalar_lea.vmem %s9355, 49 [#allocation3]
    %v9601 = vld [vmem:[%s9600] ss:$2 sm:$0xff]
    %s9602 = scalar_lea.vmem %s9355, 97 [#allocation3]
    %v9603 = vld [vmem:[%s9602] ss:$2 sm:$0xff]
    %s9604 = scalar_lea.vmem %s9355, 145 [#allocation3]
    %v9605 = vld [vmem:[%s9604] ss:$2 sm:$0xff]
    %s9606 = scalar_lea.vmem %s9355, 193 [#allocation3]
    %v9607 = vld [vmem:[%s9606] ss:$2 sm:$0xff]
    %s9608 = scalar_lea.vmem %s9355, 241 [#allocation3]
    %v9609 = vld [vmem:[%s9608] ss:$2 sm:$0xff]
    %s9610 = scalar_lea.vmem %s9355, 289 [#allocation3]
    %v9611 = vld [vmem:[%s9610] ss:$2 sm:$0xff]
    %s9612 = scalar_lea.vmem %s9355, 337 [#allocation3]
    %v9613 = vld [vmem:[%s9612] ss:$2 sm:$0xff]
    %s9614 = scalar_lea.vmem %s9355, 433 [#allocation3]
    %v9615 = vld [vmem:[%s9614] ss:$2 sm:$0xff]
    %s9616 = scalar_lea.vmem %s9355, 481 [#allocation3]
    %v9617 = vld [vmem:[%s9616] ss:$2 sm:$0xff]
    %s9618 = scalar_lea.vmem %s9355, 529 [#allocation3]
    %v9619 = vld [vmem:[%s9618] ss:$2 sm:$0xff]
    %s9620 = scalar_lea.vmem %s9355, 577 [#allocation3]
    %v9621 = vld [vmem:[%s9620] ss:$2 sm:$0xff]
    %s9622 = scalar_lea.vmem %s9355, 625 [#allocation3]
    %v9623 = vld [vmem:[%s9622] ss:$2 sm:$0xff]
    %s9624 = scalar_lea.vmem %s9355, 673 [#allocation3]
    %v9625 = vld [vmem:[%s9624] ss:$2 sm:$0xff]
    %s9626 = scalar_lea.vmem %s9355, 721 [#allocation3]
    %v9627 = vld [vmem:[%s9626] ss:$2 sm:$0xff]
    %s9628 = scalar_lea.vmem %s9355, 769 [#allocation3]
    %v9629 = vld [vmem:[%s9628] ss:$2 sm:$0xff]
    %s9630 = scalar_lea.vmem %s3, 56
    %v9631 = vld [vmem:[%s9630] sm:$0xff]
    %v9633 = vsel %vm7043, %v9599, 0
    %v9636 = vsel %vm7043, %v9601, 0
    %v9639 = vsel %vm7043, %v9603, 0
    %v9642 = vsel %vm7043, %v9605, 0
    %v9645 = vsel %vm7043, %v9607, 0
    %v9648 = vsel %vm7043, %v9609, 0
    %v9651 = vsel %vm7043, %v9611, 0
    %v9654 = vsel %vm7043, %v9613, 0
    %v9657 = vsel %vm7043, %v9615, 0
    %v9660 = vsel %vm7043, %v9617, 0
    %v9663 = vsel %vm7043, %v9619, 0
    %v9666 = vsel %vm7043, %v9621, 0
    %v9669 = vsel %vm7043, %v9623, 0
    %v9672 = vsel %vm7043, %v9625, 0
    %v9675 = vsel %vm7043, %v9627, 0
    %v9678 = vsel %vm7043, %v9629, 0
    %9680 = vmatprep.subr.mxu0 0.0
    %9681 = vmatpush1.msra.mxu0 %v9631
    %9682 = vmatprep.subr.mxu0 0.0
    %9683 = vmatpush1.msra.mxu0 0.0
    %9684 = vmatprep.subr.mxu0 0.0
    %9685 = vmatpush1.msra.mxu0 0.0
    %9686 = vmatprep.subr.mxu0 0.0
    %9687 = vmatpush1.msra.mxu0 0.0
    %9688 = vmatprep.subr.mxu0 0.0
    %9689 = vmatpush1.msra.mxu0 0.0
    %9690 = vmatprep.subr.mxu0 0.0
    %9691 = vmatpush1.msra.mxu0 0.0
    %9692 = vmatprep.subr.mxu0 0.0
    %9693 = vmatpush1.msra.mxu0 0.0
    %9694 = vmatprep.subr.mxu0 0.0
    %9695 = vmatpush1.msra.mxu0 0.0
    %9696 = vmatprep.subr.mxu0 0.0
    %9697 = vmatpush1.msra.mxu0 0.0
    %9698 = vmatprep.subr.mxu0 0.0
    %9699 = vmatpush1.msra.mxu0 0.0
    %9700 = vmatprep.subr.mxu0 0.0
    %9701 = vmatpush1.msra.mxu0 0.0
    %9702 = vmatprep.subr.mxu0 0.0
    %9703 = vmatpush1.msra.mxu0 0.0
    %9704 = vmatprep.subr.mxu0 0.0
    %9705 = vmatpush1.msra.mxu0 0.0
    %9706 = vmatprep.subr.mxu0 0.0
    %9707 = vmatpush1.msra.mxu0 0.0
    %9708 = vmatprep.subr.mxu0 0.0
    %9709 = vmatpush1.msra.mxu0 0.0
    %9710 = vmatprep.subr.mxu0 0.0
    %9711 = vmatpush1.msra.mxu0 0.0
    %9712 = vmatprep.subr.mxu0 0.0
    %9713 = vmatpush1.msra.mxu0 0.0
    %9714 = vmatprep.subr.mxu0 0.0
    %9715 = vmatpush1.msra.mxu0 0.0
    %9716 = vmatprep.subr.mxu0 0.0
    %9717 = vmatpush1.msra.mxu0 0.0
    %9718 = vmatprep.subr.mxu0 0.0
    %9719 = vmatpush1.msra.mxu0 0.0
    %9720 = vmatprep.subr.mxu0 0.0
    %9721 = vmatpush1.msra.mxu0 0.0
    %9722 = vmatprep.subr.mxu0 0.0
    %9723 = vmatpush1.msra.mxu0 0.0
    %9724 = vmatprep.subr.mxu0 0.0
    %9725 = vmatpush1.msra.mxu0 0.0
    %9726 = vmatprep.subr.mxu0 0.0
    %9727 = vmatpush1.msra.mxu0 0.0
    %9728 = vmatprep.subr.mxu0 0.0
    %9729 = vmatpush1.msra.mxu0 0.0
    %9730 = vmatprep.subr.mxu0 0.0
    %9731 = vmatpush1.msra.mxu0 0.0
    %9732 = vmatprep.subr.mxu0 0.0
    %9733 = vmatpush1.msra.mxu0 0.0
    %9734 = vmatprep.subr.mxu0 0.0
    %9735 = vmatpush1.msra.mxu0 0.0
    %9736 = vmatprep.subr.mxu0 0.0
    %9737 = vmatpush1.msra.mxu0 0.0
    %9738 = vmatprep.subr.mxu0 0.0
    %9739 = vmatpush1.msra.mxu0 0.0
    %9740 = vmatprep.subr.mxu0 0.0
    %9741 = vmatpush1.msra.mxu0 0.0
    %9742 = vmatprep.subr.mxu0 0.0
    %9743 = vmatpush1.msra.mxu0 0.0
    %9744 = vmatprep.mubr.f32.mxu0 0.0
    %9745 = vmatmul.mubr.f32.gmra.mrb[0].mxu0 %v9633
    %v9746 = vpop.f32.mrb[0].mxu0
    %v9747 = vadd.f32 0.0, %v9746
    %v9748 = vpop.f32.mrb[0].mxu0
    %9749 = vmatprep.mubr.f32.mxu0 0.0
    %9750 = vmatmul.mubr.f32.gmra.mrb[0].mxu0 %v9636
    %v9751 = vpop.f32.mrb[0].mxu0
    %v9752 = vadd.f32 0.0, %v9751
    %v9753 = vpop.f32.mrb[0].mxu0
    %9754 = vmatprep.mubr.f32.mxu0 0.0
    %9755 = vmatmul.mubr.f32.gmra.mrb[0].mxu0 %v9639
    %v9756 = vpop.f32.mrb[0].mxu0
    %v9757 = vadd.f32 0.0, %v9756
    %v9758 = vpop.f32.mrb[0].mxu0
    %9759 = vmatprep.mubr.f32.mxu0 0.0
    %9760 = vmatmul.mubr.f32.gmra.mrb[0].mxu0 %v9642
    %v9761 = vpop.f32.mrb[0].mxu0
    %v9762 = vadd.f32 0.0, %v9761
    %v9763 = vpop.f32.mrb[0].mxu0
    %9764 = vmatprep.mubr.f32.mxu0 0.0
    %9765 = vmatmul.mubr.f32.gmra.mrb[0].mxu0 %v9645
    %v9766 = vpop.f32.mrb[0].mxu0
    %v9767 = vadd.f32 0.0, %v9766
    %v9768 = vpop.f32.mrb[0].mxu0
    %9769 = vmatprep.mubr.f32.mxu0 0.0
    %9770 = vmatmul.mubr.f32.gmra.mrb[0].mxu0 %v9648
    %v9771 = vpop.f32.mrb[0].mxu0
    %v9772 = vadd.f32 0.0, %v9771
    %v9773 = vpop.f32.mrb[0].mxu0
    %9774 = vmatprep.mubr.f32.mxu0 0.0
    %9775 = vmatmul.mubr.f32.gmra.mrb[0].mxu0 %v9651
    %v9776 = vpop.f32.mrb[0].mxu0
    %v9777 = vadd.f32 0.0, %v9776
    %v9778 = vpop.f32.mrb[0].mxu0
    %9779 = vmatprep.mubr.f32.mxu0 0.0
    %9780 = vmatmul.mubr.f32.gmra.mrb[0].mxu0 %v9654
    %v9781 = vpop.f32.mrb[0].mxu0
    %v9782 = vadd.f32 0.0, %v9781
    %v9783 = vpop.f32.mrb[0].mxu0
    %9784 = vmatprep.mubr.f32.mxu0 0.0
    %9785 = vmatmul.mubr.f32.gmra.mrb[0].mxu0 %v9657
    %v9786 = vpop.f32.mrb[0].mxu0
    %v9787 = vadd.f32 0.0, %v9786
    %v9788 = vpop.f32.mrb[0].mxu0
    %9789 = vmatprep.mubr.f32.mxu0 0.0
    %9790 = vmatmul.mubr.f32.gmra.mrb[0].mxu0 %v9660
    %v9791 = vpop.f32.mrb[0].mxu0
    %v9792 = vadd.f32 0.0, %v9791
    %v9793 = vpop.f32.mrb[0].mxu0
    %9794 = vmatprep.mubr.f32.mxu0 0.0
    %9795 = vmatmul.mubr.f32.gmra.mrb[0].mxu0 %v9663
    %v9796 = vpop.f32.mrb[0].mxu0
    %v9797 = vadd.f32 0.0, %v9796
    %v9798 = vpop.f32.mrb[0].mxu0
    %9799 = vmatprep.mubr.f32.mxu0 0.0
    %9800 = vmatmul.mubr.f32.gmra.mrb[0].mxu0 %v9666
    %v9801 = vpop.f32.mrb[0].mxu0
    %v9802 = vadd.f32 0.0, %v9801
    %v9803 = vpop.f32.mrb[0].mxu0
    %9804 = vmatprep.mubr.f32.mxu0 0.0
    %9805 = vmatmul.mubr.f32.gmra.mrb[0].mxu0 %v9669
    %v9806 = vpop.f32.mrb[0].mxu0
    %v9807 = vadd.f32 0.0, %v9806
    %v9808 = vpop.f32.mrb[0].mxu0
    %9809 = vmatprep.mubr.f32.mxu0 0.0
    %9810 = vmatmul.mubr.f32.gmra.mrb[0].mxu0 %v9672
    %v9811 = vpop.f32.mrb[0].mxu0
    %v9812 = vadd.f32 0.0, %v9811
    %v9813 = vpop.f32.mrb[0].mxu0
    %9814 = vmatprep.mubr.f32.mxu0 0.0
    %9815 = vmatmul.mubr.f32.gmra.mrb[0].mxu0 %v9675
    %v9816 = vpop.f32.mrb[0].mxu0
    %v9817 = vadd.f32 0.0, %v9816
    %v9818 = vpop.f32.mrb[0].mxu0
    %9819 = vmatprep.mubr.f32.mxu0 0.0
    %9820 = vmatmul.mubr.f32.gmra.mrb[0].mxu0 %v9678
    %v9821 = vpop.f32.mrb[0].mxu0
    %v9822 = vadd.f32 0.0, %v9821
    %v9823 = vpop.f32.mrb[0].mxu0
    %9824 = vdwg.mxu0
    %v9825 = vadd.f32 %v9582, %v9747
    %v9826 = vadd.f32 %v9583, %v9752
    %v9827 = vadd.f32 %v9584, %v9757
    %v9828 = vadd.f32 %v9585, %v9762
    %v9829 = vadd.f32 %v9586, %v9767
    %v9830 = vadd.f32 %v9587, %v9772
    %v9831 = vadd.f32 %v9588, %v9777
    %v9832 = vadd.f32 %v9589, %v9782
    %v9833 = vadd.f32 %v9590, %v9787
    %v9834 = vadd.f32 %v9591, %v9792
    %v9835 = vadd.f32 %v9592, %v9797
    %v9836 = vadd.f32 %v9593, %v9802
    %v9837 = vadd.f32 %v9594, %v9807
    %v9838 = vadd.f32 %v9595, %v9812
    %v9839 = vadd.f32 %v9596, %v9817
    %v9840 = vadd.f32 %v9597, %v9822
    %s9841 = scalar_lea.vmem %s9355, 2 [#allocation3]
    %v9842 = vld [vmem:[%s9841] ss:$2 sm:$0xff]
    %s9843 = scalar_lea.vmem %s9355, 50 [#allocation3]
    %v9844 = vld [vmem:[%s9843] ss:$2 sm:$0xff]
    %s9845 = scalar_lea.vmem %s9355, 98 [#allocation3]
    %v9846 = vld [vmem:[%s9845] ss:$2 sm:$0xff]
    %s9847 = scalar_lea.vmem %s9355, 146 [#allocation3]
    %v9848 = vld [vmem:[%s9847] ss:$2 sm:$0xff]
    %s9849 = scalar_lea.vmem %s9355, 194 [#allocation3]
    %v9850 = vld [vmem:[%s9849] ss:$2 sm:$0xff]
    %s9851 = scalar_lea.vmem %s9355, 242 [#allocation3]
    %v9852 = vld [vmem:[%s9851] ss:$2 sm:$0xff]
    %s9853 = scalar_lea.vmem %s9355, 290 [#allocation3]
    %v9854 = vld [vmem:[%s9853] ss:$2 sm:$0xff]
    %s9855 = scalar_lea.vmem %s9355, 338 [#allocation3]
    %v9856 = vld [vmem:[%s9855] ss:$2 sm:$0xff]
    %s9857 = scalar_lea.vmem %s9355, 434 [#allocation3]
    %v9858 = vld [vmem:[%s9857] ss:$2 sm:$0xff]
    %s9859 = scalar_lea.vmem %s9355, 482 [#allocation3]
    %v9860 = vld [vmem:[%s9859] ss:$2 sm:$0xff]
    %s9861 = scalar_lea.vmem %s9355, 530 [#allocation3]
    %v9862 = vld [vmem:[%s9861] ss:$2 sm:$0xff]
    %s9863 = scalar_lea.vmem %s9355, 578 [#allocation3]
    %v9864 = vld [vmem:[%s9863] ss:$2 sm:$0xff]
    %s9865 = scalar_lea.vmem %s9355, 626 [#allocation3]
    %v9866 = vld [vmem:[%s9865] ss:$2 sm:$0xff]
    %s9867 = scalar_lea.vmem %s9355, 674 [#allocation3]
    %v9868 = vld [vmem:[%s9867] ss:$2 sm:$0xff]
    %s9869 = scalar_lea.vmem %s9355, 722 [#allocation3]
    %v9870 = vld [vmem:[%s9869] ss:$2 sm:$0xff]
    %s9871 = scalar_lea.vmem %s9355, 770 [#allocation3]
    %v9872 = vld [vmem:[%s9871] ss:$2 sm:$0xff]
    %s9873 = scalar_lea.vmem %s3, 64
    %v9874 = vld [vmem:[%s9873] sm:$0xff]
    %v9876 = vsel %vm7043, %v9842, 0
    %v9879 = vsel %vm7043, %v9844, 0
    %v9882 = vsel %vm7043, %v9846, 0
    %v9885 = vsel %vm7043, %v9848, 0
    %v9888 = vsel %vm7043, %v9850, 0
    %v9891 = vsel %vm7043, %v9852, 0
    %v9894 = vsel %vm7043, %v9854, 0
    %v9897 = vsel %vm7043, %v9856, 0
    %v9900 = vsel %vm7043, %v9858, 0
    %v9903 = vsel %vm7043, %v9860, 0
    %v9906 = vsel %vm7043, %v9862, 0
    %v9909 = vsel %vm7043, %v9864, 0
    %v9912 = vsel %vm7043, %v9866, 0
    %v9915 = vsel %vm7043, %v9868, 0
    %v9918 = vsel %vm7043, %v9870, 0
    %v9921 = vsel %vm7043, %v9872, 0
    %9923 = vmatprep.subr.mxu0 0.0
    %9924 = vmatpush1.msra.mxu0 %v9874
    %9925 = vmatprep.subr.mxu0 0.0
    %9926 = vmatpush1.msra.mxu0 0.0
    %9927 = vmatprep.subr.mxu0 0.0
    %9928 = vmatpush1.msra.mxu0 0.0
    %9929 = vmatprep.subr.mxu0 0.0
    %9930 = vmatpush1.msra.mxu0 0.0
    %9931 = vmatprep.subr.mxu0 0.0
    %9932 = vmatpush1.msra.mxu0 0.0
    %9933 = vmatprep.subr.mxu0 0.0
    %9934 = vmatpush1.msra.mxu0 0.0
    %9935 = vmatprep.subr.mxu0 0.0
    %9936 = vmatpush1.msra.mxu0 0.0
    %9937 = vmatprep.subr.mxu0 0.0
    %9938 = vmatpush1.msra.mxu0 0.0
    %9939 = vmatprep.subr.mxu0 0.0
    %9940 = vmatpush1.msra.mxu0 0.0
    %9941 = vmatprep.subr.mxu0 0.0
    %9942 = vmatpush1.msra.mxu0 0.0
    %9943 = vmatprep.subr.mxu0 0.0
    %9944 = vmatpush1.msra.mxu0 0.0
    %9945 = vmatprep.subr.mxu0 0.0
    %9946 = vmatpush1.msra.mxu0 0.0
    %9947 = vmatprep.subr.mxu0 0.0
    %9948 = vmatpush1.msra.mxu0 0.0
    %9949 = vmatprep.subr.mxu0 0.0
    %9950 = vmatpush1.msra.mxu0 0.0
    %9951 = vmatprep.subr.mxu0 0.0
    %9952 = vmatpush1.msra.mxu0 0.0
    %9953 = vmatprep.subr.mxu0 0.0
    %9954 = vmatpush1.msra.mxu0 0.0
    %9955 = vmatprep.subr.mxu0 0.0
    %9956 = vmatpush1.msra.mxu0 0.0
    %9957 = vmatprep.subr.mxu0 0.0
    %9958 = vmatpush1.msra.mxu0 0.0
    %9959 = vmatprep.subr.mxu0 0.0
    %9960 = vmatpush1.msra.mxu0 0.0
    %9961 = vmatprep.subr.mxu0 0.0
    %9962 = vmatpush1.msra.mxu0 0.0
    %9963 = vmatprep.subr.mxu0 0.0
    %9964 = vmatpush1.msra.mxu0 0.0
    %9965 = vmatprep.subr.mxu0 0.0
    %9966 = vmatpush1.msra.mxu0 0.0
    %9967 = vmatprep.subr.mxu0 0.0
    %9968 = vmatpush1.msra.mxu0 0.0
    %9969 = vmatprep.subr.mxu0 0.0
    %9970 = vmatpush1.msra.mxu0 0.0
    %9971 = vmatprep.subr.mxu0 0.0
    %9972 = vmatpush1.msra.mxu0 0.0
    %9973 = vmatprep.subr.mxu0 0.0
    %9974 = vmatpush1.msra.mxu0 0.0
    %9975 = vmatprep.subr.mxu0 0.0
    %9976 = vmatpush1.msra.mxu0 0.0
    %9977 = vmatprep.subr.mxu0 0.0
    %9978 = vmatpush1.msra.mxu0 0.0
    %9979 = vmatprep.subr.mxu0 0.0
    %9980 = vmatpush1.msra.mxu0 0.0
    %9981 = vmatprep.subr.mxu0 0.0
    %9982 = vmatpush1.msra.mxu0 0.0
    %9983 = vmatprep.subr.mxu0 0.0
    %9984 = vmatpush1.msra.mxu0 0.0
    %9985 = vmatprep.subr.mxu0 0.0
    %9986 = vmatpush1.msra.mxu0 0.0
    %9987 = vmatprep.mubr.f32.mxu0 0.0
    %9988 = vmatmul.mubr.f32.gmra.mrb[0].mxu0 %v9876
    %v9989 = vpop.f32.mrb[0].mxu0
    %v9990 = vadd.f32 0.0, %v9989
    %v9991 = vpop.f32.mrb[0].mxu0
    %9992 = vmatprep.mubr.f32.mxu0 0.0
    %9993 = vmatmul.mubr.f32.gmra.mrb[0].mxu0 %v9879
    %v9994 = vpop.f32.mrb[0].mxu0
    %v9995 = vadd.f32 0.0, %v9994
    %v9996 = vpop.f32.mrb[0].mxu0
    %9997 = vmatprep.mubr.f32.mxu0 0.0
    %9998 = vmatmul.mubr.f32.gmra.mrb[0].mxu0 %v9882
    %v9999 = vpop.f32.mrb[0].mxu0
    %v10000 = vadd.f32 0.0, %v9999
    %v10001 = vpop.f32.mrb[0].mxu0
    %10002 = vmatprep.mubr.f32.mxu0 0.0
    %10003 = vmatmul.mubr.f32.gmra.mrb[0].mxu0 %v9885
    %v10004 = vpop.f32.mrb[0].mxu0
    %v10005 = vadd.f32 0.0, %v10004
    %v10006 = vpop.f32.mrb[0].mxu0
    %10007 = vmatprep.mubr.f32.mxu0 0.0
    %10008 = vmatmul.mubr.f32.gmra.mrb[0].mxu0 %v9888
    %v10009 = vpop.f32.mrb[0].mxu0
    %v10010 = vadd.f32 0.0, %v10009
    %v10011 = vpop.f32.mrb[0].mxu0
    %10012 = vmatprep.mubr.f32.mxu0 0.0
    %10013 = vmatmul.mubr.f32.gmra.mrb[0].mxu0 %v9891
    %v10014 = vpop.f32.mrb[0].mxu0
    %v10015 = vadd.f32 0.0, %v10014
    %v10016 = vpop.f32.mrb[0].mxu0
    %10017 = vmatprep.mubr.f32.mxu0 0.0
    %10018 = vmatmul.mubr.f32.gmra.mrb[0].mxu0 %v9894
    %v10019 = vpop.f32.mrb[0].mxu0
    %v10020 = vadd.f32 0.0, %v10019
    %v10021 = vpop.f32.mrb[0].mxu0
    %10022 = vmatprep.mubr.f32.mxu0 0.0
    %10023 = vmatmul.mubr.f32.gmra.mrb[0].mxu0 %v9897
    %v10024 = vpop.f32.mrb[0].mxu0
    %v10025 = vadd.f32 0.0, %v10024
    %v10026 = vpop.f32.mrb[0].mxu0
    %10027 = vmatprep.mubr.f32.mxu0 0.0
    %10028 = vmatmul.mubr.f32.gmra.mrb[0].mxu0 %v9900
    %v10029 = vpop.f32.mrb[0].mxu0
    %v10030 = vadd.f32 0.0, %v10029
    %v10031 = vpop.f32.mrb[0].mxu0
    %10032 = vmatprep.mubr.f32.mxu0 0.0
    %10033 = vmatmul.mubr.f32.gmra.mrb[0].mxu0 %v9903
    %v10034 = vpop.f32.mrb[0].mxu0
    %v10035 = vadd.f32 0.0, %v10034
    %v10036 = vpop.f32.mrb[0].mxu0
    %10037 = vmatprep.mubr.f32.mxu0 0.0
    %10038 = vmatmul.mubr.f32.gmra.mrb[0].mxu0 %v9906
    %v10039 = vpop.f32.mrb[0].mxu0
    %v10040 = vadd.f32 0.0, %v10039
    %v10041 = vpop.f32.mrb[0].mxu0
    %10042 = vmatprep.mubr.f32.mxu0 0.0
    %10043 = vmatmul.mubr.f32.gmra.mrb[0].mxu0 %v9909
    %v10044 = vpop.f32.mrb[0].mxu0
    %v10045 = vadd.f32 0.0, %v10044
    %v10046 = vpop.f32.mrb[0].mxu0
    %10047 = vmatprep.mubr.f32.mxu0 0.0
    %10048 = vmatmul.mubr.f32.gmra.mrb[0].mxu0 %v9912
    %v10049 = vpop.f32.mrb[0].mxu0
    %v10050 = vadd.f32 0.0, %v10049
    %v10051 = vpop.f32.mrb[0].mxu0
    %10052 = vmatprep.mubr.f32.mxu0 0.0
    %10053 = vmatmul.mubr.f32.gmra.mrb[0].mxu0 %v9915
    %v10054 = vpop.f32.mrb[0].mxu0
    %v10055 = vadd.f32 0.0, %v10054
    %v10056 = vpop.f32.mrb[0].mxu0
    %10057 = vmatprep.mubr.f32.mxu0 0.0
    %10058 = vmatmul.mubr.f32.gmra.mrb[0].mxu0 %v9918
    %v10059 = vpop.f32.mrb[0].mxu0
    %v10060 = vadd.f32 0.0, %v10059
    %v10061 = vpop.f32.mrb[0].mxu0
    %10062 = vmatprep.mubr.f32.mxu0 0.0
    %10063 = vmatmul.mubr.f32.gmra.mrb[0].mxu0 %v9921
    %v10064 = vpop.f32.mrb[0].mxu0
    %v10065 = vadd.f32 0.0, %v10064
    %v10066 = vpop.f32.mrb[0].mxu0
    %10067 = vdwg.mxu0
    %v10068 = vadd.f32 %v9825, %v9990
    %v10069 = vadd.f32 %v9826, %v9995
    %v10070 = vadd.f32 %v9827, %v10000
    %v10071 = vadd.f32 %v9828, %v10005
    %v10072 = vadd.f32 %v9829, %v10010
    %v10073 = vadd.f32 %v9830, %v10015
    %v10074 = vadd.f32 %v9831, %v10020
    %v10075 = vadd.f32 %v9832, %v10025
    %v10076 = vadd.f32 %v9833, %v10030
    %v10077 = vadd.f32 %v9834, %v10035
    %v10078 = vadd.f32 %v9835, %v10040
    %v10079 = vadd.f32 %v9836, %v10045
    %v10080 = vadd.f32 %v9837, %v10050
    %v10081 = vadd.f32 %v9838, %v10055
    %v10082 = vadd.f32 %v9839, %v10060
    %v10083 = vadd.f32 %v9840, %v10065
    %v10084 = vsel %vm7043, %v10068, 0.0
    %v10085 = vsel %vm7043, %v10069, 0.0
    %v10086 = vadd.f32 %v10084, %v10085
    %v10087 = vsel %vm7043, %v10070, 0.0
    %v10088 = vadd.f32 %v10086, %v10087
    %v10089 = vsel %vm7043, %v10071, 0.0
    %v10090 = vadd.f32 %v10088, %v10089
    %v10091 = vsel %vm7043, %v10072, 0.0
    %v10092 = vadd.f32 %v10090, %v10091
    %v10093 = vsel %vm7043, %v10073, 0.0
    %v10094 = vadd.f32 %v10092, %v10093
    %v10095 = vsel %vm7043, %v10074, 0.0
    %v10096 = vadd.f32 %v10094, %v10095
    %v10097 = vsel %vm7043, %v10075, 0.0
    %v10098 = vadd.f32 %v10096, %v10097
    %v10099 = vsel %vm7043, %v10076, 0.0
    %v10100 = vadd.f32 %v10098, %v10099
    %v10101 = vsel %vm7043, %v10077, 0.0
    %v10102 = vadd.f32 %v10100, %v10101
    %v10103 = vsel %vm7043, %v10078, 0.0
    %v10104 = vadd.f32 %v10102, %v10103
    %v10105 = vsel %vm7043, %v10079, 0.0
    %v10106 = vadd.f32 %v10104, %v10105
    %v10107 = vsel %vm7043, %v10080, 0.0
    %v10108 = vadd.f32 %v10106, %v10107
    %v10109 = vsel %vm7043, %v10081, 0.0
    %v10110 = vadd.f32 %v10108, %v10109
    %v10111 = vsel %vm7043, %v10082, 0.0
    %v10112 = vadd.f32 %v10110, %v10111
    %v10113 = vsel %vm7043, %v10083, 0.0
    %v10114 = vadd.f32 %v10112, %v10113
    %v10115 = vrot.slane %v10114, 4
    %v10116 = vadd.f32 %v10114, %v10115
    %v10117 = vrot.slane %v10116, 2
    %v10118 = vadd.f32 %v10116, %v10117
    %v10119 = vrot.slane %v10118, 1
    %v10120 = vadd.f32 %v10118, %v10119
    %v10121 = vmul.f32 %v10120, 0.0078125
    %v10122 = vsub.f32 %v10068, %v10121
    %v10123 = vsub.f32 %v10069, %v10121
    %v10124 = vsub.f32 %v10070, %v10121
    %v10125 = vsub.f32 %v10071, %v10121
    %v10126 = vsub.f32 %v10072, %v10121
    %v10127 = vsub.f32 %v10073, %v10121
    %v10128 = vsub.f32 %v10074, %v10121
    %v10129 = vsub.f32 %v10075, %v10121
    %v10130 = vsub.f32 %v10076, %v10121
    %v10131 = vsub.f32 %v10077, %v10121
    %v10132 = vsub.f32 %v10078, %v10121
    %v10133 = vsub.f32 %v10079, %v10121
    %v10134 = vsub.f32 %v10080, %v10121
    %v10135 = vsub.f32 %v10081, %v10121
    %v10136 = vsub.f32 %v10082, %v10121
    %v10137 = vsub.f32 %v10083, %v10121
    %v10138 = vmul.f32 %v10122, %v10122
    %v10139 = vmul.f32 %v10123, %v10123
    %v10140 = vmul.f32 %v10124, %v10124
    %v10141 = vmul.f32 %v10125, %v10125
    %v10142 = vmul.f32 %v10126, %v10126
    %v10143 = vmul.f32 %v10127, %v10127
    %v10144 = vmul.f32 %v10128, %v10128
    %v10145 = vmul.f32 %v10129, %v10129
    %v10146 = vmul.f32 %v10130, %v10130
    %v10147 = vmul.f32 %v10131, %v10131
    %v10148 = vmul.f32 %v10132, %v10132
    %v10149 = vmul.f32 %v10133, %v10133
    %v10150 = vmul.f32 %v10134, %v10134
    %v10151 = vmul.f32 %v10135, %v10135
    %v10152 = vmul.f32 %v10136, %v10136
    %v10153 = vmul.f32 %v10137, %v10137
    %v10154 = vsel %vm7043, %v10138, 0.0
    %v10155 = vsel %vm7043, %v10139, 0.0
    %v10156 = vadd.f32 %v10154, %v10155
    %v10157 = vsel %vm7043, %v10140, 0.0
    %v10158 = vadd.f32 %v10156, %v10157
    %v10159 = vsel %vm7043, %v10141, 0.0
    %v10160 = vadd.f32 %v10158, %v10159
    %v10161 = vsel %vm7043, %v10142, 0.0
    %v10162 = vadd.f32 %v10160, %v10161
    %v10163 = vsel %vm7043, %v10143, 0.0
    %v10164 = vadd.f32 %v10162, %v10163
    %v10165 = vsel %vm7043, %v10144, 0.0
    %v10166 = vadd.f32 %v10164, %v10165
    %v10167 = vsel %vm7043, %v10145, 0.0
    %v10168 = vadd.f32 %v10166, %v10167
    %v10169 = vsel %vm7043, %v10146, 0.0
    %v10170 = vadd.f32 %v10168, %v10169
    %v10171 = vsel %vm7043, %v10147, 0.0
    %v10172 = vadd.f32 %v10170, %v10171
    %v10173 = vsel %vm7043, %v10148, 0.0
    %v10174 = vadd.f32 %v10172, %v10173
    %v10175 = vsel %vm7043, %v10149, 0.0
    %v10176 = vadd.f32 %v10174, %v10175
    %v10177 = vsel %vm7043, %v10150, 0.0
    %v10178 = vadd.f32 %v10176, %v10177
    %v10179 = vsel %vm7043, %v10151, 0.0
    %v10180 = vadd.f32 %v10178, %v10179
    %v10181 = vsel %vm7043, %v10152, 0.0
    %v10182 = vadd.f32 %v10180, %v10181
    %v10183 = vsel %vm7043, %v10153, 0.0
    %v10184 = vadd.f32 %v10182, %v10183
    %v10185 = vrot.slane %v10184, 4
    %v10186 = vadd.f32 %v10184, %v10185
    %v10187 = vrot.slane %v10186, 2
    %v10188 = vadd.f32 %v10186, %v10187
    %v10189 = vrot.slane %v10188, 1
    %v10190 = vadd.f32 %v10188, %v10189
    %v10191 = vmul.f32 %v10190, 0.0078125
    %v10192 = vadd.f32 %v10191, 1e-05
    %v10193 = vrsqrt.pop %v10192
    %v10194 = vmul.f32 %v21, %v10193
    %v10195 = vmul.f32 %v10121, %v10194
    %v10197 = vrot.slane %v10195, 7
    %v10199 = vsub.f32 %v21, %v10197
    %v10200 = vlaneseq
    %v10201 = vshrl.u32 %v10200, 7
    %v10202 = vsub.s32 5, %v10201
    %v10203 = vrot.slane %v10194, %v10202
    %v10204 = vmul.f32 %v10068, %v10203
    %v10205 = vmul.f32 %v10069, %v10203
    %v10206 = vmul.f32 %v10070, %v10203
    %v10207 = vmul.f32 %v10071, %v10203
    %v10208 = vmul.f32 %v10072, %v10203
    %v10209 = vmul.f32 %v10073, %v10203
    %v10210 = vmul.f32 %v10074, %v10203
    %v10211 = vmul.f32 %v10075, %v10203
    %v10212 = vmul.f32 %v10076, %v10203
    %v10213 = vmul.f32 %v10077, %v10203
    %v10214 = vmul.f32 %v10078, %v10203
    %v10215 = vmul.f32 %v10079, %v10203
    %v10216 = vmul.f32 %v10080, %v10203
    %v10217 = vmul.f32 %v10081, %v10203
    %v10218 = vmul.f32 %v10082, %v10203
    %v10219 = vmul.f32 %v10083, %v10203
    %v10220 = vlaneseq
    %v10221 = vshrl.u32 %v10220, 7
    %v10222 = vsub.s32 6, %v10221
    %v10223 = vrot.slane %v10199, %v10222
    %v10224 = vadd.f32 %v10204, %v10223
    %v10225 = vadd.f32 %v10205, %v10223
    %v10226 = vadd.f32 %v10206, %v10223
    %v10227 = vadd.f32 %v10207, %v10223
    %v10228 = vadd.f32 %v10208, %v10223
    %v10229 = vadd.f32 %v10209, %v10223
    %v10230 = vadd.f32 %v10210, %v10223
    %v10231 = vadd.f32 %v10211, %v10223
    %v10232 = vadd.f32 %v10212, %v10223
    %v10233 = vadd.f32 %v10213, %v10223
    %v10234 = vadd.f32 %v10214, %v10223
    %v10235 = vadd.f32 %v10215, %v10223
    %v10236 = vadd.f32 %v10216, %v10223
    %v10237 = vadd.f32 %v10217, %v10223
    %v10238 = vadd.f32 %v10218, %v10223
    %v10239 = vadd.f32 %v10219, %v10223
    %v10240 = vld [vmem:[%s0] ss:$2 sm:$0xff]
    %s10241 = scalar_lea.vmem %s0, 32
    %v10242 = vld [vmem:[%s10241] ss:$2 sm:$0xff]
    %s10243 = scalar_lea.vmem %s0, 64
    %v10244 = vld [vmem:[%s10243] ss:$2 sm:$0xff]
    %s10245 = scalar_lea.vmem %s0, 96
    %v10246 = vld [vmem:[%s10245] ss:$2 sm:$0xff]
    %s10247 = scalar_lea.vmem %s0, 128
    %v10248 = vld [vmem:[%s10247] ss:$2 sm:$0xff]
    %s10249 = scalar_lea.vmem %s0, 160
    %v10250 = vld [vmem:[%s10249] ss:$2 sm:$0xff]
    %s10251 = scalar_lea.vmem %s0, 192
    %v10252 = vld [vmem:[%s10251] ss:$2 sm:$0xff]
    %s10253 = scalar_lea.vmem %s0, 224
    %v10254 = vld [vmem:[%s10253] ss:$2 sm:$0xff]
    %s10255 = scalar_lea.vmem %s0, 256
    %v10256 = vld [vmem:[%s10255] ss:$2 sm:$0xff]
    %s10257 = scalar_lea.vmem %s0, 288
    %v10258 = vld [vmem:[%s10257] ss:$2 sm:$0xff]
    %s10259 = scalar_lea.vmem %s0, 320
    %v10260 = vld [vmem:[%s10259] ss:$2 sm:$0xff]
    %s10261 = scalar_lea.vmem %s0, 352
    %v10262 = vld [vmem:[%s10261] ss:$2 sm:$0xff]
    %s10263 = scalar_lea.vmem %s0, 384
    %v10264 = vld [vmem:[%s10263] ss:$2 sm:$0xff]
    %s10265 = scalar_lea.vmem %s0, 416
    %v10266 = vld [vmem:[%s10265] ss:$2 sm:$0xff]
    %s10267 = scalar_lea.vmem %s0, 448
    %v10268 = vld [vmem:[%s10267] ss:$2 sm:$0xff]
    %s10269 = scalar_lea.vmem %s0, 480
    %v10270 = vld [vmem:[%s10269] ss:$2 sm:$0xff]
    %v10271 = vld [vmem:[%s4] sm:$0xf]
    %v10273 = vsel %vm87, %v10240, 0
    %v10276 = vsel %vm87, %v10242, 0
    %v10279 = vsel %vm87, %v10244, 0
    %v10282 = vsel %vm87, %v10246, 0
    %v10285 = vsel %vm87, %v10248, 0
    %v10288 = vsel %vm87, %v10250, 0
    %v10291 = vsel %vm87, %v10252, 0
    %v10294 = vsel %vm87, %v10254, 0
    %v10297 = vsel %vm87, %v10256, 0
    %v10300 = vsel %vm87, %v10258, 0
    %v10303 = vsel %vm87, %v10260, 0
    %v10306 = vsel %vm87, %v10262, 0
    %v10309 = vsel %vm87, %v10264, 0
    %v10312 = vsel %vm87, %v10266, 0
    %v10315 = vsel %vm87, %v10268, 0
    %v10318 = vsel %vm87, %v10270, 0
    %v10321 = vsel %vm1103, %v10271, 0
    %10323 = vmatprep.subr.mxu0 0.0
    %10324 = vmatpush1.msra.mxu0 %v10321
    %10325 = vmatprep.subr.mxu0 0.0
    %10326 = vmatpush1.msra.mxu0 0.0
    %10327 = vmatprep.subr.mxu0 0.0
    %10328 = vmatpush1.msra.mxu0 0.0
    %10329 = vmatprep.subr.mxu0 0.0
    %10330 = vmatpush1.msra.mxu0 0.0
    %10331 = vmatprep.subr.mxu0 0.0
    %10332 = vmatpush1.msra.mxu0 0.0
    %10333 = vmatprep.subr.mxu0 0.0
    %10334 = vmatpush1.msra.mxu0 0.0
    %10335 = vmatprep.subr.mxu0 0.0
    %10336 = vmatpush1.msra.mxu0 0.0
    %10337 = vmatprep.subr.mxu0 0.0
    %10338 = vmatpush1.msra.mxu0 0.0
    %10339 = vmatprep.subr.mxu0 0.0
    %10340 = vmatpush1.msra.mxu0 0.0
    %10341 = vmatprep.subr.mxu0 0.0
    %10342 = vmatpush1.msra.mxu0 0.0
    %10343 = vmatprep.subr.mxu0 0.0
    %10344 = vmatpush1.msra.mxu0 0.0
    %10345 = vmatprep.subr.mxu0 0.0
    %10346 = vmatpush1.msra.mxu0 0.0
    %10347 = vmatprep.subr.mxu0 0.0
    %10348 = vmatpush1.msra.mxu0 0.0
    %10349 = vmatprep.subr.mxu0 0.0
    %10350 = vmatpush1.msra.mxu0 0.0
    %10351 = vmatprep.subr.mxu0 0.0
    %10352 = vmatpush1.msra.mxu0 0.0
    %10353 = vmatprep.subr.mxu0 0.0
    %10354 = vmatpush1.msra.mxu0 0.0
    %10355 = vmatprep.subr.mxu0 0.0
    %10356 = vmatpush1.msra.mxu0 0.0
    %10357 = vmatprep.subr.mxu0 0.0
    %10358 = vmatpush1.msra.mxu0 0.0
    %10359 = vmatprep.subr.mxu0 0.0
    %10360 = vmatpush1.msra.mxu0 0.0
    %10361 = vmatprep.subr.mxu0 0.0
    %10362 = vmatpush1.msra.mxu0 0.0
    %10363 = vmatprep.subr.mxu0 0.0
    %10364 = vmatpush1.msra.mxu0 0.0
    %10365 = vmatprep.subr.mxu0 0.0
    %10366 = vmatpush1.msra.mxu0 0.0
    %10367 = vmatprep.subr.mxu0 0.0
    %10368 = vmatpush1.msra.mxu0 0.0
    %10369 = vmatprep.subr.mxu0 0.0
    %10370 = vmatpush1.msra.mxu0 0.0
    %10371 = vmatprep.subr.mxu0 0.0
    %10372 = vmatpush1.msra.mxu0 0.0
    %10373 = vmatprep.subr.mxu0 0.0
    %10374 = vmatpush1.msra.mxu0 0.0
    %10375 = vmatprep.subr.mxu0 0.0
    %10376 = vmatpush1.msra.mxu0 0.0
    %10377 = vmatprep.subr.mxu0 0.0
    %10378 = vmatpush1.msra.mxu0 0.0
    %10379 = vmatprep.subr.mxu0 0.0
    %10380 = vmatpush1.msra.mxu0 0.0
    %10381 = vmatprep.subr.mxu0 0.0
    %10382 = vmatpush1.msra.mxu0 0.0
    %10383 = vmatprep.subr.mxu0 0.0
    %10384 = vmatpush1.msra.mxu0 0.0
    %10385 = vmatprep.subr.mxu0 0.0
    %10386 = vmatpush1.msra.mxu0 0.0
    %10387 = vmatprep.mubr.f32.mxu0 0.0
    %10388 = vmatmul.mubr.f32.gmra.mrb[0].mxu0 %v10273
    %v10389 = vpop.f32.mrb[0].mxu0
    %v10390 = vadd.f32 0.0, %v10389
    %v10391 = vpop.f32.mrb[0].mxu0
    %10392 = vmatprep.mubr.f32.mxu0 0.0
    %10393 = vmatmul.mubr.f32.gmra.mrb[0].mxu0 %v10276
    %v10394 = vpop.f32.mrb[0].mxu0
    %v10395 = vadd.f32 0.0, %v10394
    %v10396 = vpop.f32.mrb[0].mxu0
    %10397 = vmatprep.mubr.f32.mxu0 0.0
    %10398 = vmatmul.mubr.f32.gmra.mrb[0].mxu0 %v10279
    %v10399 = vpop.f32.mrb[0].mxu0
    %v10400 = vadd.f32 0.0, %v10399
    %v10401 = vpop.f32.mrb[0].mxu0
    %10402 = vmatprep.mubr.f32.mxu0 0.0
    %10403 = vmatmul.mubr.f32.gmra.mrb[0].mxu0 %v10282
    %v10404 = vpop.f32.mrb[0].mxu0
    %v10405 = vadd.f32 0.0, %v10404
    %v10406 = vpop.f32.mrb[0].mxu0
    %10407 = vmatprep.mubr.f32.mxu0 0.0
    %10408 = vmatmul.mubr.f32.gmra.mrb[0].mxu0 %v10285
    %v10409 = vpop.f32.mrb[0].mxu0
    %v10410 = vadd.f32 0.0, %v10409
    %v10411 = vpop.f32.mrb[0].mxu0
    %10412 = vmatprep.mubr.f32.mxu0 0.0
    %10413 = vmatmul.mubr.f32.gmra.mrb[0].mxu0 %v10288
    %v10414 = vpop.f32.mrb[0].mxu0
    %v10415 = vadd.f32 0.0, %v10414
    %v10416 = vpop.f32.mrb[0].mxu0
    %10417 = vmatprep.mubr.f32.mxu0 0.0
    %10418 = vmatmul.mubr.f32.gmra.mrb[0].mxu0 %v10291
    %v10419 = vpop.f32.mrb[0].mxu0
    %v10420 = vadd.f32 0.0, %v10419
    %v10421 = vpop.f32.mrb[0].mxu0
    %10422 = vmatprep.mubr.f32.mxu0 0.0
    %10423 = vmatmul.mubr.f32.gmra.mrb[0].mxu0 %v10294
    %v10424 = vpop.f32.mrb[0].mxu0
    %v10425 = vadd.f32 0.0, %v10424
    %v10426 = vpop.f32.mrb[0].mxu0
    %10427 = vmatprep.mubr.f32.mxu0 0.0
    %10428 = vmatmul.mubr.f32.gmra.mrb[0].mxu0 %v10297
    %v10429 = vpop.f32.mrb[0].mxu0
    %v10430 = vadd.f32 0.0, %v10429
    %v10431 = vpop.f32.mrb[0].mxu0
    %10432 = vmatprep.mubr.f32.mxu0 0.0
    %10433 = vmatmul.mubr.f32.gmra.mrb[0].mxu0 %v10300
    %v10434 = vpop.f32.mrb[0].mxu0
    %v10435 = vadd.f32 0.0, %v10434
    %v10436 = vpop.f32.mrb[0].mxu0
    %10437 = vmatprep.mubr.f32.mxu0 0.0
    %10438 = vmatmul.mubr.f32.gmra.mrb[0].mxu0 %v10303
    %v10439 = vpop.f32.mrb[0].mxu0
    %v10440 = vadd.f32 0.0, %v10439
    %v10441 = vpop.f32.mrb[0].mxu0
    %10442 = vmatprep.mubr.f32.mxu0 0.0
    %10443 = vmatmul.mubr.f32.gmra.mrb[0].mxu0 %v10306
    %v10444 = vpop.f32.mrb[0].mxu0
    %v10445 = vadd.f32 0.0, %v10444
    %v10446 = vpop.f32.mrb[0].mxu0
    %10447 = vmatprep.mubr.f32.mxu0 0.0
    %10448 = vmatmul.mubr.f32.gmra.mrb[0].mxu0 %v10309
    %v10449 = vpop.f32.mrb[0].mxu0
    %v10450 = vadd.f32 0.0, %v10449
    %v10451 = vpop.f32.mrb[0].mxu0
    %10452 = vmatprep.mubr.f32.mxu0 0.0
    %10453 = vmatmul.mubr.f32.gmra.mrb[0].mxu0 %v10312
    %v10454 = vpop.f32.mrb[0].mxu0
    %v10455 = vadd.f32 0.0, %v10454
    %v10456 = vpop.f32.mrb[0].mxu0
    %10457 = vmatprep.mubr.f32.mxu0 0.0
    %10458 = vmatmul.mubr.f32.gmra.mrb[0].mxu0 %v10315
    %v10459 = vpop.f32.mrb[0].mxu0
    %v10460 = vadd.f32 0.0, %v10459
    %v10461 = vpop.f32.mrb[0].mxu0
    %10462 = vmatprep.mubr.f32.mxu0 0.0
    %10463 = vmatmul.mubr.f32.gmra.mrb[0].mxu0 %v10318
    %v10464 = vpop.f32.mrb[0].mxu0
    %v10465 = vadd.f32 0.0, %v10464
    %v10466 = vpop.f32.mrb[0].mxu0
    %10467 = vdwg.mxu0
    %v10468 = vsel %vm7043, %v10390, 0.0
    %v10469 = vsel %vm7043, %v10395, 0.0
    %v10470 = vadd.f32 %v10468, %v10469
    %v10471 = vsel %vm7043, %v10400, 0.0
    %v10472 = vadd.f32 %v10470, %v10471
    %v10473 = vsel %vm7043, %v10405, 0.0
    %v10474 = vadd.f32 %v10472, %v10473
    %v10475 = vsel %vm7043, %v10410, 0.0
    %v10476 = vadd.f32 %v10474, %v10475
    %v10477 = vsel %vm7043, %v10415, 0.0
    %v10478 = vadd.f32 %v10476, %v10477
    %v10479 = vsel %vm7043, %v10420, 0.0
    %v10480 = vadd.f32 %v10478, %v10479
    %v10481 = vsel %vm7043, %v10425, 0.0
    %v10482 = vadd.f32 %v10480, %v10481
    %v10483 = vsel %vm7043, %v10430, 0.0
    %v10484 = vadd.f32 %v10482, %v10483
    %v10485 = vsel %vm7043, %v10435, 0.0
    %v10486 = vadd.f32 %v10484, %v10485
    %v10487 = vsel %vm7043, %v10440, 0.0
    %v10488 = vadd.f32 %v10486, %v10487
    %v10489 = vsel %vm7043, %v10445, 0.0
    %v10490 = vadd.f32 %v10488, %v10489
    %v10491 = vsel %vm7043, %v10450, 0.0
    %v10492 = vadd.f32 %v10490, %v10491
    %v10493 = vsel %vm7043, %v10455, 0.0
    %v10494 = vadd.f32 %v10492, %v10493
    %v10495 = vsel %vm7043, %v10460, 0.0
    %v10496 = vadd.f32 %v10494, %v10495
    %v10497 = vsel %vm7043, %v10465, 0.0
    %v10498 = vadd.f32 %v10496, %v10497
    %v10499 = vrot.slane %v10498, 4
    %v10500 = vadd.f32 %v10498, %v10499
    %v10501 = vrot.slane %v10500, 2
    %v10502 = vadd.f32 %v10500, %v10501
    %v10503 = vrot.slane %v10502, 1
    %v10504 = vadd.f32 %v10502, %v10503
    %v10505 = vmul.f32 %v10504, 0.0078125
    %v10506 = vsub.f32 %v10390, %v10505
    %v10507 = vsub.f32 %v10395, %v10505
    %v10508 = vsub.f32 %v10400, %v10505
    %v10509 = vsub.f32 %v10405, %v10505
    %v10510 = vsub.f32 %v10410, %v10505
    %v10511 = vsub.f32 %v10415, %v10505
    %v10512 = vsub.f32 %v10420, %v10505
    %v10513 = vsub.f32 %v10425, %v10505
    %v10514 = vsub.f32 %v10430, %v10505
    %v10515 = vsub.f32 %v10435, %v10505
    %v10516 = vsub.f32 %v10440, %v10505
    %v10517 = vsub.f32 %v10445, %v10505
    %v10518 = vsub.f32 %v10450, %v10505
    %v10519 = vsub.f32 %v10455, %v10505
    %v10520 = vsub.f32 %v10460, %v10505
    %v10521 = vsub.f32 %v10465, %v10505
    %v10522 = vmul.f32 %v10506, %v10506
    %v10523 = vmul.f32 %v10507, %v10507
    %v10524 = vmul.f32 %v10508, %v10508
    %v10525 = vmul.f32 %v10509, %v10509
    %v10526 = vmul.f32 %v10510, %v10510
    %v10527 = vmul.f32 %v10511, %v10511
    %v10528 = vmul.f32 %v10512, %v10512
    %v10529 = vmul.f32 %v10513, %v10513
    %v10530 = vmul.f32 %v10514, %v10514
    %v10531 = vmul.f32 %v10515, %v10515
    %v10532 = vmul.f32 %v10516, %v10516
    %v10533 = vmul.f32 %v10517, %v10517
    %v10534 = vmul.f32 %v10518, %v10518
    %v10535 = vmul.f32 %v10519, %v10519
    %v10536 = vmul.f32 %v10520, %v10520
    %v10537 = vmul.f32 %v10521, %v10521
    %v10538 = vsel %vm7043, %v10522, 0.0
    %v10539 = vsel %vm7043, %v10523, 0.0
    %v10540 = vadd.f32 %v10538, %v10539
    %v10541 = vsel %vm7043, %v10524, 0.0
    %v10542 = vadd.f32 %v10540, %v10541
    %v10543 = vsel %vm7043, %v10525, 0.0
    %v10544 = vadd.f32 %v10542, %v10543
    %v10545 = vsel %vm7043, %v10526, 0.0
    %v10546 = vadd.f32 %v10544, %v10545
    %v10547 = vsel %vm7043, %v10527, 0.0
    %v10548 = vadd.f32 %v10546, %v10547
    %v10549 = vsel %vm7043, %v10528, 0.0
    %v10550 = vadd.f32 %v10548, %v10549
    %v10551 = vsel %vm7043, %v10529, 0.0
    %v10552 = vadd.f32 %v10550, %v10551
    %v10553 = vsel %vm7043, %v10530, 0.0
    %v10554 = vadd.f32 %v10552, %v10553
    %v10555 = vsel %vm7043, %v10531, 0.0
    %v10556 = vadd.f32 %v10554, %v10555
    %v10557 = vsel %vm7043, %v10532, 0.0
    %v10558 = vadd.f32 %v10556, %v10557
    %v10559 = vsel %vm7043, %v10533, 0.0
    %v10560 = vadd.f32 %v10558, %v10559
    %v10561 = vsel %vm7043, %v10534, 0.0
    %v10562 = vadd.f32 %v10560, %v10561
    %v10563 = vsel %vm7043, %v10535, 0.0
    %v10564 = vadd.f32 %v10562, %v10563
    %v10565 = vsel %vm7043, %v10536, 0.0
    %v10566 = vadd.f32 %v10564, %v10565
    %v10567 = vsel %vm7043, %v10537, 0.0
    %v10568 = vadd.f32 %v10566, %v10567
    %v10569 = vrot.slane %v10568, 4
    %v10570 = vadd.f32 %v10568, %v10569
    %v10571 = vrot.slane %v10570, 2
    %v10572 = vadd.f32 %v10570, %v10571
    %v10573 = vrot.slane %v10572, 1
    %v10574 = vadd.f32 %v10572, %v10573
    %v10575 = vmul.f32 %v10574, 0.0078125
    %v10576 = vadd.f32 %v10575, 1e-05
    %v10577 = vrsqrt.pop %v10576
    %v10578 = vmul.f32 %v21, %v10577
    %v10579 = vmul.f32 %v10505, %v10578
    %v10581 = vrot.slane %v10579, 7
    %v10583 = vsub.f32 %v22, %v10581
    %v10584 = vlaneseq
    %v10585 = vshrl.u32 %v10584, 7
    %v10586 = vsub.s32 7, %v10585
    %v10587 = vrot.slane %v10578, %v10586
    %v10588 = vmul.f32 %v10390, %v10587
    %v10589 = vmul.f32 %v10395, %v10587
    %v10590 = vmul.f32 %v10400, %v10587
    %v10591 = vmul.f32 %v10405, %v10587
    %v10592 = vmul.f32 %v10410, %v10587
    %v10593 = vmul.f32 %v10415, %v10587
    %v10594 = vmul.f32 %v10420, %v10587
    %v10595 = vmul.f32 %v10425, %v10587
    %v10596 = vmul.f32 %v10430, %v10587
    %v10597 = vmul.f32 %v10435, %v10587
    %v10598 = vmul.f32 %v10440, %v10587
    %v10599 = vmul.f32 %v10445, %v10587
    %v10600 = vmul.f32 %v10450, %v10587
    %v10601 = vmul.f32 %v10455, %v10587
    %v10602 = vmul.f32 %v10460, %v10587
    %v10603 = vmul.f32 %v10465, %v10587
    %v10604 = vlaneseq
    %v10605 = vshrl.u32 %v10604, 7
    %v10606 = vsub.s32 0, %v10605
    %v10607 = vrot.slane %v10583, %v10606
    %v10608 = vadd.f32 %v10588, %v10607
    %v10609 = vadd.f32 %v10589, %v10607
    %v10610 = vadd.f32 %v10590, %v10607
    %v10611 = vadd.f32 %v10591, %v10607
    %v10612 = vadd.f32 %v10592, %v10607
    %v10613 = vadd.f32 %v10593, %v10607
    %v10614 = vadd.f32 %v10594, %v10607
    %v10615 = vadd.f32 %v10595, %v10607
    %v10616 = vadd.f32 %v10596, %v10607
    %v10617 = vadd.f32 %v10597, %v10607
    %v10618 = vadd.f32 %v10598, %v10607
    %v10619 = vadd.f32 %v10599, %v10607
    %v10620 = vadd.f32 %v10600, %v10607
    %v10621 = vadd.f32 %v10601, %v10607
    %v10622 = vadd.f32 %v10602, %v10607
    %v10623 = vadd.f32 %v10603, %v10607
    %v10624 = vadd.f32 %v10224, %v10608
    %v10625 = vadd.f32 %v10225, %v10609
    %v10626 = vadd.f32 %v10226, %v10610
    %v10627 = vadd.f32 %v10227, %v10611
    %v10628 = vadd.f32 %v10228, %v10612
    %v10629 = vadd.f32 %v10229, %v10613
    %v10630 = vadd.f32 %v10230, %v10614
    %v10631 = vadd.f32 %v10231, %v10615
    %v10632 = vadd.f32 %v10232, %v10616
    %v10633 = vadd.f32 %v10233, %v10617
    %v10634 = vadd.f32 %v10234, %v10618
    %v10635 = vadd.f32 %v10235, %v10619
    %v10636 = vadd.f32 %v10236, %v10620
    %v10637 = vadd.f32 %v10237, %v10621
    %v10638 = vadd.f32 %v10238, %v10622
    %v10639 = vadd.f32 %v10239, %v10623
    %10640 = vst.msk [vmem:[#allocation4] sm:$0xff] %vm7043, %v10624
    %10641 = vst.msk [vmem:[#allocation4 + $0x8] sm:$0xff] %vm7043, %v10625
    %10642 = vst.msk [vmem:[#allocation4 + $0x10] sm:$0xff] %vm7043, %v10626
    %10643 = vst.msk [vmem:[#allocation4 + $0x18] sm:$0xff] %vm7043, %v10627
    %10644 = vst.msk [vmem:[#allocation4 + $0x20] sm:$0xff] %vm7043, %v10628
    %10645 = vst.msk [vmem:[#allocation4 + $0x28] sm:$0xff] %vm7043, %v10629
    %10646 = vst.msk [vmem:[#allocation4 + $0x30] sm:$0xff] %vm7043, %v10630
    %10647 = vst.msk [vmem:[#allocation4 + $0x38] sm:$0xff] %vm7043, %v10631
    %10648 = vst.msk [vmem:[#allocation4 + $0x40] sm:$0xff] %vm7043, %v10632
    %10649 = vst.msk [vmem:[#allocation4 + $0x48] sm:$0xff] %vm7043, %v10633
    %10650 = vst.msk [vmem:[#allocation4 + $0x50] sm:$0xff] %vm7043, %v10634
    %10651 = vst.msk [vmem:[#allocation4 + $0x58] sm:$0xff] %vm7043, %v10635
    %10652 = vst.msk [vmem:[#allocation4 + $0x60] sm:$0xff] %vm7043, %v10636
    %10653 = vst.msk [vmem:[#allocation4 + $0x68] sm:$0xff] %vm7043, %v10637
    %10654 = vst.msk [vmem:[#allocation4 + $0x70] sm:$0xff] %vm7043, %v10638
    %10655 = vst.msk [vmem:[#allocation4 + $0x78] sm:$0xff] %vm7043, %v10639
    // Predicated region
    $region22: #{tpu_custom_call.1} parent=1 // pred_check
      _
    $region23: #{tpu_custom_call.1} parent=1 // pred_check_branch
      %10657 = sbr.rel (0) target = $region25
    $region24: #{tpu_custom_call.1} parent=1 // pred_region
      %s10659 = ssub.s32 2048, 2048
      %10660 = vsyncadd [#allocation5], %s10659
      %s10661 = sshll.u32 [#allocation4], 4
      %s10662 = int_to_ptr.vmem [resolvable:$true] %s10661
      %10667 = dma.vmem_to_hbm [thread:$0]  %s10662, 2048, %s5, [#allocation5], 128, 128, 8
    $region25: #{tpu_custom_call.1} parent=1 // pred_fallthru
      _
    // Predicated region
    $region26: #{tpu_custom_call.1} parent=1 // pred_check
      _
    $region27: #{tpu_custom_call.1} parent=1 // pred_check_branch
      %10669 = sbr.rel (0) target = $region29
    $region28: #{tpu_custom_call.1} parent=1 // pred_region
      %10670 = dma.done [#allocation5], 2048
    $region29: #{tpu_custom_call.1} parent=1 // pred_fallthru
      _
    %10671 = vsyncpa [#allocation5], 1

</llo_original>
